<compile_context>
chip_gen: v7x
topology: tpu7x:2x2x1
jax: 0.10.0
libtpu: 0.0.40
codegen_flags: <defaults>
</compile_context>

<pallas_src>
import functools
import math

import jax
import jax.numpy as jnp
from jax.experimental import pallas as pl
from jax.experimental.pallas import tpu as pltpu

_BN_POOL_SCALE = 1.0 / math.sqrt(1.0 + 1e-5)   # BN(affine=False) @ init stats
_NEG_INF = -1e30


def _mm(a, b):
    """MXU matmul: bf16 operands, f32 accumulation."""
    return jnp.dot(a.astype(jnp.bfloat16), b.astype(jnp.bfloat16),
                   preferred_element_type=jnp.float32)


# -----------------------------------------------------------------------------
# Single fused kernel: one grid step == one batch sample.
# -----------------------------------------------------------------------------
def _fused_block_kernel(wmix_ref, x_ref, c1w_ref, s1_ref, b1_ref,
                        c2w_ref, s2_ref, b2_ref,
                        dw_ref, dsc_ref, dbi_ref,
                        bw_ref, cw_ref, sew1_ref, sew2_ref, invcnt_ref,
                        o_ref,
                        pad1, pad2, padq0, padqn,
                        *, H, W, Cin, C, Cq, stride, steps, has_down):
    f32 = jnp.float32
    Ho = (H + 2 - 3) // stride + 1
    Wo = (W + 2 - 3) // stride + 1
    M = Ho * Wo                                 # rows for this sample

    x = x_ref[...]                              # (1, H, W, Cin)

    # ---- residual branch: 1x1 downsample conv + BN, or identity --------------
    if has_down:
        if stride == 1:
            xs = x
        else:
            xs = x_ref[:, pl.ds(0, Ho, stride), pl.ds(0, Wo, stride), :]
        residual = (_mm(xs.reshape(M, Cin), dw_ref[...])
                    * dsc_ref[...] + dbi_ref[...])                   # (M, C)
    else:
        residual = x.reshape(M, C)              # stride==1 and Cin==C (asserted)

    # ---- conv1 (3x3, stride) + BN1 + ReLU: im2col-in-VMEM, one K=9*Cin matmul
    pad1[...] = jnp.zeros(pad1.shape, f32)
    pad1[:, 1:H + 1, 1:W + 1, :] = x
    if stride == 1:
        wins1 = [pad1[:, kh:kh + Ho, kw:kw + Wo, :]
                 for kh in range(3) for kw in range(3)]
    else:
        wins1 = [pad1[:, pl.ds(kh, Ho, stride), pl.ds(kw, Wo, stride), :]
                 for kh in range(3) for kw in range(3)]
    col1 = jnp.concatenate(wins1, axis=-1).reshape(M, 9 * Cin)       # (M, 9*Cin)
    out1 = jnp.maximum(_mm(col1, c1w_ref[...]) * s1_ref[...] + b1_ref[...],
                       0.0)                                          # (M, C)

    # ---- conv2 (3x3, stride 1) + BN2: im2col-in-VMEM, one K=9*C matmul -------
    pad2[...] = jnp.zeros(pad2.shape, f32)
    pad2[:, 1:Ho + 1, 1:Wo + 1, :] = out1.reshape(1, Ho, Wo, C)
    wins2 = [pad2[:, kh:kh + Ho, kw:kw + Wo, :]
             for kh in range(3) for kw in range(3)]
    col2 = jnp.concatenate(wins2, axis=-1).reshape(M, 9 * C)         # (M, 9*C)
    out2 = _mm(col2, c2w_ref[...]) * s2_ref[...] + b2_ref[...]       # (M, C)

    # ---- ReceptiveFieldAttention ----------------------------------------------
    inv_cnt = invcnt_ref[...]                                        # (1,Ho,Wo,1)
    t0 = _mm(out2, bw_ref[...])                                      # (M, Cq)
    states = [t0.reshape(1, Ho, Wo, Cq)]

    padq0[...] = jnp.zeros(padq0.shape, f32)                         # zero border
    padqn[...] = jnp.full(padqn.shape, _NEG_INF, f32)                # -inf border

    pool_cache = {}

    def pools_of(idx, h):
        """Separable 3x3 avg/max pool of state `idx`; computed once and cached."""
        if idx in pool_cache:
            return pool_cache[idx]
        padq0[:, 1:Ho + 1, 1:Wo + 1, :] = h
        padqn[:, 1:Ho + 1, 1:Wo + 1, :] = h
        rs = (padq0[:, :, 0:Wo, :] + padq0[:, :, 1:Wo + 1, :]
              + padq0[:, :, 2:Wo + 2, :])                            # (1,Ho+2,Wo,Cq)
        avg = (rs[:, 0:Ho] + rs[:, 1:Ho + 1] + rs[:, 2:Ho + 2]) * inv_cnt
        rm = jnp.maximum(jnp.maximum(padqn[:, :, 0:Wo, :],
                                     padqn[:, :, 1:Wo + 1, :]),
                         padqn[:, :, 2:Wo + 2, :])
        mx = jnp.maximum(jnp.maximum(rm[:, 0:Ho], rm[:, 1:Ho + 1]),
                         rm[:, 2:Ho + 2])
        pool_cache[idx] = (avg, mx)
        return avg, mx

    offset = 0
    for _ in range(steps):
        s_new = None
        for j, h in enumerate(states):
            avg, mx = pools_of(j, h)
            w_skip = wmix_ref[offset + j, 0]
            w_avg = wmix_ref[offset + j, 1]     # pool-BN scale folded in wrapper
            w_max = wmix_ref[offset + j, 2]     # pool-BN scale folded in wrapper
            contrib = w_skip * h + w_avg * avg + w_max * mx
            s_new = contrib if s_new is None else s_new + contrib
        offset += len(states)
        states.append(s_new)

    # conv1x1 over the channel-concat of the last `steps` states: ONE matmul.
    cat = jnp.concatenate([s.reshape(M, Cq) for s in states[-steps:]], axis=-1)
    node = _mm(cat, cw_ref[...]) + out2         # "node_out + x" in the reference

    # SE(reduction=4): GAP -> fc -> ReLU -> fc -> sigmoid -> gate
    y = jnp.mean(node, axis=0, keepdims=True)                        # (1, C)
    y = jnp.maximum(_mm(y, sew1_ref[...]), 0.0)
    y = jax.nn.sigmoid(_mm(y, sew2_ref[...]))                        # (1, C)
    node = node * y

    # ---- out = ReLU(attention(out) + residual) ---------------------------------
    o_ref[...] = jnp.maximum(node + residual, 0.0)


# -----------------------------------------------------------------------------
# Wrapper
# -----------------------------------------------------------------------------
def bn_fold(gamma, beta, mean, var, eps=1e-5):
    scale = gamma / jnp.sqrt(var + eps)
    return scale, beta - mean * scale


def cifar_rf_basic_block(x_nchw, weights, params, stride=1, steps=3):
    """Forward pass of CifarRFBasicBlock.  x_nchw: (N, Cin, H, W) -> (N, C, Ho, Wo)."""
    N, Cin, H, W = x_nchw.shape
    C = params["conv1_w"].shape[-1]
    Cq = C // 4
    Ho = (H + 2 - 3) // stride + 1
    Wo = (W + 2 - 3) // stride + 1
    M = Ho * Wo
    n_edges = steps * (steps + 1) // 2
    assert weights.shape == (n_edges, 3)
    has_down = "down_w" in params
    if not has_down:
        assert stride == 1 and Cin == C, "identity residual needs stride==1, Cin==C"

    f32, bf16 = jnp.float32, jnp.bfloat16
    x = jnp.transpose(x_nchw, (0, 2, 3, 1))                  # NCHW -> NHWC

    s1, b1 = bn_fold(*params["bn1"])
    s2, b2 = bn_fold(*params["bn2"])
    if has_down:
        dsc, dbi = bn_fold(*params["down_bn"])
        dw = params["down_w"]
    else:                                                    # identity residual (refs unused)
        dw = jnp.eye(Cin, C, dtype=f32)
        dsc, dbi = jnp.ones((C,), f32), jnp.zeros((C,), f32)

    # Fold pool-op BatchNorm(affine=False, init stats) scale into mixing weights.
    wmix = weights * jnp.array([1.0, _BN_POOL_SCALE, _BN_POOL_SCALE], f32)

    # avg_pool_3x3 normalisation, count_include_pad=False (DARTS convention)
    ar_h = jnp.arange(Ho, dtype=f32)
    ar_w = jnp.arange(Wo, dtype=f32)
    cnt_h = 3.0 - (ar_h == 0).astype(f32) - (ar_h == Ho - 1).astype(f32)
    cnt_w = 3.0 - (ar_w == 0).astype(f32) - (ar_w == Wo - 1).astype(f32)
    inv_cnt = (1.0 / (cnt_h[:, None] * cnt_w[None, :])).reshape(1, Ho, Wo, 1)

    args = (
        wmix,                                                # (n_edges, 3) -> SMEM
        x,                                                   # (N, H, W, Cin)
        params["conv1_w"].reshape(9 * Cin, C).astype(bf16),  # tap-major im2col weights
        s1.reshape(1, C), b1.reshape(1, C),
        params["conv2_w"].reshape(9 * C, C).astype(bf16),
        s2.reshape(1, C), b2.reshape(1, C),
        dw.astype(bf16), dsc.reshape(1, C), dbi.reshape(1, C),
        params["bottle_w"].astype(bf16),                     # (C, Cq)
        params["conv1x1_w"].astype(bf16),                    # (steps*Cq, C)
        params["se_w1"].astype(bf16),                        # (C, C//4)
        params["se_w2"].astype(bf16),                        # (C//4, C)
        inv_cnt,
    )

    def _full_spec(a):
        shp = a.shape
        return pl.BlockSpec(shp, lambda n: (0,) * len(shp))

    in_specs = [
        pl.BlockSpec((n_edges, 3), lambda n: (0, 0),
                     memory_space=pltpu.MemorySpace.SMEM),
        pl.BlockSpec((1, H, W, Cin), lambda n: (n, 0, 0, 0)),
    ] + [_full_spec(a) for a in args[2:]]

    kernel = functools.partial(
        _fused_block_kernel, H=H, W=W, Cin=Cin, C=C, Cq=Cq,
        stride=stride, steps=steps, has_down=has_down)

    # Advisory cost estimate so XLA can overlap neighbours with this small call.
    mm_flops = 2 * M * (9 * Cin * C + 9 * C * C + C * Cq + steps * Cq * C)
    mm_flops += 2 * 2 * C * (C // 4)                         # SE fcs
    if has_down:
        mm_flops += 2 * M * Cin * C
    bytes_accessed = sum(math.prod(a.shape) * a.dtype.itemsize for a in args)
    bytes_accessed += N * M * C * 4                          # output
    cost = pl.CostEstimate(flops=int(N * mm_flops), transcendentals=int(N * C),
                           bytes_accessed=int(bytes_accessed))

    y = pl.pallas_call(
        kernel,
        out_shape=jax.ShapeDtypeStruct((N * M, C), jnp.float32),
        grid=(N,),
        in_specs=in_specs,
        out_specs=pl.BlockSpec((M, C), lambda n: (n, 0)),
        scratch_shapes=[
            pltpu.VMEM((1, H + 2, W + 2, Cin), jnp.float32),   # conv1 zero-pad
            pltpu.VMEM((1, Ho + 2, Wo + 2, C), jnp.float32),   # conv2 zero-pad
            pltpu.VMEM((1, Ho + 2, Wo + 2, Cq), jnp.float32),  # pool zero-pad
            pltpu.VMEM((1, Ho + 2, Wo + 2, Cq), jnp.float32),  # pool -inf-pad
        ],
        compiler_params=pltpu.CompilerParams(
            dimension_semantics=("parallel",)),                # v7x: one sample/TC
        cost_estimate=cost,
    )(*args)

    return jnp.transpose(y.reshape(N, Ho, Wo, C), (0, 3, 1, 2))   # NHWC -> NCHW


# -----------------------------------------------------------------------------
# Deterministic parameter construction
# -----------------------------------------------------------------------------
def init_params(key, inplanes, planes):
    C = planes
    Cq = C // 4
    ks = jax.random.split(key, 10)

    def nrm(k, shape, s=0.1):
        return jax.random.normal(k, shape, dtype=jnp.float32) * s

    def bn_params(k, c):
        k1, k2, k3, k4 = jax.random.split(k, 4)
        gamma = 1.0 + 0.1 * jax.random.normal(k1, (c,), jnp.float32)
        beta = 0.1 * jax.random.normal(k2, (c,), jnp.float32)
        rmean = 0.05 * jax.random.normal(k3, (c,), jnp.float32)
        rvar = 1.0 + 0.1 * jnp.abs(jax.random.normal(k4, (c,), jnp.float32))
        return gamma, beta, rmean, rvar

    params = {
        "conv1_w": nrm(ks[0], (3, 3, inplanes, planes)),   # HWIO
        "bn1": bn_params(ks[1], planes),
        "conv2_w": nrm(ks[2], (3, 3, planes, planes)),
        "bn2": bn_params(ks[3], planes),
        "bottle_w": nrm(ks[4], (C, Cq)),                   # 1x1 conv as (Cin, Cout)
        "conv1x1_w": nrm(ks[5], (Cq * 3, C)),
        "se_w1": nrm(ks[6], (C, C // 4)),                  # SE(reduction=4), no bias
        "se_w2": nrm(ks[7], (C // 4, C)),
    }
    if inplanes != planes:
        params["down_w"] = nrm(ks[8], (inplanes, planes))
        params["down_bn"] = bn_params(ks[9], planes)
    return params


if __name__ == "__main__":
    inplanes, planes, stride, step = 8, 16, 1, 3
    N, H, W = 2, 16, 16

    key = jax.random.PRNGKey(0)
    kx, ka, kp = jax.random.split(key, 3)

    x = jax.random.normal(kx, (N, inplanes, H, W), dtype=jnp.float32)
    n_edges = step * (step + 1) // 2                       # 6 MixedOps
    alphas = jax.random.normal(ka, (n_edges, 3), dtype=jnp.float32)
    weights = jax.nn.softmax(alphas, axis=-1)              # per-edge primitive weights
    params = init_params(kp, inplanes, planes)

    fwd = jax.jit(functools.partial(cifar_rf_basic_block, stride=stride, steps=step))
    out = jax.block_until_ready(fwd(x, weights, params))
    assert out.shape == (N, planes, H, W)
    assert bool(jnp.all(jnp.isfinite(out)))
    print("KERNEL_OK")
</pallas_src>

<mosaic_0001>
module attributes {stable_mosaic.version = 11 : i64} {
  func.func @_fused_block_kernel(%arg0: i32, %arg1: memref<6x3xf32, #tpu.memory_space<smem>>, %arg2: memref<1x16x16x8xf32, #tpu.memory_space<vmem>>, %arg3: memref<72x16xbf16, #tpu.memory_space<vmem>>, %arg4: memref<1x16xf32, #tpu.memory_space<vmem>>, %arg5: memref<1x16xf32, #tpu.memory_space<vmem>>, %arg6: memref<144x16xbf16, #tpu.memory_space<vmem>>, %arg7: memref<1x16xf32, #tpu.memory_space<vmem>>, %arg8: memref<1x16xf32, #tpu.memory_space<vmem>>, %arg9: memref<8x16xbf16, #tpu.memory_space<vmem>>, %arg10: memref<1x16xf32, #tpu.memory_space<vmem>>, %arg11: memref<1x16xf32, #tpu.memory_space<vmem>>, %arg12: memref<16x4xbf16, #tpu.memory_space<vmem>>, %arg13: memref<12x16xbf16, #tpu.memory_space<vmem>>, %arg14: memref<16x4xbf16, #tpu.memory_space<vmem>>, %arg15: memref<4x16xbf16, #tpu.memory_space<vmem>>, %arg16: memref<1x16x16x1xf32, #tpu.memory_space<vmem>>, %arg17: memref<256x16xf32, #tpu.memory_space<vmem>>, %arg18: memref<1x18x18x8xf32, #tpu.memory_space<vmem>>, %arg19: memref<1x18x18x16xf32, #tpu.memory_space<vmem>>, %arg20: memref<1x18x18x4xf32, #tpu.memory_space<vmem>>, %arg21: memref<1x18x18x4xf32, #tpu.memory_space<vmem>>) attributes {dimension_semantics = [#tpu.dimension_semantics<parallel>], iteration_bounds = array<i64: 2>, scalar_prefetch = 0 : i64, scratch_operands = 4 : i64, tpu.core_type = #tpu.core_type<tc>, window_params = [{transform_indices = @transform_0, window_bounds = array<i64: 6, 3>}, {transform_indices = @transform_1, window_bounds = array<i64: 1, 16, 16, 8>}, {pipeline_mode = #tpu.pipeline_mode<synchronous>, transform_indices = @transform_2, window_bounds = array<i64: 72, 16>}, {pipeline_mode = #tpu.pipeline_mode<synchronous>, transform_indices = @transform_3, window_bounds = array<i64: 1, 16>}, {pipeline_mode = #tpu.pipeline_mode<synchronous>, transform_indices = @transform_4, window_bounds = array<i64: 1, 16>}, {pipeline_mode = #tpu.pipeline_mode<synchronous>, transform_indices = @transform_5, window_bounds = array<i64: 144, 16>}, {pipeline_mode = #tpu.pipeline_mode<synchronous>, transform_indices = @transform_6, window_bounds = array<i64: 1, 16>}, {pipeline_mode = #tpu.pipeline_mode<synchronous>, transform_indices = @transform_7, window_bounds = array<i64: 1, 16>}, {pipeline_mode = #tpu.pipeline_mode<synchronous>, transform_indices = @transform_8, window_bounds = array<i64: 8, 16>}, {pipeline_mode = #tpu.pipeline_mode<synchronous>, transform_indices = @transform_9, window_bounds = array<i64: 1, 16>}, {pipeline_mode = #tpu.pipeline_mode<synchronous>, transform_indices = @transform_10, window_bounds = array<i64: 1, 16>}, {pipeline_mode = #tpu.pipeline_mode<synchronous>, transform_indices = @transform_11, window_bounds = array<i64: 16, 4>}, {pipeline_mode = #tpu.pipeline_mode<synchronous>, transform_indices = @transform_12, window_bounds = array<i64: 12, 16>}, {pipeline_mode = #tpu.pipeline_mode<synchronous>, transform_indices = @transform_13, window_bounds = array<i64: 16, 4>}, {pipeline_mode = #tpu.pipeline_mode<synchronous>, transform_indices = @transform_14, window_bounds = array<i64: 4, 16>}, {pipeline_mode = #tpu.pipeline_mode<synchronous>, transform_indices = @transform_15, window_bounds = array<i64: 1, 16, 16, 1>}, {transform_indices = @transform_16, window_bounds = array<i64: 256, 16>}]} {
    %c0 = arith.constant 0 : index
    %c0_0 = arith.constant 0 : index
    %c0_1 = arith.constant 0 : index
    %c0_2 = arith.constant 0 : index
    %0 = vector.load %arg2[%c0, %c0_0, %c0_1, %c0_2] : memref<1x16x16x8xf32, #tpu.memory_space<vmem>>, vector<1x16x16x8xf32>
    %1 = vector.shape_cast %0 : vector<1x16x16x8xf32> to vector<256x8xf32>
    %c0_3 = arith.constant 0 : index
    %c0_4 = arith.constant 0 : index
    %2 = vector.load %arg9[%c0_3, %c0_4] : memref<8x16xbf16, #tpu.memory_space<vmem>>, vector<8x16xbf16>
    %3 = arith.truncf %1 : vector<256x8xf32> to vector<256x8xbf16>
    %cst = arith.constant dense<0.000000e+00> : vector<256x16xf32>
    %4 = tpu.matmul %3, %2, %cst {dimension_numbers = #tpu.dot_dimension_numbers<[1], [0], [0], [1], [0, 0, 1, 1], [], []>} : vector<256x8xbf16>, vector<8x16xbf16>, vector<256x16xf32> -> vector<256x16xf32>
    %c0_5 = arith.constant 0 : index
    %c0_6 = arith.constant 0 : index
    %5 = vector.load %arg10[%c0_5, %c0_6] : memref<1x16xf32, #tpu.memory_space<vmem>>, vector<1x16xf32>
    %6 = vector.broadcast %5 : vector<1x16xf32> to vector<256x16xf32>
    %7 = arith.mulf %4, %6 : vector<256x16xf32>
    %c0_7 = arith.constant 0 : index
    %c0_8 = arith.constant 0 : index
    %8 = vector.load %arg11[%c0_7, %c0_8] : memref<1x16xf32, #tpu.memory_space<vmem>>, vector<1x16xf32>
    %9 = vector.broadcast %8 : vector<1x16xf32> to vector<256x16xf32>
    %10 = arith.addf %7, %9 : vector<256x16xf32>
    %cst_9 = arith.constant 0.000000e+00 : f32
    %11 = vector.broadcast %cst_9 : f32 to vector<1x18x18x8xf32>
    %c0_10 = arith.constant 0 : index
    %c0_11 = arith.constant 0 : index
    %c0_12 = arith.constant 0 : index
    %c0_13 = arith.constant 0 : index
    %12 = vector.load %arg18[%c0_10, %c0_11, %c0_12, %c0_13] : memref<1x18x18x8xf32, #tpu.memory_space<vmem>>, vector<1x18x18x8xf32>
    tpu.vector_store %arg18[%c0_10, %c0_11, %c0_12, %c0_13], %11 {strides = array<i32>} : memref<1x18x18x8xf32, #tpu.memory_space<vmem>>, vector<1x18x18x8xf32>,
    %c0_14 = arith.constant 0 : index
    %c1 = arith.constant 1 : index
    %c1_15 = arith.constant 1 : index
    %c0_16 = arith.constant 0 : index
    %13 = vector.load %arg18[%c0_14, %c1, %c1_15, %c0_16] : memref<1x18x18x8xf32, #tpu.memory_space<vmem>>, vector<1x16x16x8xf32>
    tpu.vector_store %arg18[%c0_14, %c1, %c1_15, %c0_16], %0 {strides = array<i32>} : memref<1x18x18x8xf32, #tpu.memory_space<vmem>>, vector<1x16x16x8xf32>,
    %c0_17 = arith.constant 0 : index
    %c0_18 = arith.constant 0 : index
    %c0_19 = arith.constant 0 : index
    %c0_20 = arith.constant 0 : index
    %14 = vector.load %arg18[%c0_17, %c0_18, %c0_19, %c0_20] : memref<1x18x18x8xf32, #tpu.memory_space<vmem>>, vector<1x16x16x8xf32>
    %c0_21 = arith.constant 0 : index
    %c0_22 = arith.constant 0 : index
    %c1_23 = arith.constant 1 : index
    %c0_24 = arith.constant 0 : index
    %15 = vector.load %arg18[%c0_21, %c0_22, %c1_23, %c0_24] : memref<1x18x18x8xf32, #tpu.memory_space<vmem>>, vector<1x16x16x8xf32>
    %c0_25 = arith.constant 0 : index
    %c0_26 = arith.constant 0 : index
    %c2 = arith.constant 2 : index
    %c0_27 = arith.constant 0 : index
    %16 = vector.load %arg18[%c0_25, %c0_26, %c2, %c0_27] : memref<1x18x18x8xf32, #tpu.memory_space<vmem>>, vector<1x16x16x8xf32>
    %c0_28 = arith.constant 0 : index
    %c1_29 = arith.constant 1 : index
    %c0_30 = arith.constant 0 : index
    %c0_31 = arith.constant 0 : index
    %17 = vector.load %arg18[%c0_28, %c1_29, %c0_30, %c0_31] : memref<1x18x18x8xf32, #tpu.memory_space<vmem>>, vector<1x16x16x8xf32>
    %c0_32 = arith.constant 0 : index
    %c1_33 = arith.constant 1 : index
    %c1_34 = arith.constant 1 : index
    %c0_35 = arith.constant 0 : index
    %18 = vector.load %arg18[%c0_32, %c1_33, %c1_34, %c0_35] : memref<1x18x18x8xf32, #tpu.memory_space<vmem>>, vector<1x16x16x8xf32>
    %c0_36 = arith.constant 0 : index
    %c1_37 = arith.constant 1 : index
    %c2_38 = arith.constant 2 : index
    %c0_39 = arith.constant 0 : index
    %19 = vector.load %arg18[%c0_36, %c1_37, %c2_38, %c0_39] : memref<1x18x18x8xf32, #tpu.memory_space<vmem>>, vector<1x16x16x8xf32>
    %c0_40 = arith.constant 0 : index
    %c2_41 = arith.constant 2 : index
    %c0_42 = arith.constant 0 : index
    %c0_43 = arith.constant 0 : index
    %20 = vector.load %arg18[%c0_40, %c2_41, %c0_42, %c0_43] : memref<1x18x18x8xf32, #tpu.memory_space<vmem>>, vector<1x16x16x8xf32>
    %c0_44 = arith.constant 0 : index
    %c2_45 = arith.constant 2 : index
    %c1_46 = arith.constant 1 : index
    %c0_47 = arith.constant 0 : index
    %21 = vector.load %arg18[%c0_44, %c2_45, %c1_46, %c0_47] : memref<1x18x18x8xf32, #tpu.memory_space<vmem>>, vector<1x16x16x8xf32>
    %c0_48 = arith.constant 0 : index
    %c2_49 = arith.constant 2 : index
    %c2_50 = arith.constant 2 : index
    %c0_51 = arith.constant 0 : index
    %22 = vector.load %arg18[%c0_48, %c2_49, %c2_50, %c0_51] : memref<1x18x18x8xf32, #tpu.memory_space<vmem>>, vector<1x16x16x8xf32>
    %23 = tpu.concatenate %14, %15, %16, %17, %18, %19, %20, %21, %22 in 3 : vector<1x16x16x8xf32>, vector<1x16x16x8xf32>, vector<1x16x16x8xf32>, vector<1x16x16x8xf32>, vector<1x16x16x8xf32>, vector<1x16x16x8xf32>, vector<1x16x16x8xf32>, vector<1x16x16x8xf32>, vector<1x16x16x8xf32> -> vector<1x16x16x72xf32>
    %24 = vector.shape_cast %23 : vector<1x16x16x72xf32> to vector<256x72xf32>
    %c0_52 = arith.constant 0 : index
    %c0_53 = arith.constant 0 : index
    %25 = vector.load %arg3[%c0_52, %c0_53] : memref<72x16xbf16, #tpu.memory_space<vmem>>, vector<72x16xbf16>
    %26 = arith.truncf %24 : vector<256x72xf32> to vector<256x72xbf16>
    %cst_54 = arith.constant dense<0.000000e+00> : vector<256x16xf32>
    %27 = tpu.matmul %26, %25, %cst_54 {dimension_numbers = #tpu.dot_dimension_numbers<[1], [0], [0], [1], [0, 0, 1, 1], [], []>} : vector<256x72xbf16>, vector<72x16xbf16>, vector<256x16xf32> -> vector<256x16xf32>
    %c0_55 = arith.constant 0 : index
    %c0_56 = arith.constant 0 : index
    %28 = vector.load %arg4[%c0_55, %c0_56] : memref<1x16xf32, #tpu.memory_space<vmem>>, vector<1x16xf32>
    %29 = vector.broadcast %28 : vector<1x16xf32> to vector<256x16xf32>
    %30 = arith.mulf %27, %29 : vector<256x16xf32>
    %c0_57 = arith.constant 0 : index
    %c0_58 = arith.constant 0 : index
    %31 = vector.load %arg5[%c0_57, %c0_58] : memref<1x16xf32, #tpu.memory_space<vmem>>, vector<1x16xf32>
    %32 = vector.broadcast %31 : vector<1x16xf32> to vector<256x16xf32>
    %33 = arith.addf %30, %32 : vector<256x16xf32>
    %cst_59 = arith.constant 0.000000e+00 : f32
    %34 = vector.broadcast %cst_59 : f32 to vector<256x16xf32>
    %35 = arith.maximumf %33, %34 : vector<256x16xf32>
    %cst_60 = arith.constant 0.000000e+00 : f32
    %36 = vector.broadcast %cst_60 : f32 to vector<1x18x18x16xf32>
    %c0_61 = arith.constant 0 : index
    %c0_62 = arith.constant 0 : index
    %c0_63 = arith.constant 0 : index
    %c0_64 = arith.constant 0 : index
    %37 = vector.load %arg19[%c0_61, %c0_62, %c0_63, %c0_64] : memref<1x18x18x16xf32, #tpu.memory_space<vmem>>, vector<1x18x18x16xf32>
    tpu.vector_store %arg19[%c0_61, %c0_62, %c0_63, %c0_64], %36 {strides = array<i32>} : memref<1x18x18x16xf32, #tpu.memory_space<vmem>>, vector<1x18x18x16xf32>,
    %38 = vector.shape_cast %35 : vector<256x16xf32> to vector<1x16x16x16xf32>
    %c0_65 = arith.constant 0 : index
    %c1_66 = arith.constant 1 : index
    %c1_67 = arith.constant 1 : index
    %c0_68 = arith.constant 0 : index
    %39 = vector.load %arg19[%c0_65, %c1_66, %c1_67, %c0_68] : memref<1x18x18x16xf32, #tpu.memory_space<vmem>>, vector<1x16x16x16xf32>
    tpu.vector_store %arg19[%c0_65, %c1_66, %c1_67, %c0_68], %38 {strides = array<i32>} : memref<1x18x18x16xf32, #tpu.memory_space<vmem>>, vector<1x16x16x16xf32>,
    %c0_69 = arith.constant 0 : index
    %c0_70 = arith.constant 0 : index
    %c0_71 = arith.constant 0 : index
    %c0_72 = arith.constant 0 : index
    %40 = vector.load %arg19[%c0_69, %c0_70, %c0_71, %c0_72] : memref<1x18x18x16xf32, #tpu.memory_space<vmem>>, vector<1x16x16x16xf32>
    %c0_73 = arith.constant 0 : index
    %c0_74 = arith.constant 0 : index
    %c1_75 = arith.constant 1 : index
    %c0_76 = arith.constant 0 : index
    %41 = vector.load %arg19[%c0_73, %c0_74, %c1_75, %c0_76] : memref<1x18x18x16xf32, #tpu.memory_space<vmem>>, vector<1x16x16x16xf32>
    %c0_77 = arith.constant 0 : index
    %c0_78 = arith.constant 0 : index
    %c2_79 = arith.constant 2 : index
    %c0_80 = arith.constant 0 : index
    %42 = vector.load %arg19[%c0_77, %c0_78, %c2_79, %c0_80] : memref<1x18x18x16xf32, #tpu.memory_space<vmem>>, vector<1x16x16x16xf32>
    %c0_81 = arith.constant 0 : index
    %c1_82 = arith.constant 1 : index
    %c0_83 = arith.constant 0 : index
    %c0_84 = arith.constant 0 : index
    %43 = vector.load %arg19[%c0_81, %c1_82, %c0_83, %c0_84] : memref<1x18x18x16xf32, #tpu.memory_space<vmem>>, vector<1x16x16x16xf32>
    %c0_85 = arith.constant 0 : index
    %c1_86 = arith.constant 1 : index
    %c1_87 = arith.constant 1 : index
    %c0_88 = arith.constant 0 : index
    %44 = vector.load %arg19[%c0_85, %c1_86, %c1_87, %c0_88] : memref<1x18x18x16xf32, #tpu.memory_space<vmem>>, vector<1x16x16x16xf32>
    %c0_89 = arith.constant 0 : index
    %c1_90 = arith.constant 1 : index
    %c2_91 = arith.constant 2 : index
    %c0_92 = arith.constant 0 : index
    %45 = vector.load %arg19[%c0_89, %c1_90, %c2_91, %c0_92] : memref<1x18x18x16xf32, #tpu.memory_space<vmem>>, vector<1x16x16x16xf32>
    %c0_93 = arith.constant 0 : index
    %c2_94 = arith.constant 2 : index
    %c0_95 = arith.constant 0 : index
    %c0_96 = arith.constant 0 : index
    %46 = vector.load %arg19[%c0_93, %c2_94, %c0_95, %c0_96] : memref<1x18x18x16xf32, #tpu.memory_space<vmem>>, vector<1x16x16x16xf32>
    %c0_97 = arith.constant 0 : index
    %c2_98 = arith.constant 2 : index
    %c1_99 = arith.constant 1 : index
    %c0_100 = arith.constant 0 : index
    %47 = vector.load %arg19[%c0_97, %c2_98, %c1_99, %c0_100] : memref<1x18x18x16xf32, #tpu.memory_space<vmem>>, vector<1x16x16x16xf32>
    %c0_101 = arith.constant 0 : index
    %c2_102 = arith.constant 2 : index
    %c2_103 = arith.constant 2 : index
    %c0_104 = arith.constant 0 : index
    %48 = vector.load %arg19[%c0_101, %c2_102, %c2_103, %c0_104] : memref<1x18x18x16xf32, #tpu.memory_space<vmem>>, vector<1x16x16x16xf32>
    %49 = tpu.concatenate %40, %41, %42, %43, %44, %45, %46, %47, %48 in 3 : vector<1x16x16x16xf32>, vector<1x16x16x16xf32>, vector<1x16x16x16xf32>, vector<1x16x16x16xf32>, vector<1x16x16x16xf32>, vector<1x16x16x16xf32>, vector<1x16x16x16xf32>, vector<1x16x16x16xf32>, vector<1x16x16x16xf32> -> vector<1x16x16x144xf32>
    %50 = vector.shape_cast %49 : vector<1x16x16x144xf32> to vector<256x144xf32>
    %c0_105 = arith.constant 0 : index
    %c0_106 = arith.constant 0 : index
    %51 = vector.load %arg6[%c0_105, %c0_106] : memref<144x16xbf16, #tpu.memory_space<vmem>>, vector<144x16xbf16>
    %52 = arith.truncf %50 : vector<256x144xf32> to vector<256x144xbf16>
    %cst_107 = arith.constant dense<0.000000e+00> : vector<256x16xf32>
    %53 = tpu.matmul %52, %51, %cst_107 {dimension_numbers = #tpu.dot_dimension_numbers<[1], [0], [0], [1], [0, 0, 1, 1], [], []>} : vector<256x144xbf16>, vector<144x16xbf16>, vector<256x16xf32> -> vector<256x16xf32>
    %c0_108 = arith.constant 0 : index
    %c0_109 = arith.constant 0 : index
    %54 = vector.load %arg7[%c0_108, %c0_109] : memref<1x16xf32, #tpu.memory_space<vmem>>, vector<1x16xf32>
    %55 = vector.broadcast %54 : vector<1x16xf32> to vector<256x16xf32>
    %56 = arith.mulf %53, %55 : vector<256x16xf32>
    %c0_110 = arith.constant 0 : index
    %c0_111 = arith.constant 0 : index
    %57 = vector.load %arg8[%c0_110, %c0_111] : memref<1x16xf32, #tpu.memory_space<vmem>>, vector<1x16xf32>
    %58 = vector.broadcast %57 : vector<1x16xf32> to vector<256x16xf32>
    %59 = arith.addf %56, %58 : vector<256x16xf32>
    %c0_112 = arith.constant 0 : index
    %c0_113 = arith.constant 0 : index
    %c0_114 = arith.constant 0 : index
    %c0_115 = arith.constant 0 : index
    %60 = vector.load %arg16[%c0_112, %c0_113, %c0_114, %c0_115] : memref<1x16x16x1xf32, #tpu.memory_space<vmem>>, vector<1x16x16x1xf32>
    %c0_116 = arith.constant 0 : index
    %c0_117 = arith.constant 0 : index
    %61 = vector.load %arg12[%c0_116, %c0_117] : memref<16x4xbf16, #tpu.memory_space<vmem>>, vector<16x4xbf16>
    %62 = arith.truncf %59 : vector<256x16xf32> to vector<256x16xbf16>
    %cst_118 = arith.constant dense<0.000000e+00> : vector<256x4xf32>
    %63 = tpu.matmul %62, %61, %cst_118 {dimension_numbers = #tpu.dot_dimension_numbers<[1], [0], [0], [1], [0, 0, 1, 1], [], []>} : vector<256x16xbf16>, vector<16x4xbf16>, vector<256x4xf32> -> vector<256x4xf32>
    %64 = vector.shape_cast %63 : vector<256x4xf32> to vector<1x16x16x4xf32>
    %cst_119 = arith.constant 0.000000e+00 : f32
    %65 = vector.broadcast %cst_119 : f32 to vector<1x18x18x4xf32>
    %c0_120 = arith.constant 0 : index
    %c0_121 = arith.constant 0 : index
    %c0_122 = arith.constant 0 : index
    %c0_123 = arith.constant 0 : index
    %66 = vector.load %arg20[%c0_120, %c0_121, %c0_122, %c0_123] : memref<1x18x18x4xf32, #tpu.memory_space<vmem>>, vector<1x18x18x4xf32>
    tpu.vector_store %arg20[%c0_120, %c0_121, %c0_122, %c0_123], %65 {strides = array<i32>} : memref<1x18x18x4xf32, #tpu.memory_space<vmem>>, vector<1x18x18x4xf32>,
    %cst_124 = arith.constant -1.000000e+30 : f32
    %67 = vector.broadcast %cst_124 : f32 to vector<1x18x18x4xf32>
    %c0_125 = arith.constant 0 : index
    %c0_126 = arith.constant 0 : index
    %c0_127 = arith.constant 0 : index
    %c0_128 = arith.constant 0 : index
    %68 = vector.load %arg21[%c0_125, %c0_126, %c0_127, %c0_128] : memref<1x18x18x4xf32, #tpu.memory_space<vmem>>, vector<1x18x18x4xf32>
    tpu.vector_store %arg21[%c0_125, %c0_126, %c0_127, %c0_128], %67 {strides = array<i32>} : memref<1x18x18x4xf32, #tpu.memory_space<vmem>>, vector<1x18x18x4xf32>,
    %c0_129 = arith.constant 0 : index
    %c1_130 = arith.constant 1 : index
    %c1_131 = arith.constant 1 : index
    %c0_132 = arith.constant 0 : index
    %69 = vector.load %arg20[%c0_129, %c1_130, %c1_131, %c0_132] : memref<1x18x18x4xf32, #tpu.memory_space<vmem>>, vector<1x16x16x4xf32>
    tpu.vector_store %arg20[%c0_129, %c1_130, %c1_131, %c0_132], %64 {strides = array<i32>} : memref<1x18x18x4xf32, #tpu.memory_space<vmem>>, vector<1x16x16x4xf32>,
    %c0_133 = arith.constant 0 : index
    %c1_134 = arith.constant 1 : index
    %c1_135 = arith.constant 1 : index
    %c0_136 = arith.constant 0 : index
    %70 = vector.load %arg21[%c0_133, %c1_134, %c1_135, %c0_136] : memref<1x18x18x4xf32, #tpu.memory_space<vmem>>, vector<1x16x16x4xf32>
    tpu.vector_store %arg21[%c0_133, %c1_134, %c1_135, %c0_136], %64 {strides = array<i32>} : memref<1x18x18x4xf32, #tpu.memory_space<vmem>>, vector<1x16x16x4xf32>,
    %c0_137 = arith.constant 0 : index
    %c0_138 = arith.constant 0 : index
    %c0_139 = arith.constant 0 : index
    %c0_140 = arith.constant 0 : index
    %71 = vector.load %arg20[%c0_137, %c0_138, %c0_139, %c0_140] : memref<1x18x18x4xf32, #tpu.memory_space<vmem>>, vector<1x18x16x4xf32>
    %c0_141 = arith.constant 0 : index
    %c0_142 = arith.constant 0 : index
    %c1_143 = arith.constant 1 : index
    %c0_144 = arith.constant 0 : index
    %72 = vector.load %arg20[%c0_141, %c0_142, %c1_143, %c0_144] : memref<1x18x18x4xf32, #tpu.memory_space<vmem>>, vector<1x18x16x4xf32>
    %73 = arith.addf %71, %72 : vector<1x18x16x4xf32>
    %c0_145 = arith.constant 0 : index
    %c0_146 = arith.constant 0 : index
    %c2_147 = arith.constant 2 : index
    %c0_148 = arith.constant 0 : index
    %74 = vector.load %arg20[%c0_145, %c0_146, %c2_147, %c0_148] : memref<1x18x18x4xf32, #tpu.memory_space<vmem>>, vector<1x18x16x4xf32>
    %75 = arith.addf %73, %74 : vector<1x18x16x4xf32>
    %76 = vector.extract_strided_slice %75 {offsets = [0, 0, 0, 0], sizes = [1, 16, 16, 4], strides = [1, 1, 1, 1]} : vector<1x18x16x4xf32> to vector<1x16x16x4xf32>
    %77 = vector.extract_strided_slice %75 {offsets = [0, 1, 0, 0], sizes = [1, 16, 16, 4], strides = [1, 1, 1, 1]} : vector<1x18x16x4xf32> to vector<1x16x16x4xf32>
    %78 = arith.addf %76, %77 : vector<1x16x16x4xf32>
    %79 = vector.extract_strided_slice %75 {offsets = [0, 2, 0, 0], sizes = [1, 16, 16, 4], strides = [1, 1, 1, 1]} : vector<1x18x16x4xf32> to vector<1x16x16x4xf32>
    %80 = arith.addf %78, %79 : vector<1x16x16x4xf32>
    %81 = vector.broadcast %60 : vector<1x16x16x1xf32> to vector<1x16x16x4xf32>
    %82 = arith.mulf %80, %81 : vector<1x16x16x4xf32>
    %c0_149 = arith.constant 0 : index
    %c0_150 = arith.constant 0 : index
    %c0_151 = arith.constant 0 : index
    %c0_152 = arith.constant 0 : index
    %83 = vector.load %arg21[%c0_149, %c0_150, %c0_151, %c0_152] : memref<1x18x18x4xf32, #tpu.memory_space<vmem>>, vector<1x18x16x4xf32>
    %c0_153 = arith.constant 0 : index
    %c0_154 = arith.constant 0 : index
    %c1_155 = arith.constant 1 : index
    %c0_156 = arith.constant 0 : index
    %84 = vector.load %arg21[%c0_153, %c0_154, %c1_155, %c0_156] : memref<1x18x18x4xf32, #tpu.memory_space<vmem>>, vector<1x18x16x4xf32>
    %85 = arith.maximumf %83, %84 : vector<1x18x16x4xf32>
    %c0_157 = arith.constant 0 : index
    %c0_158 = arith.constant 0 : index
    %c2_159 = arith.constant 2 : index
    %c0_160 = arith.constant 0 : index
    %86 = vector.load %arg21[%c0_157, %c0_158, %c2_159, %c0_160] : memref<1x18x18x4xf32, #tpu.memory_space<vmem>>, vector<1x18x16x4xf32>
    %87 = arith.maximumf %85, %86 : vector<1x18x16x4xf32>
    %88 = vector.extract_strided_slice %87 {offsets = [0, 0, 0, 0], sizes = [1, 16, 16, 4], strides = [1, 1, 1, 1]} : vector<1x18x16x4xf32> to vector<1x16x16x4xf32>
    %89 = vector.extract_strided_slice %87 {offsets = [0, 1, 0, 0], sizes = [1, 16, 16, 4], strides = [1, 1, 1, 1]} : vector<1x18x16x4xf32> to vector<1x16x16x4xf32>
    %90 = arith.maximumf %88, %89 : vector<1x16x16x4xf32>
    %91 = vector.extract_strided_slice %87 {offsets = [0, 2, 0, 0], sizes = [1, 16, 16, 4], strides = [1, 1, 1, 1]} : vector<1x18x16x4xf32> to vector<1x16x16x4xf32>
    %92 = arith.maximumf %90, %91 : vector<1x16x16x4xf32>
    %c0_161 = arith.constant 0 : index
    %c0_162 = arith.constant 0 : index
    %93 = memref.load %arg1[%c0_161, %c0_162] : memref<6x3xf32, #tpu.memory_space<smem>>
    %c0_163 = arith.constant 0 : index
    %c1_164 = arith.constant 1 : index
    %94 = memref.load %arg1[%c0_163, %c1_164] : memref<6x3xf32, #tpu.memory_space<smem>>
    %c0_165 = arith.constant 0 : index
    %c2_166 = arith.constant 2 : index
    %95 = memref.load %arg1[%c0_165, %c2_166] : memref<6x3xf32, #tpu.memory_space<smem>>
    %96 = vector.broadcast %93 : f32 to vector<1x16x16x4xf32>
    %97 = arith.mulf %96, %64 : vector<1x16x16x4xf32>
    %98 = vector.broadcast %94 : f32 to vector<1x16x16x4xf32>
    %99 = arith.mulf %98, %82 : vector<1x16x16x4xf32>
    %100 = arith.addf %97, %99 : vector<1x16x16x4xf32>
    %101 = vector.broadcast %95 : f32 to vector<1x16x16x4xf32>
    %102 = arith.mulf %101, %92 : vector<1x16x16x4xf32>
    %103 = arith.addf %100, %102 : vector<1x16x16x4xf32>
    %c1_167 = arith.constant 1 : index
    %c0_168 = arith.constant 0 : index
    %104 = memref.load %arg1[%c1_167, %c0_168] : memref<6x3xf32, #tpu.memory_space<smem>>
    %c1_169 = arith.constant 1 : index
    %c1_170 = arith.constant 1 : index
    %105 = memref.load %arg1[%c1_169, %c1_170] : memref<6x3xf32, #tpu.memory_space<smem>>
    %c1_171 = arith.constant 1 : index
    %c2_172 = arith.constant 2 : index
    %106 = memref.load %arg1[%c1_171, %c2_172] : memref<6x3xf32, #tpu.memory_space<smem>>
    %107 = vector.broadcast %104 : f32 to vector<1x16x16x4xf32>
    %108 = arith.mulf %107, %64 : vector<1x16x16x4xf32>
    %109 = vector.broadcast %105 : f32 to vector<1x16x16x4xf32>
    %110 = arith.mulf %109, %82 : vector<1x16x16x4xf32>
    %111 = arith.addf %108, %110 : vector<1x16x16x4xf32>
    %112 = vector.broadcast %106 : f32 to vector<1x16x16x4xf32>
    %113 = arith.mulf %112, %92 : vector<1x16x16x4xf32>
    %114 = arith.addf %111, %113 : vector<1x16x16x4xf32>
    %c0_173 = arith.constant 0 : index
    %c1_174 = arith.constant 1 : index
    %c1_175 = arith.constant 1 : index
    %c0_176 = arith.constant 0 : index
    %115 = vector.load %arg20[%c0_173, %c1_174, %c1_175, %c0_176] : memref<1x18x18x4xf32, #tpu.memory_space<vmem>>, vector<1x16x16x4xf32>
    tpu.vector_store %arg20[%c0_173, %c1_174, %c1_175, %c0_176], %103 {strides = array<i32>} : memref<1x18x18x4xf32, #tpu.memory_space<vmem>>, vector<1x16x16x4xf32>,
    %c0_177 = arith.constant 0 : index
    %c1_178 = arith.constant 1 : index
    %c1_179 = arith.constant 1 : index
    %c0_180 = arith.constant 0 : index
    %116 = vector.load %arg21[%c0_177, %c1_178, %c1_179, %c0_180] : memref<1x18x18x4xf32, #tpu.memory_space<vmem>>, vector<1x16x16x4xf32>
    tpu.vector_store %arg21[%c0_177, %c1_178, %c1_179, %c0_180], %103 {strides = array<i32>} : memref<1x18x18x4xf32, #tpu.memory_space<vmem>>, vector<1x16x16x4xf32>,
    %c0_181 = arith.constant 0 : index
    %c0_182 = arith.constant 0 : index
    %c0_183 = arith.constant 0 : index
    %c0_184 = arith.constant 0 : index
    %117 = vector.load %arg20[%c0_181, %c0_182, %c0_183, %c0_184] : memref<1x18x18x4xf32, #tpu.memory_space<vmem>>, vector<1x18x16x4xf32>
    %c0_185 = arith.constant 0 : index
    %c0_186 = arith.constant 0 : index
    %c1_187 = arith.constant 1 : index
    %c0_188 = arith.constant 0 : index
    %118 = vector.load %arg20[%c0_185, %c0_186, %c1_187, %c0_188] : memref<1x18x18x4xf32, #tpu.memory_space<vmem>>, vector<1x18x16x4xf32>
    %119 = arith.addf %117, %118 : vector<1x18x16x4xf32>
    %c0_189 = arith.constant 0 : index
    %c0_190 = arith.constant 0 : index
    %c2_191 = arith.constant 2 : index
    %c0_192 = arith.constant 0 : index
    %120 = vector.load %arg20[%c0_189, %c0_190, %c2_191, %c0_192] : memref<1x18x18x4xf32, #tpu.memory_space<vmem>>, vector<1x18x16x4xf32>
    %121 = arith.addf %119, %120 : vector<1x18x16x4xf32>
    %122 = vector.extract_strided_slice %121 {offsets = [0, 0, 0, 0], sizes = [1, 16, 16, 4], strides = [1, 1, 1, 1]} : vector<1x18x16x4xf32> to vector<1x16x16x4xf32>
    %123 = vector.extract_strided_slice %121 {offsets = [0, 1, 0, 0], sizes = [1, 16, 16, 4], strides = [1, 1, 1, 1]} : vector<1x18x16x4xf32> to vector<1x16x16x4xf32>
    %124 = arith.addf %122, %123 : vector<1x16x16x4xf32>
    %125 = vector.extract_strided_slice %121 {offsets = [0, 2, 0, 0], sizes = [1, 16, 16, 4], strides = [1, 1, 1, 1]} : vector<1x18x16x4xf32> to vector<1x16x16x4xf32>
    %126 = arith.addf %124, %125 : vector<1x16x16x4xf32>
    %127 = vector.broadcast %60 : vector<1x16x16x1xf32> to vector<1x16x16x4xf32>
    %128 = arith.mulf %126, %127 : vector<1x16x16x4xf32>
    %c0_193 = arith.constant 0 : index
    %c0_194 = arith.constant 0 : index
    %c0_195 = arith.constant 0 : index
    %c0_196 = arith.constant 0 : index
    %129 = vector.load %arg21[%c0_193, %c0_194, %c0_195, %c0_196] : memref<1x18x18x4xf32, #tpu.memory_space<vmem>>, vector<1x18x16x4xf32>
    %c0_197 = arith.constant 0 : index
    %c0_198 = arith.constant 0 : index
    %c1_199 = arith.constant 1 : index
    %c0_200 = arith.constant 0 : index
    %130 = vector.load %arg21[%c0_197, %c0_198, %c1_199, %c0_200] : memref<1x18x18x4xf32, #tpu.memory_space<vmem>>, vector<1x18x16x4xf32>
    %131 = arith.maximumf %129, %130 : vector<1x18x16x4xf32>
    %c0_201 = arith.constant 0 : index
    %c0_202 = arith.constant 0 : index
    %c2_203 = arith.constant 2 : index
    %c0_204 = arith.constant 0 : index
    %132 = vector.load %arg21[%c0_201, %c0_202, %c2_203, %c0_204] : memref<1x18x18x4xf32, #tpu.memory_space<vmem>>, vector<1x18x16x4xf32>
    %133 = arith.maximumf %131, %132 : vector<1x18x16x4xf32>
    %134 = vector.extract_strided_slice %133 {offsets = [0, 0, 0, 0], sizes = [1, 16, 16, 4], strides = [1, 1, 1, 1]} : vector<1x18x16x4xf32> to vector<1x16x16x4xf32>
    %135 = vector.extract_strided_slice %133 {offsets = [0, 1, 0, 0], sizes = [1, 16, 16, 4], strides = [1, 1, 1, 1]} : vector<1x18x16x4xf32> to vector<1x16x16x4xf32>
    %136 = arith.maximumf %134, %135 : vector<1x16x16x4xf32>
    %137 = vector.extract_strided_slice %133 {offsets = [0, 2, 0, 0], sizes = [1, 16, 16, 4], strides = [1, 1, 1, 1]} : vector<1x18x16x4xf32> to vector<1x16x16x4xf32>
    %138 = arith.maximumf %136, %137 : vector<1x16x16x4xf32>
    %c2_205 = arith.constant 2 : index
    %c0_206 = arith.constant 0 : index
    %139 = memref.load %arg1[%c2_205, %c0_206] : memref<6x3xf32, #tpu.memory_space<smem>>
    %c2_207 = arith.constant 2 : index
    %c1_208 = arith.constant 1 : index
    %140 = memref.load %arg1[%c2_207, %c1_208] : memref<6x3xf32, #tpu.memory_space<smem>>
    %c2_209 = arith.constant 2 : index
    %c2_210 = arith.constant 2 : index
    %141 = memref.load %arg1[%c2_209, %c2_210] : memref<6x3xf32, #tpu.memory_space<smem>>
    %142 = vector.broadcast %139 : f32 to vector<1x16x16x4xf32>
    %143 = arith.mulf %142, %103 : vector<1x16x16x4xf32>
    %144 = vector.broadcast %140 : f32 to vector<1x16x16x4xf32>
    %145 = arith.mulf %144, %128 : vector<1x16x16x4xf32>
    %146 = arith.addf %143, %145 : vector<1x16x16x4xf32>
    %147 = vector.broadcast %141 : f32 to vector<1x16x16x4xf32>
    %148 = arith.mulf %147, %138 : vector<1x16x16x4xf32>
    %149 = arith.addf %146, %148 : vector<1x16x16x4xf32>
    %150 = arith.addf %114, %149 : vector<1x16x16x4xf32>
    %c3 = arith.constant 3 : index
    %c0_211 = arith.constant 0 : index
    %151 = memref.load %arg1[%c3, %c0_211] : memref<6x3xf32, #tpu.memory_space<smem>>
    %c3_212 = arith.constant 3 : index
    %c1_213 = arith.constant 1 : index
    %152 = memref.load %arg1[%c3_212, %c1_213] : memref<6x3xf32, #tpu.memory_space<smem>>
    %c3_214 = arith.constant 3 : index
    %c2_215 = arith.constant 2 : index
    %153 = memref.load %arg1[%c3_214, %c2_215] : memref<6x3xf32, #tpu.memory_space<smem>>
    %154 = vector.broadcast %151 : f32 to vector<1x16x16x4xf32>
    %155 = arith.mulf %154, %64 : vector<1x16x16x4xf32>
    %156 = vector.broadcast %152 : f32 to vector<1x16x16x4xf32>
    %157 = arith.mulf %156, %82 : vector<1x16x16x4xf32>
    %158 = arith.addf %155, %157 : vector<1x16x16x4xf32>
    %159 = vector.broadcast %153 : f32 to vector<1x16x16x4xf32>
    %160 = arith.mulf %159, %92 : vector<1x16x16x4xf32>
    %161 = arith.addf %158, %160 : vector<1x16x16x4xf32>
    %c4 = arith.constant 4 : index
    %c0_216 = arith.constant 0 : index
    %162 = memref.load %arg1[%c4, %c0_216] : memref<6x3xf32, #tpu.memory_space<smem>>
    %c4_217 = arith.constant 4 : index
    %c1_218 = arith.constant 1 : index
    %163 = memref.load %arg1[%c4_217, %c1_218] : memref<6x3xf32, #tpu.memory_space<smem>>
    %c4_219 = arith.constant 4 : index
    %c2_220 = arith.constant 2 : index
    %164 = memref.load %arg1[%c4_219, %c2_220] : memref<6x3xf32, #tpu.memory_space<smem>>
    %165 = vector.broadcast %162 : f32 to vector<1x16x16x4xf32>
    %166 = arith.mulf %165, %103 : vector<1x16x16x4xf32>
    %167 = vector.broadcast %163 : f32 to vector<1x16x16x4xf32>
    %168 = arith.mulf %167, %128 : vector<1x16x16x4xf32>
    %169 = arith.addf %166, %168 : vector<1x16x16x4xf32>
    %170 = vector.broadcast %164 : f32 to vector<1x16x16x4xf32>
    %171 = arith.mulf %170, %138 : vector<1x16x16x4xf32>
    %172 = arith.addf %169, %171 : vector<1x16x16x4xf32>
    %173 = arith.addf %161, %172 : vector<1x16x16x4xf32>
    %c0_221 = arith.constant 0 : index
    %c1_222 = arith.constant 1 : index
    %c1_223 = arith.constant 1 : index
    %c0_224 = arith.constant 0 : index
    %174 = vector.load %arg20[%c0_221, %c1_222, %c1_223, %c0_224] : memref<1x18x18x4xf32, #tpu.memory_space<vmem>>, vector<1x16x16x4xf32>
    tpu.vector_store %arg20[%c0_221, %c1_222, %c1_223, %c0_224], %150 {strides = array<i32>} : memref<1x18x18x4xf32, #tpu.memory_space<vmem>>, vector<1x16x16x4xf32>,
    %c0_225 = arith.constant 0 : index
    %c1_226 = arith.constant 1 : index
    %c1_227 = arith.constant 1 : index
    %c0_228 = arith.constant 0 : index
    %175 = vector.load %arg21[%c0_225, %c1_226, %c1_227, %c0_228] : memref<1x18x18x4xf32, #tpu.memory_space<vmem>>, vector<1x16x16x4xf32>
    tpu.vector_store %arg21[%c0_225, %c1_226, %c1_227, %c0_228], %150 {strides = array<i32>} : memref<1x18x18x4xf32, #tpu.memory_space<vmem>>, vector<1x16x16x4xf32>,
    %c0_229 = arith.constant 0 : index
    %c0_230 = arith.constant 0 : index
    %c0_231 = arith.constant 0 : index
    %c0_232 = arith.constant 0 : index
    %176 = vector.load %arg20[%c0_229, %c0_230, %c0_231, %c0_232] : memref<1x18x18x4xf32, #tpu.memory_space<vmem>>, vector<1x18x16x4xf32>
    %c0_233 = arith.constant 0 : index
    %c0_234 = arith.constant 0 : index
    %c1_235 = arith.constant 1 : index
    %c0_236 = arith.constant 0 : index
    %177 = vector.load %arg20[%c0_233, %c0_234, %c1_235, %c0_236] : memref<1x18x18x4xf32, #tpu.memory_space<vmem>>, vector<1x18x16x4xf32>
    %178 = arith.addf %176, %177 : vector<1x18x16x4xf32>
    %c0_237 = arith.constant 0 : index
    %c0_238 = arith.constant 0 : index
    %c2_239 = arith.constant 2 : index
    %c0_240 = arith.constant 0 : index
    %179 = vector.load %arg20[%c0_237, %c0_238, %c2_239, %c0_240] : memref<1x18x18x4xf32, #tpu.memory_space<vmem>>, vector<1x18x16x4xf32>
    %180 = arith.addf %178, %179 : vector<1x18x16x4xf32>
    %181 = vector.extract_strided_slice %180 {offsets = [0, 0, 0, 0], sizes = [1, 16, 16, 4], strides = [1, 1, 1, 1]} : vector<1x18x16x4xf32> to vector<1x16x16x4xf32>
    %182 = vector.extract_strided_slice %180 {offsets = [0, 1, 0, 0], sizes = [1, 16, 16, 4], strides = [1, 1, 1, 1]} : vector<1x18x16x4xf32> to vector<1x16x16x4xf32>
    %183 = arith.addf %181, %182 : vector<1x16x16x4xf32>
    %184 = vector.extract_strided_slice %180 {offsets = [0, 2, 0, 0], sizes = [1, 16, 16, 4], strides = [1, 1, 1, 1]} : vector<1x18x16x4xf32> to vector<1x16x16x4xf32>
    %185 = arith.addf %183, %184 : vector<1x16x16x4xf32>
    %186 = vector.broadcast %60 : vector<1x16x16x1xf32> to vector<1x16x16x4xf32>
    %187 = arith.mulf %185, %186 : vector<1x16x16x4xf32>
    %c0_241 = arith.constant 0 : index
    %c0_242 = arith.constant 0 : index
    %c0_243 = arith.constant 0 : index
    %c0_244 = arith.constant 0 : index
    %188 = vector.load %arg21[%c0_241, %c0_242, %c0_243, %c0_244] : memref<1x18x18x4xf32, #tpu.memory_space<vmem>>, vector<1x18x16x4xf32>
    %c0_245 = arith.constant 0 : index
    %c0_246 = arith.constant 0 : index
    %c1_247 = arith.constant 1 : index
    %c0_248 = arith.constant 0 : index
    %189 = vector.load %arg21[%c0_245, %c0_246, %c1_247, %c0_248] : memref<1x18x18x4xf32, #tpu.memory_space<vmem>>, vector<1x18x16x4xf32>
    %190 = arith.maximumf %188, %189 : vector<1x18x16x4xf32>
    %c0_249 = arith.constant 0 : index
    %c0_250 = arith.constant 0 : index
    %c2_251 = arith.constant 2 : index
    %c0_252 = arith.constant 0 : index
    %191 = vector.load %arg21[%c0_249, %c0_250, %c2_251, %c0_252] : memref<1x18x18x4xf32, #tpu.memory_space<vmem>>, vector<1x18x16x4xf32>
    %192 = arith.maximumf %190, %191 : vector<1x18x16x4xf32>
    %193 = vector.extract_strided_slice %192 {offsets = [0, 0, 0, 0], sizes = [1, 16, 16, 4], strides = [1, 1, 1, 1]} : vector<1x18x16x4xf32> to vector<1x16x16x4xf32>
    %194 = vector.extract_strided_slice %192 {offsets = [0, 1, 0, 0], sizes = [1, 16, 16, 4], strides = [1, 1, 1, 1]} : vector<1x18x16x4xf32> to vector<1x16x16x4xf32>
    %195 = arith.maximumf %193, %194 : vector<1x16x16x4xf32>
    %196 = vector.extract_strided_slice %192 {offsets = [0, 2, 0, 0], sizes = [1, 16, 16, 4], strides = [1, 1, 1, 1]} : vector<1x18x16x4xf32> to vector<1x16x16x4xf32>
    %197 = arith.maximumf %195, %196 : vector<1x16x16x4xf32>
    %c5 = arith.constant 5 : index
    %c0_253 = arith.constant 0 : index
    %198 = memref.load %arg1[%c5, %c0_253] : memref<6x3xf32, #tpu.memory_space<smem>>
    %c5_254 = arith.constant 5 : index
    %c1_255 = arith.constant 1 : index
    %199 = memref.load %arg1[%c5_254, %c1_255] : memref<6x3xf32, #tpu.memory_space<smem>>
    %c5_256 = arith.constant 5 : index
    %c2_257 = arith.constant 2 : index
    %200 = memref.load %arg1[%c5_256, %c2_257] : memref<6x3xf32, #tpu.memory_space<smem>>
    %201 = vector.broadcast %198 : f32 to vector<1x16x16x4xf32>
    %202 = arith.mulf %201, %150 : vector<1x16x16x4xf32>
    %203 = vector.broadcast %199 : f32 to vector<1x16x16x4xf32>
    %204 = arith.mulf %203, %187 : vector<1x16x16x4xf32>
    %205 = arith.addf %202, %204 : vector<1x16x16x4xf32>
    %206 = vector.broadcast %200 : f32 to vector<1x16x16x4xf32>
    %207 = arith.mulf %206, %197 : vector<1x16x16x4xf32>
    %208 = arith.addf %205, %207 : vector<1x16x16x4xf32>
    %209 = arith.addf %173, %208 : vector<1x16x16x4xf32>
    %210 = vector.shape_cast %103 : vector<1x16x16x4xf32> to vector<256x4xf32>
    %211 = vector.shape_cast %150 : vector<1x16x16x4xf32> to vector<256x4xf32>
    %212 = vector.shape_cast %209 : vector<1x16x16x4xf32> to vector<256x4xf32>
    %213 = tpu.concatenate %210, %211, %212 in 1 : vector<256x4xf32>, vector<256x4xf32>, vector<256x4xf32> -> vector<256x12xf32>
    %c0_258 = arith.constant 0 : index
    %c0_259 = arith.constant 0 : index
    %214 = vector.load %arg13[%c0_258, %c0_259] : memref<12x16xbf16, #tpu.memory_space<vmem>>, vector<12x16xbf16>
    %215 = arith.truncf %213 : vector<256x12xf32> to vector<256x12xbf16>
    %cst_260 = arith.constant dense<0.000000e+00> : vector<256x16xf32>
    %216 = tpu.matmul %215, %214, %cst_260 {dimension_numbers = #tpu.dot_dimension_numbers<[1], [0], [0], [1], [0, 0, 1, 1], [], []>} : vector<256x12xbf16>, vector<12x16xbf16>, vector<256x16xf32> -> vector<256x16xf32>
    %217 = arith.addf %216, %59 : vector<256x16xf32>
    %cst_261 = arith.constant dense<0.000000e+00> : vector<16xf32>
    %218 = vector.multi_reduction <add>, %217, %cst_261 [0] : vector<256x16xf32> to vector<16xf32>
    %219 = vector.shape_cast %218 : vector<16xf32> to vector<1x16xf32>
    %cst_262 = arith.constant 2.560000e+02 : f32
    %220 = vector.broadcast %cst_262 : f32 to vector<1x16xf32>
    %221 = arith.divf %219, %220 : vector<1x16xf32>
    %c0_263 = arith.constant 0 : index
    %c0_264 = arith.constant 0 : index
    %222 = vector.load %arg14[%c0_263, %c0_264] : memref<16x4xbf16, #tpu.memory_space<vmem>>, vector<16x4xbf16>
    %223 = arith.truncf %221 : vector<1x16xf32> to vector<1x16xbf16>
    %cst_265 = arith.constant dense<0.000000e+00> : vector<1x4xf32>
    %224 = tpu.matmul %223, %222, %cst_265 {dimension_numbers = #tpu.dot_dimension_numbers<[1], [0], [0], [1], [0, 0, 1, 1], [], []>} : vector<1x16xbf16>, vector<16x4xbf16>, vector<1x4xf32> -> vector<1x4xf32>
    %cst_266 = arith.constant 0.000000e+00 : f32
    %225 = vector.broadcast %cst_266 : f32 to vector<1x4xf32>
    %226 = arith.maximumf %224, %225 : vector<1x4xf32>
    %c0_267 = arith.constant 0 : index
    %c0_268 = arith.constant 0 : index
    %227 = vector.load %arg15[%c0_267, %c0_268] : memref<4x16xbf16, #tpu.memory_space<vmem>>, vector<4x16xbf16>
    %228 = arith.truncf %226 : vector<1x4xf32> to vector<1x4xbf16>
    %cst_269 = arith.constant dense<0.000000e+00> : vector<1x16xf32>
    %229 = tpu.matmul %228, %227, %cst_269 {dimension_numbers = #tpu.dot_dimension_numbers<[1], [0], [0], [1], [0, 0, 1, 1], [], []>} : vector<1x4xbf16>, vector<4x16xbf16>, vector<1x16xf32> -> vector<1x16xf32>
    %230 = arith.negf %229 : vector<1x16xf32>
    %231 = math.exp %230 : vector<1x16xf32>
    %cst_270 = arith.constant 1.000000e+00 : f32
    %232 = vector.broadcast %cst_270 : f32 to vector<1x16xf32>
    %233 = arith.addf %232, %231 : vector<1x16xf32>
    %234 = arith.divf %232, %233 : vector<1x16xf32>
    %235 = vector.broadcast %234 : vector<1x16xf32> to vector<256x16xf32>
    %236 = arith.mulf %217, %235 : vector<256x16xf32>
    %237 = arith.addf %236, %10 : vector<256x16xf32>
    %cst_271 = arith.constant 0.000000e+00 : f32
    %238 = vector.broadcast %cst_271 : f32 to vector<256x16xf32>
    %239 = arith.maximumf %237, %238 : vector<256x16xf32>
    %c0_272 = arith.constant 0 : index
    %c0_273 = arith.constant 0 : index
    %240 = vector.load %arg17[%c0_272, %c0_273] : memref<256x16xf32, #tpu.memory_space<vmem>>, vector<256x16xf32>
    tpu.vector_store %arg17[%c0_272, %c0_273], %239 {strides = array<i32>} : memref<256x16xf32, #tpu.memory_space<vmem>>, vector<256x16xf32>,
    return
  }
  func.func @transform_0(%arg0: i32) -> (i32, i32) {
    %c0_i32 = arith.constant 0 : i32
    %c0_i32_0 = arith.constant 0 : i32
    %c0_i32_1 = arith.constant 0 : i32
    return %c0_i32, %c0_i32_0 : i32, i32
  }
  func.func @transform_1(%arg0: i32) -> (i32, i32, i32, i32) {
    %c0_i32 = arith.constant 0 : i32
    %c0_i32_0 = arith.constant 0 : i32
    %c0_i32_1 = arith.constant 0 : i32
    %c0_i32_2 = arith.constant 0 : i32
    return %arg0, %c0_i32, %c0_i32_0, %c0_i32_1 : i32, i32, i32, i32
  }
  func.func @transform_2(%arg0: i32) -> (i32, i32) {
    %c0_i32 = arith.constant 0 : i32
    %c0_i32_0 = arith.constant 0 : i32
    %c0_i32_1 = arith.constant 0 : i32
    return %c0_i32, %c0_i32_0 : i32, i32
  }
  func.func @transform_3(%arg0: i32) -> (i32, i32) {
    %c0_i32 = arith.constant 0 : i32
    %c0_i32_0 = arith.constant 0 : i32
    %c0_i32_1 = arith.constant 0 : i32
    return %c0_i32, %c0_i32_0 : i32, i32
  }
  func.func @transform_4(%arg0: i32) -> (i32, i32) {
    %c0_i32 = arith.constant 0 : i32
    %c0_i32_0 = arith.constant 0 : i32
    %c0_i32_1 = arith.constant 0 : i32
    return %c0_i32, %c0_i32_0 : i32, i32
  }
  func.func @transform_5(%arg0: i32) -> (i32, i32) {
    %c0_i32 = arith.constant 0 : i32
    %c0_i32_0 = arith.constant 0 : i32
    %c0_i32_1 = arith.constant 0 : i32
    return %c0_i32, %c0_i32_0 : i32, i32
  }
  func.func @transform_6(%arg0: i32) -> (i32, i32) {
    %c0_i32 = arith.constant 0 : i32
    %c0_i32_0 = arith.constant 0 : i32
    %c0_i32_1 = arith.constant 0 : i32
    return %c0_i32, %c0_i32_0 : i32, i32
  }
  func.func @transform_7(%arg0: i32) -> (i32, i32) {
    %c0_i32 = arith.constant 0 : i32
    %c0_i32_0 = arith.constant 0 : i32
    %c0_i32_1 = arith.constant 0 : i32
    return %c0_i32, %c0_i32_0 : i32, i32
  }
  func.func @transform_8(%arg0: i32) -> (i32, i32) {
    %c0_i32 = arith.constant 0 : i32
    %c0_i32_0 = arith.constant 0 : i32
    %c0_i32_1 = arith.constant 0 : i32
    return %c0_i32, %c0_i32_0 : i32, i32
  }
  func.func @transform_9(%arg0: i32) -> (i32, i32) {
    %c0_i32 = arith.constant 0 : i32
    %c0_i32_0 = arith.constant 0 : i32
    %c0_i32_1 = arith.constant 0 : i32
    return %c0_i32, %c0_i32_0 : i32, i32
  }
  func.func @transform_10(%arg0: i32) -> (i32, i32) {
    %c0_i32 = arith.constant 0 : i32
    %c0_i32_0 = arith.constant 0 : i32
    %c0_i32_1 = arith.constant 0 : i32
    return %c0_i32, %c0_i32_0 : i32, i32
  }
  func.func @transform_11(%arg0: i32) -> (i32, i32) {
    %c0_i32 = arith.constant 0 : i32
    %c0_i32_0 = arith.constant 0 : i32
    %c0_i32_1 = arith.constant 0 : i32
    return %c0_i32, %c0_i32_0 : i32, i32
  }
  func.func @transform_12(%arg0: i32) -> (i32, i32) {
    %c0_i32 = arith.constant 0 : i32
    %c0_i32_0 = arith.constant 0 : i32
    %c0_i32_1 = arith.constant 0 : i32
    return %c0_i32, %c0_i32_0 : i32, i32
  }
  func.func @transform_13(%arg0: i32) -> (i32, i32) {
    %c0_i32 = arith.constant 0 : i32
    %c0_i32_0 = arith.constant 0 : i32
    %c0_i32_1 = arith.constant 0 : i32
    return %c0_i32, %c0_i32_0 : i32, i32
  }
  func.func @transform_14(%arg0: i32) -> (i32, i32) {
    %c0_i32 = arith.constant 0 : i32
    %c0_i32_0 = arith.constant 0 : i32
    %c0_i32_1 = arith.constant 0 : i32
    return %c0_i32, %c0_i32_0 : i32, i32
  }
  func.func @transform_15(%arg0: i32) -> (i32, i32, i32, i32) {
    %c0_i32 = arith.constant 0 : i32
    %c0_i32_0 = arith.constant 0 : i32
    %c0_i32_1 = arith.constant 0 : i32
    %c0_i32_2 = arith.constant 0 : i32
    %c0_i32_3 = arith.constant 0 : i32
    return %c0_i32, %c0_i32_0, %c0_i32_1, %c0_i32_2 : i32, i32, i32, i32
  }
  func.func @transform_16(%arg0: i32) -> (i32, i32) {
    %c0_i32 = arith.constant 0 : i32
    %c0_i32_0 = arith.constant 0 : i32
    return %arg0, %c0_i32 : i32, i32
  }
}

</mosaic_0001>

<llo_original>
// kernel: cifar_rf_basic_block.1
$region0: #{cifar_rf_basic_block.1}
  #allocation0 [shape = 'u32[]', space=smem, size = 0x4, offset = 0x4, fixed_abs, tag = 'smem constant byte address 0x4 - core index']
  #allocation1 [shape = 'u32[144,128]{1,0:T(1,128)}', space=vmem, size = 0x12000, scoped, tag = 'internal scratch']
  #allocation2 [shape = 'f32[1,18,18,8]{3,2,1,0:T(8,128)}', space=vmem, size = 0x36000, scoped, tag = 'scratch operand']
  #allocation3 [shape = 'f32[1,18,18,16]{3,2,1,0:T(8,128)}', space=vmem, size = 0x36000, scoped, tag = 'scratch operand']
  #allocation4 [shape = 'f32[1,18,18,4]{3,2,1,0:T(8,128)}', space=vmem, size = 0x36000, scoped, tag = 'scratch operand']
  #allocation5 [shape = 'f32[1,18,18,4]{3,2,1,0:T(8,128)}', space=vmem, size = 0x36000, scoped, tag = 'scratch operand']
  %s0 = inlined_call_operand.vmem [shape: f32[6,3], index: 0, kind: input, shape index: {}]
  %s1 = inlined_call_operand.vmem [shape: f32[2,16,16,8], index: 1, kind: input, shape index: {}]
  %s2 = inlined_call_operand.vmem [shape: bf16[72,16], index: 2, kind: input, shape index: {}]
  %s3 = inlined_call_operand.vmem [shape: f32[1,16], index: 3, kind: input, shape index: {}]
  %s4 = inlined_call_operand.vmem [shape: f32[1,16], index: 4, kind: input, shape index: {}]
  %s5 = inlined_call_operand.vmem [shape: bf16[144,16], index: 5, kind: input, shape index: {}]
  %s6 = inlined_call_operand.vmem [shape: f32[1,16], index: 6, kind: input, shape index: {}]
  %s7 = inlined_call_operand.vmem [shape: f32[1,16], index: 7, kind: input, shape index: {}]
  %s8 = inlined_call_operand.vmem [shape: bf16[8,16], index: 8, kind: input, shape index: {}]
  %s9 = inlined_call_operand.vmem [shape: f32[1,16], index: 9, kind: input, shape index: {}]
  %s10 = inlined_call_operand.vmem [shape: f32[1,16], index: 10, kind: input, shape index: {}]
  %s11 = inlined_call_operand.vmem [shape: bf16[16,4], index: 11, kind: input, shape index: {}]
  %s12 = inlined_call_operand.vmem [shape: bf16[12,16], index: 12, kind: input, shape index: {}]
  %s13 = inlined_call_operand.vmem [shape: bf16[16,4], index: 13, kind: input, shape index: {}]
  %s14 = inlined_call_operand.vmem [shape: bf16[4,16], index: 14, kind: input, shape index: {}]
  %s15 = inlined_call_operand.vmem [shape: f32[1,16,16,1], index: 15, kind: input, shape index: {}]
  %s16 = inlined_call_operand.vmem [shape: f32[512,16], index: 16, kind: output, shape index: {}]
  %s17 = sld [smem:[#allocation0]]
  $region101: #{cifar_rf_basic_block.1} parent=0
    _
  %s19 = ssub.s32 1, %s17
  %s20 = scalar_select 0, %s19, %s17
  $region1: #{cifar_rf_basic_block.1} parent=0
    #allocation6 [shape = 'u8[4096]{0}', space=smem, size = 0x1000, scoped, tag = 'input window, operand 0, single buffered']
    #allocation7 [shape = 's32[2]{0}', space=sflag, size = 0x8, scoped, tag = 'scoped memory for cifar_rf_basic_block.1']
    %21 = vsyncpa [#allocation7], 0
    loop: start=0, step=1, limit=4
    $region2: #{cifar_rf_basic_block.1} parent=1 // loop_pre_header
      _
    $region3: #{cifar_rf_basic_block.1} parent=1 // loop_header
      %s23 = sphi 0, %s27
      %p24 = scmp.ge.s32.totalorder %s23, 4
      %s31 = sphi 0, %s31
      %s33 = sphi 0, %s31
      %s34 = sphi 0, %s33
      %s48 = sphi 0, %s34
      %s54 = sphi 0, %s56
      %s57 = sphi 0, %s54
      %s58 = sphi 0, %s57
      %s74 = sphi 0, %s58
      %s78 = sphi 0, %s78
      %s80 = sphi 0, %s78
      %s81 = sphi 0, %s80
      %s95 = sphi 0, %s81
      %s99 = sphi 0, %s99
      %s101 = sphi 0, %s99
      %s102 = sphi 0, %s101
      %s116 = sphi 0, %s102
      %s120 = sphi 0, %s120
      %s122 = sphi 0, %s120
      %s123 = sphi 0, %s122
      %s137 = sphi 0, %s123
      %s141 = sphi 0, %s141
      %s143 = sphi 0, %s141
      %s144 = sphi 0, %s143
      %s158 = sphi 0, %s144
      %s162 = sphi 0, %s162
      %s164 = sphi 0, %s162
      %s165 = sphi 0, %s164
      %s179 = sphi 0, %s165
      %s183 = sphi 0, %s183
      %s185 = sphi 0, %s183
      %s186 = sphi 0, %s185
      %s200 = sphi 0, %s186
      %s204 = sphi 0, %s204
      %s206 = sphi 0, %s204
      %s207 = sphi 0, %s206
      %s221 = sphi 0, %s207
      %s225 = sphi 0, %s225
      %s227 = sphi 0, %s225
      %s228 = sphi 0, %s227
      %s242 = sphi 0, %s228
      %s246 = sphi 0, %s246
      %s248 = sphi 0, %s246
      %s249 = sphi 0, %s248
      %s263 = sphi 0, %s249
      %s267 = sphi 0, %s267
      %s269 = sphi 0, %s267
      %s270 = sphi 0, %s269
      %s284 = sphi 0, %s270
      %s288 = sphi 0, %s288
      %s290 = sphi 0, %s288
      %s291 = sphi 0, %s290
      %s305 = sphi 0, %s291
      %s309 = sphi 0, %s309
      %s311 = sphi 0, %s309
      %s312 = sphi 0, %s311
      %s326 = sphi 0, %s312
      %s330 = sphi 0, %s330
      %s332 = sphi 0, %s330
      %s333 = sphi 0, %s332
      %s347 = sphi 0, %s333
      %s351 = sphi 0, %s351
      %s353 = sphi 0, %s351
      %s354 = sphi 0, %s353
      %s368 = sphi 0, %s354
      %s374 = sphi 0, %s376
      %s377 = sphi 0, %s374
      %s378 = sphi 0, %s377
      %s394 = sphi 0, %s378
    $region4: #{cifar_rf_basic_block.1} parent=1 // loop_header_branch
      %26 = sbr.rel (%p24) target = $region8
    $region5: #{cifar_rf_basic_block.1} parent=1 // loop_body
      %s28 = ssub.s32 %s23, 1
      %s29 = ssub.s32 %s23, 2
      %s30 = sadd.s32 %s23, 1
      %s32 = sadd.s32 %s31, 1
      %p35 = scmp.eq.s32.totalorder %s23, 1
      %p36 = scmp.ne.s32.totalorder %s31, %s33
      %p37 = scmp.eq.s32.totalorder %s23, 0
      %p38 = por %p36, %p37
      %p39 = scmp.ne.s32.totalorder %s31, %s33
      %p40 = scmp.eq.s32.totalorder %s28, 1
      %p41 = por %p39, %p40
      %p42 = scmp.ne.s32.totalorder %s33, %s34
      %p43 = scmp.eq.s32.totalorder %s28, 0
      %p44 = por %p42, %p43
      %p45 = scmp.ne.s32.totalorder %s33, %s34
      %p46 = scmp.eq.s32.totalorder %s29, 1
      %p47 = por %p45, %p46
      %p49 = scmp.ne.s32.totalorder %s34, %s48
      %p50 = scmp.eq.s32.totalorder %s29, 0
      %p51 = por %p49, %p50
      %s52 = ssub.s32 %s23, %s30
      %p53 = scmp.eq.s32.totalorder %s52, 0
      %s55 = sadd.s32 %s54, 1
      %s56 = scalar_select %p53, %s54, %s55
      %p59 = pneg %p53
      %p60 = scmp.eq.s32.totalorder %s23, 1
      %p61 = por %p59, %p60
      %p62 = scmp.ne.s32.totalorder %s54, %s57
      %p63 = scmp.eq.s32.totalorder %s23, 0
      %p64 = por %p62, %p63
      %p65 = scmp.ne.s32.totalorder %s54, %s57
      %p66 = scmp.eq.s32.totalorder %s28, 1
      %p67 = por %p65, %p66
      %p68 = scmp.ne.s32.totalorder %s57, %s58
      %p69 = scmp.eq.s32.totalorder %s28, 0
      %p70 = por %p68, %p69
      %p71 = scmp.ne.s32.totalorder %s57, %s58
      %p72 = scmp.eq.s32.totalorder %s29, 1
      %p73 = por %p71, %p72
      %p75 = scmp.ne.s32.totalorder %s58, %s74
      %p76 = scmp.eq.s32.totalorder %s29, 0
      %p77 = por %p75, %p76
      %s79 = sadd.s32 %s78, 1
      %p82 = scmp.eq.s32.totalorder %s23, 1
      %p83 = scmp.ne.s32.totalorder %s78, %s80
      %p84 = scmp.eq.s32.totalorder %s23, 0
      %p85 = por %p83, %p84
      %p86 = scmp.ne.s32.totalorder %s78, %s80
      %p87 = scmp.eq.s32.totalorder %s28, 1
      %p88 = por %p86, %p87
      %p89 = scmp.ne.s32.totalorder %s80, %s81
      %p90 = scmp.eq.s32.totalorder %s28, 0
      %p91 = por %p89, %p90
      %p92 = scmp.ne.s32.totalorder %s80, %s81
      %p93 = scmp.eq.s32.totalorder %s29, 1
      %p94 = por %p92, %p93
      %p96 = scmp.ne.s32.totalorder %s81, %s95
      %p97 = scmp.eq.s32.totalorder %s29, 0
      %p98 = por %p96, %p97
      %s100 = sadd.s32 %s99, 1
      %p103 = scmp.eq.s32.totalorder %s23, 1
      %p104 = scmp.ne.s32.totalorder %s99, %s101
      %p105 = scmp.eq.s32.totalorder %s23, 0
      %p106 = por %p104, %p105
      %p107 = scmp.ne.s32.totalorder %s99, %s101
      %p108 = scmp.eq.s32.totalorder %s28, 1
      %p109 = por %p107, %p108
      %p110 = scmp.ne.s32.totalorder %s101, %s102
      %p111 = scmp.eq.s32.totalorder %s28, 0
      %p112 = por %p110, %p111
      %p113 = scmp.ne.s32.totalorder %s101, %s102
      %p114 = scmp.eq.s32.totalorder %s29, 1
      %p115 = por %p113, %p114
      %p117 = scmp.ne.s32.totalorder %s102, %s116
      %p118 = scmp.eq.s32.totalorder %s29, 0
      %p119 = por %p117, %p118
      %s121 = sadd.s32 %s120, 1
      %p124 = scmp.eq.s32.totalorder %s23, 1
      %p125 = scmp.ne.s32.totalorder %s120, %s122
      %p126 = scmp.eq.s32.totalorder %s23, 0
      %p127 = por %p125, %p126
      %p128 = scmp.ne.s32.totalorder %s120, %s122
      %p129 = scmp.eq.s32.totalorder %s28, 1
      %p130 = por %p128, %p129
      %p131 = scmp.ne.s32.totalorder %s122, %s123
      %p132 = scmp.eq.s32.totalorder %s28, 0
      %p133 = por %p131, %p132
      %p134 = scmp.ne.s32.totalorder %s122, %s123
      %p135 = scmp.eq.s32.totalorder %s29, 1
      %p136 = por %p134, %p135
      %p138 = scmp.ne.s32.totalorder %s123, %s137
      %p139 = scmp.eq.s32.totalorder %s29, 0
      %p140 = por %p138, %p139
      %s142 = sadd.s32 %s141, 1
      %p145 = scmp.eq.s32.totalorder %s23, 1
      %p146 = scmp.ne.s32.totalorder %s141, %s143
      %p147 = scmp.eq.s32.totalorder %s23, 0
      %p148 = por %p146, %p147
      %p149 = scmp.ne.s32.totalorder %s141, %s143
      %p150 = scmp.eq.s32.totalorder %s28, 1
      %p151 = por %p149, %p150
      %p152 = scmp.ne.s32.totalorder %s143, %s144
      %p153 = scmp.eq.s32.totalorder %s28, 0
      %p154 = por %p152, %p153
      %p155 = scmp.ne.s32.totalorder %s143, %s144
      %p156 = scmp.eq.s32.totalorder %s29, 1
      %p157 = por %p155, %p156
      %p159 = scmp.ne.s32.totalorder %s144, %s158
      %p160 = scmp.eq.s32.totalorder %s29, 0
      %p161 = por %p159, %p160
      %s163 = sadd.s32 %s162, 1
      %p166 = scmp.eq.s32.totalorder %s23, 1
      %p167 = scmp.ne.s32.totalorder %s162, %s164
      %p168 = scmp.eq.s32.totalorder %s23, 0
      %p169 = por %p167, %p168
      %p170 = scmp.ne.s32.totalorder %s162, %s164
      %p171 = scmp.eq.s32.totalorder %s28, 1
      %p172 = por %p170, %p171
      %p173 = scmp.ne.s32.totalorder %s164, %s165
      %p174 = scmp.eq.s32.totalorder %s28, 0
      %p175 = por %p173, %p174
      %p176 = scmp.ne.s32.totalorder %s164, %s165
      %p177 = scmp.eq.s32.totalorder %s29, 1
      %p178 = por %p176, %p177
      %p180 = scmp.ne.s32.totalorder %s165, %s179
      %p181 = scmp.eq.s32.totalorder %s29, 0
      %p182 = por %p180, %p181
      %s184 = sadd.s32 %s183, 1
      %p187 = scmp.eq.s32.totalorder %s23, 1
      %p188 = scmp.ne.s32.totalorder %s183, %s185
      %p189 = scmp.eq.s32.totalorder %s23, 0
      %p190 = por %p188, %p189
      %p191 = scmp.ne.s32.totalorder %s183, %s185
      %p192 = scmp.eq.s32.totalorder %s28, 1
      %p193 = por %p191, %p192
      %p194 = scmp.ne.s32.totalorder %s185, %s186
      %p195 = scmp.eq.s32.totalorder %s28, 0
      %p196 = por %p194, %p195
      %p197 = scmp.ne.s32.totalorder %s185, %s186
      %p198 = scmp.eq.s32.totalorder %s29, 1
      %p199 = por %p197, %p198
      %p201 = scmp.ne.s32.totalorder %s186, %s200
      %p202 = scmp.eq.s32.totalorder %s29, 0
      %p203 = por %p201, %p202
      %s205 = sadd.s32 %s204, 1
      %p208 = scmp.eq.s32.totalorder %s23, 1
      %p209 = scmp.ne.s32.totalorder %s204, %s206
      %p210 = scmp.eq.s32.totalorder %s23, 0
      %p211 = por %p209, %p210
      %p212 = scmp.ne.s32.totalorder %s204, %s206
      %p213 = scmp.eq.s32.totalorder %s28, 1
      %p214 = por %p212, %p213
      %p215 = scmp.ne.s32.totalorder %s206, %s207
      %p216 = scmp.eq.s32.totalorder %s28, 0
      %p217 = por %p215, %p216
      %p218 = scmp.ne.s32.totalorder %s206, %s207
      %p219 = scmp.eq.s32.totalorder %s29, 1
      %p220 = por %p218, %p219
      %p222 = scmp.ne.s32.totalorder %s207, %s221
      %p223 = scmp.eq.s32.totalorder %s29, 0
      %p224 = por %p222, %p223
      %s226 = sadd.s32 %s225, 1
      %p229 = scmp.eq.s32.totalorder %s23, 1
      %p230 = scmp.ne.s32.totalorder %s225, %s227
      %p231 = scmp.eq.s32.totalorder %s23, 0
      %p232 = por %p230, %p231
      %p233 = scmp.ne.s32.totalorder %s225, %s227
      %p234 = scmp.eq.s32.totalorder %s28, 1
      %p235 = por %p233, %p234
      %p236 = scmp.ne.s32.totalorder %s227, %s228
      %p237 = scmp.eq.s32.totalorder %s28, 0
      %p238 = por %p236, %p237
      %p239 = scmp.ne.s32.totalorder %s227, %s228
      %p240 = scmp.eq.s32.totalorder %s29, 1
      %p241 = por %p239, %p240
      %p243 = scmp.ne.s32.totalorder %s228, %s242
      %p244 = scmp.eq.s32.totalorder %s29, 0
      %p245 = por %p243, %p244
      %s247 = sadd.s32 %s246, 1
      %p250 = scmp.eq.s32.totalorder %s23, 1
      %p251 = scmp.ne.s32.totalorder %s246, %s248
      %p252 = scmp.eq.s32.totalorder %s23, 0
      %p253 = por %p251, %p252
      %p254 = scmp.ne.s32.totalorder %s246, %s248
      %p255 = scmp.eq.s32.totalorder %s28, 1
      %p256 = por %p254, %p255
      %p257 = scmp.ne.s32.totalorder %s248, %s249
      %p258 = scmp.eq.s32.totalorder %s28, 0
      %p259 = por %p257, %p258
      %p260 = scmp.ne.s32.totalorder %s248, %s249
      %p261 = scmp.eq.s32.totalorder %s29, 1
      %p262 = por %p260, %p261
      %p264 = scmp.ne.s32.totalorder %s249, %s263
      %p265 = scmp.eq.s32.totalorder %s29, 0
      %p266 = por %p264, %p265
      %s268 = sadd.s32 %s267, 1
      %p271 = scmp.eq.s32.totalorder %s23, 1
      %p272 = scmp.ne.s32.totalorder %s267, %s269
      %p273 = scmp.eq.s32.totalorder %s23, 0
      %p274 = por %p272, %p273
      %p275 = scmp.ne.s32.totalorder %s267, %s269
      %p276 = scmp.eq.s32.totalorder %s28, 1
      %p277 = por %p275, %p276
      %p278 = scmp.ne.s32.totalorder %s269, %s270
      %p279 = scmp.eq.s32.totalorder %s28, 0
      %p280 = por %p278, %p279
      %p281 = scmp.ne.s32.totalorder %s269, %s270
      %p282 = scmp.eq.s32.totalorder %s29, 1
      %p283 = por %p281, %p282
      %p285 = scmp.ne.s32.totalorder %s270, %s284
      %p286 = scmp.eq.s32.totalorder %s29, 0
      %p287 = por %p285, %p286
      %s289 = sadd.s32 %s288, 1
      %p292 = scmp.eq.s32.totalorder %s23, 1
      %p293 = scmp.ne.s32.totalorder %s288, %s290
      %p294 = scmp.eq.s32.totalorder %s23, 0
      %p295 = por %p293, %p294
      %p296 = scmp.ne.s32.totalorder %s288, %s290
      %p297 = scmp.eq.s32.totalorder %s28, 1
      %p298 = por %p296, %p297
      %p299 = scmp.ne.s32.totalorder %s290, %s291
      %p300 = scmp.eq.s32.totalorder %s28, 0
      %p301 = por %p299, %p300
      %p302 = scmp.ne.s32.totalorder %s290, %s291
      %p303 = scmp.eq.s32.totalorder %s29, 1
      %p304 = por %p302, %p303
      %p306 = scmp.ne.s32.totalorder %s291, %s305
      %p307 = scmp.eq.s32.totalorder %s29, 0
      %p308 = por %p306, %p307
      %s310 = sadd.s32 %s309, 1
      %p313 = scmp.eq.s32.totalorder %s23, 1
      %p314 = scmp.ne.s32.totalorder %s309, %s311
      %p315 = scmp.eq.s32.totalorder %s23, 0
      %p316 = por %p314, %p315
      %p317 = scmp.ne.s32.totalorder %s309, %s311
      %p318 = scmp.eq.s32.totalorder %s28, 1
      %p319 = por %p317, %p318
      %p320 = scmp.ne.s32.totalorder %s311, %s312
      %p321 = scmp.eq.s32.totalorder %s28, 0
      %p322 = por %p320, %p321
      %p323 = scmp.ne.s32.totalorder %s311, %s312
      %p324 = scmp.eq.s32.totalorder %s29, 1
      %p325 = por %p323, %p324
      %p327 = scmp.ne.s32.totalorder %s312, %s326
      %p328 = scmp.eq.s32.totalorder %s29, 0
      %p329 = por %p327, %p328
      %s331 = sadd.s32 %s330, 1
      %p334 = scmp.eq.s32.totalorder %s23, 1
      %p335 = scmp.ne.s32.totalorder %s330, %s332
      %p336 = scmp.eq.s32.totalorder %s23, 0
      %p337 = por %p335, %p336
      %p338 = scmp.ne.s32.totalorder %s330, %s332
      %p339 = scmp.eq.s32.totalorder %s28, 1
      %p340 = por %p338, %p339
      %p341 = scmp.ne.s32.totalorder %s332, %s333
      %p342 = scmp.eq.s32.totalorder %s28, 0
      %p343 = por %p341, %p342
      %p344 = scmp.ne.s32.totalorder %s332, %s333
      %p345 = scmp.eq.s32.totalorder %s29, 1
      %p346 = por %p344, %p345
      %p348 = scmp.ne.s32.totalorder %s333, %s347
      %p349 = scmp.eq.s32.totalorder %s29, 0
      %p350 = por %p348, %p349
      %s352 = sadd.s32 %s351, 1
      %p355 = scmp.eq.s32.totalorder %s23, 1
      %p356 = scmp.ne.s32.totalorder %s351, %s353
      %p357 = scmp.eq.s32.totalorder %s23, 0
      %p358 = por %p356, %p357
      %p359 = scmp.ne.s32.totalorder %s351, %s353
      %p360 = scmp.eq.s32.totalorder %s28, 1
      %p361 = por %p359, %p360
      %p362 = scmp.ne.s32.totalorder %s353, %s354
      %p363 = scmp.eq.s32.totalorder %s28, 0
      %p364 = por %p362, %p363
      %p365 = scmp.ne.s32.totalorder %s353, %s354
      %p366 = scmp.eq.s32.totalorder %s29, 1
      %p367 = por %p365, %p366
      %p369 = scmp.ne.s32.totalorder %s354, %s368
      %p370 = scmp.eq.s32.totalorder %s29, 0
      %p371 = por %p369, %p370
      %s372 = ssub.s32 %s23, %s30
      %p373 = scmp.eq.s32.totalorder %s372, 0
      %s375 = sadd.s32 %s374, 1
      %s376 = scalar_select %p373, %s374, %s375
      %p379 = pneg %p373
      %p380 = scmp.eq.s32.totalorder %s23, 1
      %p381 = por %p379, %p380
      %p382 = scmp.ne.s32.totalorder %s374, %s377
      %p383 = scmp.eq.s32.totalorder %s23, 0
      %p384 = por %p382, %p383
      %p385 = scmp.ne.s32.totalorder %s374, %s377
      %p386 = scmp.eq.s32.totalorder %s28, 1
      %p387 = por %p385, %p386
      %p388 = scmp.ne.s32.totalorder %s377, %s378
      %p389 = scmp.eq.s32.totalorder %s28, 0
      %p390 = por %p388, %p389
      %p391 = scmp.ne.s32.totalorder %s377, %s378
      %p392 = scmp.eq.s32.totalorder %s29, 1
      %p393 = por %p391, %p392
      %p395 = scmp.ne.s32.totalorder %s378, %s394
      %p396 = scmp.eq.s32.totalorder %s29, 0
      %p397 = por %p395, %p396
      %p398 = scmp.le.s32.totalorder 1, %s23
      %p399 = scmp.lt.s32.totalorder %s23, 3
      %p400 = pnand %p398, %p399
      %p401 = pneg %p400
      // Predicated region
      $region9: #{cifar_rf_basic_block.1} parent=5 // pred_check
        _
      $region10: #{cifar_rf_basic_block.1} parent=5 // pred_check_branch
        %403 = sbr.rel (%p400) target = $region12
      $region11: #{cifar_rf_basic_block.1} parent=5 // pred_region
        %s404 = ssub.s32 %s23, 1
        // Predicated region
        $region13: #{cifar_rf_basic_block.1} parent=11 // pred_check
          %p405 = pneg %p44
        $region14: #{cifar_rf_basic_block.1} parent=11 // pred_check_branch
          %407 = sbr.rel (%p405) target = $region16
        $region15: #{cifar_rf_basic_block.1} parent=11 // pred_region
          %s409 = ssub.s32 128, 128
          %410 = vsyncadd [#allocation7], %s409
          %s412 = sshll.u32 %s0, 4
          %s413 = int_to_ptr.vmem [resolvable:$true] %s412
          %415 = dma.vmem_to_smem %s413, 128, [#allocation6], [#allocation7]
        $region16: #{cifar_rf_basic_block.1} parent=11 // pred_fallthru
          _
        // Predicated region
        $region17: #{cifar_rf_basic_block.1} parent=11 // pred_check
          %p416 = pneg %p91
        $region18: #{cifar_rf_basic_block.1} parent=11 // pred_check_branch
          %418 = sbr.rel (%p416) target = $region20
        $region19: #{cifar_rf_basic_block.1} parent=11 // pred_region
          _
        $region20: #{cifar_rf_basic_block.1} parent=11 // pred_fallthru
          _
        // Predicated region
        $region21: #{cifar_rf_basic_block.1} parent=11 // pred_check
          %p419 = pneg %p112
        $region22: #{cifar_rf_basic_block.1} parent=11 // pred_check_branch
          %421 = sbr.rel (%p419) target = $region24
        $region23: #{cifar_rf_basic_block.1} parent=11 // pred_region
          _
        $region24: #{cifar_rf_basic_block.1} parent=11 // pred_fallthru
          _
        // Predicated region
        $region25: #{cifar_rf_basic_block.1} parent=11 // pred_check
          %p422 = pneg %p133
        $region26: #{cifar_rf_basic_block.1} parent=11 // pred_check_branch
          %424 = sbr.rel (%p422) target = $region28
        $region27: #{cifar_rf_basic_block.1} parent=11 // pred_region
          _
        $region28: #{cifar_rf_basic_block.1} parent=11 // pred_fallthru
          _
        // Predicated region
        $region29: #{cifar_rf_basic_block.1} parent=11 // pred_check
          %p425 = pneg %p154
        $region30: #{cifar_rf_basic_block.1} parent=11 // pred_check_branch
          %427 = sbr.rel (%p425) target = $region32
        $region31: #{cifar_rf_basic_block.1} parent=11 // pred_region
          _
        $region32: #{cifar_rf_basic_block.1} parent=11 // pred_fallthru
          _
        // Predicated region
        $region33: #{cifar_rf_basic_block.1} parent=11 // pred_check
          %p428 = pneg %p175
        $region34: #{cifar_rf_basic_block.1} parent=11 // pred_check_branch
          %430 = sbr.rel (%p428) target = $region36
        $region35: #{cifar_rf_basic_block.1} parent=11 // pred_region
          _
        $region36: #{cifar_rf_basic_block.1} parent=11 // pred_fallthru
          _
        // Predicated region
        $region37: #{cifar_rf_basic_block.1} parent=11 // pred_check
          %p431 = pneg %p196
        $region38: #{cifar_rf_basic_block.1} parent=11 // pred_check_branch
          %433 = sbr.rel (%p431) target = $region40
        $region39: #{cifar_rf_basic_block.1} parent=11 // pred_region
          _
        $region40: #{cifar_rf_basic_block.1} parent=11 // pred_fallthru
          _
        // Predicated region
        $region41: #{cifar_rf_basic_block.1} parent=11 // pred_check
          %p434 = pneg %p217
        $region42: #{cifar_rf_basic_block.1} parent=11 // pred_check_branch
          %436 = sbr.rel (%p434) target = $region44
        $region43: #{cifar_rf_basic_block.1} parent=11 // pred_region
          _
        $region44: #{cifar_rf_basic_block.1} parent=11 // pred_fallthru
          _
        // Predicated region
        $region45: #{cifar_rf_basic_block.1} parent=11 // pred_check
          %p437 = pneg %p238
        $region46: #{cifar_rf_basic_block.1} parent=11 // pred_check_branch
          %439 = sbr.rel (%p437) target = $region48
        $region47: #{cifar_rf_basic_block.1} parent=11 // pred_region
          _
        $region48: #{cifar_rf_basic_block.1} parent=11 // pred_fallthru
          _
        // Predicated region
        $region49: #{cifar_rf_basic_block.1} parent=11 // pred_check
          %p440 = pneg %p259
        $region50: #{cifar_rf_basic_block.1} parent=11 // pred_check_branch
          %442 = sbr.rel (%p440) target = $region52
        $region51: #{cifar_rf_basic_block.1} parent=11 // pred_region
          _
        $region52: #{cifar_rf_basic_block.1} parent=11 // pred_fallthru
          _
        // Predicated region
        $region53: #{cifar_rf_basic_block.1} parent=11 // pred_check
          %p443 = pneg %p280
        $region54: #{cifar_rf_basic_block.1} parent=11 // pred_check_branch
          %445 = sbr.rel (%p443) target = $region56
        $region55: #{cifar_rf_basic_block.1} parent=11 // pred_region
          _
        $region56: #{cifar_rf_basic_block.1} parent=11 // pred_fallthru
          _
        // Predicated region
        $region57: #{cifar_rf_basic_block.1} parent=11 // pred_check
          %p446 = pneg %p301
        $region58: #{cifar_rf_basic_block.1} parent=11 // pred_check_branch
          %448 = sbr.rel (%p446) target = $region60
        $region59: #{cifar_rf_basic_block.1} parent=11 // pred_region
          _
        $region60: #{cifar_rf_basic_block.1} parent=11 // pred_fallthru
          _
        // Predicated region
        $region61: #{cifar_rf_basic_block.1} parent=11 // pred_check
          %p449 = pneg %p322
        $region62: #{cifar_rf_basic_block.1} parent=11 // pred_check_branch
          %451 = sbr.rel (%p449) target = $region64
        $region63: #{cifar_rf_basic_block.1} parent=11 // pred_region
          _
        $region64: #{cifar_rf_basic_block.1} parent=11 // pred_fallthru
          _
        // Predicated region
        $region65: #{cifar_rf_basic_block.1} parent=11 // pred_check
          %p452 = pneg %p343
        $region66: #{cifar_rf_basic_block.1} parent=11 // pred_check_branch
          %454 = sbr.rel (%p452) target = $region68
        $region67: #{cifar_rf_basic_block.1} parent=11 // pred_region
          _
        $region68: #{cifar_rf_basic_block.1} parent=11 // pred_fallthru
          _
        // Predicated region
        $region69: #{cifar_rf_basic_block.1} parent=11 // pred_check
          %p455 = pneg %p364
        $region70: #{cifar_rf_basic_block.1} parent=11 // pred_check_branch
          %457 = sbr.rel (%p455) target = $region72
        $region71: #{cifar_rf_basic_block.1} parent=11 // pred_region
          _
        $region72: #{cifar_rf_basic_block.1} parent=11 // pred_fallthru
          _
      $region12: #{cifar_rf_basic_block.1} parent=5 // pred_fallthru
        _
      %p458 = scmp.lt.s32.totalorder %s23, 2
      // Predicated region
      $region73: #{cifar_rf_basic_block.1} parent=5 // pred_check
        %p459 = pneg %p458
      $region74: #{cifar_rf_basic_block.1} parent=5 // pred_check_branch
        %461 = sbr.rel (%p459) target = $region76
      $region75: #{cifar_rf_basic_block.1} parent=5 // pred_region
        // Predicated region
        $region77: #{cifar_rf_basic_block.1} parent=75 // pred_check
          %p462 = pneg %p64
        $region78: #{cifar_rf_basic_block.1} parent=75 // pred_check_branch
          %464 = sbr.rel (%p462) target = $region80
        $region79: #{cifar_rf_basic_block.1} parent=75 // pred_region
          %p465 = scmp.lt.s32.totalorder %s23, 1
          %s466 = scalar_select %p465, %s23, 1
          %s467 = smul.addr %s466, 32
          %s468 = smul.addr %s467, 8
          %s469 = scalar_lea.vmem %s1, %s468
        $region80: #{cifar_rf_basic_block.1} parent=75 // pred_fallthru
          _
      $region76: #{cifar_rf_basic_block.1} parent=5 // pred_fallthru
        _
      %p470 = scmp.le.s32.totalorder 1, %s23
      %p471 = scmp.lt.s32.totalorder %s23, 3
      %p472 = pnand %p470, %p471
      %p473 = pneg %p472
      // Predicated region
      $region81: #{cifar_rf_basic_block.1} parent=5 // pred_check
        _
      $region82: #{cifar_rf_basic_block.1} parent=5 // pred_check_branch
        %475 = sbr.rel (%p472) target = $region84
      $region83: #{cifar_rf_basic_block.1} parent=5 // pred_region
        %s476 = ssub.s32 %s23, 1
        // Predicated region
        $region85: #{cifar_rf_basic_block.1} parent=83 // pred_check
          %p477 = pneg %p44
        $region86: #{cifar_rf_basic_block.1} parent=83 // pred_check_branch
          %479 = sbr.rel (%p477) target = $region88
        $region87: #{cifar_rf_basic_block.1} parent=83 // pred_region
          %480 = dma.done [#allocation7], 128
        $region88: #{cifar_rf_basic_block.1} parent=83 // pred_fallthru
          _
        %481 = sfence
        %p482 = pneg %p44
        %p483 = pneg %p41
        %p484 = scmp.lt.s32.totalorder %s28, 1
        %s485 = scalar_select %p484, %s28, 1
        %s486 = smul.addr %s485, 32
        %s487 = smul.addr %s486, 8
        %s488 = scalar_lea.vmem %s1, %s487
        %p489 = pneg %p70
        %p490 = pneg %p67
        %p491 = pneg %p91
        %p492 = pneg %p88
        %p493 = pneg %p112
        %p494 = pneg %p109
        %p495 = pneg %p133
        %p496 = pneg %p130
        %p497 = pneg %p154
        %p498 = pneg %p151
        %p499 = pneg %p175
        %p500 = pneg %p172
        %p501 = pneg %p196
        %p502 = pneg %p193
        %p503 = pneg %p217
        %p504 = pneg %p214
        %p505 = pneg %p238
        %p506 = pneg %p235
        %p507 = pneg %p259
        %p508 = pneg %p256
        %p509 = pneg %p280
        %p510 = pneg %p277
        %p511 = pneg %p301
        %p512 = pneg %p298
        %p513 = pneg %p322
        %p514 = pneg %p319
        %p515 = pneg %p343
        %p516 = pneg %p340
        %p517 = pneg %p364
        %p518 = pneg %p361
        %p519 = pneg %p390
        %p520 = pneg %p387
        %s521 = smul.u32 32, %s28
        %p522 = scmp.lt.s32.totalorder %s521, 63
        %s523 = scalar_select %p522, %s521, 63
        %s524 = smul.addr %s523, 8
        %s525 = scalar_lea.vmem %s16, %s524
        %p526 = scmp.lt.s32.totalorder %s28, 1
        %s527 = scalar_select %p526, %s28, 1
        %s528 = smul.addr %s527, 32
        %s529 = smul.addr %s528, 8
        %s530 = scalar_lea.vmem %s1, %s529
        %s531 = smul.u32 32, %s28
        %p532 = scmp.lt.s32.totalorder %s531, 63
        %s533 = scalar_select %p532, %s531, 63
        %s534 = smul.addr %s533, 8
        %s535 = scalar_lea.vmem %s16, %s534
        %s536 = smul.u32 32, %s28
        %v538 = vld [vmem:[%s530] sm:$0xff]
        %v539 = vld [vmem:[%s530 + $0x8] sm:$0xff]
        %v540 = vld [vmem:[%s530 + $0x10] sm:$0xff]
        %v541 = vld [vmem:[%s530 + $0x18] sm:$0xff]
        %v542 = vld [vmem:[%s530 + $0x20] sm:$0xff]
        %v543 = vld [vmem:[%s530 + $0x28] sm:$0xff]
        %v544 = vld [vmem:[%s530 + $0x30] sm:$0xff]
        %v545 = vld [vmem:[%s530 + $0x38] sm:$0xff]
        %v546 = vld [vmem:[%s530 + $0x40] sm:$0xff]
        %v547 = vld [vmem:[%s530 + $0x48] sm:$0xff]
        %v548 = vld [vmem:[%s530 + $0x50] sm:$0xff]
        %v549 = vld [vmem:[%s530 + $0x58] sm:$0xff]
        %v550 = vld [vmem:[%s530 + $0x60] sm:$0xff]
        %v551 = vld [vmem:[%s530 + $0x68] sm:$0xff]
        %v552 = vld [vmem:[%s530 + $0x70] sm:$0xff]
        %v553 = vld [vmem:[%s530 + $0x78] sm:$0xff]
        %v554 = vld [vmem:[%s530 + $0x80] sm:$0xff]
        %v555 = vld [vmem:[%s530 + $0x88] sm:$0xff]
        %v556 = vld [vmem:[%s530 + $0x90] sm:$0xff]
        %v557 = vld [vmem:[%s530 + $0x98] sm:$0xff]
        %v558 = vld [vmem:[%s530 + $0xa0] sm:$0xff]
        %v559 = vld [vmem:[%s530 + $0xa8] sm:$0xff]
        %v560 = vld [vmem:[%s530 + $0xb0] sm:$0xff]
        %v561 = vld [vmem:[%s530 + $0xb8] sm:$0xff]
        %v562 = vld [vmem:[%s530 + $0xc0] sm:$0xff]
        %v563 = vld [vmem:[%s530 + $0xc8] sm:$0xff]
        %v564 = vld [vmem:[%s530 + $0xd0] sm:$0xff]
        %v565 = vld [vmem:[%s530 + $0xd8] sm:$0xff]
        %v566 = vld [vmem:[%s530 + $0xe0] sm:$0xff]
        %v567 = vld [vmem:[%s530 + $0xe8] sm:$0xff]
        %v568 = vld [vmem:[%s530 + $0xf0] sm:$0xff]
        %v569 = vld [vmem:[%s530 + $0xf8] sm:$0xff]
        %v570 = vld [vmem:[%s8] sm:$0xf]
        %v571 = vpack.c.bf16 %v539, %v538
        %v572 = vpack.c.bf16 %v541, %v540
        %v573 = vpack.c.bf16 %v543, %v542
        %v574 = vpack.c.bf16 %v545, %v544
        %v575 = vpack.c.bf16 %v547, %v546
        %v576 = vpack.c.bf16 %v549, %v548
        %v577 = vpack.c.bf16 %v551, %v550
        %v578 = vpack.c.bf16 %v553, %v552
        %v579 = vpack.c.bf16 %v555, %v554
        %v580 = vpack.c.bf16 %v557, %v556
        %v581 = vpack.c.bf16 %v559, %v558
        %v582 = vpack.c.bf16 %v561, %v560
        %v583 = vpack.c.bf16 %v563, %v562
        %v584 = vpack.c.bf16 %v565, %v564
        %v585 = vpack.c.bf16 %v567, %v566
        %v586 = vpack.c.bf16 %v569, %v568
        %vm587 = vcmask 64512
        %v589 = vsel %vm587, %v571, 0
        %v592 = vsel %vm587, %v572, 0
        %v595 = vsel %vm587, %v573, 0
        %v598 = vsel %vm587, %v574, 0
        %v601 = vsel %vm587, %v575, 0
        %v604 = vsel %vm587, %v576, 0
        %v607 = vsel %vm587, %v577, 0
        %v610 = vsel %vm587, %v578, 0
        %v613 = vsel %vm587, %v579, 0
        %v616 = vsel %vm587, %v580, 0
        %v619 = vsel %vm587, %v581, 0
        %v622 = vsel %vm587, %v582, 0
        %v625 = vsel %vm587, %v583, 0
        %v628 = vsel %vm587, %v584, 0
        %v631 = vsel %vm587, %v585, 0
        %v634 = vsel %vm587, %v586, 0
        %vm636 = vcmask 1043456
        %v638 = vsel %vm636, %v570, 0
        %640 = vmatprep.subr.bf16.mxu0 0
        %641 = vmatpush1.bf16.msra.mxu0 %v638
        %642 = vmatprep.subr.bf16.mxu0 0
        %643 = vmatpush1.bf16.msra.mxu0 0
        %644 = vmatprep.subr.bf16.mxu0 0
        %645 = vmatpush1.bf16.msra.mxu0 0
        %646 = vmatprep.subr.bf16.mxu0 0
        %647 = vmatpush1.bf16.msra.mxu0 0
        %648 = vmatprep.subr.bf16.mxu0 0
        %649 = vmatpush1.bf16.msra.mxu0 0
        %650 = vmatprep.subr.bf16.mxu0 0
        %651 = vmatpush1.bf16.msra.mxu0 0
        %652 = vmatprep.subr.bf16.mxu0 0
        %653 = vmatpush1.bf16.msra.mxu0 0
        %654 = vmatprep.subr.bf16.mxu0 0
        %655 = vmatpush1.bf16.msra.mxu0 0
        %656 = vmatprep.subr.bf16.mxu0 0
        %657 = vmatpush1.bf16.msra.mxu0 0
        %658 = vmatprep.subr.bf16.mxu0 0
        %659 = vmatpush1.bf16.msra.mxu0 0
        %660 = vmatprep.subr.bf16.mxu0 0
        %661 = vmatpush1.bf16.msra.mxu0 0
        %662 = vmatprep.subr.bf16.mxu0 0
        %663 = vmatpush1.bf16.msra.mxu0 0
        %664 = vmatprep.subr.bf16.mxu0 0
        %665 = vmatpush1.bf16.msra.mxu0 0
        %666 = vmatprep.subr.bf16.mxu0 0
        %667 = vmatpush1.bf16.msra.mxu0 0
        %668 = vmatprep.subr.bf16.mxu0 0
        %669 = vmatpush1.bf16.msra.mxu0 0
        %670 = vmatprep.subr.bf16.mxu0 0
        %671 = vmatpush1.bf16.msra.mxu0 0
        %672 = vmatprep.mubr.bf16.mxu0 0
        %673 = vmatmul.mubr.bf16.gmra.mrb[0].mxu0 %v589
        %v674 = vpop.f32.mrb[0].mxu0
        %v675 = vadd.f32 0.0, %v674
        %v676 = vpop.f32.mrb[0].mxu0
        %v677 = vpop.f32.mrb[0].mxu0
        %v678 = vadd.f32 0.0, %v677
        %v679 = vpop.f32.mrb[0].mxu0
        %680 = vmatprep.mubr.bf16.mxu0 0
        %681 = vmatmul.mubr.bf16.gmra.mrb[0].mxu0 %v592
        %v682 = vpop.f32.mrb[0].mxu0
        %v683 = vadd.f32 0.0, %v682
        %v684 = vpop.f32.mrb[0].mxu0
        %v685 = vpop.f32.mrb[0].mxu0
        %v686 = vadd.f32 0.0, %v685
        %v687 = vpop.f32.mrb[0].mxu0
        %688 = vmatprep.mubr.bf16.mxu0 0
        %689 = vmatmul.mubr.bf16.gmra.mrb[0].mxu0 %v595
        %v690 = vpop.f32.mrb[0].mxu0
        %v691 = vadd.f32 0.0, %v690
        %v692 = vpop.f32.mrb[0].mxu0
        %v693 = vpop.f32.mrb[0].mxu0
        %v694 = vadd.f32 0.0, %v693
        %v695 = vpop.f32.mrb[0].mxu0
        %696 = vmatprep.mubr.bf16.mxu0 0
        %697 = vmatmul.mubr.bf16.gmra.mrb[0].mxu0 %v598
        %v698 = vpop.f32.mrb[0].mxu0
        %v699 = vadd.f32 0.0, %v698
        %v700 = vpop.f32.mrb[0].mxu0
        %v701 = vpop.f32.mrb[0].mxu0
        %v702 = vadd.f32 0.0, %v701
        %v703 = vpop.f32.mrb[0].mxu0
        %704 = vmatprep.mubr.bf16.mxu0 0
        %705 = vmatmul.mubr.bf16.gmra.mrb[0].mxu0 %v601
        %v706 = vpop.f32.mrb[0].mxu0
        %v707 = vadd.f32 0.0, %v706
        %v708 = vpop.f32.mrb[0].mxu0
        %v709 = vpop.f32.mrb[0].mxu0
        %v710 = vadd.f32 0.0, %v709
        %v711 = vpop.f32.mrb[0].mxu0
        %712 = vmatprep.mubr.bf16.mxu0 0
        %713 = vmatmul.mubr.bf16.gmra.mrb[0].mxu0 %v604
        %v714 = vpop.f32.mrb[0].mxu0
        %v715 = vadd.f32 0.0, %v714
        %v716 = vpop.f32.mrb[0].mxu0
        %v717 = vpop.f32.mrb[0].mxu0
        %v718 = vadd.f32 0.0, %v717
        %v719 = vpop.f32.mrb[0].mxu0
        %720 = vmatprep.mubr.bf16.mxu0 0
        %721 = vmatmul.mubr.bf16.gmra.mrb[0].mxu0 %v607
        %v722 = vpop.f32.mrb[0].mxu0
        %v723 = vadd.f32 0.0, %v722
        %v724 = vpop.f32.mrb[0].mxu0
        %v725 = vpop.f32.mrb[0].mxu0
        %v726 = vadd.f32 0.0, %v725
        %v727 = vpop.f32.mrb[0].mxu0
        %728 = vmatprep.mubr.bf16.mxu0 0
        %729 = vmatmul.mubr.bf16.gmra.mrb[0].mxu0 %v610
        %v730 = vpop.f32.mrb[0].mxu0
        %v731 = vadd.f32 0.0, %v730
        %v732 = vpop.f32.mrb[0].mxu0
        %v733 = vpop.f32.mrb[0].mxu0
        %v734 = vadd.f32 0.0, %v733
        %v735 = vpop.f32.mrb[0].mxu0
        %736 = vmatprep.mubr.bf16.mxu0 0
        %737 = vmatmul.mubr.bf16.gmra.mrb[0].mxu0 %v613
        %v738 = vpop.f32.mrb[0].mxu0
        %v739 = vadd.f32 0.0, %v738
        %v740 = vpop.f32.mrb[0].mxu0
        %v741 = vpop.f32.mrb[0].mxu0
        %v742 = vadd.f32 0.0, %v741
        %v743 = vpop.f32.mrb[0].mxu0
        %744 = vmatprep.mubr.bf16.mxu0 0
        %745 = vmatmul.mubr.bf16.gmra.mrb[0].mxu0 %v616
        %v746 = vpop.f32.mrb[0].mxu0
        %v747 = vadd.f32 0.0, %v746
        %v748 = vpop.f32.mrb[0].mxu0
        %v749 = vpop.f32.mrb[0].mxu0
        %v750 = vadd.f32 0.0, %v749
        %v751 = vpop.f32.mrb[0].mxu0
        %752 = vmatprep.mubr.bf16.mxu0 0
        %753 = vmatmul.mubr.bf16.gmra.mrb[0].mxu0 %v619
        %v754 = vpop.f32.mrb[0].mxu0
        %v755 = vadd.f32 0.0, %v754
        %v756 = vpop.f32.mrb[0].mxu0
        %v757 = vpop.f32.mrb[0].mxu0
        %v758 = vadd.f32 0.0, %v757
        %v759 = vpop.f32.mrb[0].mxu0
        %760 = vmatprep.mubr.bf16.mxu0 0
        %761 = vmatmul.mubr.bf16.gmra.mrb[0].mxu0 %v622
        %v762 = vpop.f32.mrb[0].mxu0
        %v763 = vadd.f32 0.0, %v762
        %v764 = vpop.f32.mrb[0].mxu0
        %v765 = vpop.f32.mrb[0].mxu0
        %v766 = vadd.f32 0.0, %v765
        %v767 = vpop.f32.mrb[0].mxu0
        %768 = vmatprep.mubr.bf16.mxu0 0
        %769 = vmatmul.mubr.bf16.gmra.mrb[0].mxu0 %v625
        %v770 = vpop.f32.mrb[0].mxu0
        %v771 = vadd.f32 0.0, %v770
        %v772 = vpop.f32.mrb[0].mxu0
        %v773 = vpop.f32.mrb[0].mxu0
        %v774 = vadd.f32 0.0, %v773
        %v775 = vpop.f32.mrb[0].mxu0
        %776 = vmatprep.mubr.bf16.mxu0 0
        %777 = vmatmul.mubr.bf16.gmra.mrb[0].mxu0 %v628
        %v778 = vpop.f32.mrb[0].mxu0
        %v779 = vadd.f32 0.0, %v778
        %v780 = vpop.f32.mrb[0].mxu0
        %v781 = vpop.f32.mrb[0].mxu0
        %v782 = vadd.f32 0.0, %v781
        %v783 = vpop.f32.mrb[0].mxu0
        %784 = vmatprep.mubr.bf16.mxu0 0
        %785 = vmatmul.mubr.bf16.gmra.mrb[0].mxu0 %v631
        %v786 = vpop.f32.mrb[0].mxu0
        %v787 = vadd.f32 0.0, %v786
        %v788 = vpop.f32.mrb[0].mxu0
        %v789 = vpop.f32.mrb[0].mxu0
        %v790 = vadd.f32 0.0, %v789
        %v791 = vpop.f32.mrb[0].mxu0
        %792 = vmatprep.mubr.bf16.mxu0 0
        %793 = vmatmul.mubr.bf16.gmra.mrb[0].mxu0 %v634
        %v794 = vpop.f32.mrb[0].mxu0
        %v795 = vadd.f32 0.0, %v794
        %v796 = vpop.f32.mrb[0].mxu0
        %v797 = vpop.f32.mrb[0].mxu0
        %v798 = vadd.f32 0.0, %v797
        %v799 = vpop.f32.mrb[0].mxu0
        %800 = vdwg.mxu0
        %v801 = vld [vmem:[%s9] sm:$0x1]
        %v803 = vlaneseq
        %v804 = vshrl.u32 %v803, 7
        %v805 = vsub.s32 0, %v804
        %v806 = vrot.slane %v801, %v805
        %v808 = vmul.f32 %v675, %v806
        %v809 = vmul.f32 %v678, %v806
        %v810 = vmul.f32 %v683, %v806
        %v811 = vmul.f32 %v686, %v806
        %v812 = vmul.f32 %v691, %v806
        %v813 = vmul.f32 %v694, %v806
        %v814 = vmul.f32 %v699, %v806
        %v815 = vmul.f32 %v702, %v806
        %v816 = vmul.f32 %v707, %v806
        %v817 = vmul.f32 %v710, %v806
        %v818 = vmul.f32 %v715, %v806
        %v819 = vmul.f32 %v718, %v806
        %v820 = vmul.f32 %v723, %v806
        %v821 = vmul.f32 %v726, %v806
        %v822 = vmul.f32 %v731, %v806
        %v823 = vmul.f32 %v734, %v806
        %v824 = vmul.f32 %v739, %v806
        %v825 = vmul.f32 %v742, %v806
        %v826 = vmul.f32 %v747, %v806
        %v827 = vmul.f32 %v750, %v806
        %v828 = vmul.f32 %v755, %v806
        %v829 = vmul.f32 %v758, %v806
        %v830 = vmul.f32 %v763, %v806
        %v831 = vmul.f32 %v766, %v806
        %v832 = vmul.f32 %v771, %v806
        %v833 = vmul.f32 %v774, %v806
        %v834 = vmul.f32 %v779, %v806
        %v835 = vmul.f32 %v782, %v806
        %v836 = vmul.f32 %v787, %v806
        %v837 = vmul.f32 %v790, %v806
        %v838 = vmul.f32 %v795, %v806
        %v839 = vmul.f32 %v798, %v806
        %v840 = vld [vmem:[%s10] sm:$0x1]
        %v842 = vlaneseq
        %v843 = vshrl.u32 %v842, 7
        %v844 = vsub.s32 0, %v843
        %v845 = vrot.slane %v840, %v844
        %v847 = vadd.f32 %v808, %v845
        %v848 = vadd.f32 %v809, %v845
        %v849 = vadd.f32 %v810, %v845
        %v850 = vadd.f32 %v811, %v845
        %v851 = vadd.f32 %v812, %v845
        %v852 = vadd.f32 %v813, %v845
        %v853 = vadd.f32 %v814, %v845
        %v854 = vadd.f32 %v815, %v845
        %v855 = vadd.f32 %v816, %v845
        %v856 = vadd.f32 %v817, %v845
        %v857 = vadd.f32 %v818, %v845
        %v858 = vadd.f32 %v819, %v845
        %v859 = vadd.f32 %v820, %v845
        %v860 = vadd.f32 %v821, %v845
        %v861 = vadd.f32 %v822, %v845
        %v862 = vadd.f32 %v823, %v845
        %v863 = vadd.f32 %v824, %v845
        %v864 = vadd.f32 %v825, %v845
        %v865 = vadd.f32 %v826, %v845
        %v866 = vadd.f32 %v827, %v845
        %v867 = vadd.f32 %v828, %v845
        %v868 = vadd.f32 %v829, %v845
        %v869 = vadd.f32 %v830, %v845
        %v870 = vadd.f32 %v831, %v845
        %v871 = vadd.f32 %v832, %v845
        %v872 = vadd.f32 %v833, %v845
        %v873 = vadd.f32 %v834, %v845
        %v874 = vadd.f32 %v835, %v845
        %v875 = vadd.f32 %v836, %v845
        %v876 = vadd.f32 %v837, %v845
        %v877 = vadd.f32 %v838, %v845
        %v878 = vadd.f32 %v839, %v845
        %879 = vst.msk [vmem:[#allocation2] sm:$0xff] %vm587, 0.0
        %880 = vst.msk [vmem:[#allocation2 + $0x8] sm:$0xff] %vm587, 0.0
        %vm881 = vcmask 58368
        %882 = vst.msk [vmem:[#allocation2 + $0x10] sm:$0x3] %vm881, 0.0
        %883 = vst.msk [vmem:[#allocation2 + $0x18] sm:$0xff] %vm587, 0.0
        %884 = vst.msk [vmem:[#allocation2 + $0x20] sm:$0xff] %vm587, 0.0
        %885 = vst.msk [vmem:[#allocation2 + $0x28] sm:$0x3] %vm881, 0.0
        %886 = vst.msk [vmem:[#allocation2 + $0x30] sm:$0xff] %vm587, 0.0
        %887 = vst.msk [vmem:[#allocation2 + $0x38] sm:$0xff] %vm587, 0.0
        %888 = vst.msk [vmem:[#allocation2 + $0x40] sm:$0x3] %vm881, 0.0
        %889 = vst.msk [vmem:[#allocation2 + $0x48] sm:$0xff] %vm587, 0.0
        %890 = vst.msk [vmem:[#allocation2 + $0x50] sm:$0xff] %vm587, 0.0
        %891 = vst.msk [vmem:[#allocation2 + $0x58] sm:$0x3] %vm881, 0.0
        %892 = vst.msk [vmem:[#allocation2 + $0x60] sm:$0xff] %vm587, 0.0
        %893 = vst.msk [vmem:[#allocation2 + $0x68] sm:$0xff] %vm587, 0.0
        %894 = vst.msk [vmem:[#allocation2 + $0x70] sm:$0x3] %vm881, 0.0
        %895 = vst.msk [vmem:[#allocation2 + $0x78] sm:$0xff] %vm587, 0.0
        %896 = vst.msk [vmem:[#allocation2 + $0x80] sm:$0xff] %vm587, 0.0
        %897 = vst.msk [vmem:[#allocation2 + $0x88] sm:$0x3] %vm881, 0.0
        %898 = vst.msk [vmem:[#allocation2 + $0x90] sm:$0xff] %vm587, 0.0
        %899 = vst.msk [vmem:[#allocation2 + $0x98] sm:$0xff] %vm587, 0.0
        %900 = vst.msk [vmem:[#allocation2 + $0xa0] sm:$0x3] %vm881, 0.0
        %901 = vst.msk [vmem:[#allocation2 + $0xa8] sm:$0xff] %vm587, 0.0
        %902 = vst.msk [vmem:[#allocation2 + $0xb0] sm:$0xff] %vm587, 0.0
        %903 = vst.msk [vmem:[#allocation2 + $0xb8] sm:$0x3] %vm881, 0.0
        %904 = vst.msk [vmem:[#allocation2 + $0xc0] sm:$0xff] %vm587, 0.0
        %905 = vst.msk [vmem:[#allocation2 + $0xc8] sm:$0xff] %vm587, 0.0
        %906 = vst.msk [vmem:[#allocation2 + $0xd0] sm:$0x3] %vm881, 0.0
        %907 = vst.msk [vmem:[#allocation2 + $0xd8] sm:$0xff] %vm587, 0.0
        %908 = vst.msk [vmem:[#allocation2 + $0xe0] sm:$0xff] %vm587, 0.0
        %909 = vst.msk [vmem:[#allocation2 + $0xe8] sm:$0x3] %vm881, 0.0
        %910 = vst.msk [vmem:[#allocation2 + $0xf0] sm:$0xff] %vm587, 0.0
        %911 = vst.msk [vmem:[#allocation2 + $0xf8] sm:$0xff] %vm587, 0.0
        %912 = vst.msk [vmem:[#allocation2 + $0x100] sm:$0x3] %vm881, 0.0
        %913 = vst.msk [vmem:[#allocation2 + $0x108] sm:$0xff] %vm587, 0.0
        %914 = vst.msk [vmem:[#allocation2 + $0x110] sm:$0xff] %vm587, 0.0
        %915 = vst.msk [vmem:[#allocation2 + $0x118] sm:$0x3] %vm881, 0.0
        %916 = vst.msk [vmem:[#allocation2 + $0x120] sm:$0xff] %vm587, 0.0
        %917 = vst.msk [vmem:[#allocation2 + $0x128] sm:$0xff] %vm587, 0.0
        %918 = vst.msk [vmem:[#allocation2 + $0x130] sm:$0x3] %vm881, 0.0
        %919 = vst.msk [vmem:[#allocation2 + $0x138] sm:$0xff] %vm587, 0.0
        %920 = vst.msk [vmem:[#allocation2 + $0x140] sm:$0xff] %vm587, 0.0
        %921 = vst.msk [vmem:[#allocation2 + $0x148] sm:$0x3] %vm881, 0.0
        %922 = vst.msk [vmem:[#allocation2 + $0x150] sm:$0xff] %vm587, 0.0
        %923 = vst.msk [vmem:[#allocation2 + $0x158] sm:$0xff] %vm587, 0.0
        %924 = vst.msk [vmem:[#allocation2 + $0x160] sm:$0x3] %vm881, 0.0
        %925 = vst.msk [vmem:[#allocation2 + $0x168] sm:$0xff] %vm587, 0.0
        %926 = vst.msk [vmem:[#allocation2 + $0x170] sm:$0xff] %vm587, 0.0
        %927 = vst.msk [vmem:[#allocation2 + $0x178] sm:$0x3] %vm881, 0.0
        %928 = vst.msk [vmem:[#allocation2 + $0x180] sm:$0xff] %vm587, 0.0
        %929 = vst.msk [vmem:[#allocation2 + $0x188] sm:$0xff] %vm587, 0.0
        %930 = vst.msk [vmem:[#allocation2 + $0x190] sm:$0x3] %vm881, 0.0
        %931 = vst.msk [vmem:[#allocation2 + $0x198] sm:$0xff] %vm587, 0.0
        %932 = vst.msk [vmem:[#allocation2 + $0x1a0] sm:$0xff] %vm587, 0.0
        %933 = vst.msk [vmem:[#allocation2 + $0x1a8] sm:$0x3] %vm881, 0.0
        %s934 = scalar_lea.vmem [#allocation2], 24
        %935 = vst.msk [vmem:[%s934 + $0x1] sm:$0xff] %vm587, %v538
        %936 = vst.msk [vmem:[%s934 + $0x9] sm:$0xff] %vm587, %v539
        %937 = vst.msk [vmem:[%s934 + $0x19] sm:$0xff] %vm587, %v540
        %938 = vst.msk [vmem:[%s934 + $0x21] sm:$0xff] %vm587, %v541
        %939 = vst.msk [vmem:[%s934 + $0x31] sm:$0xff] %vm587, %v542
        %940 = vst.msk [vmem:[%s934 + $0x39] sm:$0xff] %vm587, %v543
        %941 = vst.msk [vmem:[%s934 + $0x49] sm:$0xff] %vm587, %v544
        %942 = vst.msk [vmem:[%s934 + $0x51] sm:$0xff] %vm587, %v545
        %943 = vst.msk [vmem:[%s934 + $0x61] sm:$0xff] %vm587, %v546
        %944 = vst.msk [vmem:[%s934 + $0x69] sm:$0xff] %vm587, %v547
        %945 = vst.msk [vmem:[%s934 + $0x79] sm:$0xff] %vm587, %v548
        %946 = vst.msk [vmem:[%s934 + $0x81] sm:$0xff] %vm587, %v549
        %947 = vst.msk [vmem:[%s934 + $0x91] sm:$0xff] %vm587, %v550
        %948 = vst.msk [vmem:[%s934 + $0x99] sm:$0xff] %vm587, %v551
        %949 = vst.msk [vmem:[%s934 + $0xa9] sm:$0xff] %vm587, %v552
        %950 = vst.msk [vmem:[%s934 + $0xb1] sm:$0xff] %vm587, %v553
        %951 = vst.msk [vmem:[%s934 + $0xc1] sm:$0xff] %vm587, %v554
        %952 = vst.msk [vmem:[%s934 + $0xc9] sm:$0xff] %vm587, %v555
        %953 = vst.msk [vmem:[%s934 + $0xd9] sm:$0xff] %vm587, %v556
        %954 = vst.msk [vmem:[%s934 + $0xe1] sm:$0xff] %vm587, %v557
        %955 = vst.msk [vmem:[%s934 + $0xf1] sm:$0xff] %vm587, %v558
        %956 = vst.msk [vmem:[%s934 + $0xf9] sm:$0xff] %vm587, %v559
        %957 = vst.msk [vmem:[%s934 + $0x109] sm:$0xff] %vm587, %v560
        %958 = vst.msk [vmem:[%s934 + $0x111] sm:$0xff] %vm587, %v561
        %959 = vst.msk [vmem:[%s934 + $0x121] sm:$0xff] %vm587, %v562
        %960 = vst.msk [vmem:[%s934 + $0x129] sm:$0xff] %vm587, %v563
        %961 = vst.msk [vmem:[%s934 + $0x139] sm:$0xff] %vm587, %v564
        %962 = vst.msk [vmem:[%s934 + $0x141] sm:$0xff] %vm587, %v565
        %963 = vst.msk [vmem:[%s934 + $0x151] sm:$0xff] %vm587, %v566
        %964 = vst.msk [vmem:[%s934 + $0x159] sm:$0xff] %vm587, %v567
        %965 = vst.msk [vmem:[%s934 + $0x169] sm:$0xff] %vm587, %v568
        %966 = vst.msk [vmem:[%s934 + $0x171] sm:$0xff] %vm587, %v569
        %v967 = vld [vmem:[#allocation2] sm:$0xff]
        %v968 = vld [vmem:[#allocation2 + $0x8] sm:$0xff]
        %v969 = vld [vmem:[#allocation2 + $0x18] sm:$0xff]
        %v970 = vld [vmem:[#allocation2 + $0x20] sm:$0xff]
        %v971 = vld [vmem:[#allocation2 + $0x30] sm:$0xff]
        %v972 = vld [vmem:[#allocation2 + $0x38] sm:$0xff]
        %v973 = vld [vmem:[#allocation2 + $0x48] sm:$0xff]
        %v974 = vld [vmem:[#allocation2 + $0x50] sm:$0xff]
        %v975 = vld [vmem:[#allocation2 + $0x60] sm:$0xff]
        %v976 = vld [vmem:[#allocation2 + $0x68] sm:$0xff]
        %v977 = vld [vmem:[#allocation2 + $0x78] sm:$0xff]
        %v978 = vld [vmem:[#allocation2 + $0x80] sm:$0xff]
        %v979 = vld [vmem:[#allocation2 + $0x90] sm:$0xff]
        %v980 = vld [vmem:[#allocation2 + $0x98] sm:$0xff]
        %v981 = vld [vmem:[#allocation2 + $0xa8] sm:$0xff]
        %v982 = vld [vmem:[#allocation2 + $0xb0] sm:$0xff]
        %v983 = vld [vmem:[#allocation2 + $0xc0] sm:$0xff]
        %v984 = vld [vmem:[#allocation2 + $0xc8] sm:$0xff]
        %v985 = vld [vmem:[#allocation2 + $0xd8] sm:$0xff]
        %v986 = vld [vmem:[#allocation2 + $0xe0] sm:$0xff]
        %v987 = vld [vmem:[#allocation2 + $0xf0] sm:$0xff]
        %v988 = vld [vmem:[#allocation2 + $0xf8] sm:$0xff]
        %v989 = vld [vmem:[#allocation2 + $0x108] sm:$0xff]
        %v990 = vld [vmem:[#allocation2 + $0x110] sm:$0xff]
        %v991 = vld [vmem:[#allocation2 + $0x120] sm:$0xff]
        %v992 = vld [vmem:[#allocation2 + $0x128] sm:$0xff]
        %v993 = vld [vmem:[#allocation2 + $0x138] sm:$0xff]
        %v994 = vld [vmem:[#allocation2 + $0x140] sm:$0xff]
        %v995 = vld [vmem:[#allocation2 + $0x150] sm:$0xff]
        %v996 = vld [vmem:[#allocation2 + $0x158] sm:$0xff]
        %v997 = vld [vmem:[#allocation2 + $0x168] sm:$0xff]
        %v998 = vld [vmem:[#allocation2 + $0x170] sm:$0xff]
        %v999 = vld [vmem:[#allocation2 + $0x1] sm:$0xff]
        %v1000 = vld [vmem:[#allocation2 + $0x9] sm:$0xff]
        %v1001 = vld [vmem:[#allocation2 + $0x19] sm:$0xff]
        %v1002 = vld [vmem:[#allocation2 + $0x21] sm:$0xff]
        %v1003 = vld [vmem:[#allocation2 + $0x31] sm:$0xff]
        %v1004 = vld [vmem:[#allocation2 + $0x39] sm:$0xff]
        %v1005 = vld [vmem:[#allocation2 + $0x49] sm:$0xff]
        %v1006 = vld [vmem:[#allocation2 + $0x51] sm:$0xff]
        %v1007 = vld [vmem:[#allocation2 + $0x61] sm:$0xff]
        %v1008 = vld [vmem:[#allocation2 + $0x69] sm:$0xff]
        %v1009 = vld [vmem:[#allocation2 + $0x79] sm:$0xff]
        %v1010 = vld [vmem:[#allocation2 + $0x81] sm:$0xff]
        %v1011 = vld [vmem:[#allocation2 + $0x91] sm:$0xff]
        %v1012 = vld [vmem:[#allocation2 + $0x99] sm:$0xff]
        %v1013 = vld [vmem:[#allocation2 + $0xa9] sm:$0xff]
        %v1014 = vld [vmem:[#allocation2 + $0xb1] sm:$0xff]
        %v1015 = vld [vmem:[#allocation2 + $0xc1] sm:$0xff]
        %v1016 = vld [vmem:[#allocation2 + $0xc9] sm:$0xff]
        %v1017 = vld [vmem:[#allocation2 + $0xd9] sm:$0xff]
        %v1018 = vld [vmem:[#allocation2 + $0xe1] sm:$0xff]
        %v1019 = vld [vmem:[#allocation2 + $0xf1] sm:$0xff]
        %v1020 = vld [vmem:[#allocation2 + $0xf9] sm:$0xff]
        %v1021 = vld [vmem:[#allocation2 + $0x109] sm:$0xff]
        %v1022 = vld [vmem:[#allocation2 + $0x111] sm:$0xff]
        %v1023 = vld [vmem:[#allocation2 + $0x121] sm:$0xff]
        %v1024 = vld [vmem:[#allocation2 + $0x129] sm:$0xff]
        %v1025 = vld [vmem:[#allocation2 + $0x139] sm:$0xff]
        %v1026 = vld [vmem:[#allocation2 + $0x141] sm:$0xff]
        %v1027 = vld [vmem:[#allocation2 + $0x151] sm:$0xff]
        %v1028 = vld [vmem:[#allocation2 + $0x159] sm:$0xff]
        %v1029 = vld [vmem:[#allocation2 + $0x169] sm:$0xff]
        %v1030 = vld [vmem:[#allocation2 + $0x171] sm:$0xff]
        %v1031 = vld [vmem:[#allocation2 + $0x2] sm:$0xff]
        %v1032 = vld [vmem:[#allocation2 + $0xa] sm:$0xff]
        %v1033 = vld [vmem:[#allocation2 + $0x1a] sm:$0xff]
        %v1034 = vld [vmem:[#allocation2 + $0x22] sm:$0xff]
        %v1035 = vld [vmem:[#allocation2 + $0x32] sm:$0xff]
        %v1036 = vld [vmem:[#allocation2 + $0x3a] sm:$0xff]
        %v1037 = vld [vmem:[#allocation2 + $0x4a] sm:$0xff]
        %v1038 = vld [vmem:[#allocation2 + $0x52] sm:$0xff]
        %v1039 = vld [vmem:[#allocation2 + $0x62] sm:$0xff]
        %v1040 = vld [vmem:[#allocation2 + $0x6a] sm:$0xff]
        %v1041 = vld [vmem:[#allocation2 + $0x7a] sm:$0xff]
        %v1042 = vld [vmem:[#allocation2 + $0x82] sm:$0xff]
        %v1043 = vld [vmem:[#allocation2 + $0x92] sm:$0xff]
        %v1044 = vld [vmem:[#allocation2 + $0x9a] sm:$0xff]
        %v1045 = vld [vmem:[#allocation2 + $0xaa] sm:$0xff]
        %v1046 = vld [vmem:[#allocation2 + $0xb2] sm:$0xff]
        %v1047 = vld [vmem:[#allocation2 + $0xc2] sm:$0xff]
        %v1048 = vld [vmem:[#allocation2 + $0xca] sm:$0xff]
        %v1049 = vld [vmem:[#allocation2 + $0xda] sm:$0xff]
        %v1050 = vld [vmem:[#allocation2 + $0xe2] sm:$0xff]
        %v1051 = vld [vmem:[#allocation2 + $0xf2] sm:$0xff]
        %v1052 = vld [vmem:[#allocation2 + $0xfa] sm:$0xff]
        %v1053 = vld [vmem:[#allocation2 + $0x10a] sm:$0xff]
        %v1054 = vld [vmem:[#allocation2 + $0x112] sm:$0xff]
        %v1055 = vld [vmem:[#allocation2 + $0x122] sm:$0xff]
        %v1056 = vld [vmem:[#allocation2 + $0x12a] sm:$0xff]
        %v1057 = vld [vmem:[#allocation2 + $0x13a] sm:$0xff]
        %v1058 = vld [vmem:[#allocation2 + $0x142] sm:$0xff]
        %v1059 = vld [vmem:[#allocation2 + $0x152] sm:$0xff]
        %v1060 = vld [vmem:[#allocation2 + $0x15a] sm:$0xff]
        %v1061 = vld [vmem:[#allocation2 + $0x16a] sm:$0xff]
        %v1062 = vld [vmem:[#allocation2 + $0x172] sm:$0xff]
        %v1063 = vld [vmem:[%s934] sm:$0xff]
        %v1064 = vld [vmem:[%s934 + $0x8] sm:$0xff]
        %v1065 = vld [vmem:[%s934 + $0x18] sm:$0xff]
        %v1066 = vld [vmem:[%s934 + $0x20] sm:$0xff]
        %v1067 = vld [vmem:[%s934 + $0x30] sm:$0xff]
        %v1068 = vld [vmem:[%s934 + $0x38] sm:$0xff]
        %v1069 = vld [vmem:[%s934 + $0x48] sm:$0xff]
        %v1070 = vld [vmem:[%s934 + $0x50] sm:$0xff]
        %v1071 = vld [vmem:[%s934 + $0x60] sm:$0xff]
        %v1072 = vld [vmem:[%s934 + $0x68] sm:$0xff]
        %v1073 = vld [vmem:[%s934 + $0x78] sm:$0xff]
        %v1074 = vld [vmem:[%s934 + $0x80] sm:$0xff]
        %v1075 = vld [vmem:[%s934 + $0x90] sm:$0xff]
        %v1076 = vld [vmem:[%s934 + $0x98] sm:$0xff]
        %v1077 = vld [vmem:[%s934 + $0xa8] sm:$0xff]
        %v1078 = vld [vmem:[%s934 + $0xb0] sm:$0xff]
        %v1079 = vld [vmem:[%s934 + $0xc0] sm:$0xff]
        %v1080 = vld [vmem:[%s934 + $0xc8] sm:$0xff]
        %v1081 = vld [vmem:[%s934 + $0xd8] sm:$0xff]
        %v1082 = vld [vmem:[%s934 + $0xe0] sm:$0xff]
        %v1083 = vld [vmem:[%s934 + $0xf0] sm:$0xff]
        %v1084 = vld [vmem:[%s934 + $0xf8] sm:$0xff]
        %v1085 = vld [vmem:[%s934 + $0x108] sm:$0xff]
        %v1086 = vld [vmem:[%s934 + $0x110] sm:$0xff]
        %v1087 = vld [vmem:[%s934 + $0x120] sm:$0xff]
        %v1088 = vld [vmem:[%s934 + $0x128] sm:$0xff]
        %v1089 = vld [vmem:[%s934 + $0x138] sm:$0xff]
        %v1090 = vld [vmem:[%s934 + $0x140] sm:$0xff]
        %v1091 = vld [vmem:[%s934 + $0x150] sm:$0xff]
        %v1092 = vld [vmem:[%s934 + $0x158] sm:$0xff]
        %v1093 = vld [vmem:[%s934 + $0x168] sm:$0xff]
        %v1094 = vld [vmem:[%s934 + $0x170] sm:$0xff]
        %v1095 = vld [vmem:[%s934 + $0x1] sm:$0xff]
        %v1096 = vld [vmem:[%s934 + $0x9] sm:$0xff]
        %v1097 = vld [vmem:[%s934 + $0x19] sm:$0xff]
        %v1098 = vld [vmem:[%s934 + $0x21] sm:$0xff]
        %v1099 = vld [vmem:[%s934 + $0x31] sm:$0xff]
        %v1100 = vld [vmem:[%s934 + $0x39] sm:$0xff]
        %v1101 = vld [vmem:[%s934 + $0x49] sm:$0xff]
        %v1102 = vld [vmem:[%s934 + $0x51] sm:$0xff]
        %v1103 = vld [vmem:[%s934 + $0x61] sm:$0xff]
        %v1104 = vld [vmem:[%s934 + $0x69] sm:$0xff]
        %v1105 = vld [vmem:[%s934 + $0x79] sm:$0xff]
        %v1106 = vld [vmem:[%s934 + $0x81] sm:$0xff]
        %v1107 = vld [vmem:[%s934 + $0x91] sm:$0xff]
        %v1108 = vld [vmem:[%s934 + $0x99] sm:$0xff]
        %v1109 = vld [vmem:[%s934 + $0xa9] sm:$0xff]
        %v1110 = vld [vmem:[%s934 + $0xb1] sm:$0xff]
        %v1111 = vld [vmem:[%s934 + $0xc1] sm:$0xff]
        %v1112 = vld [vmem:[%s934 + $0xc9] sm:$0xff]
        %v1113 = vld [vmem:[%s934 + $0xd9] sm:$0xff]
        %v1114 = vld [vmem:[%s934 + $0xe1] sm:$0xff]
        %v1115 = vld [vmem:[%s934 + $0xf1] sm:$0xff]
        %v1116 = vld [vmem:[%s934 + $0xf9] sm:$0xff]
        %v1117 = vld [vmem:[%s934 + $0x109] sm:$0xff]
        %v1118 = vld [vmem:[%s934 + $0x111] sm:$0xff]
        %v1119 = vld [vmem:[%s934 + $0x121] sm:$0xff]
        %v1120 = vld [vmem:[%s934 + $0x129] sm:$0xff]
        %v1121 = vld [vmem:[%s934 + $0x139] sm:$0xff]
        %v1122 = vld [vmem:[%s934 + $0x141] sm:$0xff]
        %v1123 = vld [vmem:[%s934 + $0x151] sm:$0xff]
        %v1124 = vld [vmem:[%s934 + $0x159] sm:$0xff]
        %v1125 = vld [vmem:[%s934 + $0x169] sm:$0xff]
        %v1126 = vld [vmem:[%s934 + $0x171] sm:$0xff]
        %v1127 = vld [vmem:[%s934 + $0x2] sm:$0xff]
        %v1128 = vld [vmem:[%s934 + $0xa] sm:$0xff]
        %v1129 = vld [vmem:[%s934 + $0x1a] sm:$0xff]
        %v1130 = vld [vmem:[%s934 + $0x22] sm:$0xff]
        %v1131 = vld [vmem:[%s934 + $0x32] sm:$0xff]
        %v1132 = vld [vmem:[%s934 + $0x3a] sm:$0xff]
        %v1133 = vld [vmem:[%s934 + $0x4a] sm:$0xff]
        %v1134 = vld [vmem:[%s934 + $0x52] sm:$0xff]
        %v1135 = vld [vmem:[%s934 + $0x62] sm:$0xff]
        %v1136 = vld [vmem:[%s934 + $0x6a] sm:$0xff]
        %v1137 = vld [vmem:[%s934 + $0x7a] sm:$0xff]
        %v1138 = vld [vmem:[%s934 + $0x82] sm:$0xff]
        %v1139 = vld [vmem:[%s934 + $0x92] sm:$0xff]
        %v1140 = vld [vmem:[%s934 + $0x9a] sm:$0xff]
        %v1141 = vld [vmem:[%s934 + $0xaa] sm:$0xff]
        %v1142 = vld [vmem:[%s934 + $0xb2] sm:$0xff]
        %v1143 = vld [vmem:[%s934 + $0xc2] sm:$0xff]
        %v1144 = vld [vmem:[%s934 + $0xca] sm:$0xff]
        %v1145 = vld [vmem:[%s934 + $0xda] sm:$0xff]
        %v1146 = vld [vmem:[%s934 + $0xe2] sm:$0xff]
        %v1147 = vld [vmem:[%s934 + $0xf2] sm:$0xff]
        %v1148 = vld [vmem:[%s934 + $0xfa] sm:$0xff]
        %v1149 = vld [vmem:[%s934 + $0x10a] sm:$0xff]
        %v1150 = vld [vmem:[%s934 + $0x112] sm:$0xff]
        %v1151 = vld [vmem:[%s934 + $0x122] sm:$0xff]
        %v1152 = vld [vmem:[%s934 + $0x12a] sm:$0xff]
        %v1153 = vld [vmem:[%s934 + $0x13a] sm:$0xff]
        %v1154 = vld [vmem:[%s934 + $0x142] sm:$0xff]
        %v1155 = vld [vmem:[%s934 + $0x152] sm:$0xff]
        %v1156 = vld [vmem:[%s934 + $0x15a] sm:$0xff]
        %v1157 = vld [vmem:[%s934 + $0x16a] sm:$0xff]
        %v1158 = vld [vmem:[%s934 + $0x172] sm:$0xff]
        %s1159 = scalar_lea.vmem [#allocation2], 48
        %v1160 = vld [vmem:[%s1159] sm:$0xff]
        %v1161 = vld [vmem:[%s1159 + $0x8] sm:$0xff]
        %v1162 = vld [vmem:[%s1159 + $0x18] sm:$0xff]
        %v1163 = vld [vmem:[%s1159 + $0x20] sm:$0xff]
        %v1164 = vld [vmem:[%s1159 + $0x30] sm:$0xff]
        %v1165 = vld [vmem:[%s1159 + $0x38] sm:$0xff]
        %v1166 = vld [vmem:[%s1159 + $0x48] sm:$0xff]
        %v1167 = vld [vmem:[%s1159 + $0x50] sm:$0xff]
        %v1168 = vld [vmem:[%s1159 + $0x60] sm:$0xff]
        %v1169 = vld [vmem:[%s1159 + $0x68] sm:$0xff]
        %v1170 = vld [vmem:[%s1159 + $0x78] sm:$0xff]
        %v1171 = vld [vmem:[%s1159 + $0x80] sm:$0xff]
        %v1172 = vld [vmem:[%s1159 + $0x90] sm:$0xff]
        %v1173 = vld [vmem:[%s1159 + $0x98] sm:$0xff]
        %v1174 = vld [vmem:[%s1159 + $0xa8] sm:$0xff]
        %v1175 = vld [vmem:[%s1159 + $0xb0] sm:$0xff]
        %v1176 = vld [vmem:[%s1159 + $0xc0] sm:$0xff]
        %v1177 = vld [vmem:[%s1159 + $0xc8] sm:$0xff]
        %v1178 = vld [vmem:[%s1159 + $0xd8] sm:$0xff]
        %v1179 = vld [vmem:[%s1159 + $0xe0] sm:$0xff]
        %v1180 = vld [vmem:[%s1159 + $0xf0] sm:$0xff]
        %v1181 = vld [vmem:[%s1159 + $0xf8] sm:$0xff]
        %v1182 = vld [vmem:[%s1159 + $0x108] sm:$0xff]
        %v1183 = vld [vmem:[%s1159 + $0x110] sm:$0xff]
        %v1184 = vld [vmem:[%s1159 + $0x120] sm:$0xff]
        %v1185 = vld [vmem:[%s1159 + $0x128] sm:$0xff]
        %v1186 = vld [vmem:[%s1159 + $0x138] sm:$0xff]
        %v1187 = vld [vmem:[%s1159 + $0x140] sm:$0xff]
        %v1188 = vld [vmem:[%s1159 + $0x150] sm:$0xff]
        %v1189 = vld [vmem:[%s1159 + $0x158] sm:$0xff]
        %v1190 = vld [vmem:[%s1159 + $0x168] sm:$0xff]
        %v1191 = vld [vmem:[%s1159 + $0x170] sm:$0xff]
        %v1192 = vld [vmem:[%s1159 + $0x1] sm:$0xff]
        %v1193 = vld [vmem:[%s1159 + $0x9] sm:$0xff]
        %v1194 = vld [vmem:[%s1159 + $0x19] sm:$0xff]
        %v1195 = vld [vmem:[%s1159 + $0x21] sm:$0xff]
        %v1196 = vld [vmem:[%s1159 + $0x31] sm:$0xff]
        %v1197 = vld [vmem:[%s1159 + $0x39] sm:$0xff]
        %v1198 = vld [vmem:[%s1159 + $0x49] sm:$0xff]
        %v1199 = vld [vmem:[%s1159 + $0x51] sm:$0xff]
        %v1200 = vld [vmem:[%s1159 + $0x61] sm:$0xff]
        %v1201 = vld [vmem:[%s1159 + $0x69] sm:$0xff]
        %v1202 = vld [vmem:[%s1159 + $0x79] sm:$0xff]
        %v1203 = vld [vmem:[%s1159 + $0x81] sm:$0xff]
        %v1204 = vld [vmem:[%s1159 + $0x91] sm:$0xff]
        %v1205 = vld [vmem:[%s1159 + $0x99] sm:$0xff]
        %v1206 = vld [vmem:[%s1159 + $0xa9] sm:$0xff]
        %v1207 = vld [vmem:[%s1159 + $0xb1] sm:$0xff]
        %v1208 = vld [vmem:[%s1159 + $0xc1] sm:$0xff]
        %v1209 = vld [vmem:[%s1159 + $0xc9] sm:$0xff]
        %v1210 = vld [vmem:[%s1159 + $0xd9] sm:$0xff]
        %v1211 = vld [vmem:[%s1159 + $0xe1] sm:$0xff]
        %v1212 = vld [vmem:[%s1159 + $0xf1] sm:$0xff]
        %v1213 = vld [vmem:[%s1159 + $0xf9] sm:$0xff]
        %v1214 = vld [vmem:[%s1159 + $0x109] sm:$0xff]
        %v1215 = vld [vmem:[%s1159 + $0x111] sm:$0xff]
        %v1216 = vld [vmem:[%s1159 + $0x121] sm:$0xff]
        %v1217 = vld [vmem:[%s1159 + $0x129] sm:$0xff]
        %v1218 = vld [vmem:[%s1159 + $0x139] sm:$0xff]
        %v1219 = vld [vmem:[%s1159 + $0x141] sm:$0xff]
        %v1220 = vld [vmem:[%s1159 + $0x151] sm:$0xff]
        %v1221 = vld [vmem:[%s1159 + $0x159] sm:$0xff]
        %v1222 = vld [vmem:[%s1159 + $0x169] sm:$0xff]
        %v1223 = vld [vmem:[%s1159 + $0x171] sm:$0xff]
        %v1224 = vld [vmem:[%s1159 + $0x2] sm:$0xff]
        %v1225 = vld [vmem:[%s1159 + $0xa] sm:$0xff]
        %v1226 = vld [vmem:[%s1159 + $0x1a] sm:$0xff]
        %v1227 = vld [vmem:[%s1159 + $0x22] sm:$0xff]
        %v1228 = vld [vmem:[%s1159 + $0x32] sm:$0xff]
        %v1229 = vld [vmem:[%s1159 + $0x3a] sm:$0xff]
        %v1230 = vld [vmem:[%s1159 + $0x4a] sm:$0xff]
        %v1231 = vld [vmem:[%s1159 + $0x52] sm:$0xff]
        %v1232 = vld [vmem:[%s1159 + $0x62] sm:$0xff]
        %v1233 = vld [vmem:[%s1159 + $0x6a] sm:$0xff]
        %v1234 = vld [vmem:[%s1159 + $0x7a] sm:$0xff]
        %v1235 = vld [vmem:[%s1159 + $0x82] sm:$0xff]
        %v1236 = vld [vmem:[%s1159 + $0x92] sm:$0xff]
        %v1237 = vld [vmem:[%s1159 + $0x9a] sm:$0xff]
        %v1238 = vld [vmem:[%s1159 + $0xaa] sm:$0xff]
        %v1239 = vld [vmem:[%s1159 + $0xb2] sm:$0xff]
        %v1240 = vld [vmem:[%s1159 + $0xc2] sm:$0xff]
        %v1241 = vld [vmem:[%s1159 + $0xca] sm:$0xff]
        %v1242 = vld [vmem:[%s1159 + $0xda] sm:$0xff]
        %v1243 = vld [vmem:[%s1159 + $0xe2] sm:$0xff]
        %v1244 = vld [vmem:[%s1159 + $0xf2] sm:$0xff]
        %v1245 = vld [vmem:[%s1159 + $0xfa] sm:$0xff]
        %v1246 = vld [vmem:[%s1159 + $0x10a] sm:$0xff]
        %v1247 = vld [vmem:[%s1159 + $0x112] sm:$0xff]
        %v1248 = vld [vmem:[%s1159 + $0x122] sm:$0xff]
        %v1249 = vld [vmem:[%s1159 + $0x12a] sm:$0xff]
        %v1250 = vld [vmem:[%s1159 + $0x13a] sm:$0xff]
        %v1251 = vld [vmem:[%s1159 + $0x142] sm:$0xff]
        %v1252 = vld [vmem:[%s1159 + $0x152] sm:$0xff]
        %v1253 = vld [vmem:[%s1159 + $0x15a] sm:$0xff]
        %v1254 = vld [vmem:[%s1159 + $0x16a] sm:$0xff]
        %v1255 = vld [vmem:[%s1159 + $0x172] sm:$0xff]
        %1288 = vrot.lane.b32.xlu0 %v999, 8
        %v1289 = vpop.permute.xlu0 %1288
        %1290 = vrot.lane.b32.xlu0 %v1000, 8
        %v1291 = vpop.permute.xlu0 %1290
        %1292 = vrot.lane.b32.xlu0 %v1001, 8
        %v1293 = vpop.permute.xlu0 %1292
        %1294 = vrot.lane.b32.xlu0 %v1002, 8
        %v1295 = vpop.permute.xlu0 %1294
        %1296 = vrot.lane.b32.xlu0 %v1003, 8
        %v1297 = vpop.permute.xlu0 %1296
        %1298 = vrot.lane.b32.xlu0 %v1004, 8
        %v1299 = vpop.permute.xlu0 %1298
        %1300 = vrot.lane.b32.xlu0 %v1005, 8
        %v1301 = vpop.permute.xlu0 %1300
        %1302 = vrot.lane.b32.xlu0 %v1006, 8
        %v1303 = vpop.permute.xlu0 %1302
        %1304 = vrot.lane.b32.xlu0 %v1007, 8
        %v1305 = vpop.permute.xlu0 %1304
        %1306 = vrot.lane.b32.xlu0 %v1008, 8
        %v1307 = vpop.permute.xlu0 %1306
        %1308 = vrot.lane.b32.xlu0 %v1009, 8
        %v1309 = vpop.permute.xlu0 %1308
        %1310 = vrot.lane.b32.xlu0 %v1010, 8
        %v1311 = vpop.permute.xlu0 %1310
        %1312 = vrot.lane.b32.xlu0 %v1011, 8
        %v1313 = vpop.permute.xlu0 %1312
        %1314 = vrot.lane.b32.xlu0 %v1012, 8
        %v1315 = vpop.permute.xlu0 %1314
        %1316 = vrot.lane.b32.xlu0 %v1013, 8
        %v1317 = vpop.permute.xlu0 %1316
        %1318 = vrot.lane.b32.xlu0 %v1014, 8
        %v1319 = vpop.permute.xlu0 %1318
        %1320 = vrot.lane.b32.xlu0 %v1015, 8
        %v1321 = vpop.permute.xlu0 %1320
        %1322 = vrot.lane.b32.xlu0 %v1016, 8
        %v1323 = vpop.permute.xlu0 %1322
        %1324 = vrot.lane.b32.xlu0 %v1017, 8
        %v1325 = vpop.permute.xlu0 %1324
        %1326 = vrot.lane.b32.xlu0 %v1018, 8
        %v1327 = vpop.permute.xlu0 %1326
        %1328 = vrot.lane.b32.xlu0 %v1019, 8
        %v1329 = vpop.permute.xlu0 %1328
        %1330 = vrot.lane.b32.xlu0 %v1020, 8
        %v1331 = vpop.permute.xlu0 %1330
        %1332 = vrot.lane.b32.xlu0 %v1021, 8
        %v1333 = vpop.permute.xlu0 %1332
        %1334 = vrot.lane.b32.xlu0 %v1022, 8
        %v1335 = vpop.permute.xlu0 %1334
        %1336 = vrot.lane.b32.xlu0 %v1023, 8
        %v1337 = vpop.permute.xlu0 %1336
        %1338 = vrot.lane.b32.xlu0 %v1024, 8
        %v1339 = vpop.permute.xlu0 %1338
        %1340 = vrot.lane.b32.xlu0 %v1025, 8
        %v1341 = vpop.permute.xlu0 %1340
        %1342 = vrot.lane.b32.xlu0 %v1026, 8
        %v1343 = vpop.permute.xlu0 %1342
        %1344 = vrot.lane.b32.xlu0 %v1027, 8
        %v1345 = vpop.permute.xlu0 %1344
        %1346 = vrot.lane.b32.xlu0 %v1028, 8
        %v1347 = vpop.permute.xlu0 %1346
        %1348 = vrot.lane.b32.xlu0 %v1029, 8
        %v1349 = vpop.permute.xlu0 %1348
        %1350 = vrot.lane.b32.xlu0 %v1030, 8
        %v1351 = vpop.permute.xlu0 %1350
        %1416 = vrot.lane.b32.xlu0 %v1031, 16
        %v1417 = vpop.permute.xlu0 %1416
        %1418 = vrot.lane.b32.xlu0 %v1032, 16
        %v1419 = vpop.permute.xlu0 %1418
        %1420 = vrot.lane.b32.xlu0 %v1033, 16
        %v1421 = vpop.permute.xlu0 %1420
        %1422 = vrot.lane.b32.xlu0 %v1034, 16
        %v1423 = vpop.permute.xlu0 %1422
        %1424 = vrot.lane.b32.xlu0 %v1035, 16
        %v1425 = vpop.permute.xlu0 %1424
        %1426 = vrot.lane.b32.xlu0 %v1036, 16
        %v1427 = vpop.permute.xlu0 %1426
        %1428 = vrot.lane.b32.xlu0 %v1037, 16
        %v1429 = vpop.permute.xlu0 %1428
        %1430 = vrot.lane.b32.xlu0 %v1038, 16
        %v1431 = vpop.permute.xlu0 %1430
        %1432 = vrot.lane.b32.xlu0 %v1039, 16
        %v1433 = vpop.permute.xlu0 %1432
        %1434 = vrot.lane.b32.xlu0 %v1040, 16
        %v1435 = vpop.permute.xlu0 %1434
        %1436 = vrot.lane.b32.xlu0 %v1041, 16
        %v1437 = vpop.permute.xlu0 %1436
        %1438 = vrot.lane.b32.xlu0 %v1042, 16
        %v1439 = vpop.permute.xlu0 %1438
        %1440 = vrot.lane.b32.xlu0 %v1043, 16
        %v1441 = vpop.permute.xlu0 %1440
        %1442 = vrot.lane.b32.xlu0 %v1044, 16
        %v1443 = vpop.permute.xlu0 %1442
        %1444 = vrot.lane.b32.xlu0 %v1045, 16
        %v1445 = vpop.permute.xlu0 %1444
        %1446 = vrot.lane.b32.xlu0 %v1046, 16
        %v1447 = vpop.permute.xlu0 %1446
        %1448 = vrot.lane.b32.xlu0 %v1047, 16
        %v1449 = vpop.permute.xlu0 %1448
        %1450 = vrot.lane.b32.xlu0 %v1048, 16
        %v1451 = vpop.permute.xlu0 %1450
        %1452 = vrot.lane.b32.xlu0 %v1049, 16
        %v1453 = vpop.permute.xlu0 %1452
        %1454 = vrot.lane.b32.xlu0 %v1050, 16
        %v1455 = vpop.permute.xlu0 %1454
        %1456 = vrot.lane.b32.xlu0 %v1051, 16
        %v1457 = vpop.permute.xlu0 %1456
        %1458 = vrot.lane.b32.xlu0 %v1052, 16
        %v1459 = vpop.permute.xlu0 %1458
        %1460 = vrot.lane.b32.xlu0 %v1053, 16
        %v1461 = vpop.permute.xlu0 %1460
        %1462 = vrot.lane.b32.xlu0 %v1054, 16
        %v1463 = vpop.permute.xlu0 %1462
        %1464 = vrot.lane.b32.xlu0 %v1055, 16
        %v1465 = vpop.permute.xlu0 %1464
        %1466 = vrot.lane.b32.xlu0 %v1056, 16
        %v1467 = vpop.permute.xlu0 %1466
        %1468 = vrot.lane.b32.xlu0 %v1057, 16
        %v1469 = vpop.permute.xlu0 %1468
        %1470 = vrot.lane.b32.xlu0 %v1058, 16
        %v1471 = vpop.permute.xlu0 %1470
        %1472 = vrot.lane.b32.xlu0 %v1059, 16
        %v1473 = vpop.permute.xlu0 %1472
        %1474 = vrot.lane.b32.xlu0 %v1060, 16
        %v1475 = vpop.permute.xlu0 %1474
        %1476 = vrot.lane.b32.xlu0 %v1061, 16
        %v1477 = vpop.permute.xlu0 %1476
        %1478 = vrot.lane.b32.xlu0 %v1062, 16
        %v1479 = vpop.permute.xlu0 %1478
        %1544 = vrot.lane.b32.xlu0 %v1063, 24
        %v1545 = vpop.permute.xlu0 %1544
        %1546 = vrot.lane.b32.xlu0 %v1064, 24
        %v1547 = vpop.permute.xlu0 %1546
        %1548 = vrot.lane.b32.xlu0 %v1065, 24
        %v1549 = vpop.permute.xlu0 %1548
        %1550 = vrot.lane.b32.xlu0 %v1066, 24
        %v1551 = vpop.permute.xlu0 %1550
        %1552 = vrot.lane.b32.xlu0 %v1067, 24
        %v1553 = vpop.permute.xlu0 %1552
        %1554 = vrot.lane.b32.xlu0 %v1068, 24
        %v1555 = vpop.permute.xlu0 %1554
        %1556 = vrot.lane.b32.xlu0 %v1069, 24
        %v1557 = vpop.permute.xlu0 %1556
        %1558 = vrot.lane.b32.xlu0 %v1070, 24
        %v1559 = vpop.permute.xlu0 %1558
        %1560 = vrot.lane.b32.xlu0 %v1071, 24
        %v1561 = vpop.permute.xlu0 %1560
        %1562 = vrot.lane.b32.xlu0 %v1072, 24
        %v1563 = vpop.permute.xlu0 %1562
        %1564 = vrot.lane.b32.xlu0 %v1073, 24
        %v1565 = vpop.permute.xlu0 %1564
        %1566 = vrot.lane.b32.xlu0 %v1074, 24
        %v1567 = vpop.permute.xlu0 %1566
        %1568 = vrot.lane.b32.xlu0 %v1075, 24
        %v1569 = vpop.permute.xlu0 %1568
        %1570 = vrot.lane.b32.xlu0 %v1076, 24
        %v1571 = vpop.permute.xlu0 %1570
        %1572 = vrot.lane.b32.xlu0 %v1077, 24
        %v1573 = vpop.permute.xlu0 %1572
        %1574 = vrot.lane.b32.xlu0 %v1078, 24
        %v1575 = vpop.permute.xlu0 %1574
        %1576 = vrot.lane.b32.xlu0 %v1079, 24
        %v1577 = vpop.permute.xlu0 %1576
        %1578 = vrot.lane.b32.xlu0 %v1080, 24
        %v1579 = vpop.permute.xlu0 %1578
        %1580 = vrot.lane.b32.xlu0 %v1081, 24
        %v1581 = vpop.permute.xlu0 %1580
        %1582 = vrot.lane.b32.xlu0 %v1082, 24
        %v1583 = vpop.permute.xlu0 %1582
        %1584 = vrot.lane.b32.xlu0 %v1083, 24
        %v1585 = vpop.permute.xlu0 %1584
        %1586 = vrot.lane.b32.xlu0 %v1084, 24
        %v1587 = vpop.permute.xlu0 %1586
        %1588 = vrot.lane.b32.xlu0 %v1085, 24
        %v1589 = vpop.permute.xlu0 %1588
        %1590 = vrot.lane.b32.xlu0 %v1086, 24
        %v1591 = vpop.permute.xlu0 %1590
        %1592 = vrot.lane.b32.xlu0 %v1087, 24
        %v1593 = vpop.permute.xlu0 %1592
        %1594 = vrot.lane.b32.xlu0 %v1088, 24
        %v1595 = vpop.permute.xlu0 %1594
        %1596 = vrot.lane.b32.xlu0 %v1089, 24
        %v1597 = vpop.permute.xlu0 %1596
        %1598 = vrot.lane.b32.xlu0 %v1090, 24
        %v1599 = vpop.permute.xlu0 %1598
        %1600 = vrot.lane.b32.xlu0 %v1091, 24
        %v1601 = vpop.permute.xlu0 %1600
        %1602 = vrot.lane.b32.xlu0 %v1092, 24
        %v1603 = vpop.permute.xlu0 %1602
        %1604 = vrot.lane.b32.xlu0 %v1093, 24
        %v1605 = vpop.permute.xlu0 %1604
        %1606 = vrot.lane.b32.xlu0 %v1094, 24
        %v1607 = vpop.permute.xlu0 %1606
        %1672 = vrot.lane.b32.xlu0 %v1095, 32
        %v1673 = vpop.permute.xlu0 %1672
        %1674 = vrot.lane.b32.xlu0 %v1096, 32
        %v1675 = vpop.permute.xlu0 %1674
        %1676 = vrot.lane.b32.xlu0 %v1097, 32
        %v1677 = vpop.permute.xlu0 %1676
        %1678 = vrot.lane.b32.xlu0 %v1098, 32
        %v1679 = vpop.permute.xlu0 %1678
        %1680 = vrot.lane.b32.xlu0 %v1099, 32
        %v1681 = vpop.permute.xlu0 %1680
        %1682 = vrot.lane.b32.xlu0 %v1100, 32
        %v1683 = vpop.permute.xlu0 %1682
        %1684 = vrot.lane.b32.xlu0 %v1101, 32
        %v1685 = vpop.permute.xlu0 %1684
        %1686 = vrot.lane.b32.xlu0 %v1102, 32
        %v1687 = vpop.permute.xlu0 %1686
        %1688 = vrot.lane.b32.xlu0 %v1103, 32
        %v1689 = vpop.permute.xlu0 %1688
        %1690 = vrot.lane.b32.xlu0 %v1104, 32
        %v1691 = vpop.permute.xlu0 %1690
        %1692 = vrot.lane.b32.xlu0 %v1105, 32
        %v1693 = vpop.permute.xlu0 %1692
        %1694 = vrot.lane.b32.xlu0 %v1106, 32
        %v1695 = vpop.permute.xlu0 %1694
        %1696 = vrot.lane.b32.xlu0 %v1107, 32
        %v1697 = vpop.permute.xlu0 %1696
        %1698 = vrot.lane.b32.xlu0 %v1108, 32
        %v1699 = vpop.permute.xlu0 %1698
        %1700 = vrot.lane.b32.xlu0 %v1109, 32
        %v1701 = vpop.permute.xlu0 %1700
        %1702 = vrot.lane.b32.xlu0 %v1110, 32
        %v1703 = vpop.permute.xlu0 %1702
        %1704 = vrot.lane.b32.xlu0 %v1111, 32
        %v1705 = vpop.permute.xlu0 %1704
        %1706 = vrot.lane.b32.xlu0 %v1112, 32
        %v1707 = vpop.permute.xlu0 %1706
        %1708 = vrot.lane.b32.xlu0 %v1113, 32
        %v1709 = vpop.permute.xlu0 %1708
        %1710 = vrot.lane.b32.xlu0 %v1114, 32
        %v1711 = vpop.permute.xlu0 %1710
        %1712 = vrot.lane.b32.xlu0 %v1115, 32
        %v1713 = vpop.permute.xlu0 %1712
        %1714 = vrot.lane.b32.xlu0 %v1116, 32
        %v1715 = vpop.permute.xlu0 %1714
        %1716 = vrot.lane.b32.xlu0 %v1117, 32
        %v1717 = vpop.permute.xlu0 %1716
        %1718 = vrot.lane.b32.xlu0 %v1118, 32
        %v1719 = vpop.permute.xlu0 %1718
        %1720 = vrot.lane.b32.xlu0 %v1119, 32
        %v1721 = vpop.permute.xlu0 %1720
        %1722 = vrot.lane.b32.xlu0 %v1120, 32
        %v1723 = vpop.permute.xlu0 %1722
        %1724 = vrot.lane.b32.xlu0 %v1121, 32
        %v1725 = vpop.permute.xlu0 %1724
        %1726 = vrot.lane.b32.xlu0 %v1122, 32
        %v1727 = vpop.permute.xlu0 %1726
        %1728 = vrot.lane.b32.xlu0 %v1123, 32
        %v1729 = vpop.permute.xlu0 %1728
        %1730 = vrot.lane.b32.xlu0 %v1124, 32
        %v1731 = vpop.permute.xlu0 %1730
        %1732 = vrot.lane.b32.xlu0 %v1125, 32
        %v1733 = vpop.permute.xlu0 %1732
        %1734 = vrot.lane.b32.xlu0 %v1126, 32
        %v1735 = vpop.permute.xlu0 %1734
        %1800 = vrot.lane.b32.xlu0 %v1127, 40
        %v1801 = vpop.permute.xlu0 %1800
        %1802 = vrot.lane.b32.xlu0 %v1128, 40
        %v1803 = vpop.permute.xlu0 %1802
        %1804 = vrot.lane.b32.xlu0 %v1129, 40
        %v1805 = vpop.permute.xlu0 %1804
        %1806 = vrot.lane.b32.xlu0 %v1130, 40
        %v1807 = vpop.permute.xlu0 %1806
        %1808 = vrot.lane.b32.xlu0 %v1131, 40
        %v1809 = vpop.permute.xlu0 %1808
        %1810 = vrot.lane.b32.xlu0 %v1132, 40
        %v1811 = vpop.permute.xlu0 %1810
        %1812 = vrot.lane.b32.xlu0 %v1133, 40
        %v1813 = vpop.permute.xlu0 %1812
        %1814 = vrot.lane.b32.xlu0 %v1134, 40
        %v1815 = vpop.permute.xlu0 %1814
        %1816 = vrot.lane.b32.xlu0 %v1135, 40
        %v1817 = vpop.permute.xlu0 %1816
        %1818 = vrot.lane.b32.xlu0 %v1136, 40
        %v1819 = vpop.permute.xlu0 %1818
        %1820 = vrot.lane.b32.xlu0 %v1137, 40
        %v1821 = vpop.permute.xlu0 %1820
        %1822 = vrot.lane.b32.xlu0 %v1138, 40
        %v1823 = vpop.permute.xlu0 %1822
        %1824 = vrot.lane.b32.xlu0 %v1139, 40
        %v1825 = vpop.permute.xlu0 %1824
        %1826 = vrot.lane.b32.xlu0 %v1140, 40
        %v1827 = vpop.permute.xlu0 %1826
        %1828 = vrot.lane.b32.xlu0 %v1141, 40
        %v1829 = vpop.permute.xlu0 %1828
        %1830 = vrot.lane.b32.xlu0 %v1142, 40
        %v1831 = vpop.permute.xlu0 %1830
        %1832 = vrot.lane.b32.xlu0 %v1143, 40
        %v1833 = vpop.permute.xlu0 %1832
        %1834 = vrot.lane.b32.xlu0 %v1144, 40
        %v1835 = vpop.permute.xlu0 %1834
        %1836 = vrot.lane.b32.xlu0 %v1145, 40
        %v1837 = vpop.permute.xlu0 %1836
        %1838 = vrot.lane.b32.xlu0 %v1146, 40
        %v1839 = vpop.permute.xlu0 %1838
        %1840 = vrot.lane.b32.xlu0 %v1147, 40
        %v1841 = vpop.permute.xlu0 %1840
        %1842 = vrot.lane.b32.xlu0 %v1148, 40
        %v1843 = vpop.permute.xlu0 %1842
        %1844 = vrot.lane.b32.xlu0 %v1149, 40
        %v1845 = vpop.permute.xlu0 %1844
        %1846 = vrot.lane.b32.xlu0 %v1150, 40
        %v1847 = vpop.permute.xlu0 %1846
        %1848 = vrot.lane.b32.xlu0 %v1151, 40
        %v1849 = vpop.permute.xlu0 %1848
        %1850 = vrot.lane.b32.xlu0 %v1152, 40
        %v1851 = vpop.permute.xlu0 %1850
        %1852 = vrot.lane.b32.xlu0 %v1153, 40
        %v1853 = vpop.permute.xlu0 %1852
        %1854 = vrot.lane.b32.xlu0 %v1154, 40
        %v1855 = vpop.permute.xlu0 %1854
        %1856 = vrot.lane.b32.xlu0 %v1155, 40
        %v1857 = vpop.permute.xlu0 %1856
        %1858 = vrot.lane.b32.xlu0 %v1156, 40
        %v1859 = vpop.permute.xlu0 %1858
        %1860 = vrot.lane.b32.xlu0 %v1157, 40
        %v1861 = vpop.permute.xlu0 %1860
        %1862 = vrot.lane.b32.xlu0 %v1158, 40
        %v1863 = vpop.permute.xlu0 %1862
        %1928 = vrot.lane.b32.xlu0 %v1160, 48
        %v1929 = vpop.permute.xlu0 %1928
        %1930 = vrot.lane.b32.xlu0 %v1161, 48
        %v1931 = vpop.permute.xlu0 %1930
        %1932 = vrot.lane.b32.xlu0 %v1162, 48
        %v1933 = vpop.permute.xlu0 %1932
        %1934 = vrot.lane.b32.xlu0 %v1163, 48
        %v1935 = vpop.permute.xlu0 %1934
        %1936 = vrot.lane.b32.xlu0 %v1164, 48
        %v1937 = vpop.permute.xlu0 %1936
        %1938 = vrot.lane.b32.xlu0 %v1165, 48
        %v1939 = vpop.permute.xlu0 %1938
        %1940 = vrot.lane.b32.xlu0 %v1166, 48
        %v1941 = vpop.permute.xlu0 %1940
        %1942 = vrot.lane.b32.xlu0 %v1167, 48
        %v1943 = vpop.permute.xlu0 %1942
        %1944 = vrot.lane.b32.xlu0 %v1168, 48
        %v1945 = vpop.permute.xlu0 %1944
        %1946 = vrot.lane.b32.xlu0 %v1169, 48
        %v1947 = vpop.permute.xlu0 %1946
        %1948 = vrot.lane.b32.xlu0 %v1170, 48
        %v1949 = vpop.permute.xlu0 %1948
        %1950 = vrot.lane.b32.xlu0 %v1171, 48
        %v1951 = vpop.permute.xlu0 %1950
        %1952 = vrot.lane.b32.xlu0 %v1172, 48
        %v1953 = vpop.permute.xlu0 %1952
        %1954 = vrot.lane.b32.xlu0 %v1173, 48
        %v1955 = vpop.permute.xlu0 %1954
        %1956 = vrot.lane.b32.xlu0 %v1174, 48
        %v1957 = vpop.permute.xlu0 %1956
        %1958 = vrot.lane.b32.xlu0 %v1175, 48
        %v1959 = vpop.permute.xlu0 %1958
        %1960 = vrot.lane.b32.xlu0 %v1176, 48
        %v1961 = vpop.permute.xlu0 %1960
        %1962 = vrot.lane.b32.xlu0 %v1177, 48
        %v1963 = vpop.permute.xlu0 %1962
        %1964 = vrot.lane.b32.xlu0 %v1178, 48
        %v1965 = vpop.permute.xlu0 %1964
        %1966 = vrot.lane.b32.xlu0 %v1179, 48
        %v1967 = vpop.permute.xlu0 %1966
        %1968 = vrot.lane.b32.xlu0 %v1180, 48
        %v1969 = vpop.permute.xlu0 %1968
        %1970 = vrot.lane.b32.xlu0 %v1181, 48
        %v1971 = vpop.permute.xlu0 %1970
        %1972 = vrot.lane.b32.xlu0 %v1182, 48
        %v1973 = vpop.permute.xlu0 %1972
        %1974 = vrot.lane.b32.xlu0 %v1183, 48
        %v1975 = vpop.permute.xlu0 %1974
        %1976 = vrot.lane.b32.xlu0 %v1184, 48
        %v1977 = vpop.permute.xlu0 %1976
        %1978 = vrot.lane.b32.xlu0 %v1185, 48
        %v1979 = vpop.permute.xlu0 %1978
        %1980 = vrot.lane.b32.xlu0 %v1186, 48
        %v1981 = vpop.permute.xlu0 %1980
        %1982 = vrot.lane.b32.xlu0 %v1187, 48
        %v1983 = vpop.permute.xlu0 %1982
        %1984 = vrot.lane.b32.xlu0 %v1188, 48
        %v1985 = vpop.permute.xlu0 %1984
        %1986 = vrot.lane.b32.xlu0 %v1189, 48
        %v1987 = vpop.permute.xlu0 %1986
        %1988 = vrot.lane.b32.xlu0 %v1190, 48
        %v1989 = vpop.permute.xlu0 %1988
        %1990 = vrot.lane.b32.xlu0 %v1191, 48
        %v1991 = vpop.permute.xlu0 %1990
        %2056 = vrot.lane.b32.xlu0 %v1192, 56
        %v2057 = vpop.permute.xlu0 %2056
        %2058 = vrot.lane.b32.xlu0 %v1193, 56
        %v2059 = vpop.permute.xlu0 %2058
        %2060 = vrot.lane.b32.xlu0 %v1194, 56
        %v2061 = vpop.permute.xlu0 %2060
        %2062 = vrot.lane.b32.xlu0 %v1195, 56
        %v2063 = vpop.permute.xlu0 %2062
        %2064 = vrot.lane.b32.xlu0 %v1196, 56
        %v2065 = vpop.permute.xlu0 %2064
        %2066 = vrot.lane.b32.xlu0 %v1197, 56
        %v2067 = vpop.permute.xlu0 %2066
        %2068 = vrot.lane.b32.xlu0 %v1198, 56
        %v2069 = vpop.permute.xlu0 %2068
        %2070 = vrot.lane.b32.xlu0 %v1199, 56
        %v2071 = vpop.permute.xlu0 %2070
        %2072 = vrot.lane.b32.xlu0 %v1200, 56
        %v2073 = vpop.permute.xlu0 %2072
        %2074 = vrot.lane.b32.xlu0 %v1201, 56
        %v2075 = vpop.permute.xlu0 %2074
        %2076 = vrot.lane.b32.xlu0 %v1202, 56
        %v2077 = vpop.permute.xlu0 %2076
        %2078 = vrot.lane.b32.xlu0 %v1203, 56
        %v2079 = vpop.permute.xlu0 %2078
        %2080 = vrot.lane.b32.xlu0 %v1204, 56
        %v2081 = vpop.permute.xlu0 %2080
        %2082 = vrot.lane.b32.xlu0 %v1205, 56
        %v2083 = vpop.permute.xlu0 %2082
        %2084 = vrot.lane.b32.xlu0 %v1206, 56
        %v2085 = vpop.permute.xlu0 %2084
        %2086 = vrot.lane.b32.xlu0 %v1207, 56
        %v2087 = vpop.permute.xlu0 %2086
        %2088 = vrot.lane.b32.xlu0 %v1208, 56
        %v2089 = vpop.permute.xlu0 %2088
        %2090 = vrot.lane.b32.xlu0 %v1209, 56
        %v2091 = vpop.permute.xlu0 %2090
        %2092 = vrot.lane.b32.xlu0 %v1210, 56
        %v2093 = vpop.permute.xlu0 %2092
        %2094 = vrot.lane.b32.xlu0 %v1211, 56
        %v2095 = vpop.permute.xlu0 %2094
        %2096 = vrot.lane.b32.xlu0 %v1212, 56
        %v2097 = vpop.permute.xlu0 %2096
        %2098 = vrot.lane.b32.xlu0 %v1213, 56
        %v2099 = vpop.permute.xlu0 %2098
        %2100 = vrot.lane.b32.xlu0 %v1214, 56
        %v2101 = vpop.permute.xlu0 %2100
        %2102 = vrot.lane.b32.xlu0 %v1215, 56
        %v2103 = vpop.permute.xlu0 %2102
        %2104 = vrot.lane.b32.xlu0 %v1216, 56
        %v2105 = vpop.permute.xlu0 %2104
        %2106 = vrot.lane.b32.xlu0 %v1217, 56
        %v2107 = vpop.permute.xlu0 %2106
        %2108 = vrot.lane.b32.xlu0 %v1218, 56
        %v2109 = vpop.permute.xlu0 %2108
        %2110 = vrot.lane.b32.xlu0 %v1219, 56
        %v2111 = vpop.permute.xlu0 %2110
        %2112 = vrot.lane.b32.xlu0 %v1220, 56
        %v2113 = vpop.permute.xlu0 %2112
        %2114 = vrot.lane.b32.xlu0 %v1221, 56
        %v2115 = vpop.permute.xlu0 %2114
        %2116 = vrot.lane.b32.xlu0 %v1222, 56
        %v2117 = vpop.permute.xlu0 %2116
        %2118 = vrot.lane.b32.xlu0 %v1223, 56
        %v2119 = vpop.permute.xlu0 %2118
        %2184 = vrot.lane.b32.xlu0 %v1224, 64
        %v2185 = vpop.permute.xlu0 %2184
        %2186 = vrot.lane.b32.xlu0 %v1225, 64
        %v2187 = vpop.permute.xlu0 %2186
        %2188 = vrot.lane.b32.xlu0 %v1226, 64
        %v2189 = vpop.permute.xlu0 %2188
        %2190 = vrot.lane.b32.xlu0 %v1227, 64
        %v2191 = vpop.permute.xlu0 %2190
        %2192 = vrot.lane.b32.xlu0 %v1228, 64
        %v2193 = vpop.permute.xlu0 %2192
        %2194 = vrot.lane.b32.xlu0 %v1229, 64
        %v2195 = vpop.permute.xlu0 %2194
        %2196 = vrot.lane.b32.xlu0 %v1230, 64
        %v2197 = vpop.permute.xlu0 %2196
        %2198 = vrot.lane.b32.xlu0 %v1231, 64
        %v2199 = vpop.permute.xlu0 %2198
        %2200 = vrot.lane.b32.xlu0 %v1232, 64
        %v2201 = vpop.permute.xlu0 %2200
        %2202 = vrot.lane.b32.xlu0 %v1233, 64
        %v2203 = vpop.permute.xlu0 %2202
        %2204 = vrot.lane.b32.xlu0 %v1234, 64
        %v2205 = vpop.permute.xlu0 %2204
        %2206 = vrot.lane.b32.xlu0 %v1235, 64
        %v2207 = vpop.permute.xlu0 %2206
        %2208 = vrot.lane.b32.xlu0 %v1236, 64
        %v2209 = vpop.permute.xlu0 %2208
        %2210 = vrot.lane.b32.xlu0 %v1237, 64
        %v2211 = vpop.permute.xlu0 %2210
        %2212 = vrot.lane.b32.xlu0 %v1238, 64
        %v2213 = vpop.permute.xlu0 %2212
        %2214 = vrot.lane.b32.xlu0 %v1239, 64
        %v2215 = vpop.permute.xlu0 %2214
        %2216 = vrot.lane.b32.xlu0 %v1240, 64
        %v2217 = vpop.permute.xlu0 %2216
        %2218 = vrot.lane.b32.xlu0 %v1241, 64
        %v2219 = vpop.permute.xlu0 %2218
        %2220 = vrot.lane.b32.xlu0 %v1242, 64
        %v2221 = vpop.permute.xlu0 %2220
        %2222 = vrot.lane.b32.xlu0 %v1243, 64
        %v2223 = vpop.permute.xlu0 %2222
        %2224 = vrot.lane.b32.xlu0 %v1244, 64
        %v2225 = vpop.permute.xlu0 %2224
        %2226 = vrot.lane.b32.xlu0 %v1245, 64
        %v2227 = vpop.permute.xlu0 %2226
        %2228 = vrot.lane.b32.xlu0 %v1246, 64
        %v2229 = vpop.permute.xlu0 %2228
        %2230 = vrot.lane.b32.xlu0 %v1247, 64
        %v2231 = vpop.permute.xlu0 %2230
        %2232 = vrot.lane.b32.xlu0 %v1248, 64
        %v2233 = vpop.permute.xlu0 %2232
        %2234 = vrot.lane.b32.xlu0 %v1249, 64
        %v2235 = vpop.permute.xlu0 %2234
        %2236 = vrot.lane.b32.xlu0 %v1250, 64
        %v2237 = vpop.permute.xlu0 %2236
        %2238 = vrot.lane.b32.xlu0 %v1251, 64
        %v2239 = vpop.permute.xlu0 %2238
        %2240 = vrot.lane.b32.xlu0 %v1252, 64
        %v2241 = vpop.permute.xlu0 %2240
        %2242 = vrot.lane.b32.xlu0 %v1253, 64
        %v2243 = vpop.permute.xlu0 %2242
        %2244 = vrot.lane.b32.xlu0 %v1254, 64
        %v2245 = vpop.permute.xlu0 %2244
        %2246 = vrot.lane.b32.xlu0 %v1255, 64
        %v2247 = vpop.permute.xlu0 %2246
        %v2280 = vsel %vm587, %v967, %v1289
        %v2281 = vsel %vm587, %v968, %v1291
        %v2282 = vsel %vm587, %v969, %v1293
        %v2283 = vsel %vm587, %v970, %v1295
        %v2284 = vsel %vm587, %v971, %v1297
        %v2285 = vsel %vm587, %v972, %v1299
        %v2286 = vsel %vm587, %v973, %v1301
        %v2287 = vsel %vm587, %v974, %v1303
        %v2288 = vsel %vm587, %v975, %v1305
        %v2289 = vsel %vm587, %v976, %v1307
        %v2290 = vsel %vm587, %v977, %v1309
        %v2291 = vsel %vm587, %v978, %v1311
        %v2292 = vsel %vm587, %v979, %v1313
        %v2293 = vsel %vm587, %v980, %v1315
        %v2294 = vsel %vm587, %v981, %v1317
        %v2295 = vsel %vm587, %v982, %v1319
        %v2296 = vsel %vm587, %v983, %v1321
        %v2297 = vsel %vm587, %v984, %v1323
        %v2298 = vsel %vm587, %v985, %v1325
        %v2299 = vsel %vm587, %v986, %v1327
        %v2300 = vsel %vm587, %v987, %v1329
        %v2301 = vsel %vm587, %v988, %v1331
        %v2302 = vsel %vm587, %v989, %v1333
        %v2303 = vsel %vm587, %v990, %v1335
        %v2304 = vsel %vm587, %v991, %v1337
        %v2305 = vsel %vm587, %v992, %v1339
        %v2306 = vsel %vm587, %v993, %v1341
        %v2307 = vsel %vm587, %v994, %v1343
        %v2308 = vsel %vm587, %v995, %v1345
        %v2309 = vsel %vm587, %v996, %v1347
        %v2310 = vsel %vm587, %v997, %v1349
        %v2311 = vsel %vm587, %v998, %v1351
        %vm2312 = vcmask 130048
        %v2313 = vsel %vm2312, %v2280, %v1417
        %v2314 = vsel %vm2312, %v2281, %v1419
        %v2315 = vsel %vm2312, %v2282, %v1421
        %v2316 = vsel %vm2312, %v2283, %v1423
        %v2317 = vsel %vm2312, %v2284, %v1425
        %v2318 = vsel %vm2312, %v2285, %v1427
        %v2319 = vsel %vm2312, %v2286, %v1429
        %v2320 = vsel %vm2312, %v2287, %v1431
        %v2321 = vsel %vm2312, %v2288, %v1433
        %v2322 = vsel %vm2312, %v2289, %v1435
        %v2323 = vsel %vm2312, %v2290, %v1437
        %v2324 = vsel %vm2312, %v2291, %v1439
        %v2325 = vsel %vm2312, %v2292, %v1441
        %v2326 = vsel %vm2312, %v2293, %v1443
        %v2327 = vsel %vm2312, %v2294, %v1445
        %v2328 = vsel %vm2312, %v2295, %v1447
        %v2329 = vsel %vm2312, %v2296, %v1449
        %v2330 = vsel %vm2312, %v2297, %v1451
        %v2331 = vsel %vm2312, %v2298, %v1453
        %v2332 = vsel %vm2312, %v2299, %v1455
        %v2333 = vsel %vm2312, %v2300, %v1457
        %v2334 = vsel %vm2312, %v2301, %v1459
        %v2335 = vsel %vm2312, %v2302, %v1461
        %v2336 = vsel %vm2312, %v2303, %v1463
        %v2337 = vsel %vm2312, %v2304, %v1465
        %v2338 = vsel %vm2312, %v2305, %v1467
        %v2339 = vsel %vm2312, %v2306, %v1469
        %v2340 = vsel %vm2312, %v2307, %v1471
        %v2341 = vsel %vm2312, %v2308, %v1473
        %v2342 = vsel %vm2312, %v2309, %v1475
        %v2343 = vsel %vm2312, %v2310, %v1477
        %v2344 = vsel %vm2312, %v2311, %v1479
        %vm2345 = vcmask 195584
        %v2346 = vsel %vm2345, %v2313, %v1545
        %v2347 = vsel %vm2345, %v2314, %v1547
        %v2348 = vsel %vm2345, %v2315, %v1549
        %v2349 = vsel %vm2345, %v2316, %v1551
        %v2350 = vsel %vm2345, %v2317, %v1553
        %v2351 = vsel %vm2345, %v2318, %v1555
        %v2352 = vsel %vm2345, %v2319, %v1557
        %v2353 = vsel %vm2345, %v2320, %v1559
        %v2354 = vsel %vm2345, %v2321, %v1561
        %v2355 = vsel %vm2345, %v2322, %v1563
        %v2356 = vsel %vm2345, %v2323, %v1565
        %v2357 = vsel %vm2345, %v2324, %v1567
        %v2358 = vsel %vm2345, %v2325, %v1569
        %v2359 = vsel %vm2345, %v2326, %v1571
        %v2360 = vsel %vm2345, %v2327, %v1573
        %v2361 = vsel %vm2345, %v2328, %v1575
        %v2362 = vsel %vm2345, %v2329, %v1577
        %v2363 = vsel %vm2345, %v2330, %v1579
        %v2364 = vsel %vm2345, %v2331, %v1581
        %v2365 = vsel %vm2345, %v2332, %v1583
        %v2366 = vsel %vm2345, %v2333, %v1585
        %v2367 = vsel %vm2345, %v2334, %v1587
        %v2368 = vsel %vm2345, %v2335, %v1589
        %v2369 = vsel %vm2345, %v2336, %v1591
        %v2370 = vsel %vm2345, %v2337, %v1593
        %v2371 = vsel %vm2345, %v2338, %v1595
        %v2372 = vsel %vm2345, %v2339, %v1597
        %v2373 = vsel %vm2345, %v2340, %v1599
        %v2374 = vsel %vm2345, %v2341, %v1601
        %v2375 = vsel %vm2345, %v2342, %v1603
        %v2376 = vsel %vm2345, %v2343, %v1605
        %v2377 = vsel %vm2345, %v2344, %v1607
        %vm2378 = vcmask 261120
        %v2379 = vsel %vm2378, %v2346, %v1673
        %v2380 = vsel %vm2378, %v2347, %v1675
        %v2381 = vsel %vm2378, %v2348, %v1677
        %v2382 = vsel %vm2378, %v2349, %v1679
        %v2383 = vsel %vm2378, %v2350, %v1681
        %v2384 = vsel %vm2378, %v2351, %v1683
        %v2385 = vsel %vm2378, %v2352, %v1685
        %v2386 = vsel %vm2378, %v2353, %v1687
        %v2387 = vsel %vm2378, %v2354, %v1689
        %v2388 = vsel %vm2378, %v2355, %v1691
        %v2389 = vsel %vm2378, %v2356, %v1693
        %v2390 = vsel %vm2378, %v2357, %v1695
        %v2391 = vsel %vm2378, %v2358, %v1697
        %v2392 = vsel %vm2378, %v2359, %v1699
        %v2393 = vsel %vm2378, %v2360, %v1701
        %v2394 = vsel %vm2378, %v2361, %v1703
        %v2395 = vsel %vm2378, %v2362, %v1705
        %v2396 = vsel %vm2378, %v2363, %v1707
        %v2397 = vsel %vm2378, %v2364, %v1709
        %v2398 = vsel %vm2378, %v2365, %v1711
        %v2399 = vsel %vm2378, %v2366, %v1713
        %v2400 = vsel %vm2378, %v2367, %v1715
        %v2401 = vsel %vm2378, %v2368, %v1717
        %v2402 = vsel %vm2378, %v2369, %v1719
        %v2403 = vsel %vm2378, %v2370, %v1721
        %v2404 = vsel %vm2378, %v2371, %v1723
        %v2405 = vsel %vm2378, %v2372, %v1725
        %v2406 = vsel %vm2378, %v2373, %v1727
        %v2407 = vsel %vm2378, %v2374, %v1729
        %v2408 = vsel %vm2378, %v2375, %v1731
        %v2409 = vsel %vm2378, %v2376, %v1733
        %v2410 = vsel %vm2378, %v2377, %v1735
        %vm2411 = vcmask 326656
        %v2412 = vsel %vm2411, %v2379, %v1801
        %v2413 = vsel %vm2411, %v2380, %v1803
        %v2414 = vsel %vm2411, %v2381, %v1805
        %v2415 = vsel %vm2411, %v2382, %v1807
        %v2416 = vsel %vm2411, %v2383, %v1809
        %v2417 = vsel %vm2411, %v2384, %v1811
        %v2418 = vsel %vm2411, %v2385, %v1813
        %v2419 = vsel %vm2411, %v2386, %v1815
        %v2420 = vsel %vm2411, %v2387, %v1817
        %v2421 = vsel %vm2411, %v2388, %v1819
        %v2422 = vsel %vm2411, %v2389, %v1821
        %v2423 = vsel %vm2411, %v2390, %v1823
        %v2424 = vsel %vm2411, %v2391, %v1825
        %v2425 = vsel %vm2411, %v2392, %v1827
        %v2426 = vsel %vm2411, %v2393, %v1829
        %v2427 = vsel %vm2411, %v2394, %v1831
        %v2428 = vsel %vm2411, %v2395, %v1833
        %v2429 = vsel %vm2411, %v2396, %v1835
        %v2430 = vsel %vm2411, %v2397, %v1837
        %v2431 = vsel %vm2411, %v2398, %v1839
        %v2432 = vsel %vm2411, %v2399, %v1841
        %v2433 = vsel %vm2411, %v2400, %v1843
        %v2434 = vsel %vm2411, %v2401, %v1845
        %v2435 = vsel %vm2411, %v2402, %v1847
        %v2436 = vsel %vm2411, %v2403, %v1849
        %v2437 = vsel %vm2411, %v2404, %v1851
        %v2438 = vsel %vm2411, %v2405, %v1853
        %v2439 = vsel %vm2411, %v2406, %v1855
        %v2440 = vsel %vm2411, %v2407, %v1857
        %v2441 = vsel %vm2411, %v2408, %v1859
        %v2442 = vsel %vm2411, %v2409, %v1861
        %v2443 = vsel %vm2411, %v2410, %v1863
        %vm2444 = vcmask 392192
        %v2445 = vsel %vm2444, %v2412, %v1929
        %v2446 = vsel %vm2444, %v2413, %v1931
        %v2447 = vsel %vm2444, %v2414, %v1933
        %v2448 = vsel %vm2444, %v2415, %v1935
        %v2449 = vsel %vm2444, %v2416, %v1937
        %v2450 = vsel %vm2444, %v2417, %v1939
        %v2451 = vsel %vm2444, %v2418, %v1941
        %v2452 = vsel %vm2444, %v2419, %v1943
        %v2453 = vsel %vm2444, %v2420, %v1945
        %v2454 = vsel %vm2444, %v2421, %v1947
        %v2455 = vsel %vm2444, %v2422, %v1949
        %v2456 = vsel %vm2444, %v2423, %v1951
        %v2457 = vsel %vm2444, %v2424, %v1953
        %v2458 = vsel %vm2444, %v2425, %v1955
        %v2459 = vsel %vm2444, %v2426, %v1957
        %v2460 = vsel %vm2444, %v2427, %v1959
        %v2461 = vsel %vm2444, %v2428, %v1961
        %v2462 = vsel %vm2444, %v2429, %v1963
        %v2463 = vsel %vm2444, %v2430, %v1965
        %v2464 = vsel %vm2444, %v2431, %v1967
        %v2465 = vsel %vm2444, %v2432, %v1969
        %v2466 = vsel %vm2444, %v2433, %v1971
        %v2467 = vsel %vm2444, %v2434, %v1973
        %v2468 = vsel %vm2444, %v2435, %v1975
        %v2469 = vsel %vm2444, %v2436, %v1977
        %v2470 = vsel %vm2444, %v2437, %v1979
        %v2471 = vsel %vm2444, %v2438, %v1981
        %v2472 = vsel %vm2444, %v2439, %v1983
        %v2473 = vsel %vm2444, %v2440, %v1985
        %v2474 = vsel %vm2444, %v2441, %v1987
        %v2475 = vsel %vm2444, %v2442, %v1989
        %v2476 = vsel %vm2444, %v2443, %v1991
        %vm2477 = vcmask 457728
        %v2478 = vsel %vm2477, %v2445, %v2057
        %v2479 = vsel %vm2477, %v2446, %v2059
        %v2480 = vsel %vm2477, %v2447, %v2061
        %v2481 = vsel %vm2477, %v2448, %v2063
        %v2482 = vsel %vm2477, %v2449, %v2065
        %v2483 = vsel %vm2477, %v2450, %v2067
        %v2484 = vsel %vm2477, %v2451, %v2069
        %v2485 = vsel %vm2477, %v2452, %v2071
        %v2486 = vsel %vm2477, %v2453, %v2073
        %v2487 = vsel %vm2477, %v2454, %v2075
        %v2488 = vsel %vm2477, %v2455, %v2077
        %v2489 = vsel %vm2477, %v2456, %v2079
        %v2490 = vsel %vm2477, %v2457, %v2081
        %v2491 = vsel %vm2477, %v2458, %v2083
        %v2492 = vsel %vm2477, %v2459, %v2085
        %v2493 = vsel %vm2477, %v2460, %v2087
        %v2494 = vsel %vm2477, %v2461, %v2089
        %v2495 = vsel %vm2477, %v2462, %v2091
        %v2496 = vsel %vm2477, %v2463, %v2093
        %v2497 = vsel %vm2477, %v2464, %v2095
        %v2498 = vsel %vm2477, %v2465, %v2097
        %v2499 = vsel %vm2477, %v2466, %v2099
        %v2500 = vsel %vm2477, %v2467, %v2101
        %v2501 = vsel %vm2477, %v2468, %v2103
        %v2502 = vsel %vm2477, %v2469, %v2105
        %v2503 = vsel %vm2477, %v2470, %v2107
        %v2504 = vsel %vm2477, %v2471, %v2109
        %v2505 = vsel %vm2477, %v2472, %v2111
        %v2506 = vsel %vm2477, %v2473, %v2113
        %v2507 = vsel %vm2477, %v2474, %v2115
        %v2508 = vsel %vm2477, %v2475, %v2117
        %v2509 = vsel %vm2477, %v2476, %v2119
        %vm2510 = vcmask 523264
        %v2511 = vsel %vm2510, %v2478, %v2185
        %v2512 = vsel %vm2510, %v2479, %v2187
        %v2513 = vsel %vm2510, %v2480, %v2189
        %v2514 = vsel %vm2510, %v2481, %v2191
        %v2515 = vsel %vm2510, %v2482, %v2193
        %v2516 = vsel %vm2510, %v2483, %v2195
        %v2517 = vsel %vm2510, %v2484, %v2197
        %v2518 = vsel %vm2510, %v2485, %v2199
        %v2519 = vsel %vm2510, %v2486, %v2201
        %v2520 = vsel %vm2510, %v2487, %v2203
        %v2521 = vsel %vm2510, %v2488, %v2205
        %v2522 = vsel %vm2510, %v2489, %v2207
        %v2523 = vsel %vm2510, %v2490, %v2209
        %v2524 = vsel %vm2510, %v2491, %v2211
        %v2525 = vsel %vm2510, %v2492, %v2213
        %v2526 = vsel %vm2510, %v2493, %v2215
        %v2527 = vsel %vm2510, %v2494, %v2217
        %v2528 = vsel %vm2510, %v2495, %v2219
        %v2529 = vsel %vm2510, %v2496, %v2221
        %v2530 = vsel %vm2510, %v2497, %v2223
        %v2531 = vsel %vm2510, %v2498, %v2225
        %v2532 = vsel %vm2510, %v2499, %v2227
        %v2533 = vsel %vm2510, %v2500, %v2229
        %v2534 = vsel %vm2510, %v2501, %v2231
        %v2535 = vsel %vm2510, %v2502, %v2233
        %v2536 = vsel %vm2510, %v2503, %v2235
        %v2537 = vsel %vm2510, %v2504, %v2237
        %v2538 = vsel %vm2510, %v2505, %v2239
        %v2539 = vsel %vm2510, %v2506, %v2241
        %v2540 = vsel %vm2510, %v2507, %v2243
        %v2541 = vsel %vm2510, %v2508, %v2245
        %v2542 = vsel %vm2510, %v2509, %v2247
        %v2543 = vld [vmem:[%s2] sm:$0xf]
        %v2544 = vld [vmem:[%s2 + $0x4] sm:$0xf]
        %v2545 = vld [vmem:[%s2 + $0x8] sm:$0xf]
        %v2546 = vld [vmem:[%s2 + $0xc] sm:$0xf]
        %v2547 = vld [vmem:[%s2 + $0x10] sm:$0xf]
        %v2548 = vld [vmem:[%s2 + $0x14] sm:$0xf]
        %v2549 = vld [vmem:[%s2 + $0x18] sm:$0xf]
        %v2550 = vld [vmem:[%s2 + $0x1c] sm:$0xf]
        %v2551 = vld [vmem:[%s2 + $0x20] sm:$0xf]
        %v2552 = vpack.c.bf16 %v2512, %v2511
        %v2553 = vpack.c.bf16 %v2514, %v2513
        %v2554 = vpack.c.bf16 %v2516, %v2515
        %v2555 = vpack.c.bf16 %v2518, %v2517
        %v2556 = vpack.c.bf16 %v2520, %v2519
        %v2557 = vpack.c.bf16 %v2522, %v2521
        %v2558 = vpack.c.bf16 %v2524, %v2523
        %v2559 = vpack.c.bf16 %v2526, %v2525
        %v2560 = vpack.c.bf16 %v2528, %v2527
        %v2561 = vpack.c.bf16 %v2530, %v2529
        %v2562 = vpack.c.bf16 %v2532, %v2531
        %v2563 = vpack.c.bf16 %v2534, %v2533
        %v2564 = vpack.c.bf16 %v2536, %v2535
        %v2565 = vpack.c.bf16 %v2538, %v2537
        %v2566 = vpack.c.bf16 %v2540, %v2539
        %v2567 = vpack.c.bf16 %v2542, %v2541
        %v2577 = vunpack.c.l.b16 %v2543
        %v2578 = vunpack.c.l.b16 %v2544
        %v2579 = vunpack.c.l.b16 %v2545
        %v2580 = vunpack.c.l.b16 %v2546
        %v2581 = vunpack.c.l.b16 %v2547
        %v2582 = vunpack.c.l.b16 %v2548
        %v2583 = vunpack.c.l.b16 %v2549
        %v2584 = vunpack.c.l.b16 %v2550
        %v2585 = vunpack.c.l.b16 %v2551
        %v2586 = vpack.c.b16 %v2578, %v2577
        %v2587 = vpack.c.b16 %v2580, %v2579
        %v2588 = vpack.c.b16 %v2582, %v2581
        %v2589 = vpack.c.b16 %v2584, %v2583
        %v2590 = vpack.c.b16 %v2585, %v2585
        %vm2595 = vcmask 588800
        %v2597 = vsel %vm2595, %v2552, 0
        %v2600 = vsel %vm2595, %v2553, 0
        %v2603 = vsel %vm2595, %v2554, 0
        %v2606 = vsel %vm2595, %v2555, 0
        %v2609 = vsel %vm2595, %v2556, 0
        %v2612 = vsel %vm2595, %v2557, 0
        %v2615 = vsel %vm2595, %v2558, 0
        %v2618 = vsel %vm2595, %v2559, 0
        %v2621 = vsel %vm2595, %v2560, 0
        %v2624 = vsel %vm2595, %v2561, 0
        %v2627 = vsel %vm2595, %v2562, 0
        %v2630 = vsel %vm2595, %v2563, 0
        %v2633 = vsel %vm2595, %v2564, 0
        %v2636 = vsel %vm2595, %v2565, 0
        %v2639 = vsel %vm2595, %v2566, 0
        %v2642 = vsel %vm2595, %v2567, 0
        %v2645 = vsel %vm636, %v2590, 0
        %2647 = vmatprep.subr.bf16.mxu0 0
        %2648 = vmatpush1.bf16.msra.mxu0 %v2586
        %2649 = vmatprep.subr.bf16.mxu0 0
        %2650 = vmatpush1.bf16.msra.mxu0 %v2587
        %2651 = vmatprep.subr.bf16.mxu0 0
        %2652 = vmatpush1.bf16.msra.mxu0 %v2588
        %2653 = vmatprep.subr.bf16.mxu0 0
        %2654 = vmatpush1.bf16.msra.mxu0 %v2589
        %2655 = vmatprep.subr.bf16.mxu0 0
        %2656 = vmatpush1.bf16.msra.mxu0 %v2645
        %2657 = vmatprep.subr.bf16.mxu0 0
        %2658 = vmatpush1.bf16.msra.mxu0 0
        %2659 = vmatprep.subr.bf16.mxu0 0
        %2660 = vmatpush1.bf16.msra.mxu0 0
        %2661 = vmatprep.subr.bf16.mxu0 0
        %2662 = vmatpush1.bf16.msra.mxu0 0
        %2663 = vmatprep.subr.bf16.mxu0 0
        %2664 = vmatpush1.bf16.msra.mxu0 0
        %2665 = vmatprep.subr.bf16.mxu0 0
        %2666 = vmatpush1.bf16.msra.mxu0 0
        %2667 = vmatprep.subr.bf16.mxu0 0
        %2668 = vmatpush1.bf16.msra.mxu0 0
        %2669 = vmatprep.subr.bf16.mxu0 0
        %2670 = vmatpush1.bf16.msra.mxu0 0
        %2671 = vmatprep.subr.bf16.mxu0 0
        %2672 = vmatpush1.bf16.msra.mxu0 0
        %2673 = vmatprep.subr.bf16.mxu0 0
        %2674 = vmatpush1.bf16.msra.mxu0 0
        %2675 = vmatprep.subr.bf16.mxu0 0
        %2676 = vmatpush1.bf16.msra.mxu0 0
        %2677 = vmatprep.subr.bf16.mxu0 0
        %2678 = vmatpush1.bf16.msra.mxu0 0
        %2679 = vmatprep.mubr.bf16.mxu0 0
        %2680 = vmatmul.mubr.bf16.gmra.mrb[0].mxu0 %v2597
        %v2681 = vpop.f32.mrb[0].mxu0
        %v2682 = vadd.f32 0.0, %v2681
        %v2683 = vpop.f32.mrb[0].mxu0
        %v2684 = vpop.f32.mrb[0].mxu0
        %v2685 = vadd.f32 0.0, %v2684
        %v2686 = vpop.f32.mrb[0].mxu0
        %2687 = vmatprep.mubr.bf16.mxu0 0
        %2688 = vmatmul.mubr.bf16.gmra.mrb[0].mxu0 %v2600
        %v2689 = vpop.f32.mrb[0].mxu0
        %v2690 = vadd.f32 0.0, %v2689
        %v2691 = vpop.f32.mrb[0].mxu0
        %v2692 = vpop.f32.mrb[0].mxu0
        %v2693 = vadd.f32 0.0, %v2692
        %v2694 = vpop.f32.mrb[0].mxu0
        %2695 = vmatprep.mubr.bf16.mxu0 0
        %2696 = vmatmul.mubr.bf16.gmra.mrb[0].mxu0 %v2603
        %v2697 = vpop.f32.mrb[0].mxu0
        %v2698 = vadd.f32 0.0, %v2697
        %v2699 = vpop.f32.mrb[0].mxu0
        %v2700 = vpop.f32.mrb[0].mxu0
        %v2701 = vadd.f32 0.0, %v2700
        %v2702 = vpop.f32.mrb[0].mxu0
        %2703 = vmatprep.mubr.bf16.mxu0 0
        %2704 = vmatmul.mubr.bf16.gmra.mrb[0].mxu0 %v2606
        %v2705 = vpop.f32.mrb[0].mxu0
        %v2706 = vadd.f32 0.0, %v2705
        %v2707 = vpop.f32.mrb[0].mxu0
        %v2708 = vpop.f32.mrb[0].mxu0
        %v2709 = vadd.f32 0.0, %v2708
        %v2710 = vpop.f32.mrb[0].mxu0
        %2711 = vmatprep.mubr.bf16.mxu0 0
        %2712 = vmatmul.mubr.bf16.gmra.mrb[0].mxu0 %v2609
        %v2713 = vpop.f32.mrb[0].mxu0
        %v2714 = vadd.f32 0.0, %v2713
        %v2715 = vpop.f32.mrb[0].mxu0
        %v2716 = vpop.f32.mrb[0].mxu0
        %v2717 = vadd.f32 0.0, %v2716
        %v2718 = vpop.f32.mrb[0].mxu0
        %2719 = vmatprep.mubr.bf16.mxu0 0
        %2720 = vmatmul.mubr.bf16.gmra.mrb[0].mxu0 %v2612
        %v2721 = vpop.f32.mrb[0].mxu0
        %v2722 = vadd.f32 0.0, %v2721
        %v2723 = vpop.f32.mrb[0].mxu0
        %v2724 = vpop.f32.mrb[0].mxu0
        %v2725 = vadd.f32 0.0, %v2724
        %v2726 = vpop.f32.mrb[0].mxu0
        %2727 = vmatprep.mubr.bf16.mxu0 0
        %2728 = vmatmul.mubr.bf16.gmra.mrb[0].mxu0 %v2615
        %v2729 = vpop.f32.mrb[0].mxu0
        %v2730 = vadd.f32 0.0, %v2729
        %v2731 = vpop.f32.mrb[0].mxu0
        %v2732 = vpop.f32.mrb[0].mxu0
        %v2733 = vadd.f32 0.0, %v2732
        %v2734 = vpop.f32.mrb[0].mxu0
        %2735 = vmatprep.mubr.bf16.mxu0 0
        %2736 = vmatmul.mubr.bf16.gmra.mrb[0].mxu0 %v2618
        %v2737 = vpop.f32.mrb[0].mxu0
        %v2738 = vadd.f32 0.0, %v2737
        %v2739 = vpop.f32.mrb[0].mxu0
        %v2740 = vpop.f32.mrb[0].mxu0
        %v2741 = vadd.f32 0.0, %v2740
        %v2742 = vpop.f32.mrb[0].mxu0
        %2743 = vmatprep.mubr.bf16.mxu0 0
        %2744 = vmatmul.mubr.bf16.gmra.mrb[0].mxu0 %v2621
        %v2745 = vpop.f32.mrb[0].mxu0
        %v2746 = vadd.f32 0.0, %v2745
        %v2747 = vpop.f32.mrb[0].mxu0
        %v2748 = vpop.f32.mrb[0].mxu0
        %v2749 = vadd.f32 0.0, %v2748
        %v2750 = vpop.f32.mrb[0].mxu0
        %2751 = vmatprep.mubr.bf16.mxu0 0
        %2752 = vmatmul.mubr.bf16.gmra.mrb[0].mxu0 %v2624
        %v2753 = vpop.f32.mrb[0].mxu0
        %v2754 = vadd.f32 0.0, %v2753
        %v2755 = vpop.f32.mrb[0].mxu0
        %v2756 = vpop.f32.mrb[0].mxu0
        %v2757 = vadd.f32 0.0, %v2756
        %v2758 = vpop.f32.mrb[0].mxu0
        %2759 = vmatprep.mubr.bf16.mxu0 0
        %2760 = vmatmul.mubr.bf16.gmra.mrb[0].mxu0 %v2627
        %v2761 = vpop.f32.mrb[0].mxu0
        %v2762 = vadd.f32 0.0, %v2761
        %v2763 = vpop.f32.mrb[0].mxu0
        %v2764 = vpop.f32.mrb[0].mxu0
        %v2765 = vadd.f32 0.0, %v2764
        %v2766 = vpop.f32.mrb[0].mxu0
        %2767 = vmatprep.mubr.bf16.mxu0 0
        %2768 = vmatmul.mubr.bf16.gmra.mrb[0].mxu0 %v2630
        %v2769 = vpop.f32.mrb[0].mxu0
        %v2770 = vadd.f32 0.0, %v2769
        %v2771 = vpop.f32.mrb[0].mxu0
        %v2772 = vpop.f32.mrb[0].mxu0
        %v2773 = vadd.f32 0.0, %v2772
        %v2774 = vpop.f32.mrb[0].mxu0
        %2775 = vmatprep.mubr.bf16.mxu0 0
        %2776 = vmatmul.mubr.bf16.gmra.mrb[0].mxu0 %v2633
        %v2777 = vpop.f32.mrb[0].mxu0
        %v2778 = vadd.f32 0.0, %v2777
        %v2779 = vpop.f32.mrb[0].mxu0
        %v2780 = vpop.f32.mrb[0].mxu0
        %v2781 = vadd.f32 0.0, %v2780
        %v2782 = vpop.f32.mrb[0].mxu0
        %2783 = vmatprep.mubr.bf16.mxu0 0
        %2784 = vmatmul.mubr.bf16.gmra.mrb[0].mxu0 %v2636
        %v2785 = vpop.f32.mrb[0].mxu0
        %v2786 = vadd.f32 0.0, %v2785
        %v2787 = vpop.f32.mrb[0].mxu0
        %v2788 = vpop.f32.mrb[0].mxu0
        %v2789 = vadd.f32 0.0, %v2788
        %v2790 = vpop.f32.mrb[0].mxu0
        %2791 = vmatprep.mubr.bf16.mxu0 0
        %2792 = vmatmul.mubr.bf16.gmra.mrb[0].mxu0 %v2639
        %v2793 = vpop.f32.mrb[0].mxu0
        %v2794 = vadd.f32 0.0, %v2793
        %v2795 = vpop.f32.mrb[0].mxu0
        %v2796 = vpop.f32.mrb[0].mxu0
        %v2797 = vadd.f32 0.0, %v2796
        %v2798 = vpop.f32.mrb[0].mxu0
        %2799 = vmatprep.mubr.bf16.mxu0 0
        %2800 = vmatmul.mubr.bf16.gmra.mrb[0].mxu0 %v2642
        %v2801 = vpop.f32.mrb[0].mxu0
        %v2802 = vadd.f32 0.0, %v2801
        %v2803 = vpop.f32.mrb[0].mxu0
        %v2804 = vpop.f32.mrb[0].mxu0
        %v2805 = vadd.f32 0.0, %v2804
        %v2806 = vpop.f32.mrb[0].mxu0
        %2807 = vdwg.mxu0
        %v2808 = vld [vmem:[%s3] sm:$0x1]
        %v2810 = vlaneseq
        %v2811 = vshrl.u32 %v2810, 7
        %v2812 = vsub.s32 0, %v2811
        %v2813 = vrot.slane %v2808, %v2812
        %v2815 = vmul.f32 %v2682, %v2813
        %v2816 = vmul.f32 %v2685, %v2813
        %v2817 = vmul.f32 %v2690, %v2813
        %v2818 = vmul.f32 %v2693, %v2813
        %v2819 = vmul.f32 %v2698, %v2813
        %v2820 = vmul.f32 %v2701, %v2813
        %v2821 = vmul.f32 %v2706, %v2813
        %v2822 = vmul.f32 %v2709, %v2813
        %v2823 = vmul.f32 %v2714, %v2813
        %v2824 = vmul.f32 %v2717, %v2813
        %v2825 = vmul.f32 %v2722, %v2813
        %v2826 = vmul.f32 %v2725, %v2813
        %v2827 = vmul.f32 %v2730, %v2813
        %v2828 = vmul.f32 %v2733, %v2813
        %v2829 = vmul.f32 %v2738, %v2813
        %v2830 = vmul.f32 %v2741, %v2813
        %v2831 = vmul.f32 %v2746, %v2813
        %v2832 = vmul.f32 %v2749, %v2813
        %v2833 = vmul.f32 %v2754, %v2813
        %v2834 = vmul.f32 %v2757, %v2813
        %v2835 = vmul.f32 %v2762, %v2813
        %v2836 = vmul.f32 %v2765, %v2813
        %v2837 = vmul.f32 %v2770, %v2813
        %v2838 = vmul.f32 %v2773, %v2813
        %v2839 = vmul.f32 %v2778, %v2813
        %v2840 = vmul.f32 %v2781, %v2813
        %v2841 = vmul.f32 %v2786, %v2813
        %v2842 = vmul.f32 %v2789, %v2813
        %v2843 = vmul.f32 %v2794, %v2813
        %v2844 = vmul.f32 %v2797, %v2813
        %v2845 = vmul.f32 %v2802, %v2813
        %v2846 = vmul.f32 %v2805, %v2813
        %v2847 = vld [vmem:[%s4] sm:$0x1]
        %v2849 = vlaneseq
        %v2850 = vshrl.u32 %v2849, 7
        %v2851 = vsub.s32 0, %v2850
        %v2852 = vrot.slane %v2847, %v2851
        %v2854 = vadd.f32 %v2815, %v2852
        %v2855 = vadd.f32 %v2816, %v2852
        %v2856 = vadd.f32 %v2817, %v2852
        %v2857 = vadd.f32 %v2818, %v2852
        %v2858 = vadd.f32 %v2819, %v2852
        %v2859 = vadd.f32 %v2820, %v2852
        %v2860 = vadd.f32 %v2821, %v2852
        %v2861 = vadd.f32 %v2822, %v2852
        %v2862 = vadd.f32 %v2823, %v2852
        %v2863 = vadd.f32 %v2824, %v2852
        %v2864 = vadd.f32 %v2825, %v2852
        %v2865 = vadd.f32 %v2826, %v2852
        %v2866 = vadd.f32 %v2827, %v2852
        %v2867 = vadd.f32 %v2828, %v2852
        %v2868 = vadd.f32 %v2829, %v2852
        %v2869 = vadd.f32 %v2830, %v2852
        %v2870 = vadd.f32 %v2831, %v2852
        %v2871 = vadd.f32 %v2832, %v2852
        %v2872 = vadd.f32 %v2833, %v2852
        %v2873 = vadd.f32 %v2834, %v2852
        %v2874 = vadd.f32 %v2835, %v2852
        %v2875 = vadd.f32 %v2836, %v2852
        %v2876 = vadd.f32 %v2837, %v2852
        %v2877 = vadd.f32 %v2838, %v2852
        %v2878 = vadd.f32 %v2839, %v2852
        %v2879 = vadd.f32 %v2840, %v2852
        %v2880 = vadd.f32 %v2841, %v2852
        %v2881 = vadd.f32 %v2842, %v2852
        %v2882 = vadd.f32 %v2843, %v2852
        %v2883 = vadd.f32 %v2844, %v2852
        %v2884 = vadd.f32 %v2845, %v2852
        %v2885 = vadd.f32 %v2846, %v2852
        %v2886 = vmax.f32 %v2854, 0.0
        %v2887 = vmax.f32 %v2855, 0.0
        %v2888 = vmax.f32 %v2856, 0.0
        %v2889 = vmax.f32 %v2857, 0.0
        %v2890 = vmax.f32 %v2858, 0.0
        %v2891 = vmax.f32 %v2859, 0.0
        %v2892 = vmax.f32 %v2860, 0.0
        %v2893 = vmax.f32 %v2861, 0.0
        %v2894 = vmax.f32 %v2862, 0.0
        %v2895 = vmax.f32 %v2863, 0.0
        %v2896 = vmax.f32 %v2864, 0.0
        %v2897 = vmax.f32 %v2865, 0.0
        %v2898 = vmax.f32 %v2866, 0.0
        %v2899 = vmax.f32 %v2867, 0.0
        %v2900 = vmax.f32 %v2868, 0.0
        %v2901 = vmax.f32 %v2869, 0.0
        %v2902 = vmax.f32 %v2870, 0.0
        %v2903 = vmax.f32 %v2871, 0.0
        %v2904 = vmax.f32 %v2872, 0.0
        %v2905 = vmax.f32 %v2873, 0.0
        %v2906 = vmax.f32 %v2874, 0.0
        %v2907 = vmax.f32 %v2875, 0.0
        %v2908 = vmax.f32 %v2876, 0.0
        %v2909 = vmax.f32 %v2877, 0.0
        %v2910 = vmax.f32 %v2878, 0.0
        %v2911 = vmax.f32 %v2879, 0.0
        %v2912 = vmax.f32 %v2880, 0.0
        %v2913 = vmax.f32 %v2881, 0.0
        %v2914 = vmax.f32 %v2882, 0.0
        %v2915 = vmax.f32 %v2883, 0.0
        %v2916 = vmax.f32 %v2884, 0.0
        %v2917 = vmax.f32 %v2885, 0.0
        %2918 = vst.msk [vmem:[#allocation3] sm:$0xff] %vm2312, 0.0
        %2919 = vst.msk [vmem:[#allocation3 + $0x8] sm:$0xff] %vm2312, 0.0
        %vm2920 = vcmask 123904
        %2921 = vst.msk [vmem:[#allocation3 + $0x10] sm:$0x3] %vm2920, 0.0
        %2922 = vst.msk [vmem:[#allocation3 + $0x18] sm:$0xff] %vm2312, 0.0
        %2923 = vst.msk [vmem:[#allocation3 + $0x20] sm:$0xff] %vm2312, 0.0
        %2924 = vst.msk [vmem:[#allocation3 + $0x28] sm:$0x3] %vm2920, 0.0
        %2925 = vst.msk [vmem:[#allocation3 + $0x30] sm:$0xff] %vm2312, 0.0
        %2926 = vst.msk [vmem:[#allocation3 + $0x38] sm:$0xff] %vm2312, 0.0
        %2927 = vst.msk [vmem:[#allocation3 + $0x40] sm:$0x3] %vm2920, 0.0
        %2928 = vst.msk [vmem:[#allocation3 + $0x48] sm:$0xff] %vm2312, 0.0
        %2929 = vst.msk [vmem:[#allocation3 + $0x50] sm:$0xff] %vm2312, 0.0
        %2930 = vst.msk [vmem:[#allocation3 + $0x58] sm:$0x3] %vm2920, 0.0
        %2931 = vst.msk [vmem:[#allocation3 + $0x60] sm:$0xff] %vm2312, 0.0
        %2932 = vst.msk [vmem:[#allocation3 + $0x68] sm:$0xff] %vm2312, 0.0
        %2933 = vst.msk [vmem:[#allocation3 + $0x70] sm:$0x3] %vm2920, 0.0
        %2934 = vst.msk [vmem:[#allocation3 + $0x78] sm:$0xff] %vm2312, 0.0
        %2935 = vst.msk [vmem:[#allocation3 + $0x80] sm:$0xff] %vm2312, 0.0
        %2936 = vst.msk [vmem:[#allocation3 + $0x88] sm:$0x3] %vm2920, 0.0
        %2937 = vst.msk [vmem:[#allocation3 + $0x90] sm:$0xff] %vm2312, 0.0
        %2938 = vst.msk [vmem:[#allocation3 + $0x98] sm:$0xff] %vm2312, 0.0
        %2939 = vst.msk [vmem:[#allocation3 + $0xa0] sm:$0x3] %vm2920, 0.0
        %2940 = vst.msk [vmem:[#allocation3 + $0xa8] sm:$0xff] %vm2312, 0.0
        %2941 = vst.msk [vmem:[#allocation3 + $0xb0] sm:$0xff] %vm2312, 0.0
        %2942 = vst.msk [vmem:[#allocation3 + $0xb8] sm:$0x3] %vm2920, 0.0
        %2943 = vst.msk [vmem:[#allocation3 + $0xc0] sm:$0xff] %vm2312, 0.0
        %2944 = vst.msk [vmem:[#allocation3 + $0xc8] sm:$0xff] %vm2312, 0.0
        %2945 = vst.msk [vmem:[#allocation3 + $0xd0] sm:$0x3] %vm2920, 0.0
        %2946 = vst.msk [vmem:[#allocation3 + $0xd8] sm:$0xff] %vm2312, 0.0
        %2947 = vst.msk [vmem:[#allocation3 + $0xe0] sm:$0xff] %vm2312, 0.0
        %2948 = vst.msk [vmem:[#allocation3 + $0xe8] sm:$0x3] %vm2920, 0.0
        %2949 = vst.msk [vmem:[#allocation3 + $0xf0] sm:$0xff] %vm2312, 0.0
        %2950 = vst.msk [vmem:[#allocation3 + $0xf8] sm:$0xff] %vm2312, 0.0
        %2951 = vst.msk [vmem:[#allocation3 + $0x100] sm:$0x3] %vm2920, 0.0
        %2952 = vst.msk [vmem:[#allocation3 + $0x108] sm:$0xff] %vm2312, 0.0
        %2953 = vst.msk [vmem:[#allocation3 + $0x110] sm:$0xff] %vm2312, 0.0
        %2954 = vst.msk [vmem:[#allocation3 + $0x118] sm:$0x3] %vm2920, 0.0
        %2955 = vst.msk [vmem:[#allocation3 + $0x120] sm:$0xff] %vm2312, 0.0
        %2956 = vst.msk [vmem:[#allocation3 + $0x128] sm:$0xff] %vm2312, 0.0
        %2957 = vst.msk [vmem:[#allocation3 + $0x130] sm:$0x3] %vm2920, 0.0
        %2958 = vst.msk [vmem:[#allocation3 + $0x138] sm:$0xff] %vm2312, 0.0
        %2959 = vst.msk [vmem:[#allocation3 + $0x140] sm:$0xff] %vm2312, 0.0
        %2960 = vst.msk [vmem:[#allocation3 + $0x148] sm:$0x3] %vm2920, 0.0
        %2961 = vst.msk [vmem:[#allocation3 + $0x150] sm:$0xff] %vm2312, 0.0
        %2962 = vst.msk [vmem:[#allocation3 + $0x158] sm:$0xff] %vm2312, 0.0
        %2963 = vst.msk [vmem:[#allocation3 + $0x160] sm:$0x3] %vm2920, 0.0
        %2964 = vst.msk [vmem:[#allocation3 + $0x168] sm:$0xff] %vm2312, 0.0
        %2965 = vst.msk [vmem:[#allocation3 + $0x170] sm:$0xff] %vm2312, 0.0
        %2966 = vst.msk [vmem:[#allocation3 + $0x178] sm:$0x3] %vm2920, 0.0
        %2967 = vst.msk [vmem:[#allocation3 + $0x180] sm:$0xff] %vm2312, 0.0
        %2968 = vst.msk [vmem:[#allocation3 + $0x188] sm:$0xff] %vm2312, 0.0
        %2969 = vst.msk [vmem:[#allocation3 + $0x190] sm:$0x3] %vm2920, 0.0
        %2970 = vst.msk [vmem:[#allocation3 + $0x198] sm:$0xff] %vm2312, 0.0
        %2971 = vst.msk [vmem:[#allocation3 + $0x1a0] sm:$0xff] %vm2312, 0.0
        %2972 = vst.msk [vmem:[#allocation3 + $0x1a8] sm:$0x3] %vm2920, 0.0
        %s2973 = scalar_lea.vmem [#allocation3], 24
        %2974 = vst.msk [vmem:[%s2973 + $0x1] sm:$0xff] %vm2312, %v2886
        %2975 = vst.msk [vmem:[%s2973 + $0x9] sm:$0xff] %vm2312, %v2887
        %2976 = vst.msk [vmem:[%s2973 + $0x19] sm:$0xff] %vm2312, %v2888
        %2977 = vst.msk [vmem:[%s2973 + $0x21] sm:$0xff] %vm2312, %v2889
        %2978 = vst.msk [vmem:[%s2973 + $0x31] sm:$0xff] %vm2312, %v2890
        %2979 = vst.msk [vmem:[%s2973 + $0x39] sm:$0xff] %vm2312, %v2891
        %2980 = vst.msk [vmem:[%s2973 + $0x49] sm:$0xff] %vm2312, %v2892
        %2981 = vst.msk [vmem:[%s2973 + $0x51] sm:$0xff] %vm2312, %v2893
        %2982 = vst.msk [vmem:[%s2973 + $0x61] sm:$0xff] %vm2312, %v2894
        %2983 = vst.msk [vmem:[%s2973 + $0x69] sm:$0xff] %vm2312, %v2895
        %2984 = vst.msk [vmem:[%s2973 + $0x79] sm:$0xff] %vm2312, %v2896
        %2985 = vst.msk [vmem:[%s2973 + $0x81] sm:$0xff] %vm2312, %v2897
        %2986 = vst.msk [vmem:[%s2973 + $0x91] sm:$0xff] %vm2312, %v2898
        %2987 = vst.msk [vmem:[%s2973 + $0x99] sm:$0xff] %vm2312, %v2899
        %2988 = vst.msk [vmem:[%s2973 + $0xa9] sm:$0xff] %vm2312, %v2900
        %2989 = vst.msk [vmem:[%s2973 + $0xb1] sm:$0xff] %vm2312, %v2901
        %2990 = vst.msk [vmem:[%s2973 + $0xc1] sm:$0xff] %vm2312, %v2902
        %2991 = vst.msk [vmem:[%s2973 + $0xc9] sm:$0xff] %vm2312, %v2903
        %2992 = vst.msk [vmem:[%s2973 + $0xd9] sm:$0xff] %vm2312, %v2904
        %2993 = vst.msk [vmem:[%s2973 + $0xe1] sm:$0xff] %vm2312, %v2905
        %2994 = vst.msk [vmem:[%s2973 + $0xf1] sm:$0xff] %vm2312, %v2906
        %2995 = vst.msk [vmem:[%s2973 + $0xf9] sm:$0xff] %vm2312, %v2907
        %2996 = vst.msk [vmem:[%s2973 + $0x109] sm:$0xff] %vm2312, %v2908
        %2997 = vst.msk [vmem:[%s2973 + $0x111] sm:$0xff] %vm2312, %v2909
        %2998 = vst.msk [vmem:[%s2973 + $0x121] sm:$0xff] %vm2312, %v2910
        %2999 = vst.msk [vmem:[%s2973 + $0x129] sm:$0xff] %vm2312, %v2911
        %3000 = vst.msk [vmem:[%s2973 + $0x139] sm:$0xff] %vm2312, %v2912
        %3001 = vst.msk [vmem:[%s2973 + $0x141] sm:$0xff] %vm2312, %v2913
        %3002 = vst.msk [vmem:[%s2973 + $0x151] sm:$0xff] %vm2312, %v2914
        %3003 = vst.msk [vmem:[%s2973 + $0x159] sm:$0xff] %vm2312, %v2915
        %3004 = vst.msk [vmem:[%s2973 + $0x169] sm:$0xff] %vm2312, %v2916
        %3005 = vst.msk [vmem:[%s2973 + $0x171] sm:$0xff] %vm2312, %v2917
        %v3006 = vld [vmem:[#allocation3] sm:$0xff]
        %v3007 = vld [vmem:[#allocation3 + $0x8] sm:$0xff]
        %v3008 = vld [vmem:[#allocation3 + $0x18] sm:$0xff]
        %v3009 = vld [vmem:[#allocation3 + $0x20] sm:$0xff]
        %v3010 = vld [vmem:[#allocation3 + $0x30] sm:$0xff]
        %v3011 = vld [vmem:[#allocation3 + $0x38] sm:$0xff]
        %v3012 = vld [vmem:[#allocation3 + $0x48] sm:$0xff]
        %v3013 = vld [vmem:[#allocation3 + $0x50] sm:$0xff]
        %v3014 = vld [vmem:[#allocation3 + $0x60] sm:$0xff]
        %v3015 = vld [vmem:[#allocation3 + $0x68] sm:$0xff]
        %v3016 = vld [vmem:[#allocation3 + $0x78] sm:$0xff]
        %v3017 = vld [vmem:[#allocation3 + $0x80] sm:$0xff]
        %v3018 = vld [vmem:[#allocation3 + $0x90] sm:$0xff]
        %v3019 = vld [vmem:[#allocation3 + $0x98] sm:$0xff]
        %v3020 = vld [vmem:[#allocation3 + $0xa8] sm:$0xff]
        %v3021 = vld [vmem:[#allocation3 + $0xb0] sm:$0xff]
        %v3022 = vld [vmem:[#allocation3 + $0xc0] sm:$0xff]
        %v3023 = vld [vmem:[#allocation3 + $0xc8] sm:$0xff]
        %v3024 = vld [vmem:[#allocation3 + $0xd8] sm:$0xff]
        %v3025 = vld [vmem:[#allocation3 + $0xe0] sm:$0xff]
        %v3026 = vld [vmem:[#allocation3 + $0xf0] sm:$0xff]
        %v3027 = vld [vmem:[#allocation3 + $0xf8] sm:$0xff]
        %v3028 = vld [vmem:[#allocation3 + $0x108] sm:$0xff]
        %v3029 = vld [vmem:[#allocation3 + $0x110] sm:$0xff]
        %v3030 = vld [vmem:[#allocation3 + $0x120] sm:$0xff]
        %v3031 = vld [vmem:[#allocation3 + $0x128] sm:$0xff]
        %v3032 = vld [vmem:[#allocation3 + $0x138] sm:$0xff]
        %v3033 = vld [vmem:[#allocation3 + $0x140] sm:$0xff]
        %v3034 = vld [vmem:[#allocation3 + $0x150] sm:$0xff]
        %v3035 = vld [vmem:[#allocation3 + $0x158] sm:$0xff]
        %v3036 = vld [vmem:[#allocation3 + $0x168] sm:$0xff]
        %v3037 = vld [vmem:[#allocation3 + $0x170] sm:$0xff]
        %v3038 = vld [vmem:[#allocation3 + $0x1] sm:$0xff]
        %v3039 = vld [vmem:[#allocation3 + $0x9] sm:$0xff]
        %v3040 = vld [vmem:[#allocation3 + $0x19] sm:$0xff]
        %v3041 = vld [vmem:[#allocation3 + $0x21] sm:$0xff]
        %v3042 = vld [vmem:[#allocation3 + $0x31] sm:$0xff]
        %v3043 = vld [vmem:[#allocation3 + $0x39] sm:$0xff]
        %v3044 = vld [vmem:[#allocation3 + $0x49] sm:$0xff]
        %v3045 = vld [vmem:[#allocation3 + $0x51] sm:$0xff]
        %v3046 = vld [vmem:[#allocation3 + $0x61] sm:$0xff]
        %v3047 = vld [vmem:[#allocation3 + $0x69] sm:$0xff]
        %v3048 = vld [vmem:[#allocation3 + $0x79] sm:$0xff]
        %v3049 = vld [vmem:[#allocation3 + $0x81] sm:$0xff]
        %v3050 = vld [vmem:[#allocation3 + $0x91] sm:$0xff]
        %v3051 = vld [vmem:[#allocation3 + $0x99] sm:$0xff]
        %v3052 = vld [vmem:[#allocation3 + $0xa9] sm:$0xff]
        %v3053 = vld [vmem:[#allocation3 + $0xb1] sm:$0xff]
        %v3054 = vld [vmem:[#allocation3 + $0xc1] sm:$0xff]
        %v3055 = vld [vmem:[#allocation3 + $0xc9] sm:$0xff]
        %v3056 = vld [vmem:[#allocation3 + $0xd9] sm:$0xff]
        %v3057 = vld [vmem:[#allocation3 + $0xe1] sm:$0xff]
        %v3058 = vld [vmem:[#allocation3 + $0xf1] sm:$0xff]
        %v3059 = vld [vmem:[#allocation3 + $0xf9] sm:$0xff]
        %v3060 = vld [vmem:[#allocation3 + $0x109] sm:$0xff]
        %v3061 = vld [vmem:[#allocation3 + $0x111] sm:$0xff]
        %v3062 = vld [vmem:[#allocation3 + $0x121] sm:$0xff]
        %v3063 = vld [vmem:[#allocation3 + $0x129] sm:$0xff]
        %v3064 = vld [vmem:[#allocation3 + $0x139] sm:$0xff]
        %v3065 = vld [vmem:[#allocation3 + $0x141] sm:$0xff]
        %v3066 = vld [vmem:[#allocation3 + $0x151] sm:$0xff]
        %v3067 = vld [vmem:[#allocation3 + $0x159] sm:$0xff]
        %v3068 = vld [vmem:[#allocation3 + $0x169] sm:$0xff]
        %v3069 = vld [vmem:[#allocation3 + $0x171] sm:$0xff]
        %v3070 = vld [vmem:[#allocation3 + $0x2] sm:$0xff]
        %v3071 = vld [vmem:[#allocation3 + $0xa] sm:$0xff]
        %v3072 = vld [vmem:[#allocation3 + $0x1a] sm:$0xff]
        %v3073 = vld [vmem:[#allocation3 + $0x22] sm:$0xff]
        %v3074 = vld [vmem:[#allocation3 + $0x32] sm:$0xff]
        %v3075 = vld [vmem:[#allocation3 + $0x3a] sm:$0xff]
        %v3076 = vld [vmem:[#allocation3 + $0x4a] sm:$0xff]
        %v3077 = vld [vmem:[#allocation3 + $0x52] sm:$0xff]
        %v3078 = vld [vmem:[#allocation3 + $0x62] sm:$0xff]
        %v3079 = vld [vmem:[#allocation3 + $0x6a] sm:$0xff]
        %v3080 = vld [vmem:[#allocation3 + $0x7a] sm:$0xff]
        %v3081 = vld [vmem:[#allocation3 + $0x82] sm:$0xff]
        %v3082 = vld [vmem:[#allocation3 + $0x92] sm:$0xff]
        %v3083 = vld [vmem:[#allocation3 + $0x9a] sm:$0xff]
        %v3084 = vld [vmem:[#allocation3 + $0xaa] sm:$0xff]
        %v3085 = vld [vmem:[#allocation3 + $0xb2] sm:$0xff]
        %v3086 = vld [vmem:[#allocation3 + $0xc2] sm:$0xff]
        %v3087 = vld [vmem:[#allocation3 + $0xca] sm:$0xff]
        %v3088 = vld [vmem:[#allocation3 + $0xda] sm:$0xff]
        %v3089 = vld [vmem:[#allocation3 + $0xe2] sm:$0xff]
        %v3090 = vld [vmem:[#allocation3 + $0xf2] sm:$0xff]
        %v3091 = vld [vmem:[#allocation3 + $0xfa] sm:$0xff]
        %v3092 = vld [vmem:[#allocation3 + $0x10a] sm:$0xff]
        %v3093 = vld [vmem:[#allocation3 + $0x112] sm:$0xff]
        %v3094 = vld [vmem:[#allocation3 + $0x122] sm:$0xff]
        %v3095 = vld [vmem:[#allocation3 + $0x12a] sm:$0xff]
        %v3096 = vld [vmem:[#allocation3 + $0x13a] sm:$0xff]
        %v3097 = vld [vmem:[#allocation3 + $0x142] sm:$0xff]
        %v3098 = vld [vmem:[#allocation3 + $0x152] sm:$0xff]
        %v3099 = vld [vmem:[#allocation3 + $0x15a] sm:$0xff]
        %v3100 = vld [vmem:[#allocation3 + $0x16a] sm:$0xff]
        %v3101 = vld [vmem:[#allocation3 + $0x172] sm:$0xff]
        %v3102 = vld [vmem:[%s2973] sm:$0xff]
        %v3103 = vld [vmem:[%s2973 + $0x8] sm:$0xff]
        %v3104 = vld [vmem:[%s2973 + $0x18] sm:$0xff]
        %v3105 = vld [vmem:[%s2973 + $0x20] sm:$0xff]
        %v3106 = vld [vmem:[%s2973 + $0x30] sm:$0xff]
        %v3107 = vld [vmem:[%s2973 + $0x38] sm:$0xff]
        %v3108 = vld [vmem:[%s2973 + $0x48] sm:$0xff]
        %v3109 = vld [vmem:[%s2973 + $0x50] sm:$0xff]
        %v3110 = vld [vmem:[%s2973 + $0x60] sm:$0xff]
        %v3111 = vld [vmem:[%s2973 + $0x68] sm:$0xff]
        %v3112 = vld [vmem:[%s2973 + $0x78] sm:$0xff]
        %v3113 = vld [vmem:[%s2973 + $0x80] sm:$0xff]
        %v3114 = vld [vmem:[%s2973 + $0x90] sm:$0xff]
        %v3115 = vld [vmem:[%s2973 + $0x98] sm:$0xff]
        %v3116 = vld [vmem:[%s2973 + $0xa8] sm:$0xff]
        %v3117 = vld [vmem:[%s2973 + $0xb0] sm:$0xff]
        %v3118 = vld [vmem:[%s2973 + $0xc0] sm:$0xff]
        %v3119 = vld [vmem:[%s2973 + $0xc8] sm:$0xff]
        %v3120 = vld [vmem:[%s2973 + $0xd8] sm:$0xff]
        %v3121 = vld [vmem:[%s2973 + $0xe0] sm:$0xff]
        %v3122 = vld [vmem:[%s2973 + $0xf0] sm:$0xff]
        %v3123 = vld [vmem:[%s2973 + $0xf8] sm:$0xff]
        %v3124 = vld [vmem:[%s2973 + $0x108] sm:$0xff]
        %v3125 = vld [vmem:[%s2973 + $0x110] sm:$0xff]
        %v3126 = vld [vmem:[%s2973 + $0x120] sm:$0xff]
        %v3127 = vld [vmem:[%s2973 + $0x128] sm:$0xff]
        %v3128 = vld [vmem:[%s2973 + $0x138] sm:$0xff]
        %v3129 = vld [vmem:[%s2973 + $0x140] sm:$0xff]
        %v3130 = vld [vmem:[%s2973 + $0x150] sm:$0xff]
        %v3131 = vld [vmem:[%s2973 + $0x158] sm:$0xff]
        %v3132 = vld [vmem:[%s2973 + $0x168] sm:$0xff]
        %v3133 = vld [vmem:[%s2973 + $0x170] sm:$0xff]
        %v3134 = vld [vmem:[%s2973 + $0x1] sm:$0xff]
        %v3135 = vld [vmem:[%s2973 + $0x9] sm:$0xff]
        %v3136 = vld [vmem:[%s2973 + $0x19] sm:$0xff]
        %v3137 = vld [vmem:[%s2973 + $0x21] sm:$0xff]
        %v3138 = vld [vmem:[%s2973 + $0x31] sm:$0xff]
        %v3139 = vld [vmem:[%s2973 + $0x39] sm:$0xff]
        %v3140 = vld [vmem:[%s2973 + $0x49] sm:$0xff]
        %v3141 = vld [vmem:[%s2973 + $0x51] sm:$0xff]
        %v3142 = vld [vmem:[%s2973 + $0x61] sm:$0xff]
        %v3143 = vld [vmem:[%s2973 + $0x69] sm:$0xff]
        %v3144 = vld [vmem:[%s2973 + $0x79] sm:$0xff]
        %v3145 = vld [vmem:[%s2973 + $0x81] sm:$0xff]
        %v3146 = vld [vmem:[%s2973 + $0x91] sm:$0xff]
        %v3147 = vld [vmem:[%s2973 + $0x99] sm:$0xff]
        %v3148 = vld [vmem:[%s2973 + $0xa9] sm:$0xff]
        %v3149 = vld [vmem:[%s2973 + $0xb1] sm:$0xff]
        %v3150 = vld [vmem:[%s2973 + $0xc1] sm:$0xff]
        %v3151 = vld [vmem:[%s2973 + $0xc9] sm:$0xff]
        %v3152 = vld [vmem:[%s2973 + $0xd9] sm:$0xff]
        %v3153 = vld [vmem:[%s2973 + $0xe1] sm:$0xff]
        %v3154 = vld [vmem:[%s2973 + $0xf1] sm:$0xff]
        %v3155 = vld [vmem:[%s2973 + $0xf9] sm:$0xff]
        %v3156 = vld [vmem:[%s2973 + $0x109] sm:$0xff]
        %v3157 = vld [vmem:[%s2973 + $0x111] sm:$0xff]
        %v3158 = vld [vmem:[%s2973 + $0x121] sm:$0xff]
        %v3159 = vld [vmem:[%s2973 + $0x129] sm:$0xff]
        %v3160 = vld [vmem:[%s2973 + $0x139] sm:$0xff]
        %v3161 = vld [vmem:[%s2973 + $0x141] sm:$0xff]
        %v3162 = vld [vmem:[%s2973 + $0x151] sm:$0xff]
        %v3163 = vld [vmem:[%s2973 + $0x159] sm:$0xff]
        %v3164 = vld [vmem:[%s2973 + $0x169] sm:$0xff]
        %v3165 = vld [vmem:[%s2973 + $0x171] sm:$0xff]
        %v3166 = vld [vmem:[%s2973 + $0x2] sm:$0xff]
        %v3167 = vld [vmem:[%s2973 + $0xa] sm:$0xff]
        %v3168 = vld [vmem:[%s2973 + $0x1a] sm:$0xff]
        %v3169 = vld [vmem:[%s2973 + $0x22] sm:$0xff]
        %v3170 = vld [vmem:[%s2973 + $0x32] sm:$0xff]
        %v3171 = vld [vmem:[%s2973 + $0x3a] sm:$0xff]
        %v3172 = vld [vmem:[%s2973 + $0x4a] sm:$0xff]
        %v3173 = vld [vmem:[%s2973 + $0x52] sm:$0xff]
        %v3174 = vld [vmem:[%s2973 + $0x62] sm:$0xff]
        %v3175 = vld [vmem:[%s2973 + $0x6a] sm:$0xff]
        %v3176 = vld [vmem:[%s2973 + $0x7a] sm:$0xff]
        %v3177 = vld [vmem:[%s2973 + $0x82] sm:$0xff]
        %v3178 = vld [vmem:[%s2973 + $0x92] sm:$0xff]
        %v3179 = vld [vmem:[%s2973 + $0x9a] sm:$0xff]
        %v3180 = vld [vmem:[%s2973 + $0xaa] sm:$0xff]
        %v3181 = vld [vmem:[%s2973 + $0xb2] sm:$0xff]
        %v3182 = vld [vmem:[%s2973 + $0xc2] sm:$0xff]
        %v3183 = vld [vmem:[%s2973 + $0xca] sm:$0xff]
        %v3184 = vld [vmem:[%s2973 + $0xda] sm:$0xff]
        %v3185 = vld [vmem:[%s2973 + $0xe2] sm:$0xff]
        %v3186 = vld [vmem:[%s2973 + $0xf2] sm:$0xff]
        %v3187 = vld [vmem:[%s2973 + $0xfa] sm:$0xff]
        %v3188 = vld [vmem:[%s2973 + $0x10a] sm:$0xff]
        %v3189 = vld [vmem:[%s2973 + $0x112] sm:$0xff]
        %v3190 = vld [vmem:[%s2973 + $0x122] sm:$0xff]
        %v3191 = vld [vmem:[%s2973 + $0x12a] sm:$0xff]
        %v3192 = vld [vmem:[%s2973 + $0x13a] sm:$0xff]
        %v3193 = vld [vmem:[%s2973 + $0x142] sm:$0xff]
        %v3194 = vld [vmem:[%s2973 + $0x152] sm:$0xff]
        %v3195 = vld [vmem:[%s2973 + $0x15a] sm:$0xff]
        %v3196 = vld [vmem:[%s2973 + $0x16a] sm:$0xff]
        %v3197 = vld [vmem:[%s2973 + $0x172] sm:$0xff]
        %s3198 = scalar_lea.vmem [#allocation3], 48
        %v3199 = vld [vmem:[%s3198] sm:$0xff]
        %v3200 = vld [vmem:[%s3198 + $0x8] sm:$0xff]
        %v3201 = vld [vmem:[%s3198 + $0x18] sm:$0xff]
        %v3202 = vld [vmem:[%s3198 + $0x20] sm:$0xff]
        %v3203 = vld [vmem:[%s3198 + $0x30] sm:$0xff]
        %v3204 = vld [vmem:[%s3198 + $0x38] sm:$0xff]
        %v3205 = vld [vmem:[%s3198 + $0x48] sm:$0xff]
        %v3206 = vld [vmem:[%s3198 + $0x50] sm:$0xff]
        %v3207 = vld [vmem:[%s3198 + $0x60] sm:$0xff]
        %v3208 = vld [vmem:[%s3198 + $0x68] sm:$0xff]
        %v3209 = vld [vmem:[%s3198 + $0x78] sm:$0xff]
        %v3210 = vld [vmem:[%s3198 + $0x80] sm:$0xff]
        %v3211 = vld [vmem:[%s3198 + $0x90] sm:$0xff]
        %v3212 = vld [vmem:[%s3198 + $0x98] sm:$0xff]
        %v3213 = vld [vmem:[%s3198 + $0xa8] sm:$0xff]
        %v3214 = vld [vmem:[%s3198 + $0xb0] sm:$0xff]
        %v3215 = vld [vmem:[%s3198 + $0xc0] sm:$0xff]
        %v3216 = vld [vmem:[%s3198 + $0xc8] sm:$0xff]
        %v3217 = vld [vmem:[%s3198 + $0xd8] sm:$0xff]
        %v3218 = vld [vmem:[%s3198 + $0xe0] sm:$0xff]
        %v3219 = vld [vmem:[%s3198 + $0xf0] sm:$0xff]
        %v3220 = vld [vmem:[%s3198 + $0xf8] sm:$0xff]
        %v3221 = vld [vmem:[%s3198 + $0x108] sm:$0xff]
        %v3222 = vld [vmem:[%s3198 + $0x110] sm:$0xff]
        %v3223 = vld [vmem:[%s3198 + $0x120] sm:$0xff]
        %v3224 = vld [vmem:[%s3198 + $0x128] sm:$0xff]
        %v3225 = vld [vmem:[%s3198 + $0x138] sm:$0xff]
        %v3226 = vld [vmem:[%s3198 + $0x140] sm:$0xff]
        %v3227 = vld [vmem:[%s3198 + $0x150] sm:$0xff]
        %v3228 = vld [vmem:[%s3198 + $0x158] sm:$0xff]
        %v3229 = vld [vmem:[%s3198 + $0x168] sm:$0xff]
        %v3230 = vld [vmem:[%s3198 + $0x170] sm:$0xff]
        %v3231 = vld [vmem:[%s3198 + $0x1] sm:$0xff]
        %v3232 = vld [vmem:[%s3198 + $0x9] sm:$0xff]
        %v3233 = vld [vmem:[%s3198 + $0x19] sm:$0xff]
        %v3234 = vld [vmem:[%s3198 + $0x21] sm:$0xff]
        %v3235 = vld [vmem:[%s3198 + $0x31] sm:$0xff]
        %v3236 = vld [vmem:[%s3198 + $0x39] sm:$0xff]
        %v3237 = vld [vmem:[%s3198 + $0x49] sm:$0xff]
        %v3238 = vld [vmem:[%s3198 + $0x51] sm:$0xff]
        %v3239 = vld [vmem:[%s3198 + $0x61] sm:$0xff]
        %v3240 = vld [vmem:[%s3198 + $0x69] sm:$0xff]
        %v3241 = vld [vmem:[%s3198 + $0x79] sm:$0xff]
        %v3242 = vld [vmem:[%s3198 + $0x81] sm:$0xff]
        %v3243 = vld [vmem:[%s3198 + $0x91] sm:$0xff]
        %v3244 = vld [vmem:[%s3198 + $0x99] sm:$0xff]
        %v3245 = vld [vmem:[%s3198 + $0xa9] sm:$0xff]
        %v3246 = vld [vmem:[%s3198 + $0xb1] sm:$0xff]
        %v3247 = vld [vmem:[%s3198 + $0xc1] sm:$0xff]
        %v3248 = vld [vmem:[%s3198 + $0xc9] sm:$0xff]
        %v3249 = vld [vmem:[%s3198 + $0xd9] sm:$0xff]
        %v3250 = vld [vmem:[%s3198 + $0xe1] sm:$0xff]
        %v3251 = vld [vmem:[%s3198 + $0xf1] sm:$0xff]
        %v3252 = vld [vmem:[%s3198 + $0xf9] sm:$0xff]
        %v3253 = vld [vmem:[%s3198 + $0x109] sm:$0xff]
        %v3254 = vld [vmem:[%s3198 + $0x111] sm:$0xff]
        %v3255 = vld [vmem:[%s3198 + $0x121] sm:$0xff]
        %v3256 = vld [vmem:[%s3198 + $0x129] sm:$0xff]
        %v3257 = vld [vmem:[%s3198 + $0x139] sm:$0xff]
        %v3258 = vld [vmem:[%s3198 + $0x141] sm:$0xff]
        %v3259 = vld [vmem:[%s3198 + $0x151] sm:$0xff]
        %v3260 = vld [vmem:[%s3198 + $0x159] sm:$0xff]
        %v3261 = vld [vmem:[%s3198 + $0x169] sm:$0xff]
        %v3262 = vld [vmem:[%s3198 + $0x171] sm:$0xff]
        %v3263 = vld [vmem:[%s3198 + $0x2] sm:$0xff]
        %v3264 = vld [vmem:[%s3198 + $0xa] sm:$0xff]
        %v3265 = vld [vmem:[%s3198 + $0x1a] sm:$0xff]
        %v3266 = vld [vmem:[%s3198 + $0x22] sm:$0xff]
        %v3267 = vld [vmem:[%s3198 + $0x32] sm:$0xff]
        %v3268 = vld [vmem:[%s3198 + $0x3a] sm:$0xff]
        %v3269 = vld [vmem:[%s3198 + $0x4a] sm:$0xff]
        %v3270 = vld [vmem:[%s3198 + $0x52] sm:$0xff]
        %v3271 = vld [vmem:[%s3198 + $0x62] sm:$0xff]
        %v3272 = vld [vmem:[%s3198 + $0x6a] sm:$0xff]
        %v3273 = vld [vmem:[%s3198 + $0x7a] sm:$0xff]
        %v3274 = vld [vmem:[%s3198 + $0x82] sm:$0xff]
        %v3275 = vld [vmem:[%s3198 + $0x92] sm:$0xff]
        %v3276 = vld [vmem:[%s3198 + $0x9a] sm:$0xff]
        %v3277 = vld [vmem:[%s3198 + $0xaa] sm:$0xff]
        %v3278 = vld [vmem:[%s3198 + $0xb2] sm:$0xff]
        %v3279 = vld [vmem:[%s3198 + $0xc2] sm:$0xff]
        %v3280 = vld [vmem:[%s3198 + $0xca] sm:$0xff]
        %v3281 = vld [vmem:[%s3198 + $0xda] sm:$0xff]
        %v3282 = vld [vmem:[%s3198 + $0xe2] sm:$0xff]
        %v3283 = vld [vmem:[%s3198 + $0xf2] sm:$0xff]
        %v3284 = vld [vmem:[%s3198 + $0xfa] sm:$0xff]
        %v3285 = vld [vmem:[%s3198 + $0x10a] sm:$0xff]
        %v3286 = vld [vmem:[%s3198 + $0x112] sm:$0xff]
        %v3287 = vld [vmem:[%s3198 + $0x122] sm:$0xff]
        %v3288 = vld [vmem:[%s3198 + $0x12a] sm:$0xff]
        %v3289 = vld [vmem:[%s3198 + $0x13a] sm:$0xff]
        %v3290 = vld [vmem:[%s3198 + $0x142] sm:$0xff]
        %v3291 = vld [vmem:[%s3198 + $0x152] sm:$0xff]
        %v3292 = vld [vmem:[%s3198 + $0x15a] sm:$0xff]
        %v3293 = vld [vmem:[%s3198 + $0x16a] sm:$0xff]
        %v3294 = vld [vmem:[%s3198 + $0x172] sm:$0xff]
        %3327 = vrot.lane.b32.xlu0 %v3038, 16
        %v3328 = vpop.permute.xlu0 %3327
        %3329 = vrot.lane.b32.xlu0 %v3039, 16
        %v3330 = vpop.permute.xlu0 %3329
        %3331 = vrot.lane.b32.xlu0 %v3040, 16
        %v3332 = vpop.permute.xlu0 %3331
        %3333 = vrot.lane.b32.xlu0 %v3041, 16
        %v3334 = vpop.permute.xlu0 %3333
        %3335 = vrot.lane.b32.xlu0 %v3042, 16
        %v3336 = vpop.permute.xlu0 %3335
        %3337 = vrot.lane.b32.xlu0 %v3043, 16
        %v3338 = vpop.permute.xlu0 %3337
        %3339 = vrot.lane.b32.xlu0 %v3044, 16
        %v3340 = vpop.permute.xlu0 %3339
        %3341 = vrot.lane.b32.xlu0 %v3045, 16
        %v3342 = vpop.permute.xlu0 %3341
        %3343 = vrot.lane.b32.xlu0 %v3046, 16
        %v3344 = vpop.permute.xlu0 %3343
        %3345 = vrot.lane.b32.xlu0 %v3047, 16
        %v3346 = vpop.permute.xlu0 %3345
        %3347 = vrot.lane.b32.xlu0 %v3048, 16
        %v3348 = vpop.permute.xlu0 %3347
        %3349 = vrot.lane.b32.xlu0 %v3049, 16
        %v3350 = vpop.permute.xlu0 %3349
        %3351 = vrot.lane.b32.xlu0 %v3050, 16
        %v3352 = vpop.permute.xlu0 %3351
        %3353 = vrot.lane.b32.xlu0 %v3051, 16
        %v3354 = vpop.permute.xlu0 %3353
        %3355 = vrot.lane.b32.xlu0 %v3052, 16
        %v3356 = vpop.permute.xlu0 %3355
        %3357 = vrot.lane.b32.xlu0 %v3053, 16
        %v3358 = vpop.permute.xlu0 %3357
        %3359 = vrot.lane.b32.xlu0 %v3054, 16
        %v3360 = vpop.permute.xlu0 %3359
        %3361 = vrot.lane.b32.xlu0 %v3055, 16
        %v3362 = vpop.permute.xlu0 %3361
        %3363 = vrot.lane.b32.xlu0 %v3056, 16
        %v3364 = vpop.permute.xlu0 %3363
        %3365 = vrot.lane.b32.xlu0 %v3057, 16
        %v3366 = vpop.permute.xlu0 %3365
        %3367 = vrot.lane.b32.xlu0 %v3058, 16
        %v3368 = vpop.permute.xlu0 %3367
        %3369 = vrot.lane.b32.xlu0 %v3059, 16
        %v3370 = vpop.permute.xlu0 %3369
        %3371 = vrot.lane.b32.xlu0 %v3060, 16
        %v3372 = vpop.permute.xlu0 %3371
        %3373 = vrot.lane.b32.xlu0 %v3061, 16
        %v3374 = vpop.permute.xlu0 %3373
        %3375 = vrot.lane.b32.xlu0 %v3062, 16
        %v3376 = vpop.permute.xlu0 %3375
        %3377 = vrot.lane.b32.xlu0 %v3063, 16
        %v3378 = vpop.permute.xlu0 %3377
        %3379 = vrot.lane.b32.xlu0 %v3064, 16
        %v3380 = vpop.permute.xlu0 %3379
        %3381 = vrot.lane.b32.xlu0 %v3065, 16
        %v3382 = vpop.permute.xlu0 %3381
        %3383 = vrot.lane.b32.xlu0 %v3066, 16
        %v3384 = vpop.permute.xlu0 %3383
        %3385 = vrot.lane.b32.xlu0 %v3067, 16
        %v3386 = vpop.permute.xlu0 %3385
        %3387 = vrot.lane.b32.xlu0 %v3068, 16
        %v3388 = vpop.permute.xlu0 %3387
        %3389 = vrot.lane.b32.xlu0 %v3069, 16
        %v3390 = vpop.permute.xlu0 %3389
        %3455 = vrot.lane.b32.xlu0 %v3070, 32
        %v3456 = vpop.permute.xlu0 %3455
        %3457 = vrot.lane.b32.xlu0 %v3071, 32
        %v3458 = vpop.permute.xlu0 %3457
        %3459 = vrot.lane.b32.xlu0 %v3072, 32
        %v3460 = vpop.permute.xlu0 %3459
        %3461 = vrot.lane.b32.xlu0 %v3073, 32
        %v3462 = vpop.permute.xlu0 %3461
        %3463 = vrot.lane.b32.xlu0 %v3074, 32
        %v3464 = vpop.permute.xlu0 %3463
        %3465 = vrot.lane.b32.xlu0 %v3075, 32
        %v3466 = vpop.permute.xlu0 %3465
        %3467 = vrot.lane.b32.xlu0 %v3076, 32
        %v3468 = vpop.permute.xlu0 %3467
        %3469 = vrot.lane.b32.xlu0 %v3077, 32
        %v3470 = vpop.permute.xlu0 %3469
        %3471 = vrot.lane.b32.xlu0 %v3078, 32
        %v3472 = vpop.permute.xlu0 %3471
        %3473 = vrot.lane.b32.xlu0 %v3079, 32
        %v3474 = vpop.permute.xlu0 %3473
        %3475 = vrot.lane.b32.xlu0 %v3080, 32
        %v3476 = vpop.permute.xlu0 %3475
        %3477 = vrot.lane.b32.xlu0 %v3081, 32
        %v3478 = vpop.permute.xlu0 %3477
        %3479 = vrot.lane.b32.xlu0 %v3082, 32
        %v3480 = vpop.permute.xlu0 %3479
        %3481 = vrot.lane.b32.xlu0 %v3083, 32
        %v3482 = vpop.permute.xlu0 %3481
        %3483 = vrot.lane.b32.xlu0 %v3084, 32
        %v3484 = vpop.permute.xlu0 %3483
        %3485 = vrot.lane.b32.xlu0 %v3085, 32
        %v3486 = vpop.permute.xlu0 %3485
        %3487 = vrot.lane.b32.xlu0 %v3086, 32
        %v3488 = vpop.permute.xlu0 %3487
        %3489 = vrot.lane.b32.xlu0 %v3087, 32
        %v3490 = vpop.permute.xlu0 %3489
        %3491 = vrot.lane.b32.xlu0 %v3088, 32
        %v3492 = vpop.permute.xlu0 %3491
        %3493 = vrot.lane.b32.xlu0 %v3089, 32
        %v3494 = vpop.permute.xlu0 %3493
        %3495 = vrot.lane.b32.xlu0 %v3090, 32
        %v3496 = vpop.permute.xlu0 %3495
        %3497 = vrot.lane.b32.xlu0 %v3091, 32
        %v3498 = vpop.permute.xlu0 %3497
        %3499 = vrot.lane.b32.xlu0 %v3092, 32
        %v3500 = vpop.permute.xlu0 %3499
        %3501 = vrot.lane.b32.xlu0 %v3093, 32
        %v3502 = vpop.permute.xlu0 %3501
        %3503 = vrot.lane.b32.xlu0 %v3094, 32
        %v3504 = vpop.permute.xlu0 %3503
        %3505 = vrot.lane.b32.xlu0 %v3095, 32
        %v3506 = vpop.permute.xlu0 %3505
        %3507 = vrot.lane.b32.xlu0 %v3096, 32
        %v3508 = vpop.permute.xlu0 %3507
        %3509 = vrot.lane.b32.xlu0 %v3097, 32
        %v3510 = vpop.permute.xlu0 %3509
        %3511 = vrot.lane.b32.xlu0 %v3098, 32
        %v3512 = vpop.permute.xlu0 %3511
        %3513 = vrot.lane.b32.xlu0 %v3099, 32
        %v3514 = vpop.permute.xlu0 %3513
        %3515 = vrot.lane.b32.xlu0 %v3100, 32
        %v3516 = vpop.permute.xlu0 %3515
        %3517 = vrot.lane.b32.xlu0 %v3101, 32
        %v3518 = vpop.permute.xlu0 %3517
        %3583 = vrot.lane.b32.xlu0 %v3102, 48
        %v3584 = vpop.permute.xlu0 %3583
        %3585 = vrot.lane.b32.xlu0 %v3103, 48
        %v3586 = vpop.permute.xlu0 %3585
        %3587 = vrot.lane.b32.xlu0 %v3104, 48
        %v3588 = vpop.permute.xlu0 %3587
        %3589 = vrot.lane.b32.xlu0 %v3105, 48
        %v3590 = vpop.permute.xlu0 %3589
        %3591 = vrot.lane.b32.xlu0 %v3106, 48
        %v3592 = vpop.permute.xlu0 %3591
        %3593 = vrot.lane.b32.xlu0 %v3107, 48
        %v3594 = vpop.permute.xlu0 %3593
        %3595 = vrot.lane.b32.xlu0 %v3108, 48
        %v3596 = vpop.permute.xlu0 %3595
        %3597 = vrot.lane.b32.xlu0 %v3109, 48
        %v3598 = vpop.permute.xlu0 %3597
        %3599 = vrot.lane.b32.xlu0 %v3110, 48
        %v3600 = vpop.permute.xlu0 %3599
        %3601 = vrot.lane.b32.xlu0 %v3111, 48
        %v3602 = vpop.permute.xlu0 %3601
        %3603 = vrot.lane.b32.xlu0 %v3112, 48
        %v3604 = vpop.permute.xlu0 %3603
        %3605 = vrot.lane.b32.xlu0 %v3113, 48
        %v3606 = vpop.permute.xlu0 %3605
        %3607 = vrot.lane.b32.xlu0 %v3114, 48
        %v3608 = vpop.permute.xlu0 %3607
        %3609 = vrot.lane.b32.xlu0 %v3115, 48
        %v3610 = vpop.permute.xlu0 %3609
        %3611 = vrot.lane.b32.xlu0 %v3116, 48
        %v3612 = vpop.permute.xlu0 %3611
        %3613 = vrot.lane.b32.xlu0 %v3117, 48
        %v3614 = vpop.permute.xlu0 %3613
        %3615 = vrot.lane.b32.xlu0 %v3118, 48
        %v3616 = vpop.permute.xlu0 %3615
        %3617 = vrot.lane.b32.xlu0 %v3119, 48
        %v3618 = vpop.permute.xlu0 %3617
        %3619 = vrot.lane.b32.xlu0 %v3120, 48
        %v3620 = vpop.permute.xlu0 %3619
        %3621 = vrot.lane.b32.xlu0 %v3121, 48
        %v3622 = vpop.permute.xlu0 %3621
        %3623 = vrot.lane.b32.xlu0 %v3122, 48
        %v3624 = vpop.permute.xlu0 %3623
        %3625 = vrot.lane.b32.xlu0 %v3123, 48
        %v3626 = vpop.permute.xlu0 %3625
        %3627 = vrot.lane.b32.xlu0 %v3124, 48
        %v3628 = vpop.permute.xlu0 %3627
        %3629 = vrot.lane.b32.xlu0 %v3125, 48
        %v3630 = vpop.permute.xlu0 %3629
        %3631 = vrot.lane.b32.xlu0 %v3126, 48
        %v3632 = vpop.permute.xlu0 %3631
        %3633 = vrot.lane.b32.xlu0 %v3127, 48
        %v3634 = vpop.permute.xlu0 %3633
        %3635 = vrot.lane.b32.xlu0 %v3128, 48
        %v3636 = vpop.permute.xlu0 %3635
        %3637 = vrot.lane.b32.xlu0 %v3129, 48
        %v3638 = vpop.permute.xlu0 %3637
        %3639 = vrot.lane.b32.xlu0 %v3130, 48
        %v3640 = vpop.permute.xlu0 %3639
        %3641 = vrot.lane.b32.xlu0 %v3131, 48
        %v3642 = vpop.permute.xlu0 %3641
        %3643 = vrot.lane.b32.xlu0 %v3132, 48
        %v3644 = vpop.permute.xlu0 %3643
        %3645 = vrot.lane.b32.xlu0 %v3133, 48
        %v3646 = vpop.permute.xlu0 %3645
        %3711 = vrot.lane.b32.xlu0 %v3134, 64
        %v3712 = vpop.permute.xlu0 %3711
        %3713 = vrot.lane.b32.xlu0 %v3135, 64
        %v3714 = vpop.permute.xlu0 %3713
        %3715 = vrot.lane.b32.xlu0 %v3136, 64
        %v3716 = vpop.permute.xlu0 %3715
        %3717 = vrot.lane.b32.xlu0 %v3137, 64
        %v3718 = vpop.permute.xlu0 %3717
        %3719 = vrot.lane.b32.xlu0 %v3138, 64
        %v3720 = vpop.permute.xlu0 %3719
        %3721 = vrot.lane.b32.xlu0 %v3139, 64
        %v3722 = vpop.permute.xlu0 %3721
        %3723 = vrot.lane.b32.xlu0 %v3140, 64
        %v3724 = vpop.permute.xlu0 %3723
        %3725 = vrot.lane.b32.xlu0 %v3141, 64
        %v3726 = vpop.permute.xlu0 %3725
        %3727 = vrot.lane.b32.xlu0 %v3142, 64
        %v3728 = vpop.permute.xlu0 %3727
        %3729 = vrot.lane.b32.xlu0 %v3143, 64
        %v3730 = vpop.permute.xlu0 %3729
        %3731 = vrot.lane.b32.xlu0 %v3144, 64
        %v3732 = vpop.permute.xlu0 %3731
        %3733 = vrot.lane.b32.xlu0 %v3145, 64
        %v3734 = vpop.permute.xlu0 %3733
        %3735 = vrot.lane.b32.xlu0 %v3146, 64
        %v3736 = vpop.permute.xlu0 %3735
        %3737 = vrot.lane.b32.xlu0 %v3147, 64
        %v3738 = vpop.permute.xlu0 %3737
        %3739 = vrot.lane.b32.xlu0 %v3148, 64
        %v3740 = vpop.permute.xlu0 %3739
        %3741 = vrot.lane.b32.xlu0 %v3149, 64
        %v3742 = vpop.permute.xlu0 %3741
        %3743 = vrot.lane.b32.xlu0 %v3150, 64
        %v3744 = vpop.permute.xlu0 %3743
        %3745 = vrot.lane.b32.xlu0 %v3151, 64
        %v3746 = vpop.permute.xlu0 %3745
        %3747 = vrot.lane.b32.xlu0 %v3152, 64
        %v3748 = vpop.permute.xlu0 %3747
        %3749 = vrot.lane.b32.xlu0 %v3153, 64
        %v3750 = vpop.permute.xlu0 %3749
        %3751 = vrot.lane.b32.xlu0 %v3154, 64
        %v3752 = vpop.permute.xlu0 %3751
        %3753 = vrot.lane.b32.xlu0 %v3155, 64
        %v3754 = vpop.permute.xlu0 %3753
        %3755 = vrot.lane.b32.xlu0 %v3156, 64
        %v3756 = vpop.permute.xlu0 %3755
        %3757 = vrot.lane.b32.xlu0 %v3157, 64
        %v3758 = vpop.permute.xlu0 %3757
        %3759 = vrot.lane.b32.xlu0 %v3158, 64
        %v3760 = vpop.permute.xlu0 %3759
        %3761 = vrot.lane.b32.xlu0 %v3159, 64
        %v3762 = vpop.permute.xlu0 %3761
        %3763 = vrot.lane.b32.xlu0 %v3160, 64
        %v3764 = vpop.permute.xlu0 %3763
        %3765 = vrot.lane.b32.xlu0 %v3161, 64
        %v3766 = vpop.permute.xlu0 %3765
        %3767 = vrot.lane.b32.xlu0 %v3162, 64
        %v3768 = vpop.permute.xlu0 %3767
        %3769 = vrot.lane.b32.xlu0 %v3163, 64
        %v3770 = vpop.permute.xlu0 %3769
        %3771 = vrot.lane.b32.xlu0 %v3164, 64
        %v3772 = vpop.permute.xlu0 %3771
        %3773 = vrot.lane.b32.xlu0 %v3165, 64
        %v3774 = vpop.permute.xlu0 %3773
        %3839 = vrot.lane.b32.xlu0 %v3166, 80
        %v3840 = vpop.permute.xlu0 %3839
        %3841 = vrot.lane.b32.xlu0 %v3167, 80
        %v3842 = vpop.permute.xlu0 %3841
        %3843 = vrot.lane.b32.xlu0 %v3168, 80
        %v3844 = vpop.permute.xlu0 %3843
        %3845 = vrot.lane.b32.xlu0 %v3169, 80
        %v3846 = vpop.permute.xlu0 %3845
        %3847 = vrot.lane.b32.xlu0 %v3170, 80
        %v3848 = vpop.permute.xlu0 %3847
        %3849 = vrot.lane.b32.xlu0 %v3171, 80
        %v3850 = vpop.permute.xlu0 %3849
        %3851 = vrot.lane.b32.xlu0 %v3172, 80
        %v3852 = vpop.permute.xlu0 %3851
        %3853 = vrot.lane.b32.xlu0 %v3173, 80
        %v3854 = vpop.permute.xlu0 %3853
        %3855 = vrot.lane.b32.xlu0 %v3174, 80
        %v3856 = vpop.permute.xlu0 %3855
        %3857 = vrot.lane.b32.xlu0 %v3175, 80
        %v3858 = vpop.permute.xlu0 %3857
        %3859 = vrot.lane.b32.xlu0 %v3176, 80
        %v3860 = vpop.permute.xlu0 %3859
        %3861 = vrot.lane.b32.xlu0 %v3177, 80
        %v3862 = vpop.permute.xlu0 %3861
        %3863 = vrot.lane.b32.xlu0 %v3178, 80
        %v3864 = vpop.permute.xlu0 %3863
        %3865 = vrot.lane.b32.xlu0 %v3179, 80
        %v3866 = vpop.permute.xlu0 %3865
        %3867 = vrot.lane.b32.xlu0 %v3180, 80
        %v3868 = vpop.permute.xlu0 %3867
        %3869 = vrot.lane.b32.xlu0 %v3181, 80
        %v3870 = vpop.permute.xlu0 %3869
        %3871 = vrot.lane.b32.xlu0 %v3182, 80
        %v3872 = vpop.permute.xlu0 %3871
        %3873 = vrot.lane.b32.xlu0 %v3183, 80
        %v3874 = vpop.permute.xlu0 %3873
        %3875 = vrot.lane.b32.xlu0 %v3184, 80
        %v3876 = vpop.permute.xlu0 %3875
        %3877 = vrot.lane.b32.xlu0 %v3185, 80
        %v3878 = vpop.permute.xlu0 %3877
        %3879 = vrot.lane.b32.xlu0 %v3186, 80
        %v3880 = vpop.permute.xlu0 %3879
        %3881 = vrot.lane.b32.xlu0 %v3187, 80
        %v3882 = vpop.permute.xlu0 %3881
        %3883 = vrot.lane.b32.xlu0 %v3188, 80
        %v3884 = vpop.permute.xlu0 %3883
        %3885 = vrot.lane.b32.xlu0 %v3189, 80
        %v3886 = vpop.permute.xlu0 %3885
        %3887 = vrot.lane.b32.xlu0 %v3190, 80
        %v3888 = vpop.permute.xlu0 %3887
        %3889 = vrot.lane.b32.xlu0 %v3191, 80
        %v3890 = vpop.permute.xlu0 %3889
        %3891 = vrot.lane.b32.xlu0 %v3192, 80
        %v3892 = vpop.permute.xlu0 %3891
        %3893 = vrot.lane.b32.xlu0 %v3193, 80
        %v3894 = vpop.permute.xlu0 %3893
        %3895 = vrot.lane.b32.xlu0 %v3194, 80
        %v3896 = vpop.permute.xlu0 %3895
        %3897 = vrot.lane.b32.xlu0 %v3195, 80
        %v3898 = vpop.permute.xlu0 %3897
        %3899 = vrot.lane.b32.xlu0 %v3196, 80
        %v3900 = vpop.permute.xlu0 %3899
        %3901 = vrot.lane.b32.xlu0 %v3197, 80
        %v3902 = vpop.permute.xlu0 %3901
        %3967 = vrot.lane.b32.xlu0 %v3199, 96
        %v3968 = vpop.permute.xlu0 %3967
        %3969 = vrot.lane.b32.xlu0 %v3200, 96
        %v3970 = vpop.permute.xlu0 %3969
        %3971 = vrot.lane.b32.xlu0 %v3201, 96
        %v3972 = vpop.permute.xlu0 %3971
        %3973 = vrot.lane.b32.xlu0 %v3202, 96
        %v3974 = vpop.permute.xlu0 %3973
        %3975 = vrot.lane.b32.xlu0 %v3203, 96
        %v3976 = vpop.permute.xlu0 %3975
        %3977 = vrot.lane.b32.xlu0 %v3204, 96
        %v3978 = vpop.permute.xlu0 %3977
        %3979 = vrot.lane.b32.xlu0 %v3205, 96
        %v3980 = vpop.permute.xlu0 %3979
        %3981 = vrot.lane.b32.xlu0 %v3206, 96
        %v3982 = vpop.permute.xlu0 %3981
        %3983 = vrot.lane.b32.xlu0 %v3207, 96
        %v3984 = vpop.permute.xlu0 %3983
        %3985 = vrot.lane.b32.xlu0 %v3208, 96
        %v3986 = vpop.permute.xlu0 %3985
        %3987 = vrot.lane.b32.xlu0 %v3209, 96
        %v3988 = vpop.permute.xlu0 %3987
        %3989 = vrot.lane.b32.xlu0 %v3210, 96
        %v3990 = vpop.permute.xlu0 %3989
        %3991 = vrot.lane.b32.xlu0 %v3211, 96
        %v3992 = vpop.permute.xlu0 %3991
        %3993 = vrot.lane.b32.xlu0 %v3212, 96
        %v3994 = vpop.permute.xlu0 %3993
        %3995 = vrot.lane.b32.xlu0 %v3213, 96
        %v3996 = vpop.permute.xlu0 %3995
        %3997 = vrot.lane.b32.xlu0 %v3214, 96
        %v3998 = vpop.permute.xlu0 %3997
        %3999 = vrot.lane.b32.xlu0 %v3215, 96
        %v4000 = vpop.permute.xlu0 %3999
        %4001 = vrot.lane.b32.xlu0 %v3216, 96
        %v4002 = vpop.permute.xlu0 %4001
        %4003 = vrot.lane.b32.xlu0 %v3217, 96
        %v4004 = vpop.permute.xlu0 %4003
        %4005 = vrot.lane.b32.xlu0 %v3218, 96
        %v4006 = vpop.permute.xlu0 %4005
        %4007 = vrot.lane.b32.xlu0 %v3219, 96
        %v4008 = vpop.permute.xlu0 %4007
        %4009 = vrot.lane.b32.xlu0 %v3220, 96
        %v4010 = vpop.permute.xlu0 %4009
        %4011 = vrot.lane.b32.xlu0 %v3221, 96
        %v4012 = vpop.permute.xlu0 %4011
        %4013 = vrot.lane.b32.xlu0 %v3222, 96
        %v4014 = vpop.permute.xlu0 %4013
        %4015 = vrot.lane.b32.xlu0 %v3223, 96
        %v4016 = vpop.permute.xlu0 %4015
        %4017 = vrot.lane.b32.xlu0 %v3224, 96
        %v4018 = vpop.permute.xlu0 %4017
        %4019 = vrot.lane.b32.xlu0 %v3225, 96
        %v4020 = vpop.permute.xlu0 %4019
        %4021 = vrot.lane.b32.xlu0 %v3226, 96
        %v4022 = vpop.permute.xlu0 %4021
        %4023 = vrot.lane.b32.xlu0 %v3227, 96
        %v4024 = vpop.permute.xlu0 %4023
        %4025 = vrot.lane.b32.xlu0 %v3228, 96
        %v4026 = vpop.permute.xlu0 %4025
        %4027 = vrot.lane.b32.xlu0 %v3229, 96
        %v4028 = vpop.permute.xlu0 %4027
        %4029 = vrot.lane.b32.xlu0 %v3230, 96
        %v4030 = vpop.permute.xlu0 %4029
        %4095 = vrot.lane.b32.xlu0 %v3231, 112
        %v4096 = vpop.permute.xlu0 %4095
        %4097 = vrot.lane.b32.xlu0 %v3232, 112
        %v4098 = vpop.permute.xlu0 %4097
        %4099 = vrot.lane.b32.xlu0 %v3233, 112
        %v4100 = vpop.permute.xlu0 %4099
        %4101 = vrot.lane.b32.xlu0 %v3234, 112
        %v4102 = vpop.permute.xlu0 %4101
        %4103 = vrot.lane.b32.xlu0 %v3235, 112
        %v4104 = vpop.permute.xlu0 %4103
        %4105 = vrot.lane.b32.xlu0 %v3236, 112
        %v4106 = vpop.permute.xlu0 %4105
        %4107 = vrot.lane.b32.xlu0 %v3237, 112
        %v4108 = vpop.permute.xlu0 %4107
        %4109 = vrot.lane.b32.xlu0 %v3238, 112
        %v4110 = vpop.permute.xlu0 %4109
        %4111 = vrot.lane.b32.xlu0 %v3239, 112
        %v4112 = vpop.permute.xlu0 %4111
        %4113 = vrot.lane.b32.xlu0 %v3240, 112
        %v4114 = vpop.permute.xlu0 %4113
        %4115 = vrot.lane.b32.xlu0 %v3241, 112
        %v4116 = vpop.permute.xlu0 %4115
        %4117 = vrot.lane.b32.xlu0 %v3242, 112
        %v4118 = vpop.permute.xlu0 %4117
        %4119 = vrot.lane.b32.xlu0 %v3243, 112
        %v4120 = vpop.permute.xlu0 %4119
        %4121 = vrot.lane.b32.xlu0 %v3244, 112
        %v4122 = vpop.permute.xlu0 %4121
        %4123 = vrot.lane.b32.xlu0 %v3245, 112
        %v4124 = vpop.permute.xlu0 %4123
        %4125 = vrot.lane.b32.xlu0 %v3246, 112
        %v4126 = vpop.permute.xlu0 %4125
        %4127 = vrot.lane.b32.xlu0 %v3247, 112
        %v4128 = vpop.permute.xlu0 %4127
        %4129 = vrot.lane.b32.xlu0 %v3248, 112
        %v4130 = vpop.permute.xlu0 %4129
        %4131 = vrot.lane.b32.xlu0 %v3249, 112
        %v4132 = vpop.permute.xlu0 %4131
        %4133 = vrot.lane.b32.xlu0 %v3250, 112
        %v4134 = vpop.permute.xlu0 %4133
        %4135 = vrot.lane.b32.xlu0 %v3251, 112
        %v4136 = vpop.permute.xlu0 %4135
        %4137 = vrot.lane.b32.xlu0 %v3252, 112
        %v4138 = vpop.permute.xlu0 %4137
        %4139 = vrot.lane.b32.xlu0 %v3253, 112
        %v4140 = vpop.permute.xlu0 %4139
        %4141 = vrot.lane.b32.xlu0 %v3254, 112
        %v4142 = vpop.permute.xlu0 %4141
        %4143 = vrot.lane.b32.xlu0 %v3255, 112
        %v4144 = vpop.permute.xlu0 %4143
        %4145 = vrot.lane.b32.xlu0 %v3256, 112
        %v4146 = vpop.permute.xlu0 %4145
        %4147 = vrot.lane.b32.xlu0 %v3257, 112
        %v4148 = vpop.permute.xlu0 %4147
        %4149 = vrot.lane.b32.xlu0 %v3258, 112
        %v4150 = vpop.permute.xlu0 %4149
        %4151 = vrot.lane.b32.xlu0 %v3259, 112
        %v4152 = vpop.permute.xlu0 %4151
        %4153 = vrot.lane.b32.xlu0 %v3260, 112
        %v4154 = vpop.permute.xlu0 %4153
        %4155 = vrot.lane.b32.xlu0 %v3261, 112
        %v4156 = vpop.permute.xlu0 %4155
        %4157 = vrot.lane.b32.xlu0 %v3262, 112
        %v4158 = vpop.permute.xlu0 %4157
        %v4191 = vsel %vm2312, %v3006, %v3328
        %v4192 = vsel %vm2312, %v3007, %v3330
        %v4193 = vsel %vm2312, %v3008, %v3332
        %v4194 = vsel %vm2312, %v3009, %v3334
        %v4195 = vsel %vm2312, %v3010, %v3336
        %v4196 = vsel %vm2312, %v3011, %v3338
        %v4197 = vsel %vm2312, %v3012, %v3340
        %v4198 = vsel %vm2312, %v3013, %v3342
        %v4199 = vsel %vm2312, %v3014, %v3344
        %v4200 = vsel %vm2312, %v3015, %v3346
        %v4201 = vsel %vm2312, %v3016, %v3348
        %v4202 = vsel %vm2312, %v3017, %v3350
        %v4203 = vsel %vm2312, %v3018, %v3352
        %v4204 = vsel %vm2312, %v3019, %v3354
        %v4205 = vsel %vm2312, %v3020, %v3356
        %v4206 = vsel %vm2312, %v3021, %v3358
        %v4207 = vsel %vm2312, %v3022, %v3360
        %v4208 = vsel %vm2312, %v3023, %v3362
        %v4209 = vsel %vm2312, %v3024, %v3364
        %v4210 = vsel %vm2312, %v3025, %v3366
        %v4211 = vsel %vm2312, %v3026, %v3368
        %v4212 = vsel %vm2312, %v3027, %v3370
        %v4213 = vsel %vm2312, %v3028, %v3372
        %v4214 = vsel %vm2312, %v3029, %v3374
        %v4215 = vsel %vm2312, %v3030, %v3376
        %v4216 = vsel %vm2312, %v3031, %v3378
        %v4217 = vsel %vm2312, %v3032, %v3380
        %v4218 = vsel %vm2312, %v3033, %v3382
        %v4219 = vsel %vm2312, %v3034, %v3384
        %v4220 = vsel %vm2312, %v3035, %v3386
        %v4221 = vsel %vm2312, %v3036, %v3388
        %v4222 = vsel %vm2312, %v3037, %v3390
        %v4223 = vsel %vm2378, %v4191, %v3456
        %v4224 = vsel %vm2378, %v4192, %v3458
        %v4225 = vsel %vm2378, %v4193, %v3460
        %v4226 = vsel %vm2378, %v4194, %v3462
        %v4227 = vsel %vm2378, %v4195, %v3464
        %v4228 = vsel %vm2378, %v4196, %v3466
        %v4229 = vsel %vm2378, %v4197, %v3468
        %v4230 = vsel %vm2378, %v4198, %v3470
        %v4231 = vsel %vm2378, %v4199, %v3472
        %v4232 = vsel %vm2378, %v4200, %v3474
        %v4233 = vsel %vm2378, %v4201, %v3476
        %v4234 = vsel %vm2378, %v4202, %v3478
        %v4235 = vsel %vm2378, %v4203, %v3480
        %v4236 = vsel %vm2378, %v4204, %v3482
        %v4237 = vsel %vm2378, %v4205, %v3484
        %v4238 = vsel %vm2378, %v4206, %v3486
        %v4239 = vsel %vm2378, %v4207, %v3488
        %v4240 = vsel %vm2378, %v4208, %v3490
        %v4241 = vsel %vm2378, %v4209, %v3492
        %v4242 = vsel %vm2378, %v4210, %v3494
        %v4243 = vsel %vm2378, %v4211, %v3496
        %v4244 = vsel %vm2378, %v4212, %v3498
        %v4245 = vsel %vm2378, %v4213, %v3500
        %v4246 = vsel %vm2378, %v4214, %v3502
        %v4247 = vsel %vm2378, %v4215, %v3504
        %v4248 = vsel %vm2378, %v4216, %v3506
        %v4249 = vsel %vm2378, %v4217, %v3508
        %v4250 = vsel %vm2378, %v4218, %v3510
        %v4251 = vsel %vm2378, %v4219, %v3512
        %v4252 = vsel %vm2378, %v4220, %v3514
        %v4253 = vsel %vm2378, %v4221, %v3516
        %v4254 = vsel %vm2378, %v4222, %v3518
        %v4255 = vsel %vm2444, %v4223, %v3584
        %v4256 = vsel %vm2444, %v4224, %v3586
        %v4257 = vsel %vm2444, %v4225, %v3588
        %v4258 = vsel %vm2444, %v4226, %v3590
        %v4259 = vsel %vm2444, %v4227, %v3592
        %v4260 = vsel %vm2444, %v4228, %v3594
        %v4261 = vsel %vm2444, %v4229, %v3596
        %v4262 = vsel %vm2444, %v4230, %v3598
        %v4263 = vsel %vm2444, %v4231, %v3600
        %v4264 = vsel %vm2444, %v4232, %v3602
        %v4265 = vsel %vm2444, %v4233, %v3604
        %v4266 = vsel %vm2444, %v4234, %v3606
        %v4267 = vsel %vm2444, %v4235, %v3608
        %v4268 = vsel %vm2444, %v4236, %v3610
        %v4269 = vsel %vm2444, %v4237, %v3612
        %v4270 = vsel %vm2444, %v4238, %v3614
        %v4271 = vsel %vm2444, %v4239, %v3616
        %v4272 = vsel %vm2444, %v4240, %v3618
        %v4273 = vsel %vm2444, %v4241, %v3620
        %v4274 = vsel %vm2444, %v4242, %v3622
        %v4275 = vsel %vm2444, %v4243, %v3624
        %v4276 = vsel %vm2444, %v4244, %v3626
        %v4277 = vsel %vm2444, %v4245, %v3628
        %v4278 = vsel %vm2444, %v4246, %v3630
        %v4279 = vsel %vm2444, %v4247, %v3632
        %v4280 = vsel %vm2444, %v4248, %v3634
        %v4281 = vsel %vm2444, %v4249, %v3636
        %v4282 = vsel %vm2444, %v4250, %v3638
        %v4283 = vsel %vm2444, %v4251, %v3640
        %v4284 = vsel %vm2444, %v4252, %v3642
        %v4285 = vsel %vm2444, %v4253, %v3644
        %v4286 = vsel %vm2444, %v4254, %v3646
        %v4287 = vsel %vm2510, %v4255, %v3712
        %v4288 = vsel %vm2510, %v4256, %v3714
        %v4289 = vsel %vm2510, %v4257, %v3716
        %v4290 = vsel %vm2510, %v4258, %v3718
        %v4291 = vsel %vm2510, %v4259, %v3720
        %v4292 = vsel %vm2510, %v4260, %v3722
        %v4293 = vsel %vm2510, %v4261, %v3724
        %v4294 = vsel %vm2510, %v4262, %v3726
        %v4295 = vsel %vm2510, %v4263, %v3728
        %v4296 = vsel %vm2510, %v4264, %v3730
        %v4297 = vsel %vm2510, %v4265, %v3732
        %v4298 = vsel %vm2510, %v4266, %v3734
        %v4299 = vsel %vm2510, %v4267, %v3736
        %v4300 = vsel %vm2510, %v4268, %v3738
        %v4301 = vsel %vm2510, %v4269, %v3740
        %v4302 = vsel %vm2510, %v4270, %v3742
        %v4303 = vsel %vm2510, %v4271, %v3744
        %v4304 = vsel %vm2510, %v4272, %v3746
        %v4305 = vsel %vm2510, %v4273, %v3748
        %v4306 = vsel %vm2510, %v4274, %v3750
        %v4307 = vsel %vm2510, %v4275, %v3752
        %v4308 = vsel %vm2510, %v4276, %v3754
        %v4309 = vsel %vm2510, %v4277, %v3756
        %v4310 = vsel %vm2510, %v4278, %v3758
        %v4311 = vsel %vm2510, %v4279, %v3760
        %v4312 = vsel %vm2510, %v4280, %v3762
        %v4313 = vsel %vm2510, %v4281, %v3764
        %v4314 = vsel %vm2510, %v4282, %v3766
        %v4315 = vsel %vm2510, %v4283, %v3768
        %v4316 = vsel %vm2510, %v4284, %v3770
        %v4317 = vsel %vm2510, %v4285, %v3772
        %v4318 = vsel %vm2510, %v4286, %v3774
        %vm4319 = vcmask 654336
        %v4320 = vsel %vm4319, %v4287, %v3840
        %v4321 = vsel %vm4319, %v4288, %v3842
        %v4322 = vsel %vm4319, %v4289, %v3844
        %v4323 = vsel %vm4319, %v4290, %v3846
        %v4324 = vsel %vm4319, %v4291, %v3848
        %v4325 = vsel %vm4319, %v4292, %v3850
        %v4326 = vsel %vm4319, %v4293, %v3852
        %v4327 = vsel %vm4319, %v4294, %v3854
        %v4328 = vsel %vm4319, %v4295, %v3856
        %v4329 = vsel %vm4319, %v4296, %v3858
        %v4330 = vsel %vm4319, %v4297, %v3860
        %v4331 = vsel %vm4319, %v4298, %v3862
        %v4332 = vsel %vm4319, %v4299, %v3864
        %v4333 = vsel %vm4319, %v4300, %v3866
        %v4334 = vsel %vm4319, %v4301, %v3868
        %v4335 = vsel %vm4319, %v4302, %v3870
        %v4336 = vsel %vm4319, %v4303, %v3872
        %v4337 = vsel %vm4319, %v4304, %v3874
        %v4338 = vsel %vm4319, %v4305, %v3876
        %v4339 = vsel %vm4319, %v4306, %v3878
        %v4340 = vsel %vm4319, %v4307, %v3880
        %v4341 = vsel %vm4319, %v4308, %v3882
        %v4342 = vsel %vm4319, %v4309, %v3884
        %v4343 = vsel %vm4319, %v4310, %v3886
        %v4344 = vsel %vm4319, %v4311, %v3888
        %v4345 = vsel %vm4319, %v4312, %v3890
        %v4346 = vsel %vm4319, %v4313, %v3892
        %v4347 = vsel %vm4319, %v4314, %v3894
        %v4348 = vsel %vm4319, %v4315, %v3896
        %v4349 = vsel %vm4319, %v4316, %v3898
        %v4350 = vsel %vm4319, %v4317, %v3900
        %v4351 = vsel %vm4319, %v4318, %v3902
        %vm4352 = vcmask 785408
        %v4353 = vsel %vm4352, %v4320, %v3968
        %v4354 = vsel %vm4352, %v4321, %v3970
        %v4355 = vsel %vm4352, %v4322, %v3972
        %v4356 = vsel %vm4352, %v4323, %v3974
        %v4357 = vsel %vm4352, %v4324, %v3976
        %v4358 = vsel %vm4352, %v4325, %v3978
        %v4359 = vsel %vm4352, %v4326, %v3980
        %v4360 = vsel %vm4352, %v4327, %v3982
        %v4361 = vsel %vm4352, %v4328, %v3984
        %v4362 = vsel %vm4352, %v4329, %v3986
        %v4363 = vsel %vm4352, %v4330, %v3988
        %v4364 = vsel %vm4352, %v4331, %v3990
        %v4365 = vsel %vm4352, %v4332, %v3992
        %v4366 = vsel %vm4352, %v4333, %v3994
        %v4367 = vsel %vm4352, %v4334, %v3996
        %v4368 = vsel %vm4352, %v4335, %v3998
        %v4369 = vsel %vm4352, %v4336, %v4000
        %v4370 = vsel %vm4352, %v4337, %v4002
        %v4371 = vsel %vm4352, %v4338, %v4004
        %v4372 = vsel %vm4352, %v4339, %v4006
        %v4373 = vsel %vm4352, %v4340, %v4008
        %v4374 = vsel %vm4352, %v4341, %v4010
        %v4375 = vsel %vm4352, %v4342, %v4012
        %v4376 = vsel %vm4352, %v4343, %v4014
        %v4377 = vsel %vm4352, %v4344, %v4016
        %v4378 = vsel %vm4352, %v4345, %v4018
        %v4379 = vsel %vm4352, %v4346, %v4020
        %v4380 = vsel %vm4352, %v4347, %v4022
        %v4381 = vsel %vm4352, %v4348, %v4024
        %v4382 = vsel %vm4352, %v4349, %v4026
        %v4383 = vsel %vm4352, %v4350, %v4028
        %v4384 = vsel %vm4352, %v4351, %v4030
        %vm4385 = vcmask 916480
        %v4386 = vsel %vm4385, %v4353, %v4096
        %v4387 = vsel %vm4385, %v4354, %v4098
        %v4388 = vsel %vm4385, %v4355, %v4100
        %v4389 = vsel %vm4385, %v4356, %v4102
        %v4390 = vsel %vm4385, %v4357, %v4104
        %v4391 = vsel %vm4385, %v4358, %v4106
        %v4392 = vsel %vm4385, %v4359, %v4108
        %v4393 = vsel %vm4385, %v4360, %v4110
        %v4394 = vsel %vm4385, %v4361, %v4112
        %v4395 = vsel %vm4385, %v4362, %v4114
        %v4396 = vsel %vm4385, %v4363, %v4116
        %v4397 = vsel %vm4385, %v4364, %v4118
        %v4398 = vsel %vm4385, %v4365, %v4120
        %v4399 = vsel %vm4385, %v4366, %v4122
        %v4400 = vsel %vm4385, %v4367, %v4124
        %v4401 = vsel %vm4385, %v4368, %v4126
        %v4402 = vsel %vm4385, %v4369, %v4128
        %v4403 = vsel %vm4385, %v4370, %v4130
        %v4404 = vsel %vm4385, %v4371, %v4132
        %v4405 = vsel %vm4385, %v4372, %v4134
        %v4406 = vsel %vm4385, %v4373, %v4136
        %v4407 = vsel %vm4385, %v4374, %v4138
        %v4408 = vsel %vm4385, %v4375, %v4140
        %v4409 = vsel %vm4385, %v4376, %v4142
        %v4410 = vsel %vm4385, %v4377, %v4144
        %v4411 = vsel %vm4385, %v4378, %v4146
        %v4412 = vsel %vm4385, %v4379, %v4148
        %v4413 = vsel %vm4385, %v4380, %v4150
        %v4414 = vsel %vm4385, %v4381, %v4152
        %v4415 = vsel %vm4385, %v4382, %v4154
        %v4416 = vsel %vm4385, %v4383, %v4156
        %v4417 = vsel %vm4385, %v4384, %v4158
        %v4418 = vld [vmem:[%s5] sm:$0xf]
        %v4419 = vld [vmem:[%s5 + $0x4] sm:$0xf]
        %v4420 = vld [vmem:[%s5 + $0x8] sm:$0xf]
        %v4421 = vld [vmem:[%s5 + $0xc] sm:$0xf]
        %v4422 = vld [vmem:[%s5 + $0x10] sm:$0xf]
        %v4423 = vld [vmem:[%s5 + $0x14] sm:$0xf]
        %v4424 = vld [vmem:[%s5 + $0x18] sm:$0xf]
        %v4425 = vld [vmem:[%s5 + $0x1c] sm:$0xf]
        %v4426 = vld [vmem:[%s5 + $0x20] sm:$0xf]
        %v4427 = vld [vmem:[%s5 + $0x24] sm:$0xf]
        %v4428 = vld [vmem:[%s5 + $0x28] sm:$0xf]
        %v4429 = vld [vmem:[%s5 + $0x2c] sm:$0xf]
        %v4430 = vld [vmem:[%s5 + $0x30] sm:$0xf]
        %v4431 = vld [vmem:[%s5 + $0x34] sm:$0xf]
        %v4432 = vld [vmem:[%s5 + $0x38] sm:$0xf]
        %v4433 = vld [vmem:[%s5 + $0x3c] sm:$0xf]
        %v4434 = vld [vmem:[%s5 + $0x40] sm:$0xf]
        %v4435 = vld [vmem:[%s5 + $0x44] sm:$0xf]
        %v4436 = vpack.c.bf16 %v4387, %v4386
        %v4437 = vpack.c.bf16 %v3264, %v3263
        %v4438 = vpack.c.bf16 %v4389, %v4388
        %v4439 = vpack.c.bf16 %v3266, %v3265
        %v4440 = vpack.c.bf16 %v4391, %v4390
        %v4441 = vpack.c.bf16 %v3268, %v3267
        %v4442 = vpack.c.bf16 %v4393, %v4392
        %v4443 = vpack.c.bf16 %v3270, %v3269
        %v4444 = vpack.c.bf16 %v4395, %v4394
        %v4445 = vpack.c.bf16 %v3272, %v3271
        %v4446 = vpack.c.bf16 %v4397, %v4396
        %v4447 = vpack.c.bf16 %v3274, %v3273
        %v4448 = vpack.c.bf16 %v4399, %v4398
        %v4449 = vpack.c.bf16 %v3276, %v3275
        %v4450 = vpack.c.bf16 %v4401, %v4400
        %v4451 = vpack.c.bf16 %v3278, %v3277
        %v4452 = vpack.c.bf16 %v4403, %v4402
        %v4453 = vpack.c.bf16 %v3280, %v3279
        %v4454 = vpack.c.bf16 %v4405, %v4404
        %v4455 = vpack.c.bf16 %v3282, %v3281
        %v4456 = vpack.c.bf16 %v4407, %v4406
        %v4457 = vpack.c.bf16 %v3284, %v3283
        %v4458 = vpack.c.bf16 %v4409, %v4408
        %v4459 = vpack.c.bf16 %v3286, %v3285
        %v4460 = vpack.c.bf16 %v4411, %v4410
        %v4461 = vpack.c.bf16 %v3288, %v3287
        %v4462 = vpack.c.bf16 %v4413, %v4412
        %v4463 = vpack.c.bf16 %v3290, %v3289
        %v4464 = vpack.c.bf16 %v4415, %v4414
        %v4465 = vpack.c.bf16 %v3292, %v3291
        %v4466 = vpack.c.bf16 %v4417, %v4416
        %v4467 = vpack.c.bf16 %v3294, %v3293
        %v4486 = vunpack.c.l.b16 %v4418
        %v4487 = vunpack.c.l.b16 %v4419
        %v4488 = vunpack.c.l.b16 %v4420
        %v4489 = vunpack.c.l.b16 %v4421
        %v4490 = vunpack.c.l.b16 %v4422
        %v4491 = vunpack.c.l.b16 %v4423
        %v4492 = vunpack.c.l.b16 %v4424
        %v4493 = vunpack.c.l.b16 %v4425
        %v4494 = vunpack.c.l.b16 %v4426
        %v4495 = vunpack.c.l.b16 %v4427
        %v4496 = vunpack.c.l.b16 %v4428
        %v4497 = vunpack.c.l.b16 %v4429
        %v4498 = vunpack.c.l.b16 %v4430
        %v4499 = vunpack.c.l.b16 %v4431
        %v4500 = vunpack.c.l.b16 %v4432
        %v4501 = vunpack.c.l.b16 %v4433
        %v4502 = vunpack.c.l.b16 %v4434
        %v4503 = vunpack.c.l.b16 %v4435
        %v4504 = vpack.c.b16 %v4487, %v4486
        %v4505 = vpack.c.b16 %v4489, %v4488
        %v4506 = vpack.c.b16 %v4491, %v4490
        %v4507 = vpack.c.b16 %v4493, %v4492
        %v4508 = vpack.c.b16 %v4495, %v4494
        %v4509 = vpack.c.b16 %v4497, %v4496
        %v4510 = vpack.c.b16 %v4499, %v4498
        %v4511 = vpack.c.b16 %v4501, %v4500
        %v4512 = vpack.c.b16 %v4503, %v4502
        %v4523 = vsel %vm2312, %v4437, 0
        %v4526 = vsel %vm2312, %v4439, 0
        %v4529 = vsel %vm2312, %v4441, 0
        %v4532 = vsel %vm2312, %v4443, 0
        %v4535 = vsel %vm2312, %v4445, 0
        %v4538 = vsel %vm2312, %v4447, 0
        %v4541 = vsel %vm2312, %v4449, 0
        %v4544 = vsel %vm2312, %v4451, 0
        %v4547 = vsel %vm2312, %v4453, 0
        %v4550 = vsel %vm2312, %v4455, 0
        %v4553 = vsel %vm2312, %v4457, 0
        %v4556 = vsel %vm2312, %v4459, 0
        %v4559 = vsel %vm2312, %v4461, 0
        %v4562 = vsel %vm2312, %v4463, 0
        %v4565 = vsel %vm2312, %v4465, 0
        %v4568 = vsel %vm2312, %v4467, 0
        %4570 = vmatprep.subr.bf16.mxu0 0
        %4571 = vmatpush1.bf16.msra.mxu0 %v4504
        %4572 = vmatprep.subr.bf16.mxu0 0
        %4573 = vmatpush1.bf16.msra.mxu0 %v4505
        %4574 = vmatprep.subr.bf16.mxu0 0
        %4575 = vmatpush1.bf16.msra.mxu0 %v4506
        %4576 = vmatprep.subr.bf16.mxu0 0
        %4577 = vmatpush1.bf16.msra.mxu0 %v4507
        %4578 = vmatprep.subr.bf16.mxu0 0
        %4579 = vmatpush1.bf16.msra.mxu0 %v4508
        %4580 = vmatprep.subr.bf16.mxu0 0
        %4581 = vmatpush1.bf16.msra.mxu0 %v4509
        %4582 = vmatprep.subr.bf16.mxu0 0
        %4583 = vmatpush1.bf16.msra.mxu0 %v4510
        %4584 = vmatprep.subr.bf16.mxu0 0
        %4585 = vmatpush1.bf16.msra.mxu0 %v4511
        %4586 = vmatprep.subr.bf16.mxu0 0
        %4587 = vmatpush1.bf16.msra.mxu0 %v4512
        %4588 = vmatprep.subr.bf16.mxu0 0
        %4589 = vmatpush1.bf16.msra.mxu0 0
        %4590 = vmatprep.subr.bf16.mxu0 0
        %4591 = vmatpush1.bf16.msra.mxu0 0
        %4592 = vmatprep.subr.bf16.mxu0 0
        %4593 = vmatpush1.bf16.msra.mxu0 0
        %4594 = vmatprep.subr.bf16.mxu0 0
        %4595 = vmatpush1.bf16.msra.mxu0 0
        %4596 = vmatprep.subr.bf16.mxu0 0
        %4597 = vmatpush1.bf16.msra.mxu0 0
        %4598 = vmatprep.subr.bf16.mxu0 0
        %4599 = vmatpush1.bf16.msra.mxu0 0
        %4600 = vmatprep.subr.bf16.mxu0 0
        %4601 = vmatpush1.bf16.msra.mxu0 0
        %4602 = vmatprep.mubr.bf16.mxu0 %v4523
        %4603 = vmatmul.mubr.bf16.gmra.mrb[0].mxu0 %v4436
        %v4604 = vpop.f32.mrb[0].mxu0
        %v4605 = vadd.f32 0.0, %v4604
        %v4606 = vpop.f32.mrb[0].mxu0
        %v4607 = vpop.f32.mrb[0].mxu0
        %v4608 = vadd.f32 0.0, %v4607
        %v4609 = vpop.f32.mrb[0].mxu0
        %4610 = vmatprep.mubr.bf16.mxu0 %v4526
        %4611 = vmatmul.mubr.bf16.gmra.mrb[0].mxu0 %v4438
        %v4612 = vpop.f32.mrb[0].mxu0
        %v4613 = vadd.f32 0.0, %v4612
        %v4614 = vpop.f32.mrb[0].mxu0
        %v4615 = vpop.f32.mrb[0].mxu0
        %v4616 = vadd.f32 0.0, %v4615
        %v4617 = vpop.f32.mrb[0].mxu0
        %4618 = vmatprep.mubr.bf16.mxu0 %v4529
        %4619 = vmatmul.mubr.bf16.gmra.mrb[0].mxu0 %v4440
        %v4620 = vpop.f32.mrb[0].mxu0
        %v4621 = vadd.f32 0.0, %v4620
        %v4622 = vpop.f32.mrb[0].mxu0
        %v4623 = vpop.f32.mrb[0].mxu0
        %v4624 = vadd.f32 0.0, %v4623
        %v4625 = vpop.f32.mrb[0].mxu0
        %4626 = vmatprep.mubr.bf16.mxu0 %v4532
        %4627 = vmatmul.mubr.bf16.gmra.mrb[0].mxu0 %v4442
        %v4628 = vpop.f32.mrb[0].mxu0
        %v4629 = vadd.f32 0.0, %v4628
        %v4630 = vpop.f32.mrb[0].mxu0
        %v4631 = vpop.f32.mrb[0].mxu0
        %v4632 = vadd.f32 0.0, %v4631
        %v4633 = vpop.f32.mrb[0].mxu0
        %4634 = vmatprep.mubr.bf16.mxu0 %v4535
        %4635 = vmatmul.mubr.bf16.gmra.mrb[0].mxu0 %v4444
        %v4636 = vpop.f32.mrb[0].mxu0
        %v4637 = vadd.f32 0.0, %v4636
        %v4638 = vpop.f32.mrb[0].mxu0
        %v4639 = vpop.f32.mrb[0].mxu0
        %v4640 = vadd.f32 0.0, %v4639
        %v4641 = vpop.f32.mrb[0].mxu0
        %4642 = vmatprep.mubr.bf16.mxu0 %v4538
        %4643 = vmatmul.mubr.bf16.gmra.mrb[0].mxu0 %v4446
        %v4644 = vpop.f32.mrb[0].mxu0
        %v4645 = vadd.f32 0.0, %v4644
        %v4646 = vpop.f32.mrb[0].mxu0
        %v4647 = vpop.f32.mrb[0].mxu0
        %v4648 = vadd.f32 0.0, %v4647
        %v4649 = vpop.f32.mrb[0].mxu0
        %4650 = vmatprep.mubr.bf16.mxu0 %v4541
        %4651 = vmatmul.mubr.bf16.gmra.mrb[0].mxu0 %v4448
        %v4652 = vpop.f32.mrb[0].mxu0
        %v4653 = vadd.f32 0.0, %v4652
        %v4654 = vpop.f32.mrb[0].mxu0
        %v4655 = vpop.f32.mrb[0].mxu0
        %v4656 = vadd.f32 0.0, %v4655
        %v4657 = vpop.f32.mrb[0].mxu0
        %4658 = vmatprep.mubr.bf16.mxu0 %v4544
        %4659 = vmatmul.mubr.bf16.gmra.mrb[0].mxu0 %v4450
        %v4660 = vpop.f32.mrb[0].mxu0
        %v4661 = vadd.f32 0.0, %v4660
        %v4662 = vpop.f32.mrb[0].mxu0
        %v4663 = vpop.f32.mrb[0].mxu0
        %v4664 = vadd.f32 0.0, %v4663
        %v4665 = vpop.f32.mrb[0].mxu0
        %4666 = vmatprep.mubr.bf16.mxu0 %v4547
        %4667 = vmatmul.mubr.bf16.gmra.mrb[0].mxu0 %v4452
        %v4668 = vpop.f32.mrb[0].mxu0
        %v4669 = vadd.f32 0.0, %v4668
        %v4670 = vpop.f32.mrb[0].mxu0
        %v4671 = vpop.f32.mrb[0].mxu0
        %v4672 = vadd.f32 0.0, %v4671
        %v4673 = vpop.f32.mrb[0].mxu0
        %4674 = vmatprep.mubr.bf16.mxu0 %v4550
        %4675 = vmatmul.mubr.bf16.gmra.mrb[0].mxu0 %v4454
        %v4676 = vpop.f32.mrb[0].mxu0
        %v4677 = vadd.f32 0.0, %v4676
        %v4678 = vpop.f32.mrb[0].mxu0
        %v4679 = vpop.f32.mrb[0].mxu0
        %v4680 = vadd.f32 0.0, %v4679
        %v4681 = vpop.f32.mrb[0].mxu0
        %4682 = vmatprep.mubr.bf16.mxu0 %v4553
        %4683 = vmatmul.mubr.bf16.gmra.mrb[0].mxu0 %v4456
        %v4684 = vpop.f32.mrb[0].mxu0
        %v4685 = vadd.f32 0.0, %v4684
        %v4686 = vpop.f32.mrb[0].mxu0
        %v4687 = vpop.f32.mrb[0].mxu0
        %v4688 = vadd.f32 0.0, %v4687
        %v4689 = vpop.f32.mrb[0].mxu0
        %4690 = vmatprep.mubr.bf16.mxu0 %v4556
        %4691 = vmatmul.mubr.bf16.gmra.mrb[0].mxu0 %v4458
        %v4692 = vpop.f32.mrb[0].mxu0
        %v4693 = vadd.f32 0.0, %v4692
        %v4694 = vpop.f32.mrb[0].mxu0
        %v4695 = vpop.f32.mrb[0].mxu0
        %v4696 = vadd.f32 0.0, %v4695
        %v4697 = vpop.f32.mrb[0].mxu0
        %4698 = vmatprep.mubr.bf16.mxu0 %v4559
        %4699 = vmatmul.mubr.bf16.gmra.mrb[0].mxu0 %v4460
        %v4700 = vpop.f32.mrb[0].mxu0
        %v4701 = vadd.f32 0.0, %v4700
        %v4702 = vpop.f32.mrb[0].mxu0
        %v4703 = vpop.f32.mrb[0].mxu0
        %v4704 = vadd.f32 0.0, %v4703
        %v4705 = vpop.f32.mrb[0].mxu0
        %4706 = vmatprep.mubr.bf16.mxu0 %v4562
        %4707 = vmatmul.mubr.bf16.gmra.mrb[0].mxu0 %v4462
        %v4708 = vpop.f32.mrb[0].mxu0
        %v4709 = vadd.f32 0.0, %v4708
        %v4710 = vpop.f32.mrb[0].mxu0
        %v4711 = vpop.f32.mrb[0].mxu0
        %v4712 = vadd.f32 0.0, %v4711
        %v4713 = vpop.f32.mrb[0].mxu0
        %4714 = vmatprep.mubr.bf16.mxu0 %v4565
        %4715 = vmatmul.mubr.bf16.gmra.mrb[0].mxu0 %v4464
        %v4716 = vpop.f32.mrb[0].mxu0
        %v4717 = vadd.f32 0.0, %v4716
        %v4718 = vpop.f32.mrb[0].mxu0
        %v4719 = vpop.f32.mrb[0].mxu0
        %v4720 = vadd.f32 0.0, %v4719
        %v4721 = vpop.f32.mrb[0].mxu0
        %4722 = vmatprep.mubr.bf16.mxu0 %v4568
        %4723 = vmatmul.mubr.bf16.gmra.mrb[0].mxu0 %v4466
        %v4724 = vpop.f32.mrb[0].mxu0
        %v4725 = vadd.f32 0.0, %v4724
        %v4726 = vpop.f32.mrb[0].mxu0
        %v4727 = vpop.f32.mrb[0].mxu0
        %v4728 = vadd.f32 0.0, %v4727
        %v4729 = vpop.f32.mrb[0].mxu0
        %4730 = vdwg.mxu0
        %v4731 = vld [vmem:[%s6] sm:$0x1]
        %v4733 = vlaneseq
        %v4734 = vshrl.u32 %v4733, 7
        %v4735 = vsub.s32 0, %v4734
        %v4736 = vrot.slane %v4731, %v4735
        %v4738 = vmul.f32 %v4605, %v4736
        %v4739 = vmul.f32 %v4608, %v4736
        %v4740 = vmul.f32 %v4613, %v4736
        %v4741 = vmul.f32 %v4616, %v4736
        %v4742 = vmul.f32 %v4621, %v4736
        %v4743 = vmul.f32 %v4624, %v4736
        %v4744 = vmul.f32 %v4629, %v4736
        %v4745 = vmul.f32 %v4632, %v4736
        %v4746 = vmul.f32 %v4637, %v4736
        %v4747 = vmul.f32 %v4640, %v4736
        %v4748 = vmul.f32 %v4645, %v4736
        %v4749 = vmul.f32 %v4648, %v4736
        %v4750 = vmul.f32 %v4653, %v4736
        %v4751 = vmul.f32 %v4656, %v4736
        %v4752 = vmul.f32 %v4661, %v4736
        %v4753 = vmul.f32 %v4664, %v4736
        %v4754 = vmul.f32 %v4669, %v4736
        %v4755 = vmul.f32 %v4672, %v4736
        %v4756 = vmul.f32 %v4677, %v4736
        %v4757 = vmul.f32 %v4680, %v4736
        %v4758 = vmul.f32 %v4685, %v4736
        %v4759 = vmul.f32 %v4688, %v4736
        %v4760 = vmul.f32 %v4693, %v4736
        %v4761 = vmul.f32 %v4696, %v4736
        %v4762 = vmul.f32 %v4701, %v4736
        %v4763 = vmul.f32 %v4704, %v4736
        %v4764 = vmul.f32 %v4709, %v4736
        %v4765 = vmul.f32 %v4712, %v4736
        %v4766 = vmul.f32 %v4717, %v4736
        %v4767 = vmul.f32 %v4720, %v4736
        %v4768 = vmul.f32 %v4725, %v4736
        %v4769 = vmul.f32 %v4728, %v4736
        %v4770 = vld [vmem:[%s7] sm:$0x1]
        %v4772 = vlaneseq
        %v4773 = vshrl.u32 %v4772, 7
        %v4774 = vsub.s32 0, %v4773
        %v4775 = vrot.slane %v4770, %v4774
        %v4777 = vadd.f32 %v4738, %v4775
        %v4778 = vadd.f32 %v4739, %v4775
        %v4779 = vadd.f32 %v4740, %v4775
        %v4780 = vadd.f32 %v4741, %v4775
        %v4781 = vadd.f32 %v4742, %v4775
        %v4782 = vadd.f32 %v4743, %v4775
        %v4783 = vadd.f32 %v4744, %v4775
        %v4784 = vadd.f32 %v4745, %v4775
        %v4785 = vadd.f32 %v4746, %v4775
        %v4786 = vadd.f32 %v4747, %v4775
        %v4787 = vadd.f32 %v4748, %v4775
        %v4788 = vadd.f32 %v4749, %v4775
        %v4789 = vadd.f32 %v4750, %v4775
        %v4790 = vadd.f32 %v4751, %v4775
        %v4791 = vadd.f32 %v4752, %v4775
        %v4792 = vadd.f32 %v4753, %v4775
        %v4793 = vadd.f32 %v4754, %v4775
        %v4794 = vadd.f32 %v4755, %v4775
        %v4795 = vadd.f32 %v4756, %v4775
        %v4796 = vadd.f32 %v4757, %v4775
        %v4797 = vadd.f32 %v4758, %v4775
        %v4798 = vadd.f32 %v4759, %v4775
        %v4799 = vadd.f32 %v4760, %v4775
        %v4800 = vadd.f32 %v4761, %v4775
        %v4801 = vadd.f32 %v4762, %v4775
        %v4802 = vadd.f32 %v4763, %v4775
        %v4803 = vadd.f32 %v4764, %v4775
        %v4804 = vadd.f32 %v4765, %v4775
        %v4805 = vadd.f32 %v4766, %v4775
        %v4806 = vadd.f32 %v4767, %v4775
        %v4807 = vadd.f32 %v4768, %v4775
        %v4808 = vadd.f32 %v4769, %v4775
        %v4809 = vld [vmem:[%s15] sm:$0xff]
        %v4810 = vld [vmem:[%s15 + $0x8] sm:$0xff]
        %v4811 = vld [vmem:[%s15 + $0x10] sm:$0xff]
        %v4812 = vld [vmem:[%s15 + $0x18] sm:$0xff]
        %v4813 = vld [vmem:[%s15 + $0x20] sm:$0xff]
        %v4814 = vld [vmem:[%s15 + $0x28] sm:$0xff]
        %v4815 = vld [vmem:[%s15 + $0x30] sm:$0xff]
        %v4816 = vld [vmem:[%s15 + $0x38] sm:$0xff]
        %v4817 = vld [vmem:[%s15 + $0x40] sm:$0xff]
        %v4818 = vld [vmem:[%s15 + $0x48] sm:$0xff]
        %v4819 = vld [vmem:[%s15 + $0x50] sm:$0xff]
        %v4820 = vld [vmem:[%s15 + $0x58] sm:$0xff]
        %v4821 = vld [vmem:[%s15 + $0x60] sm:$0xff]
        %v4822 = vld [vmem:[%s15 + $0x68] sm:$0xff]
        %v4823 = vld [vmem:[%s15 + $0x70] sm:$0xff]
        %v4824 = vld [vmem:[%s15 + $0x78] sm:$0xff]
        %v4825 = vld [vmem:[%s15 + $0x80] sm:$0xff]
        %v4826 = vld [vmem:[%s15 + $0x88] sm:$0xff]
        %v4827 = vld [vmem:[%s15 + $0x90] sm:$0xff]
        %v4828 = vld [vmem:[%s15 + $0x98] sm:$0xff]
        %v4829 = vld [vmem:[%s15 + $0xa0] sm:$0xff]
        %v4830 = vld [vmem:[%s15 + $0xa8] sm:$0xff]
        %v4831 = vld [vmem:[%s15 + $0xb0] sm:$0xff]
        %v4832 = vld [vmem:[%s15 + $0xb8] sm:$0xff]
        %v4833 = vld [vmem:[%s15 + $0xc0] sm:$0xff]
        %v4834 = vld [vmem:[%s15 + $0xc8] sm:$0xff]
        %v4835 = vld [vmem:[%s15 + $0xd0] sm:$0xff]
        %v4836 = vld [vmem:[%s15 + $0xd8] sm:$0xff]
        %v4837 = vld [vmem:[%s15 + $0xe0] sm:$0xff]
        %v4838 = vld [vmem:[%s15 + $0xe8] sm:$0xff]
        %v4839 = vld [vmem:[%s15 + $0xf0] sm:$0xff]
        %v4840 = vld [vmem:[%s15 + $0xf8] sm:$0xff]
        %v4841 = vld [vmem:[%s11] sm:$0xf]
        %v4842 = vld [vmem:[%s11 + $0x4] sm:$0xf]
        %v4843 = vpack.c.bf16 %v4778, %v4777
        %v4844 = vpack.c.bf16 %v4780, %v4779
        %v4845 = vpack.c.bf16 %v4782, %v4781
        %v4846 = vpack.c.bf16 %v4784, %v4783
        %v4847 = vpack.c.bf16 %v4786, %v4785
        %v4848 = vpack.c.bf16 %v4788, %v4787
        %v4849 = vpack.c.bf16 %v4790, %v4789
        %v4850 = vpack.c.bf16 %v4792, %v4791
        %v4851 = vpack.c.bf16 %v4794, %v4793
        %v4852 = vpack.c.bf16 %v4796, %v4795
        %v4853 = vpack.c.bf16 %v4798, %v4797
        %v4854 = vpack.c.bf16 %v4800, %v4799
        %v4855 = vpack.c.bf16 %v4802, %v4801
        %v4856 = vpack.c.bf16 %v4804, %v4803
        %v4857 = vpack.c.bf16 %v4806, %v4805
        %v4858 = vpack.c.bf16 %v4808, %v4807
        %v4861 = vunpack.c.l.b16 %v4841
        %v4862 = vunpack.c.l.b16 %v4842
        %v4863 = vpack.c.b16 %v4862, %v4861
        %v4866 = vsel %vm2312, %v4843, 0
        %v4869 = vsel %vm2312, %v4844, 0
        %v4872 = vsel %vm2312, %v4845, 0
        %v4875 = vsel %vm2312, %v4846, 0
        %v4878 = vsel %vm2312, %v4847, 0
        %v4881 = vsel %vm2312, %v4848, 0
        %v4884 = vsel %vm2312, %v4849, 0
        %v4887 = vsel %vm2312, %v4850, 0
        %v4890 = vsel %vm2312, %v4851, 0
        %v4893 = vsel %vm2312, %v4852, 0
        %v4896 = vsel %vm2312, %v4853, 0
        %v4899 = vsel %vm2312, %v4854, 0
        %v4902 = vsel %vm2312, %v4855, 0
        %v4905 = vsel %vm2312, %v4856, 0
        %v4908 = vsel %vm2312, %v4857, 0
        %v4911 = vsel %vm2312, %v4858, 0
        %4913 = vmatprep.subr.bf16.mxu0 0
        %4914 = vmatpush1.bf16.msra.mxu0 %v4863
        %4915 = vmatprep.subr.bf16.mxu0 0
        %4916 = vmatpush1.bf16.msra.mxu0 0
        %4917 = vmatprep.subr.bf16.mxu0 0
        %4918 = vmatpush1.bf16.msra.mxu0 0
        %4919 = vmatprep.subr.bf16.mxu0 0
        %4920 = vmatpush1.bf16.msra.mxu0 0
        %4921 = vmatprep.subr.bf16.mxu0 0
        %4922 = vmatpush1.bf16.msra.mxu0 0
        %4923 = vmatprep.subr.bf16.mxu0 0
        %4924 = vmatpush1.bf16.msra.mxu0 0
        %4925 = vmatprep.subr.bf16.mxu0 0
        %4926 = vmatpush1.bf16.msra.mxu0 0
        %4927 = vmatprep.subr.bf16.mxu0 0
        %4928 = vmatpush1.bf16.msra.mxu0 0
        %4929 = vmatprep.subr.bf16.mxu0 0
        %4930 = vmatpush1.bf16.msra.mxu0 0
        %4931 = vmatprep.subr.bf16.mxu0 0
        %4932 = vmatpush1.bf16.msra.mxu0 0
        %4933 = vmatprep.subr.bf16.mxu0 0
        %4934 = vmatpush1.bf16.msra.mxu0 0
        %4935 = vmatprep.subr.bf16.mxu0 0
        %4936 = vmatpush1.bf16.msra.mxu0 0
        %4937 = vmatprep.subr.bf16.mxu0 0
        %4938 = vmatpush1.bf16.msra.mxu0 0
        %4939 = vmatprep.subr.bf16.mxu0 0
        %4940 = vmatpush1.bf16.msra.mxu0 0
        %4941 = vmatprep.subr.bf16.mxu0 0
        %4942 = vmatpush1.bf16.msra.mxu0 0
        %4943 = vmatprep.subr.bf16.mxu0 0
        %4944 = vmatpush1.bf16.msra.mxu0 0
        %4945 = vmatprep.mubr.bf16.mxu0 0
        %4946 = vmatmul.mubr.bf16.gmra.mrb[0].mxu0 %v4866
        %v4947 = vpop.f32.mrb[0].mxu0
        %v4948 = vadd.f32 0.0, %v4947
        %v4949 = vpop.f32.mrb[0].mxu0
        %v4950 = vpop.f32.mrb[0].mxu0
        %v4951 = vadd.f32 0.0, %v4950
        %v4952 = vpop.f32.mrb[0].mxu0
        %4953 = vmatprep.mubr.bf16.mxu0 0
        %4954 = vmatmul.mubr.bf16.gmra.mrb[0].mxu0 %v4869
        %v4955 = vpop.f32.mrb[0].mxu0
        %v4956 = vadd.f32 0.0, %v4955
        %v4957 = vpop.f32.mrb[0].mxu0
        %v4958 = vpop.f32.mrb[0].mxu0
        %v4959 = vadd.f32 0.0, %v4958
        %v4960 = vpop.f32.mrb[0].mxu0
        %4961 = vmatprep.mubr.bf16.mxu0 0
        %4962 = vmatmul.mubr.bf16.gmra.mrb[0].mxu0 %v4872
        %v4963 = vpop.f32.mrb[0].mxu0
        %v4964 = vadd.f32 0.0, %v4963
        %v4965 = vpop.f32.mrb[0].mxu0
        %v4966 = vpop.f32.mrb[0].mxu0
        %v4967 = vadd.f32 0.0, %v4966
        %v4968 = vpop.f32.mrb[0].mxu0
        %4969 = vmatprep.mubr.bf16.mxu0 0
        %4970 = vmatmul.mubr.bf16.gmra.mrb[0].mxu0 %v4875
        %v4971 = vpop.f32.mrb[0].mxu0
        %v4972 = vadd.f32 0.0, %v4971
        %v4973 = vpop.f32.mrb[0].mxu0
        %v4974 = vpop.f32.mrb[0].mxu0
        %v4975 = vadd.f32 0.0, %v4974
        %v4976 = vpop.f32.mrb[0].mxu0
        %4977 = vmatprep.mubr.bf16.mxu0 0
        %4978 = vmatmul.mubr.bf16.gmra.mrb[0].mxu0 %v4878
        %v4979 = vpop.f32.mrb[0].mxu0
        %v4980 = vadd.f32 0.0, %v4979
        %v4981 = vpop.f32.mrb[0].mxu0
        %v4982 = vpop.f32.mrb[0].mxu0
        %v4983 = vadd.f32 0.0, %v4982
        %v4984 = vpop.f32.mrb[0].mxu0
        %4985 = vmatprep.mubr.bf16.mxu0 0
        %4986 = vmatmul.mubr.bf16.gmra.mrb[0].mxu0 %v4881
        %v4987 = vpop.f32.mrb[0].mxu0
        %v4988 = vadd.f32 0.0, %v4987
        %v4989 = vpop.f32.mrb[0].mxu0
        %v4990 = vpop.f32.mrb[0].mxu0
        %v4991 = vadd.f32 0.0, %v4990
        %v4992 = vpop.f32.mrb[0].mxu0
        %4993 = vmatprep.mubr.bf16.mxu0 0
        %4994 = vmatmul.mubr.bf16.gmra.mrb[0].mxu0 %v4884
        %v4995 = vpop.f32.mrb[0].mxu0
        %v4996 = vadd.f32 0.0, %v4995
        %v4997 = vpop.f32.mrb[0].mxu0
        %v4998 = vpop.f32.mrb[0].mxu0
        %v4999 = vadd.f32 0.0, %v4998
        %v5000 = vpop.f32.mrb[0].mxu0
        %5001 = vmatprep.mubr.bf16.mxu0 0
        %5002 = vmatmul.mubr.bf16.gmra.mrb[0].mxu0 %v4887
        %v5003 = vpop.f32.mrb[0].mxu0
        %v5004 = vadd.f32 0.0, %v5003
        %v5005 = vpop.f32.mrb[0].mxu0
        %v5006 = vpop.f32.mrb[0].mxu0
        %v5007 = vadd.f32 0.0, %v5006
        %v5008 = vpop.f32.mrb[0].mxu0
        %5009 = vmatprep.mubr.bf16.mxu0 0
        %5010 = vmatmul.mubr.bf16.gmra.mrb[0].mxu0 %v4890
        %v5011 = vpop.f32.mrb[0].mxu0
        %v5012 = vadd.f32 0.0, %v5011
        %v5013 = vpop.f32.mrb[0].mxu0
        %v5014 = vpop.f32.mrb[0].mxu0
        %v5015 = vadd.f32 0.0, %v5014
        %v5016 = vpop.f32.mrb[0].mxu0
        %5017 = vmatprep.mubr.bf16.mxu0 0
        %5018 = vmatmul.mubr.bf16.gmra.mrb[0].mxu0 %v4893
        %v5019 = vpop.f32.mrb[0].mxu0
        %v5020 = vadd.f32 0.0, %v5019
        %v5021 = vpop.f32.mrb[0].mxu0
        %v5022 = vpop.f32.mrb[0].mxu0
        %v5023 = vadd.f32 0.0, %v5022
        %v5024 = vpop.f32.mrb[0].mxu0
        %5025 = vmatprep.mubr.bf16.mxu0 0
        %5026 = vmatmul.mubr.bf16.gmra.mrb[0].mxu0 %v4896
        %v5027 = vpop.f32.mrb[0].mxu0
        %v5028 = vadd.f32 0.0, %v5027
        %v5029 = vpop.f32.mrb[0].mxu0
        %v5030 = vpop.f32.mrb[0].mxu0
        %v5031 = vadd.f32 0.0, %v5030
        %v5032 = vpop.f32.mrb[0].mxu0
        %5033 = vmatprep.mubr.bf16.mxu0 0
        %5034 = vmatmul.mubr.bf16.gmra.mrb[0].mxu0 %v4899
        %v5035 = vpop.f32.mrb[0].mxu0
        %v5036 = vadd.f32 0.0, %v5035
        %v5037 = vpop.f32.mrb[0].mxu0
        %v5038 = vpop.f32.mrb[0].mxu0
        %v5039 = vadd.f32 0.0, %v5038
        %v5040 = vpop.f32.mrb[0].mxu0
        %5041 = vmatprep.mubr.bf16.mxu0 0
        %5042 = vmatmul.mubr.bf16.gmra.mrb[0].mxu0 %v4902
        %v5043 = vpop.f32.mrb[0].mxu0
        %v5044 = vadd.f32 0.0, %v5043
        %v5045 = vpop.f32.mrb[0].mxu0
        %v5046 = vpop.f32.mrb[0].mxu0
        %v5047 = vadd.f32 0.0, %v5046
        %v5048 = vpop.f32.mrb[0].mxu0
        %5049 = vmatprep.mubr.bf16.mxu0 0
        %5050 = vmatmul.mubr.bf16.gmra.mrb[0].mxu0 %v4905
        %v5051 = vpop.f32.mrb[0].mxu0
        %v5052 = vadd.f32 0.0, %v5051
        %v5053 = vpop.f32.mrb[0].mxu0
        %v5054 = vpop.f32.mrb[0].mxu0
        %v5055 = vadd.f32 0.0, %v5054
        %v5056 = vpop.f32.mrb[0].mxu0
        %5057 = vmatprep.mubr.bf16.mxu0 0
        %5058 = vmatmul.mubr.bf16.gmra.mrb[0].mxu0 %v4908
        %v5059 = vpop.f32.mrb[0].mxu0
        %v5060 = vadd.f32 0.0, %v5059
        %v5061 = vpop.f32.mrb[0].mxu0
        %v5062 = vpop.f32.mrb[0].mxu0
        %v5063 = vadd.f32 0.0, %v5062
        %v5064 = vpop.f32.mrb[0].mxu0
        %5065 = vmatprep.mubr.bf16.mxu0 0
        %5066 = vmatmul.mubr.bf16.gmra.mrb[0].mxu0 %v4911
        %v5067 = vpop.f32.mrb[0].mxu0
        %v5068 = vadd.f32 0.0, %v5067
        %v5069 = vpop.f32.mrb[0].mxu0
        %v5070 = vpop.f32.mrb[0].mxu0
        %v5071 = vadd.f32 0.0, %v5070
        %v5072 = vpop.f32.mrb[0].mxu0
        %5073 = vdwg.mxu0
        %vm5074 = vcmask 31744
        %5075 = vst.msk [vmem:[#allocation4] sm:$0xff] %vm5074, 0.0
        %5076 = vst.msk [vmem:[#allocation4 + $0x8] sm:$0xff] %vm5074, 0.0
        %vm5077 = vcmask 25600
        %5078 = vst.msk [vmem:[#allocation4 + $0x10] sm:$0x3] %vm5077, 0.0
        %5079 = vst.msk [vmem:[#allocation4 + $0x18] sm:$0xff] %vm5074, 0.0
        %5080 = vst.msk [vmem:[#allocation4 + $0x20] sm:$0xff] %vm5074, 0.0
        %5081 = vst.msk [vmem:[#allocation4 + $0x28] sm:$0x3] %vm5077, 0.0
        %5082 = vst.msk [vmem:[#allocation4 + $0x30] sm:$0xff] %vm5074, 0.0
        %5083 = vst.msk [vmem:[#allocation4 + $0x38] sm:$0xff] %vm5074, 0.0
        %5084 = vst.msk [vmem:[#allocation4 + $0x40] sm:$0x3] %vm5077, 0.0
        %5085 = vst.msk [vmem:[#allocation4 + $0x48] sm:$0xff] %vm5074, 0.0
        %5086 = vst.msk [vmem:[#allocation4 + $0x50] sm:$0xff] %vm5074, 0.0
        %5087 = vst.msk [vmem:[#allocation4 + $0x58] sm:$0x3] %vm5077, 0.0
        %5088 = vst.msk [vmem:[#allocation4 + $0x60] sm:$0xff] %vm5074, 0.0
        %5089 = vst.msk [vmem:[#allocation4 + $0x68] sm:$0xff] %vm5074, 0.0
        %5090 = vst.msk [vmem:[#allocation4 + $0x70] sm:$0x3] %vm5077, 0.0
        %5091 = vst.msk [vmem:[#allocation4 + $0x78] sm:$0xff] %vm5074, 0.0
        %5092 = vst.msk [vmem:[#allocation4 + $0x80] sm:$0xff] %vm5074, 0.0
        %5093 = vst.msk [vmem:[#allocation4 + $0x88] sm:$0x3] %vm5077, 0.0
        %5094 = vst.msk [vmem:[#allocation4 + $0x90] sm:$0xff] %vm5074, 0.0
        %5095 = vst.msk [vmem:[#allocation4 + $0x98] sm:$0xff] %vm5074, 0.0
        %5096 = vst.msk [vmem:[#allocation4 + $0xa0] sm:$0x3] %vm5077, 0.0
        %5097 = vst.msk [vmem:[#allocation4 + $0xa8] sm:$0xff] %vm5074, 0.0
        %5098 = vst.msk [vmem:[#allocation4 + $0xb0] sm:$0xff] %vm5074, 0.0
        %5099 = vst.msk [vmem:[#allocation4 + $0xb8] sm:$0x3] %vm5077, 0.0
        %5100 = vst.msk [vmem:[#allocation4 + $0xc0] sm:$0xff] %vm5074, 0.0
        %5101 = vst.msk [vmem:[#allocation4 + $0xc8] sm:$0xff] %vm5074, 0.0
        %5102 = vst.msk [vmem:[#allocation4 + $0xd0] sm:$0x3] %vm5077, 0.0
        %5103 = vst.msk [vmem:[#allocation4 + $0xd8] sm:$0xff] %vm5074, 0.0
        %5104 = vst.msk [vmem:[#allocation4 + $0xe0] sm:$0xff] %vm5074, 0.0
        %5105 = vst.msk [vmem:[#allocation4 + $0xe8] sm:$0x3] %vm5077, 0.0
        %5106 = vst.msk [vmem:[#allocation4 + $0xf0] sm:$0xff] %vm5074, 0.0
        %5107 = vst.msk [vmem:[#allocation4 + $0xf8] sm:$0xff] %vm5074, 0.0
        %5108 = vst.msk [vmem:[#allocation4 + $0x100] sm:$0x3] %vm5077, 0.0
        %5109 = vst.msk [vmem:[#allocation4 + $0x108] sm:$0xff] %vm5074, 0.0
        %5110 = vst.msk [vmem:[#allocation4 + $0x110] sm:$0xff] %vm5074, 0.0
        %5111 = vst.msk [vmem:[#allocation4 + $0x118] sm:$0x3] %vm5077, 0.0
        %5112 = vst.msk [vmem:[#allocation4 + $0x120] sm:$0xff] %vm5074, 0.0
        %5113 = vst.msk [vmem:[#allocation4 + $0x128] sm:$0xff] %vm5074, 0.0
        %5114 = vst.msk [vmem:[#allocation4 + $0x130] sm:$0x3] %vm5077, 0.0
        %5115 = vst.msk [vmem:[#allocation4 + $0x138] sm:$0xff] %vm5074, 0.0
        %5116 = vst.msk [vmem:[#allocation4 + $0x140] sm:$0xff] %vm5074, 0.0
        %5117 = vst.msk [vmem:[#allocation4 + $0x148] sm:$0x3] %vm5077, 0.0
        %5118 = vst.msk [vmem:[#allocation4 + $0x150] sm:$0xff] %vm5074, 0.0
        %5119 = vst.msk [vmem:[#allocation4 + $0x158] sm:$0xff] %vm5074, 0.0
        %5120 = vst.msk [vmem:[#allocation4 + $0x160] sm:$0x3] %vm5077, 0.0
        %5121 = vst.msk [vmem:[#allocation4 + $0x168] sm:$0xff] %vm5074, 0.0
        %5122 = vst.msk [vmem:[#allocation4 + $0x170] sm:$0xff] %vm5074, 0.0
        %5123 = vst.msk [vmem:[#allocation4 + $0x178] sm:$0x3] %vm5077, 0.0
        %5124 = vst.msk [vmem:[#allocation4 + $0x180] sm:$0xff] %vm5074, 0.0
        %5125 = vst.msk [vmem:[#allocation4 + $0x188] sm:$0xff] %vm5074, 0.0
        %5126 = vst.msk [vmem:[#allocation4 + $0x190] sm:$0x3] %vm5077, 0.0
        %5127 = vst.msk [vmem:[#allocation4 + $0x198] sm:$0xff] %vm5074, 0.0
        %5128 = vst.msk [vmem:[#allocation4 + $0x1a0] sm:$0xff] %vm5074, 0.0
        %5129 = vst.msk [vmem:[#allocation4 + $0x1a8] sm:$0x3] %vm5077, 0.0
        %5130 = vst.msk [vmem:[#allocation5] sm:$0xff] %vm5074, -1e+30
        %5131 = vst.msk [vmem:[#allocation5 + $0x8] sm:$0xff] %vm5074, -1e+30
        %5132 = vst.msk [vmem:[#allocation5 + $0x10] sm:$0x3] %vm5077, -1e+30
        %5133 = vst.msk [vmem:[#allocation5 + $0x18] sm:$0xff] %vm5074, -1e+30
        %5134 = vst.msk [vmem:[#allocation5 + $0x20] sm:$0xff] %vm5074, -1e+30
        %5135 = vst.msk [vmem:[#allocation5 + $0x28] sm:$0x3] %vm5077, -1e+30
        %5136 = vst.msk [vmem:[#allocation5 + $0x30] sm:$0xff] %vm5074, -1e+30
        %5137 = vst.msk [vmem:[#allocation5 + $0x38] sm:$0xff] %vm5074, -1e+30
        %5138 = vst.msk [vmem:[#allocation5 + $0x40] sm:$0x3] %vm5077, -1e+30
        %5139 = vst.msk [vmem:[#allocation5 + $0x48] sm:$0xff] %vm5074, -1e+30
        %5140 = vst.msk [vmem:[#allocation5 + $0x50] sm:$0xff] %vm5074, -1e+30
        %5141 = vst.msk [vmem:[#allocation5 + $0x58] sm:$0x3] %vm5077, -1e+30
        %5142 = vst.msk [vmem:[#allocation5 + $0x60] sm:$0xff] %vm5074, -1e+30
        %5143 = vst.msk [vmem:[#allocation5 + $0x68] sm:$0xff] %vm5074, -1e+30
        %5144 = vst.msk [vmem:[#allocation5 + $0x70] sm:$0x3] %vm5077, -1e+30
        %5145 = vst.msk [vmem:[#allocation5 + $0x78] sm:$0xff] %vm5074, -1e+30
        %5146 = vst.msk [vmem:[#allocation5 + $0x80] sm:$0xff] %vm5074, -1e+30
        %5147 = vst.msk [vmem:[#allocation5 + $0x88] sm:$0x3] %vm5077, -1e+30
        %5148 = vst.msk [vmem:[#allocation5 + $0x90] sm:$0xff] %vm5074, -1e+30
        %5149 = vst.msk [vmem:[#allocation5 + $0x98] sm:$0xff] %vm5074, -1e+30
        %5150 = vst.msk [vmem:[#allocation5 + $0xa0] sm:$0x3] %vm5077, -1e+30
        %5151 = vst.msk [vmem:[#allocation5 + $0xa8] sm:$0xff] %vm5074, -1e+30
        %5152 = vst.msk [vmem:[#allocation5 + $0xb0] sm:$0xff] %vm5074, -1e+30
        %5153 = vst.msk [vmem:[#allocation5 + $0xb8] sm:$0x3] %vm5077, -1e+30
        %5154 = vst.msk [vmem:[#allocation5 + $0xc0] sm:$0xff] %vm5074, -1e+30
        %5155 = vst.msk [vmem:[#allocation5 + $0xc8] sm:$0xff] %vm5074, -1e+30
        %5156 = vst.msk [vmem:[#allocation5 + $0xd0] sm:$0x3] %vm5077, -1e+30
        %5157 = vst.msk [vmem:[#allocation5 + $0xd8] sm:$0xff] %vm5074, -1e+30
        %5158 = vst.msk [vmem:[#allocation5 + $0xe0] sm:$0xff] %vm5074, -1e+30
        %5159 = vst.msk [vmem:[#allocation5 + $0xe8] sm:$0x3] %vm5077, -1e+30
        %5160 = vst.msk [vmem:[#allocation5 + $0xf0] sm:$0xff] %vm5074, -1e+30
        %5161 = vst.msk [vmem:[#allocation5 + $0xf8] sm:$0xff] %vm5074, -1e+30
        %5162 = vst.msk [vmem:[#allocation5 + $0x100] sm:$0x3] %vm5077, -1e+30
        %5163 = vst.msk [vmem:[#allocation5 + $0x108] sm:$0xff] %vm5074, -1e+30
        %5164 = vst.msk [vmem:[#allocation5 + $0x110] sm:$0xff] %vm5074, -1e+30
        %5165 = vst.msk [vmem:[#allocation5 + $0x118] sm:$0x3] %vm5077, -1e+30
        %5166 = vst.msk [vmem:[#allocation5 + $0x120] sm:$0xff] %vm5074, -1e+30
        %5167 = vst.msk [vmem:[#allocation5 + $0x128] sm:$0xff] %vm5074, -1e+30
        %5168 = vst.msk [vmem:[#allocation5 + $0x130] sm:$0x3] %vm5077, -1e+30
        %5169 = vst.msk [vmem:[#allocation5 + $0x138] sm:$0xff] %vm5074, -1e+30
        %5170 = vst.msk [vmem:[#allocation5 + $0x140] sm:$0xff] %vm5074, -1e+30
        %5171 = vst.msk [vmem:[#allocation5 + $0x148] sm:$0x3] %vm5077, -1e+30
        %5172 = vst.msk [vmem:[#allocation5 + $0x150] sm:$0xff] %vm5074, -1e+30
        %5173 = vst.msk [vmem:[#allocation5 + $0x158] sm:$0xff] %vm5074, -1e+30
        %5174 = vst.msk [vmem:[#allocation5 + $0x160] sm:$0x3] %vm5077, -1e+30
        %5175 = vst.msk [vmem:[#allocation5 + $0x168] sm:$0xff] %vm5074, -1e+30
        %5176 = vst.msk [vmem:[#allocation5 + $0x170] sm:$0xff] %vm5074, -1e+30
        %5177 = vst.msk [vmem:[#allocation5 + $0x178] sm:$0x3] %vm5077, -1e+30
        %5178 = vst.msk [vmem:[#allocation5 + $0x180] sm:$0xff] %vm5074, -1e+30
        %5179 = vst.msk [vmem:[#allocation5 + $0x188] sm:$0xff] %vm5074, -1e+30
        %5180 = vst.msk [vmem:[#allocation5 + $0x190] sm:$0x3] %vm5077, -1e+30
        %5181 = vst.msk [vmem:[#allocation5 + $0x198] sm:$0xff] %vm5074, -1e+30
        %5182 = vst.msk [vmem:[#allocation5 + $0x1a0] sm:$0xff] %vm5074, -1e+30
        %5183 = vst.msk [vmem:[#allocation5 + $0x1a8] sm:$0x3] %vm5077, -1e+30
        %s5184 = scalar_lea.vmem [#allocation4], 24
        %5185 = vst.msk [vmem:[%s5184 + $0x1] sm:$0xff] %vm5074, %v4948
        %5186 = vst.msk [vmem:[%s5184 + $0x9] sm:$0xff] %vm5074, %v4951
        %5187 = vst.msk [vmem:[%s5184 + $0x19] sm:$0xff] %vm5074, %v4956
        %5188 = vst.msk [vmem:[%s5184 + $0x21] sm:$0xff] %vm5074, %v4959
        %5189 = vst.msk [vmem:[%s5184 + $0x31] sm:$0xff] %vm5074, %v4964
        %5190 = vst.msk [vmem:[%s5184 + $0x39] sm:$0xff] %vm5074, %v4967
        %5191 = vst.msk [vmem:[%s5184 + $0x49] sm:$0xff] %vm5074, %v4972
        %5192 = vst.msk [vmem:[%s5184 + $0x51] sm:$0xff] %vm5074, %v4975
        %5193 = vst.msk [vmem:[%s5184 + $0x61] sm:$0xff] %vm5074, %v4980
        %5194 = vst.msk [vmem:[%s5184 + $0x69] sm:$0xff] %vm5074, %v4983
        %5195 = vst.msk [vmem:[%s5184 + $0x79] sm:$0xff] %vm5074, %v4988
        %5196 = vst.msk [vmem:[%s5184 + $0x81] sm:$0xff] %vm5074, %v4991
        %5197 = vst.msk [vmem:[%s5184 + $0x91] sm:$0xff] %vm5074, %v4996
        %5198 = vst.msk [vmem:[%s5184 + $0x99] sm:$0xff] %vm5074, %v4999
        %5199 = vst.msk [vmem:[%s5184 + $0xa9] sm:$0xff] %vm5074, %v5004
        %5200 = vst.msk [vmem:[%s5184 + $0xb1] sm:$0xff] %vm5074, %v5007
        %5201 = vst.msk [vmem:[%s5184 + $0xc1] sm:$0xff] %vm5074, %v5012
        %5202 = vst.msk [vmem:[%s5184 + $0xc9] sm:$0xff] %vm5074, %v5015
        %5203 = vst.msk [vmem:[%s5184 + $0xd9] sm:$0xff] %vm5074, %v5020
        %5204 = vst.msk [vmem:[%s5184 + $0xe1] sm:$0xff] %vm5074, %v5023
        %5205 = vst.msk [vmem:[%s5184 + $0xf1] sm:$0xff] %vm5074, %v5028
        %5206 = vst.msk [vmem:[%s5184 + $0xf9] sm:$0xff] %vm5074, %v5031
        %5207 = vst.msk [vmem:[%s5184 + $0x109] sm:$0xff] %vm5074, %v5036
        %5208 = vst.msk [vmem:[%s5184 + $0x111] sm:$0xff] %vm5074, %v5039
        %5209 = vst.msk [vmem:[%s5184 + $0x121] sm:$0xff] %vm5074, %v5044
        %5210 = vst.msk [vmem:[%s5184 + $0x129] sm:$0xff] %vm5074, %v5047
        %5211 = vst.msk [vmem:[%s5184 + $0x139] sm:$0xff] %vm5074, %v5052
        %5212 = vst.msk [vmem:[%s5184 + $0x141] sm:$0xff] %vm5074, %v5055
        %5213 = vst.msk [vmem:[%s5184 + $0x151] sm:$0xff] %vm5074, %v5060
        %5214 = vst.msk [vmem:[%s5184 + $0x159] sm:$0xff] %vm5074, %v5063
        %5215 = vst.msk [vmem:[%s5184 + $0x169] sm:$0xff] %vm5074, %v5068
        %5216 = vst.msk [vmem:[%s5184 + $0x171] sm:$0xff] %vm5074, %v5071
        %s5217 = scalar_lea.vmem [#allocation5], 24
        %5218 = vst.msk [vmem:[%s5217 + $0x1] sm:$0xff] %vm5074, %v4948
        %5219 = vst.msk [vmem:[%s5217 + $0x9] sm:$0xff] %vm5074, %v4951
        %5220 = vst.msk [vmem:[%s5217 + $0x19] sm:$0xff] %vm5074, %v4956
        %5221 = vst.msk [vmem:[%s5217 + $0x21] sm:$0xff] %vm5074, %v4959
        %5222 = vst.msk [vmem:[%s5217 + $0x31] sm:$0xff] %vm5074, %v4964
        %5223 = vst.msk [vmem:[%s5217 + $0x39] sm:$0xff] %vm5074, %v4967
        %5224 = vst.msk [vmem:[%s5217 + $0x49] sm:$0xff] %vm5074, %v4972
        %5225 = vst.msk [vmem:[%s5217 + $0x51] sm:$0xff] %vm5074, %v4975
        %5226 = vst.msk [vmem:[%s5217 + $0x61] sm:$0xff] %vm5074, %v4980
        %5227 = vst.msk [vmem:[%s5217 + $0x69] sm:$0xff] %vm5074, %v4983
        %5228 = vst.msk [vmem:[%s5217 + $0x79] sm:$0xff] %vm5074, %v4988
        %5229 = vst.msk [vmem:[%s5217 + $0x81] sm:$0xff] %vm5074, %v4991
        %5230 = vst.msk [vmem:[%s5217 + $0x91] sm:$0xff] %vm5074, %v4996
        %5231 = vst.msk [vmem:[%s5217 + $0x99] sm:$0xff] %vm5074, %v4999
        %5232 = vst.msk [vmem:[%s5217 + $0xa9] sm:$0xff] %vm5074, %v5004
        %5233 = vst.msk [vmem:[%s5217 + $0xb1] sm:$0xff] %vm5074, %v5007
        %5234 = vst.msk [vmem:[%s5217 + $0xc1] sm:$0xff] %vm5074, %v5012
        %5235 = vst.msk [vmem:[%s5217 + $0xc9] sm:$0xff] %vm5074, %v5015
        %5236 = vst.msk [vmem:[%s5217 + $0xd9] sm:$0xff] %vm5074, %v5020
        %5237 = vst.msk [vmem:[%s5217 + $0xe1] sm:$0xff] %vm5074, %v5023
        %5238 = vst.msk [vmem:[%s5217 + $0xf1] sm:$0xff] %vm5074, %v5028
        %5239 = vst.msk [vmem:[%s5217 + $0xf9] sm:$0xff] %vm5074, %v5031
        %5240 = vst.msk [vmem:[%s5217 + $0x109] sm:$0xff] %vm5074, %v5036
        %5241 = vst.msk [vmem:[%s5217 + $0x111] sm:$0xff] %vm5074, %v5039
        %5242 = vst.msk [vmem:[%s5217 + $0x121] sm:$0xff] %vm5074, %v5044
        %5243 = vst.msk [vmem:[%s5217 + $0x129] sm:$0xff] %vm5074, %v5047
        %5244 = vst.msk [vmem:[%s5217 + $0x139] sm:$0xff] %vm5074, %v5052
        %5245 = vst.msk [vmem:[%s5217 + $0x141] sm:$0xff] %vm5074, %v5055
        %5246 = vst.msk [vmem:[%s5217 + $0x151] sm:$0xff] %vm5074, %v5060
        %5247 = vst.msk [vmem:[%s5217 + $0x159] sm:$0xff] %vm5074, %v5063
        %5248 = vst.msk [vmem:[%s5217 + $0x169] sm:$0xff] %vm5074, %v5068
        %5249 = vst.msk [vmem:[%s5217 + $0x171] sm:$0xff] %vm5074, %v5071
        %v5250 = vld [vmem:[#allocation4] sm:$0xff]
        %v5251 = vld [vmem:[#allocation4 + $0x8] sm:$0xff]
        %v5252 = vld [vmem:[#allocation4 + $0x18] sm:$0xff]
        %v5253 = vld [vmem:[#allocation4 + $0x20] sm:$0xff]
        %v5254 = vld [vmem:[#allocation4 + $0x30] sm:$0xff]
        %v5255 = vld [vmem:[#allocation4 + $0x38] sm:$0xff]
        %v5256 = vld [vmem:[#allocation4 + $0x48] sm:$0xff]
        %v5257 = vld [vmem:[#allocation4 + $0x50] sm:$0xff]
        %v5258 = vld [vmem:[#allocation4 + $0x60] sm:$0xff]
        %v5259 = vld [vmem:[#allocation4 + $0x68] sm:$0xff]
        %v5260 = vld [vmem:[#allocation4 + $0x78] sm:$0xff]
        %v5261 = vld [vmem:[#allocation4 + $0x80] sm:$0xff]
        %v5262 = vld [vmem:[#allocation4 + $0x90] sm:$0xff]
        %v5263 = vld [vmem:[#allocation4 + $0x98] sm:$0xff]
        %v5264 = vld [vmem:[#allocation4 + $0xa8] sm:$0xff]
        %v5265 = vld [vmem:[#allocation4 + $0xb0] sm:$0xff]
        %v5266 = vld [vmem:[#allocation4 + $0xc0] sm:$0xff]
        %v5267 = vld [vmem:[#allocation4 + $0xc8] sm:$0xff]
        %v5268 = vld [vmem:[#allocation4 + $0xd8] sm:$0xff]
        %v5269 = vld [vmem:[#allocation4 + $0xe0] sm:$0xff]
        %v5270 = vld [vmem:[#allocation4 + $0xf0] sm:$0xff]
        %v5271 = vld [vmem:[#allocation4 + $0xf8] sm:$0xff]
        %v5272 = vld [vmem:[#allocation4 + $0x108] sm:$0xff]
        %v5273 = vld [vmem:[#allocation4 + $0x110] sm:$0xff]
        %v5274 = vld [vmem:[#allocation4 + $0x120] sm:$0xff]
        %v5275 = vld [vmem:[#allocation4 + $0x128] sm:$0xff]
        %v5276 = vld [vmem:[#allocation4 + $0x138] sm:$0xff]
        %v5277 = vld [vmem:[#allocation4 + $0x140] sm:$0xff]
        %v5278 = vld [vmem:[#allocation4 + $0x150] sm:$0xff]
        %v5279 = vld [vmem:[#allocation4 + $0x158] sm:$0xff]
        %v5280 = vld [vmem:[#allocation4 + $0x168] sm:$0xff]
        %v5281 = vld [vmem:[#allocation4 + $0x170] sm:$0xff]
        %v5282 = vld [vmem:[#allocation4 + $0x180] sm:$0xff]
        %v5283 = vld [vmem:[#allocation4 + $0x188] sm:$0xff]
        %v5284 = vld [vmem:[#allocation4 + $0x198] sm:$0xff]
        %v5285 = vld [vmem:[#allocation4 + $0x1a0] sm:$0xff]
        %v5286 = vld [vmem:[#allocation4 + $0x1] sm:$0xff]
        %v5287 = vld [vmem:[#allocation4 + $0x9] sm:$0xff]
        %v5288 = vld [vmem:[#allocation4 + $0x19] sm:$0xff]
        %v5289 = vld [vmem:[#allocation4 + $0x21] sm:$0xff]
        %v5290 = vld [vmem:[#allocation4 + $0x31] sm:$0xff]
        %v5291 = vld [vmem:[#allocation4 + $0x39] sm:$0xff]
        %v5292 = vld [vmem:[#allocation4 + $0x49] sm:$0xff]
        %v5293 = vld [vmem:[#allocation4 + $0x51] sm:$0xff]
        %v5294 = vld [vmem:[#allocation4 + $0x61] sm:$0xff]
        %v5295 = vld [vmem:[#allocation4 + $0x69] sm:$0xff]
        %v5296 = vld [vmem:[#allocation4 + $0x79] sm:$0xff]
        %v5297 = vld [vmem:[#allocation4 + $0x81] sm:$0xff]
        %v5298 = vld [vmem:[#allocation4 + $0x91] sm:$0xff]
        %v5299 = vld [vmem:[#allocation4 + $0x99] sm:$0xff]
        %v5300 = vld [vmem:[#allocation4 + $0xa9] sm:$0xff]
        %v5301 = vld [vmem:[#allocation4 + $0xb1] sm:$0xff]
        %v5302 = vld [vmem:[#allocation4 + $0xc1] sm:$0xff]
        %v5303 = vld [vmem:[#allocation4 + $0xc9] sm:$0xff]
        %v5304 = vld [vmem:[#allocation4 + $0xd9] sm:$0xff]
        %v5305 = vld [vmem:[#allocation4 + $0xe1] sm:$0xff]
        %v5306 = vld [vmem:[#allocation4 + $0xf1] sm:$0xff]
        %v5307 = vld [vmem:[#allocation4 + $0xf9] sm:$0xff]
        %v5308 = vld [vmem:[#allocation4 + $0x109] sm:$0xff]
        %v5309 = vld [vmem:[#allocation4 + $0x111] sm:$0xff]
        %v5310 = vld [vmem:[#allocation4 + $0x121] sm:$0xff]
        %v5311 = vld [vmem:[#allocation4 + $0x129] sm:$0xff]
        %v5312 = vld [vmem:[#allocation4 + $0x139] sm:$0xff]
        %v5313 = vld [vmem:[#allocation4 + $0x141] sm:$0xff]
        %v5314 = vld [vmem:[#allocation4 + $0x151] sm:$0xff]
        %v5315 = vld [vmem:[#allocation4 + $0x159] sm:$0xff]
        %v5316 = vld [vmem:[#allocation4 + $0x169] sm:$0xff]
        %v5317 = vld [vmem:[#allocation4 + $0x171] sm:$0xff]
        %v5318 = vld [vmem:[#allocation4 + $0x181] sm:$0xff]
        %v5319 = vld [vmem:[#allocation4 + $0x189] sm:$0xff]
        %v5320 = vld [vmem:[#allocation4 + $0x199] sm:$0xff]
        %v5321 = vld [vmem:[#allocation4 + $0x1a1] sm:$0xff]
        %v5322 = vadd.f32 %v5250, %v5286
        %v5323 = vadd.f32 %v5251, %v5287
        %v5324 = vadd.f32 %v5252, %v5288
        %v5325 = vadd.f32 %v5253, %v5289
        %v5326 = vadd.f32 %v5254, %v5290
        %v5327 = vadd.f32 %v5255, %v5291
        %v5328 = vadd.f32 %v5256, %v5292
        %v5329 = vadd.f32 %v5257, %v5293
        %v5330 = vadd.f32 %v5258, %v5294
        %v5331 = vadd.f32 %v5259, %v5295
        %v5332 = vadd.f32 %v5260, %v5296
        %v5333 = vadd.f32 %v5261, %v5297
        %v5334 = vadd.f32 %v5262, %v5298
        %v5335 = vadd.f32 %v5263, %v5299
        %v5336 = vadd.f32 %v5264, %v5300
        %v5337 = vadd.f32 %v5265, %v5301
        %v5338 = vadd.f32 %v5266, %v5302
        %v5339 = vadd.f32 %v5267, %v5303
        %v5340 = vadd.f32 %v5268, %v5304
        %v5341 = vadd.f32 %v5269, %v5305
        %v5342 = vadd.f32 %v5270, %v5306
        %v5343 = vadd.f32 %v5271, %v5307
        %v5344 = vadd.f32 %v5272, %v5308
        %v5345 = vadd.f32 %v5273, %v5309
        %v5346 = vadd.f32 %v5274, %v5310
        %v5347 = vadd.f32 %v5275, %v5311
        %v5348 = vadd.f32 %v5276, %v5312
        %v5349 = vadd.f32 %v5277, %v5313
        %v5350 = vadd.f32 %v5278, %v5314
        %v5351 = vadd.f32 %v5279, %v5315
        %v5352 = vadd.f32 %v5280, %v5316
        %v5353 = vadd.f32 %v5281, %v5317
        %v5354 = vadd.f32 %v5282, %v5318
        %v5355 = vadd.f32 %v5283, %v5319
        %v5356 = vadd.f32 %v5284, %v5320
        %v5357 = vadd.f32 %v5285, %v5321
        %v5358 = vld [vmem:[#allocation4 + $0x2] sm:$0xff]
        %v5359 = vld [vmem:[#allocation4 + $0xa] sm:$0xff]
        %v5360 = vld [vmem:[#allocation4 + $0x1a] sm:$0xff]
        %v5361 = vld [vmem:[#allocation4 + $0x22] sm:$0xff]
        %v5362 = vld [vmem:[#allocation4 + $0x32] sm:$0xff]
        %v5363 = vld [vmem:[#allocation4 + $0x3a] sm:$0xff]
        %v5364 = vld [vmem:[#allocation4 + $0x4a] sm:$0xff]
        %v5365 = vld [vmem:[#allocation4 + $0x52] sm:$0xff]
        %v5366 = vld [vmem:[#allocation4 + $0x62] sm:$0xff]
        %v5367 = vld [vmem:[#allocation4 + $0x6a] sm:$0xff]
        %v5368 = vld [vmem:[#allocation4 + $0x7a] sm:$0xff]
        %v5369 = vld [vmem:[#allocation4 + $0x82] sm:$0xff]
        %v5370 = vld [vmem:[#allocation4 + $0x92] sm:$0xff]
        %v5371 = vld [vmem:[#allocation4 + $0x9a] sm:$0xff]
        %v5372 = vld [vmem:[#allocation4 + $0xaa] sm:$0xff]
        %v5373 = vld [vmem:[#allocation4 + $0xb2] sm:$0xff]
        %v5374 = vld [vmem:[#allocation4 + $0xc2] sm:$0xff]
        %v5375 = vld [vmem:[#allocation4 + $0xca] sm:$0xff]
        %v5376 = vld [vmem:[#allocation4 + $0xda] sm:$0xff]
        %v5377 = vld [vmem:[#allocation4 + $0xe2] sm:$0xff]
        %v5378 = vld [vmem:[#allocation4 + $0xf2] sm:$0xff]
        %v5379 = vld [vmem:[#allocation4 + $0xfa] sm:$0xff]
        %v5380 = vld [vmem:[#allocation4 + $0x10a] sm:$0xff]
        %v5381 = vld [vmem:[#allocation4 + $0x112] sm:$0xff]
        %v5382 = vld [vmem:[#allocation4 + $0x122] sm:$0xff]
        %v5383 = vld [vmem:[#allocation4 + $0x12a] sm:$0xff]
        %v5384 = vld [vmem:[#allocation4 + $0x13a] sm:$0xff]
        %v5385 = vld [vmem:[#allocation4 + $0x142] sm:$0xff]
        %v5386 = vld [vmem:[#allocation4 + $0x152] sm:$0xff]
        %v5387 = vld [vmem:[#allocation4 + $0x15a] sm:$0xff]
        %v5388 = vld [vmem:[#allocation4 + $0x16a] sm:$0xff]
        %v5389 = vld [vmem:[#allocation4 + $0x172] sm:$0xff]
        %v5390 = vld [vmem:[#allocation4 + $0x182] sm:$0xff]
        %v5391 = vld [vmem:[#allocation4 + $0x18a] sm:$0xff]
        %v5392 = vld [vmem:[#allocation4 + $0x19a] sm:$0xff]
        %v5393 = vld [vmem:[#allocation4 + $0x1a2] sm:$0xff]
        %v5394 = vadd.f32 %v5322, %v5358
        %v5395 = vadd.f32 %v5323, %v5359
        %v5396 = vadd.f32 %v5324, %v5360
        %v5397 = vadd.f32 %v5325, %v5361
        %v5398 = vadd.f32 %v5326, %v5362
        %v5399 = vadd.f32 %v5327, %v5363
        %v5400 = vadd.f32 %v5328, %v5364
        %v5401 = vadd.f32 %v5329, %v5365
        %v5402 = vadd.f32 %v5330, %v5366
        %v5403 = vadd.f32 %v5331, %v5367
        %v5404 = vadd.f32 %v5332, %v5368
        %v5405 = vadd.f32 %v5333, %v5369
        %v5406 = vadd.f32 %v5334, %v5370
        %v5407 = vadd.f32 %v5335, %v5371
        %v5408 = vadd.f32 %v5336, %v5372
        %v5409 = vadd.f32 %v5337, %v5373
        %v5410 = vadd.f32 %v5338, %v5374
        %v5411 = vadd.f32 %v5339, %v5375
        %v5412 = vadd.f32 %v5340, %v5376
        %v5413 = vadd.f32 %v5341, %v5377
        %v5414 = vadd.f32 %v5342, %v5378
        %v5415 = vadd.f32 %v5343, %v5379
        %v5416 = vadd.f32 %v5344, %v5380
        %v5417 = vadd.f32 %v5345, %v5381
        %v5418 = vadd.f32 %v5346, %v5382
        %v5419 = vadd.f32 %v5347, %v5383
        %v5420 = vadd.f32 %v5348, %v5384
        %v5421 = vadd.f32 %v5349, %v5385
        %v5422 = vadd.f32 %v5350, %v5386
        %v5423 = vadd.f32 %v5351, %v5387
        %v5424 = vadd.f32 %v5352, %v5388
        %v5425 = vadd.f32 %v5353, %v5389
        %v5426 = vadd.f32 %v5354, %v5390
        %v5427 = vadd.f32 %v5355, %v5391
        %v5428 = vadd.f32 %v5356, %v5392
        %v5429 = vadd.f32 %v5357, %v5393
        %v5430 = vadd.f32 %v5394, %v5396
        %v5431 = vadd.f32 %v5395, %v5397
        %v5432 = vadd.f32 %v5396, %v5398
        %v5433 = vadd.f32 %v5397, %v5399
        %v5434 = vadd.f32 %v5398, %v5400
        %v5435 = vadd.f32 %v5399, %v5401
        %v5436 = vadd.f32 %v5400, %v5402
        %v5437 = vadd.f32 %v5401, %v5403
        %v5438 = vadd.f32 %v5402, %v5404
        %v5439 = vadd.f32 %v5403, %v5405
        %v5440 = vadd.f32 %v5404, %v5406
        %v5441 = vadd.f32 %v5405, %v5407
        %v5442 = vadd.f32 %v5406, %v5408
        %v5443 = vadd.f32 %v5407, %v5409
        %v5444 = vadd.f32 %v5408, %v5410
        %v5445 = vadd.f32 %v5409, %v5411
        %v5446 = vadd.f32 %v5410, %v5412
        %v5447 = vadd.f32 %v5411, %v5413
        %v5448 = vadd.f32 %v5412, %v5414
        %v5449 = vadd.f32 %v5413, %v5415
        %v5450 = vadd.f32 %v5414, %v5416
        %v5451 = vadd.f32 %v5415, %v5417
        %v5452 = vadd.f32 %v5416, %v5418
        %v5453 = vadd.f32 %v5417, %v5419
        %v5454 = vadd.f32 %v5418, %v5420
        %v5455 = vadd.f32 %v5419, %v5421
        %v5456 = vadd.f32 %v5420, %v5422
        %v5457 = vadd.f32 %v5421, %v5423
        %v5458 = vadd.f32 %v5422, %v5424
        %v5459 = vadd.f32 %v5423, %v5425
        %v5460 = vadd.f32 %v5424, %v5426
        %v5461 = vadd.f32 %v5425, %v5427
        %v5462 = vadd.f32 %v5430, %v5398
        %v5463 = vadd.f32 %v5431, %v5399
        %v5464 = vadd.f32 %v5432, %v5400
        %v5465 = vadd.f32 %v5433, %v5401
        %v5466 = vadd.f32 %v5434, %v5402
        %v5467 = vadd.f32 %v5435, %v5403
        %v5468 = vadd.f32 %v5436, %v5404
        %v5469 = vadd.f32 %v5437, %v5405
        %v5470 = vadd.f32 %v5438, %v5406
        %v5471 = vadd.f32 %v5439, %v5407
        %v5472 = vadd.f32 %v5440, %v5408
        %v5473 = vadd.f32 %v5441, %v5409
        %v5474 = vadd.f32 %v5442, %v5410
        %v5475 = vadd.f32 %v5443, %v5411
        %v5476 = vadd.f32 %v5444, %v5412
        %v5477 = vadd.f32 %v5445, %v5413
        %v5478 = vadd.f32 %v5446, %v5414
        %v5479 = vadd.f32 %v5447, %v5415
        %v5480 = vadd.f32 %v5448, %v5416
        %v5481 = vadd.f32 %v5449, %v5417
        %v5482 = vadd.f32 %v5450, %v5418
        %v5483 = vadd.f32 %v5451, %v5419
        %v5484 = vadd.f32 %v5452, %v5420
        %v5485 = vadd.f32 %v5453, %v5421
        %v5486 = vadd.f32 %v5454, %v5422
        %v5487 = vadd.f32 %v5455, %v5423
        %v5488 = vadd.f32 %v5456, %v5424
        %v5489 = vadd.f32 %v5457, %v5425
        %v5490 = vadd.f32 %v5458, %v5426
        %v5491 = vadd.f32 %v5459, %v5427
        %v5492 = vadd.f32 %v5460, %v5428
        %v5493 = vadd.f32 %v5461, %v5429
        %5495 = vset.pattern.permute.xlu0 0
        %5496 = vperm.xlu0 %5495, %v4809
        %v5497 = vpop.permute.xlu0 %5496
        %5500 = vset.pattern.permute.xlu0 0
        %5501 = vperm.xlu0 %5500, %v4810
        %v5502 = vpop.permute.xlu0 %5501
        %5505 = vset.pattern.permute.xlu0 0
        %5506 = vperm.xlu0 %5505, %v4811
        %v5507 = vpop.permute.xlu0 %5506
        %5510 = vset.pattern.permute.xlu0 0
        %5511 = vperm.xlu0 %5510, %v4812
        %v5512 = vpop.permute.xlu0 %5511
        %5515 = vset.pattern.permute.xlu0 0
        %5516 = vperm.xlu0 %5515, %v4813
        %v5517 = vpop.permute.xlu0 %5516
        %5520 = vset.pattern.permute.xlu0 0
        %5521 = vperm.xlu0 %5520, %v4814
        %v5522 = vpop.permute.xlu0 %5521
        %5525 = vset.pattern.permute.xlu0 0
        %5526 = vperm.xlu0 %5525, %v4815
        %v5527 = vpop.permute.xlu0 %5526
        %5530 = vset.pattern.permute.xlu0 0
        %5531 = vperm.xlu0 %5530, %v4816
        %v5532 = vpop.permute.xlu0 %5531
        %5535 = vset.pattern.permute.xlu0 0
        %5536 = vperm.xlu0 %5535, %v4817
        %v5537 = vpop.permute.xlu0 %5536
        %5540 = vset.pattern.permute.xlu0 0
        %5541 = vperm.xlu0 %5540, %v4818
        %v5542 = vpop.permute.xlu0 %5541
        %5545 = vset.pattern.permute.xlu0 0
        %5546 = vperm.xlu0 %5545, %v4819
        %v5547 = vpop.permute.xlu0 %5546
        %5550 = vset.pattern.permute.xlu0 0
        %5551 = vperm.xlu0 %5550, %v4820
        %v5552 = vpop.permute.xlu0 %5551
        %5555 = vset.pattern.permute.xlu0 0
        %5556 = vperm.xlu0 %5555, %v4821
        %v5557 = vpop.permute.xlu0 %5556
        %5560 = vset.pattern.permute.xlu0 0
        %5561 = vperm.xlu0 %5560, %v4822
        %v5562 = vpop.permute.xlu0 %5561
        %5565 = vset.pattern.permute.xlu0 0
        %5566 = vperm.xlu0 %5565, %v4823
        %v5567 = vpop.permute.xlu0 %5566
        %5570 = vset.pattern.permute.xlu0 0
        %5571 = vperm.xlu0 %5570, %v4824
        %v5572 = vpop.permute.xlu0 %5571
        %5575 = vset.pattern.permute.xlu0 0
        %5576 = vperm.xlu0 %5575, %v4825
        %v5577 = vpop.permute.xlu0 %5576
        %5580 = vset.pattern.permute.xlu0 0
        %5581 = vperm.xlu0 %5580, %v4826
        %v5582 = vpop.permute.xlu0 %5581
        %5585 = vset.pattern.permute.xlu0 0
        %5586 = vperm.xlu0 %5585, %v4827
        %v5587 = vpop.permute.xlu0 %5586
        %5590 = vset.pattern.permute.xlu0 0
        %5591 = vperm.xlu0 %5590, %v4828
        %v5592 = vpop.permute.xlu0 %5591
        %5595 = vset.pattern.permute.xlu0 0
        %5596 = vperm.xlu0 %5595, %v4829
        %v5597 = vpop.permute.xlu0 %5596
        %5600 = vset.pattern.permute.xlu0 0
        %5601 = vperm.xlu0 %5600, %v4830
        %v5602 = vpop.permute.xlu0 %5601
        %5605 = vset.pattern.permute.xlu0 0
        %5606 = vperm.xlu0 %5605, %v4831
        %v5607 = vpop.permute.xlu0 %5606
        %5610 = vset.pattern.permute.xlu0 0
        %5611 = vperm.xlu0 %5610, %v4832
        %v5612 = vpop.permute.xlu0 %5611
        %5615 = vset.pattern.permute.xlu0 0
        %5616 = vperm.xlu0 %5615, %v4833
        %v5617 = vpop.permute.xlu0 %5616
        %5620 = vset.pattern.permute.xlu0 0
        %5621 = vperm.xlu0 %5620, %v4834
        %v5622 = vpop.permute.xlu0 %5621
        %5625 = vset.pattern.permute.xlu0 0
        %5626 = vperm.xlu0 %5625, %v4835
        %v5627 = vpop.permute.xlu0 %5626
        %5630 = vset.pattern.permute.xlu0 0
        %5631 = vperm.xlu0 %5630, %v4836
        %v5632 = vpop.permute.xlu0 %5631
        %5635 = vset.pattern.permute.xlu0 0
        %5636 = vperm.xlu0 %5635, %v4837
        %v5637 = vpop.permute.xlu0 %5636
        %5640 = vset.pattern.permute.xlu0 0
        %5641 = vperm.xlu0 %5640, %v4838
        %v5642 = vpop.permute.xlu0 %5641
        %5645 = vset.pattern.permute.xlu0 0
        %5646 = vperm.xlu0 %5645, %v4839
        %v5647 = vpop.permute.xlu0 %5646
        %5650 = vset.pattern.permute.xlu0 0
        %5651 = vperm.xlu0 %5650, %v4840
        %v5652 = vpop.permute.xlu0 %5651
        %v5654 = vmul.f32 %v5462, %v5497
        %v5655 = vmul.f32 %v5463, %v5502
        %v5656 = vmul.f32 %v5464, %v5507
        %v5657 = vmul.f32 %v5465, %v5512
        %v5658 = vmul.f32 %v5466, %v5517
        %v5659 = vmul.f32 %v5467, %v5522
        %v5660 = vmul.f32 %v5468, %v5527
        %v5661 = vmul.f32 %v5469, %v5532
        %v5662 = vmul.f32 %v5470, %v5537
        %v5663 = vmul.f32 %v5471, %v5542
        %v5664 = vmul.f32 %v5472, %v5547
        %v5665 = vmul.f32 %v5473, %v5552
        %v5666 = vmul.f32 %v5474, %v5557
        %v5667 = vmul.f32 %v5475, %v5562
        %v5668 = vmul.f32 %v5476, %v5567
        %v5669 = vmul.f32 %v5477, %v5572
        %v5670 = vmul.f32 %v5478, %v5577
        %v5671 = vmul.f32 %v5479, %v5582
        %v5672 = vmul.f32 %v5480, %v5587
        %v5673 = vmul.f32 %v5481, %v5592
        %v5674 = vmul.f32 %v5482, %v5597
        %v5675 = vmul.f32 %v5483, %v5602
        %v5676 = vmul.f32 %v5484, %v5607
        %v5677 = vmul.f32 %v5485, %v5612
        %v5678 = vmul.f32 %v5486, %v5617
        %v5679 = vmul.f32 %v5487, %v5622
        %v5680 = vmul.f32 %v5488, %v5627
        %v5681 = vmul.f32 %v5489, %v5632
        %v5682 = vmul.f32 %v5490, %v5637
        %v5683 = vmul.f32 %v5491, %v5642
        %v5684 = vmul.f32 %v5492, %v5647
        %v5685 = vmul.f32 %v5493, %v5652
        %v5686 = vld [vmem:[#allocation5] sm:$0xff]
        %v5687 = vld [vmem:[#allocation5 + $0x8] sm:$0xff]
        %v5688 = vld [vmem:[#allocation5 + $0x18] sm:$0xff]
        %v5689 = vld [vmem:[#allocation5 + $0x20] sm:$0xff]
        %v5690 = vld [vmem:[#allocation5 + $0x30] sm:$0xff]
        %v5691 = vld [vmem:[#allocation5 + $0x38] sm:$0xff]
        %v5692 = vld [vmem:[#allocation5 + $0x48] sm:$0xff]
        %v5693 = vld [vmem:[#allocation5 + $0x50] sm:$0xff]
        %v5694 = vld [vmem:[#allocation5 + $0x60] sm:$0xff]
        %v5695 = vld [vmem:[#allocation5 + $0x68] sm:$0xff]
        %v5696 = vld [vmem:[#allocation5 + $0x78] sm:$0xff]
        %v5697 = vld [vmem:[#allocation5 + $0x80] sm:$0xff]
        %v5698 = vld [vmem:[#allocation5 + $0x90] sm:$0xff]
        %v5699 = vld [vmem:[#allocation5 + $0x98] sm:$0xff]
        %v5700 = vld [vmem:[#allocation5 + $0xa8] sm:$0xff]
        %v5701 = vld [vmem:[#allocation5 + $0xb0] sm:$0xff]
        %v5702 = vld [vmem:[#allocation5 + $0xc0] sm:$0xff]
        %v5703 = vld [vmem:[#allocation5 + $0xc8] sm:$0xff]
        %v5704 = vld [vmem:[#allocation5 + $0xd8] sm:$0xff]
        %v5705 = vld [vmem:[#allocation5 + $0xe0] sm:$0xff]
        %v5706 = vld [vmem:[#allocation5 + $0xf0] sm:$0xff]
        %v5707 = vld [vmem:[#allocation5 + $0xf8] sm:$0xff]
        %v5708 = vld [vmem:[#allocation5 + $0x108] sm:$0xff]
        %v5709 = vld [vmem:[#allocation5 + $0x110] sm:$0xff]
        %v5710 = vld [vmem:[#allocation5 + $0x120] sm:$0xff]
        %v5711 = vld [vmem:[#allocation5 + $0x128] sm:$0xff]
        %v5712 = vld [vmem:[#allocation5 + $0x138] sm:$0xff]
        %v5713 = vld [vmem:[#allocation5 + $0x140] sm:$0xff]
        %v5714 = vld [vmem:[#allocation5 + $0x150] sm:$0xff]
        %v5715 = vld [vmem:[#allocation5 + $0x158] sm:$0xff]
        %v5716 = vld [vmem:[#allocation5 + $0x168] sm:$0xff]
        %v5717 = vld [vmem:[#allocation5 + $0x170] sm:$0xff]
        %v5718 = vld [vmem:[#allocation5 + $0x180] sm:$0xff]
        %v5719 = vld [vmem:[#allocation5 + $0x188] sm:$0xff]
        %v5720 = vld [vmem:[#allocation5 + $0x198] sm:$0xff]
        %v5721 = vld [vmem:[#allocation5 + $0x1a0] sm:$0xff]
        %v5722 = vld [vmem:[#allocation5 + $0x1] sm:$0xff]
        %v5723 = vld [vmem:[#allocation5 + $0x9] sm:$0xff]
        %v5724 = vld [vmem:[#allocation5 + $0x19] sm:$0xff]
        %v5725 = vld [vmem:[#allocation5 + $0x21] sm:$0xff]
        %v5726 = vld [vmem:[#allocation5 + $0x31] sm:$0xff]
        %v5727 = vld [vmem:[#allocation5 + $0x39] sm:$0xff]
        %v5728 = vld [vmem:[#allocation5 + $0x49] sm:$0xff]
        %v5729 = vld [vmem:[#allocation5 + $0x51] sm:$0xff]
        %v5730 = vld [vmem:[#allocation5 + $0x61] sm:$0xff]
        %v5731 = vld [vmem:[#allocation5 + $0x69] sm:$0xff]
        %v5732 = vld [vmem:[#allocation5 + $0x79] sm:$0xff]
        %v5733 = vld [vmem:[#allocation5 + $0x81] sm:$0xff]
        %v5734 = vld [vmem:[#allocation5 + $0x91] sm:$0xff]
        %v5735 = vld [vmem:[#allocation5 + $0x99] sm:$0xff]
        %v5736 = vld [vmem:[#allocation5 + $0xa9] sm:$0xff]
        %v5737 = vld [vmem:[#allocation5 + $0xb1] sm:$0xff]
        %v5738 = vld [vmem:[#allocation5 + $0xc1] sm:$0xff]
        %v5739 = vld [vmem:[#allocation5 + $0xc9] sm:$0xff]
        %v5740 = vld [vmem:[#allocation5 + $0xd9] sm:$0xff]
        %v5741 = vld [vmem:[#allocation5 + $0xe1] sm:$0xff]
        %v5742 = vld [vmem:[#allocation5 + $0xf1] sm:$0xff]
        %v5743 = vld [vmem:[#allocation5 + $0xf9] sm:$0xff]
        %v5744 = vld [vmem:[#allocation5 + $0x109] sm:$0xff]
        %v5745 = vld [vmem:[#allocation5 + $0x111] sm:$0xff]
        %v5746 = vld [vmem:[#allocation5 + $0x121] sm:$0xff]
        %v5747 = vld [vmem:[#allocation5 + $0x129] sm:$0xff]
        %v5748 = vld [vmem:[#allocation5 + $0x139] sm:$0xff]
        %v5749 = vld [vmem:[#allocation5 + $0x141] sm:$0xff]
        %v5750 = vld [vmem:[#allocation5 + $0x151] sm:$0xff]
        %v5751 = vld [vmem:[#allocation5 + $0x159] sm:$0xff]
        %v5752 = vld [vmem:[#allocation5 + $0x169] sm:$0xff]
        %v5753 = vld [vmem:[#allocation5 + $0x171] sm:$0xff]
        %v5754 = vld [vmem:[#allocation5 + $0x181] sm:$0xff]
        %v5755 = vld [vmem:[#allocation5 + $0x189] sm:$0xff]
        %v5756 = vld [vmem:[#allocation5 + $0x199] sm:$0xff]
        %v5757 = vld [vmem:[#allocation5 + $0x1a1] sm:$0xff]
        %v5758 = vmax.f32 %v5686, %v5722
        %v5759 = vmax.f32 %v5687, %v5723
        %v5760 = vmax.f32 %v5688, %v5724
        %v5761 = vmax.f32 %v5689, %v5725
        %v5762 = vmax.f32 %v5690, %v5726
        %v5763 = vmax.f32 %v5691, %v5727
        %v5764 = vmax.f32 %v5692, %v5728
        %v5765 = vmax.f32 %v5693, %v5729
        %v5766 = vmax.f32 %v5694, %v5730
        %v5767 = vmax.f32 %v5695, %v5731
        %v5768 = vmax.f32 %v5696, %v5732
        %v5769 = vmax.f32 %v5697, %v5733
        %v5770 = vmax.f32 %v5698, %v5734
        %v5771 = vmax.f32 %v5699, %v5735
        %v5772 = vmax.f32 %v5700, %v5736
        %v5773 = vmax.f32 %v5701, %v5737
        %v5774 = vmax.f32 %v5702, %v5738
        %v5775 = vmax.f32 %v5703, %v5739
        %v5776 = vmax.f32 %v5704, %v5740
        %v5777 = vmax.f32 %v5705, %v5741
        %v5778 = vmax.f32 %v5706, %v5742
        %v5779 = vmax.f32 %v5707, %v5743
        %v5780 = vmax.f32 %v5708, %v5744
        %v5781 = vmax.f32 %v5709, %v5745
        %v5782 = vmax.f32 %v5710, %v5746
        %v5783 = vmax.f32 %v5711, %v5747
        %v5784 = vmax.f32 %v5712, %v5748
        %v5785 = vmax.f32 %v5713, %v5749
        %v5786 = vmax.f32 %v5714, %v5750
        %v5787 = vmax.f32 %v5715, %v5751
        %v5788 = vmax.f32 %v5716, %v5752
        %v5789 = vmax.f32 %v5717, %v5753
        %v5790 = vmax.f32 %v5718, %v5754
        %v5791 = vmax.f32 %v5719, %v5755
        %v5792 = vmax.f32 %v5720, %v5756
        %v5793 = vmax.f32 %v5721, %v5757
        %v5794 = vld [vmem:[#allocation5 + $0x2] sm:$0xff]
        %v5795 = vld [vmem:[#allocation5 + $0xa] sm:$0xff]
        %v5796 = vld [vmem:[#allocation5 + $0x1a] sm:$0xff]
        %v5797 = vld [vmem:[#allocation5 + $0x22] sm:$0xff]
        %v5798 = vld [vmem:[#allocation5 + $0x32] sm:$0xff]
        %v5799 = vld [vmem:[#allocation5 + $0x3a] sm:$0xff]
        %v5800 = vld [vmem:[#allocation5 + $0x4a] sm:$0xff]
        %v5801 = vld [vmem:[#allocation5 + $0x52] sm:$0xff]
        %v5802 = vld [vmem:[#allocation5 + $0x62] sm:$0xff]
        %v5803 = vld [vmem:[#allocation5 + $0x6a] sm:$0xff]
        %v5804 = vld [vmem:[#allocation5 + $0x7a] sm:$0xff]
        %v5805 = vld [vmem:[#allocation5 + $0x82] sm:$0xff]
        %v5806 = vld [vmem:[#allocation5 + $0x92] sm:$0xff]
        %v5807 = vld [vmem:[#allocation5 + $0x9a] sm:$0xff]
        %v5808 = vld [vmem:[#allocation5 + $0xaa] sm:$0xff]
        %v5809 = vld [vmem:[#allocation5 + $0xb2] sm:$0xff]
        %v5810 = vld [vmem:[#allocation5 + $0xc2] sm:$0xff]
        %v5811 = vld [vmem:[#allocation5 + $0xca] sm:$0xff]
        %v5812 = vld [vmem:[#allocation5 + $0xda] sm:$0xff]
        %v5813 = vld [vmem:[#allocation5 + $0xe2] sm:$0xff]
        %v5814 = vld [vmem:[#allocation5 + $0xf2] sm:$0xff]
        %v5815 = vld [vmem:[#allocation5 + $0xfa] sm:$0xff]
        %v5816 = vld [vmem:[#allocation5 + $0x10a] sm:$0xff]
        %v5817 = vld [vmem:[#allocation5 + $0x112] sm:$0xff]
        %v5818 = vld [vmem:[#allocation5 + $0x122] sm:$0xff]
        %v5819 = vld [vmem:[#allocation5 + $0x12a] sm:$0xff]
        %v5820 = vld [vmem:[#allocation5 + $0x13a] sm:$0xff]
        %v5821 = vld [vmem:[#allocation5 + $0x142] sm:$0xff]
        %v5822 = vld [vmem:[#allocation5 + $0x152] sm:$0xff]
        %v5823 = vld [vmem:[#allocation5 + $0x15a] sm:$0xff]
        %v5824 = vld [vmem:[#allocation5 + $0x16a] sm:$0xff]
        %v5825 = vld [vmem:[#allocation5 + $0x172] sm:$0xff]
        %v5826 = vld [vmem:[#allocation5 + $0x182] sm:$0xff]
        %v5827 = vld [vmem:[#allocation5 + $0x18a] sm:$0xff]
        %v5828 = vld [vmem:[#allocation5 + $0x19a] sm:$0xff]
        %v5829 = vld [vmem:[#allocation5 + $0x1a2] sm:$0xff]
        %v5830 = vmax.f32 %v5758, %v5794
        %v5831 = vmax.f32 %v5759, %v5795
        %v5832 = vmax.f32 %v5760, %v5796
        %v5833 = vmax.f32 %v5761, %v5797
        %v5834 = vmax.f32 %v5762, %v5798
        %v5835 = vmax.f32 %v5763, %v5799
        %v5836 = vmax.f32 %v5764, %v5800
        %v5837 = vmax.f32 %v5765, %v5801
        %v5838 = vmax.f32 %v5766, %v5802
        %v5839 = vmax.f32 %v5767, %v5803
        %v5840 = vmax.f32 %v5768, %v5804
        %v5841 = vmax.f32 %v5769, %v5805
        %v5842 = vmax.f32 %v5770, %v5806
        %v5843 = vmax.f32 %v5771, %v5807
        %v5844 = vmax.f32 %v5772, %v5808
        %v5845 = vmax.f32 %v5773, %v5809
        %v5846 = vmax.f32 %v5774, %v5810
        %v5847 = vmax.f32 %v5775, %v5811
        %v5848 = vmax.f32 %v5776, %v5812
        %v5849 = vmax.f32 %v5777, %v5813
        %v5850 = vmax.f32 %v5778, %v5814
        %v5851 = vmax.f32 %v5779, %v5815
        %v5852 = vmax.f32 %v5780, %v5816
        %v5853 = vmax.f32 %v5781, %v5817
        %v5854 = vmax.f32 %v5782, %v5818
        %v5855 = vmax.f32 %v5783, %v5819
        %v5856 = vmax.f32 %v5784, %v5820
        %v5857 = vmax.f32 %v5785, %v5821
        %v5858 = vmax.f32 %v5786, %v5822
        %v5859 = vmax.f32 %v5787, %v5823
        %v5860 = vmax.f32 %v5788, %v5824
        %v5861 = vmax.f32 %v5789, %v5825
        %v5862 = vmax.f32 %v5790, %v5826
        %v5863 = vmax.f32 %v5791, %v5827
        %v5864 = vmax.f32 %v5792, %v5828
        %v5865 = vmax.f32 %v5793, %v5829
        %v5866 = vmax.f32 %v5830, %v5832
        %v5867 = vmax.f32 %v5831, %v5833
        %v5868 = vmax.f32 %v5832, %v5834
        %v5869 = vmax.f32 %v5833, %v5835
        %v5870 = vmax.f32 %v5834, %v5836
        %v5871 = vmax.f32 %v5835, %v5837
        %v5872 = vmax.f32 %v5836, %v5838
        %v5873 = vmax.f32 %v5837, %v5839
        %v5874 = vmax.f32 %v5838, %v5840
        %v5875 = vmax.f32 %v5839, %v5841
        %v5876 = vmax.f32 %v5840, %v5842
        %v5877 = vmax.f32 %v5841, %v5843
        %v5878 = vmax.f32 %v5842, %v5844
        %v5879 = vmax.f32 %v5843, %v5845
        %v5880 = vmax.f32 %v5844, %v5846
        %v5881 = vmax.f32 %v5845, %v5847
        %v5882 = vmax.f32 %v5846, %v5848
        %v5883 = vmax.f32 %v5847, %v5849
        %v5884 = vmax.f32 %v5848, %v5850
        %v5885 = vmax.f32 %v5849, %v5851
        %v5886 = vmax.f32 %v5850, %v5852
        %v5887 = vmax.f32 %v5851, %v5853
        %v5888 = vmax.f32 %v5852, %v5854
        %v5889 = vmax.f32 %v5853, %v5855
        %v5890 = vmax.f32 %v5854, %v5856
        %v5891 = vmax.f32 %v5855, %v5857
        %v5892 = vmax.f32 %v5856, %v5858
        %v5893 = vmax.f32 %v5857, %v5859
        %v5894 = vmax.f32 %v5858, %v5860
        %v5895 = vmax.f32 %v5859, %v5861
        %v5896 = vmax.f32 %v5860, %v5862
        %v5897 = vmax.f32 %v5861, %v5863
        %v5898 = vmax.f32 %v5866, %v5834
        %v5899 = vmax.f32 %v5867, %v5835
        %v5900 = vmax.f32 %v5868, %v5836
        %v5901 = vmax.f32 %v5869, %v5837
        %v5902 = vmax.f32 %v5870, %v5838
        %v5903 = vmax.f32 %v5871, %v5839
        %v5904 = vmax.f32 %v5872, %v5840
        %v5905 = vmax.f32 %v5873, %v5841
        %v5906 = vmax.f32 %v5874, %v5842
        %v5907 = vmax.f32 %v5875, %v5843
        %v5908 = vmax.f32 %v5876, %v5844
        %v5909 = vmax.f32 %v5877, %v5845
        %v5910 = vmax.f32 %v5878, %v5846
        %v5911 = vmax.f32 %v5879, %v5847
        %v5912 = vmax.f32 %v5880, %v5848
        %v5913 = vmax.f32 %v5881, %v5849
        %v5914 = vmax.f32 %v5882, %v5850
        %v5915 = vmax.f32 %v5883, %v5851
        %v5916 = vmax.f32 %v5884, %v5852
        %v5917 = vmax.f32 %v5885, %v5853
        %v5918 = vmax.f32 %v5886, %v5854
        %v5919 = vmax.f32 %v5887, %v5855
        %v5920 = vmax.f32 %v5888, %v5856
        %v5921 = vmax.f32 %v5889, %v5857
        %v5922 = vmax.f32 %v5890, %v5858
        %v5923 = vmax.f32 %v5891, %v5859
        %v5924 = vmax.f32 %v5892, %v5860
        %v5925 = vmax.f32 %v5893, %v5861
        %v5926 = vmax.f32 %v5894, %v5862
        %v5927 = vmax.f32 %v5895, %v5863
        %v5928 = vmax.f32 %v5896, %v5864
        %v5929 = vmax.f32 %v5897, %v5865
        %s5930 = sld [smem:[#allocation6]]
        %s5931 = sld [smem:[#allocation6 + $0x1]]
        %s5932 = sld [smem:[#allocation6 + $0x2]]
        %v5933 = vstv %s5930
        %v5934 = vmul.f32 %v5933, %v4948
        %v5935 = vmul.f32 %v5933, %v4951
        %v5936 = vmul.f32 %v5933, %v4956
        %v5937 = vmul.f32 %v5933, %v4959
        %v5938 = vmul.f32 %v5933, %v4964
        %v5939 = vmul.f32 %v5933, %v4967
        %v5940 = vmul.f32 %v5933, %v4972
        %v5941 = vmul.f32 %v5933, %v4975
        %v5942 = vmul.f32 %v5933, %v4980
        %v5943 = vmul.f32 %v5933, %v4983
        %v5944 = vmul.f32 %v5933, %v4988
        %v5945 = vmul.f32 %v5933, %v4991
        %v5946 = vmul.f32 %v5933, %v4996
        %v5947 = vmul.f32 %v5933, %v4999
        %v5948 = vmul.f32 %v5933, %v5004
        %v5949 = vmul.f32 %v5933, %v5007
        %v5950 = vmul.f32 %v5933, %v5012
        %v5951 = vmul.f32 %v5933, %v5015
        %v5952 = vmul.f32 %v5933, %v5020
        %v5953 = vmul.f32 %v5933, %v5023
        %v5954 = vmul.f32 %v5933, %v5028
        %v5955 = vmul.f32 %v5933, %v5031
        %v5956 = vmul.f32 %v5933, %v5036
        %v5957 = vmul.f32 %v5933, %v5039
        %v5958 = vmul.f32 %v5933, %v5044
        %v5959 = vmul.f32 %v5933, %v5047
        %v5960 = vmul.f32 %v5933, %v5052
        %v5961 = vmul.f32 %v5933, %v5055
        %v5962 = vmul.f32 %v5933, %v5060
        %v5963 = vmul.f32 %v5933, %v5063
        %v5964 = vmul.f32 %v5933, %v5068
        %v5965 = vmul.f32 %v5933, %v5071
        %v5966 = vstv %s5931
        %v5967 = vmul.f32 %v5966, %v5654
        %v5968 = vmul.f32 %v5966, %v5655
        %v5969 = vmul.f32 %v5966, %v5656
        %v5970 = vmul.f32 %v5966, %v5657
        %v5971 = vmul.f32 %v5966, %v5658
        %v5972 = vmul.f32 %v5966, %v5659
        %v5973 = vmul.f32 %v5966, %v5660
        %v5974 = vmul.f32 %v5966, %v5661
        %v5975 = vmul.f32 %v5966, %v5662
        %v5976 = vmul.f32 %v5966, %v5663
        %v5977 = vmul.f32 %v5966, %v5664
        %v5978 = vmul.f32 %v5966, %v5665
        %v5979 = vmul.f32 %v5966, %v5666
        %v5980 = vmul.f32 %v5966, %v5667
        %v5981 = vmul.f32 %v5966, %v5668
        %v5982 = vmul.f32 %v5966, %v5669
        %v5983 = vmul.f32 %v5966, %v5670
        %v5984 = vmul.f32 %v5966, %v5671
        %v5985 = vmul.f32 %v5966, %v5672
        %v5986 = vmul.f32 %v5966, %v5673
        %v5987 = vmul.f32 %v5966, %v5674
        %v5988 = vmul.f32 %v5966, %v5675
        %v5989 = vmul.f32 %v5966, %v5676
        %v5990 = vmul.f32 %v5966, %v5677
        %v5991 = vmul.f32 %v5966, %v5678
        %v5992 = vmul.f32 %v5966, %v5679
        %v5993 = vmul.f32 %v5966, %v5680
        %v5994 = vmul.f32 %v5966, %v5681
        %v5995 = vmul.f32 %v5966, %v5682
        %v5996 = vmul.f32 %v5966, %v5683
        %v5997 = vmul.f32 %v5966, %v5684
        %v5998 = vmul.f32 %v5966, %v5685
        %v5999 = vadd.f32 %v5934, %v5967
        %v6000 = vadd.f32 %v5935, %v5968
        %v6001 = vadd.f32 %v5936, %v5969
        %v6002 = vadd.f32 %v5937, %v5970
        %v6003 = vadd.f32 %v5938, %v5971
        %v6004 = vadd.f32 %v5939, %v5972
        %v6005 = vadd.f32 %v5940, %v5973
        %v6006 = vadd.f32 %v5941, %v5974
        %v6007 = vadd.f32 %v5942, %v5975
        %v6008 = vadd.f32 %v5943, %v5976
        %v6009 = vadd.f32 %v5944, %v5977
        %v6010 = vadd.f32 %v5945, %v5978
        %v6011 = vadd.f32 %v5946, %v5979
        %v6012 = vadd.f32 %v5947, %v5980
        %v6013 = vadd.f32 %v5948, %v5981
        %v6014 = vadd.f32 %v5949, %v5982
        %v6015 = vadd.f32 %v5950, %v5983
        %v6016 = vadd.f32 %v5951, %v5984
        %v6017 = vadd.f32 %v5952, %v5985
        %v6018 = vadd.f32 %v5953, %v5986
        %v6019 = vadd.f32 %v5954, %v5987
        %v6020 = vadd.f32 %v5955, %v5988
        %v6021 = vadd.f32 %v5956, %v5989
        %v6022 = vadd.f32 %v5957, %v5990
        %v6023 = vadd.f32 %v5958, %v5991
        %v6024 = vadd.f32 %v5959, %v5992
        %v6025 = vadd.f32 %v5960, %v5993
        %v6026 = vadd.f32 %v5961, %v5994
        %v6027 = vadd.f32 %v5962, %v5995
        %v6028 = vadd.f32 %v5963, %v5996
        %v6029 = vadd.f32 %v5964, %v5997
        %v6030 = vadd.f32 %v5965, %v5998
        %v6031 = vstv %s5932
        %v6032 = vmul.f32 %v6031, %v5898
        %v6033 = vmul.f32 %v6031, %v5899
        %v6034 = vmul.f32 %v6031, %v5900
        %v6035 = vmul.f32 %v6031, %v5901
        %v6036 = vmul.f32 %v6031, %v5902
        %v6037 = vmul.f32 %v6031, %v5903
        %v6038 = vmul.f32 %v6031, %v5904
        %v6039 = vmul.f32 %v6031, %v5905
        %v6040 = vmul.f32 %v6031, %v5906
        %v6041 = vmul.f32 %v6031, %v5907
        %v6042 = vmul.f32 %v6031, %v5908
        %v6043 = vmul.f32 %v6031, %v5909
        %v6044 = vmul.f32 %v6031, %v5910
        %v6045 = vmul.f32 %v6031, %v5911
        %v6046 = vmul.f32 %v6031, %v5912
        %v6047 = vmul.f32 %v6031, %v5913
        %v6048 = vmul.f32 %v6031, %v5914
        %v6049 = vmul.f32 %v6031, %v5915
        %v6050 = vmul.f32 %v6031, %v5916
        %v6051 = vmul.f32 %v6031, %v5917
        %v6052 = vmul.f32 %v6031, %v5918
        %v6053 = vmul.f32 %v6031, %v5919
        %v6054 = vmul.f32 %v6031, %v5920
        %v6055 = vmul.f32 %v6031, %v5921
        %v6056 = vmul.f32 %v6031, %v5922
        %v6057 = vmul.f32 %v6031, %v5923
        %v6058 = vmul.f32 %v6031, %v5924
        %v6059 = vmul.f32 %v6031, %v5925
        %v6060 = vmul.f32 %v6031, %v5926
        %v6061 = vmul.f32 %v6031, %v5927
        %v6062 = vmul.f32 %v6031, %v5928
        %v6063 = vmul.f32 %v6031, %v5929
        %v6064 = vadd.f32 %v5999, %v6032
        %v6065 = vadd.f32 %v6000, %v6033
        %v6066 = vadd.f32 %v6001, %v6034
        %v6067 = vadd.f32 %v6002, %v6035
        %v6068 = vadd.f32 %v6003, %v6036
        %v6069 = vadd.f32 %v6004, %v6037
        %v6070 = vadd.f32 %v6005, %v6038
        %v6071 = vadd.f32 %v6006, %v6039
        %v6072 = vadd.f32 %v6007, %v6040
        %v6073 = vadd.f32 %v6008, %v6041
        %v6074 = vadd.f32 %v6009, %v6042
        %v6075 = vadd.f32 %v6010, %v6043
        %v6076 = vadd.f32 %v6011, %v6044
        %v6077 = vadd.f32 %v6012, %v6045
        %v6078 = vadd.f32 %v6013, %v6046
        %v6079 = vadd.f32 %v6014, %v6047
        %v6080 = vadd.f32 %v6015, %v6048
        %v6081 = vadd.f32 %v6016, %v6049
        %v6082 = vadd.f32 %v6017, %v6050
        %v6083 = vadd.f32 %v6018, %v6051
        %v6084 = vadd.f32 %v6019, %v6052
        %v6085 = vadd.f32 %v6020, %v6053
        %v6086 = vadd.f32 %v6021, %v6054
        %v6087 = vadd.f32 %v6022, %v6055
        %v6088 = vadd.f32 %v6023, %v6056
        %v6089 = vadd.f32 %v6024, %v6057
        %v6090 = vadd.f32 %v6025, %v6058
        %v6091 = vadd.f32 %v6026, %v6059
        %v6092 = vadd.f32 %v6027, %v6060
        %v6093 = vadd.f32 %v6028, %v6061
        %v6094 = vadd.f32 %v6029, %v6062
        %v6095 = vadd.f32 %v6030, %v6063
        %s6096 = sld [smem:[#allocation6 + $0x80]]
        %s6097 = sld [smem:[#allocation6 + $0x81]]
        %s6098 = sld [smem:[#allocation6 + $0x82]]
        %v6099 = vstv %s6096
        %v6100 = vmul.f32 %v6099, %v4948
        %v6101 = vmul.f32 %v6099, %v4951
        %v6102 = vmul.f32 %v6099, %v4956
        %v6103 = vmul.f32 %v6099, %v4959
        %v6104 = vmul.f32 %v6099, %v4964
        %v6105 = vmul.f32 %v6099, %v4967
        %v6106 = vmul.f32 %v6099, %v4972
        %v6107 = vmul.f32 %v6099, %v4975
        %v6108 = vmul.f32 %v6099, %v4980
        %v6109 = vmul.f32 %v6099, %v4983
        %v6110 = vmul.f32 %v6099, %v4988
        %v6111 = vmul.f32 %v6099, %v4991
        %v6112 = vmul.f32 %v6099, %v4996
        %v6113 = vmul.f32 %v6099, %v4999
        %v6114 = vmul.f32 %v6099, %v5004
        %v6115 = vmul.f32 %v6099, %v5007
        %v6116 = vmul.f32 %v6099, %v5012
        %v6117 = vmul.f32 %v6099, %v5015
        %v6118 = vmul.f32 %v6099, %v5020
        %v6119 = vmul.f32 %v6099, %v5023
        %v6120 = vmul.f32 %v6099, %v5028
        %v6121 = vmul.f32 %v6099, %v5031
        %v6122 = vmul.f32 %v6099, %v5036
        %v6123 = vmul.f32 %v6099, %v5039
        %v6124 = vmul.f32 %v6099, %v5044
        %v6125 = vmul.f32 %v6099, %v5047
        %v6126 = vmul.f32 %v6099, %v5052
        %v6127 = vmul.f32 %v6099, %v5055
        %v6128 = vmul.f32 %v6099, %v5060
        %v6129 = vmul.f32 %v6099, %v5063
        %v6130 = vmul.f32 %v6099, %v5068
        %v6131 = vmul.f32 %v6099, %v5071
        %v6132 = vstv %s6097
        %v6133 = vmul.f32 %v6132, %v5654
        %v6134 = vmul.f32 %v6132, %v5655
        %v6135 = vmul.f32 %v6132, %v5656
        %v6136 = vmul.f32 %v6132, %v5657
        %v6137 = vmul.f32 %v6132, %v5658
        %v6138 = vmul.f32 %v6132, %v5659
        %v6139 = vmul.f32 %v6132, %v5660
        %v6140 = vmul.f32 %v6132, %v5661
        %v6141 = vmul.f32 %v6132, %v5662
        %v6142 = vmul.f32 %v6132, %v5663
        %v6143 = vmul.f32 %v6132, %v5664
        %v6144 = vmul.f32 %v6132, %v5665
        %v6145 = vmul.f32 %v6132, %v5666
        %v6146 = vmul.f32 %v6132, %v5667
        %v6147 = vmul.f32 %v6132, %v5668
        %v6148 = vmul.f32 %v6132, %v5669
        %v6149 = vmul.f32 %v6132, %v5670
        %v6150 = vmul.f32 %v6132, %v5671
        %v6151 = vmul.f32 %v6132, %v5672
        %v6152 = vmul.f32 %v6132, %v5673
        %v6153 = vmul.f32 %v6132, %v5674
        %v6154 = vmul.f32 %v6132, %v5675
        %v6155 = vmul.f32 %v6132, %v5676
        %v6156 = vmul.f32 %v6132, %v5677
        %v6157 = vmul.f32 %v6132, %v5678
        %v6158 = vmul.f32 %v6132, %v5679
        %v6159 = vmul.f32 %v6132, %v5680
        %v6160 = vmul.f32 %v6132, %v5681
        %v6161 = vmul.f32 %v6132, %v5682
        %v6162 = vmul.f32 %v6132, %v5683
        %v6163 = vmul.f32 %v6132, %v5684
        %v6164 = vmul.f32 %v6132, %v5685
        %v6165 = vadd.f32 %v6100, %v6133
        %v6166 = vadd.f32 %v6101, %v6134
        %v6167 = vadd.f32 %v6102, %v6135
        %v6168 = vadd.f32 %v6103, %v6136
        %v6169 = vadd.f32 %v6104, %v6137
        %v6170 = vadd.f32 %v6105, %v6138
        %v6171 = vadd.f32 %v6106, %v6139
        %v6172 = vadd.f32 %v6107, %v6140
        %v6173 = vadd.f32 %v6108, %v6141
        %v6174 = vadd.f32 %v6109, %v6142
        %v6175 = vadd.f32 %v6110, %v6143
        %v6176 = vadd.f32 %v6111, %v6144
        %v6177 = vadd.f32 %v6112, %v6145
        %v6178 = vadd.f32 %v6113, %v6146
        %v6179 = vadd.f32 %v6114, %v6147
        %v6180 = vadd.f32 %v6115, %v6148
        %v6181 = vadd.f32 %v6116, %v6149
        %v6182 = vadd.f32 %v6117, %v6150
        %v6183 = vadd.f32 %v6118, %v6151
        %v6184 = vadd.f32 %v6119, %v6152
        %v6185 = vadd.f32 %v6120, %v6153
        %v6186 = vadd.f32 %v6121, %v6154
        %v6187 = vadd.f32 %v6122, %v6155
        %v6188 = vadd.f32 %v6123, %v6156
        %v6189 = vadd.f32 %v6124, %v6157
        %v6190 = vadd.f32 %v6125, %v6158
        %v6191 = vadd.f32 %v6126, %v6159
        %v6192 = vadd.f32 %v6127, %v6160
        %v6193 = vadd.f32 %v6128, %v6161
        %v6194 = vadd.f32 %v6129, %v6162
        %v6195 = vadd.f32 %v6130, %v6163
        %v6196 = vadd.f32 %v6131, %v6164
        %v6197 = vstv %s6098
        %v6198 = vmul.f32 %v6197, %v5898
        %v6199 = vmul.f32 %v6197, %v5899
        %v6200 = vmul.f32 %v6197, %v5900
        %v6201 = vmul.f32 %v6197, %v5901
        %v6202 = vmul.f32 %v6197, %v5902
        %v6203 = vmul.f32 %v6197, %v5903
        %v6204 = vmul.f32 %v6197, %v5904
        %v6205 = vmul.f32 %v6197, %v5905
        %v6206 = vmul.f32 %v6197, %v5906
        %v6207 = vmul.f32 %v6197, %v5907
        %v6208 = vmul.f32 %v6197, %v5908
        %v6209 = vmul.f32 %v6197, %v5909
        %v6210 = vmul.f32 %v6197, %v5910
        %v6211 = vmul.f32 %v6197, %v5911
        %v6212 = vmul.f32 %v6197, %v5912
        %v6213 = vmul.f32 %v6197, %v5913
        %v6214 = vmul.f32 %v6197, %v5914
        %v6215 = vmul.f32 %v6197, %v5915
        %v6216 = vmul.f32 %v6197, %v5916
        %v6217 = vmul.f32 %v6197, %v5917
        %v6218 = vmul.f32 %v6197, %v5918
        %v6219 = vmul.f32 %v6197, %v5919
        %v6220 = vmul.f32 %v6197, %v5920
        %v6221 = vmul.f32 %v6197, %v5921
        %v6222 = vmul.f32 %v6197, %v5922
        %v6223 = vmul.f32 %v6197, %v5923
        %v6224 = vmul.f32 %v6197, %v5924
        %v6225 = vmul.f32 %v6197, %v5925
        %v6226 = vmul.f32 %v6197, %v5926
        %v6227 = vmul.f32 %v6197, %v5927
        %v6228 = vmul.f32 %v6197, %v5928
        %v6229 = vmul.f32 %v6197, %v5929
        %v6230 = vadd.f32 %v6165, %v6198
        %v6231 = vadd.f32 %v6166, %v6199
        %v6232 = vadd.f32 %v6167, %v6200
        %v6233 = vadd.f32 %v6168, %v6201
        %v6234 = vadd.f32 %v6169, %v6202
        %v6235 = vadd.f32 %v6170, %v6203
        %v6236 = vadd.f32 %v6171, %v6204
        %v6237 = vadd.f32 %v6172, %v6205
        %v6238 = vadd.f32 %v6173, %v6206
        %v6239 = vadd.f32 %v6174, %v6207
        %v6240 = vadd.f32 %v6175, %v6208
        %v6241 = vadd.f32 %v6176, %v6209
        %v6242 = vadd.f32 %v6177, %v6210
        %v6243 = vadd.f32 %v6178, %v6211
        %v6244 = vadd.f32 %v6179, %v6212
        %v6245 = vadd.f32 %v6180, %v6213
        %v6246 = vadd.f32 %v6181, %v6214
        %v6247 = vadd.f32 %v6182, %v6215
        %v6248 = vadd.f32 %v6183, %v6216
        %v6249 = vadd.f32 %v6184, %v6217
        %v6250 = vadd.f32 %v6185, %v6218
        %v6251 = vadd.f32 %v6186, %v6219
        %v6252 = vadd.f32 %v6187, %v6220
        %v6253 = vadd.f32 %v6188, %v6221
        %v6254 = vadd.f32 %v6189, %v6222
        %v6255 = vadd.f32 %v6190, %v6223
        %v6256 = vadd.f32 %v6191, %v6224
        %v6257 = vadd.f32 %v6192, %v6225
        %v6258 = vadd.f32 %v6193, %v6226
        %v6259 = vadd.f32 %v6194, %v6227
        %v6260 = vadd.f32 %v6195, %v6228
        %v6261 = vadd.f32 %v6196, %v6229
        %6262 = vst.msk [vmem:[%s5184 + $0x1] sm:$0xff] %vm5074, %v6064
        %6263 = vst.msk [vmem:[%s5184 + $0x9] sm:$0xff] %vm5074, %v6065
        %6264 = vst.msk [vmem:[%s5184 + $0x19] sm:$0xff] %vm5074, %v6066
        %6265 = vst.msk [vmem:[%s5184 + $0x21] sm:$0xff] %vm5074, %v6067
        %6266 = vst.msk [vmem:[%s5184 + $0x31] sm:$0xff] %vm5074, %v6068
        %6267 = vst.msk [vmem:[%s5184 + $0x39] sm:$0xff] %vm5074, %v6069
        %6268 = vst.msk [vmem:[%s5184 + $0x49] sm:$0xff] %vm5074, %v6070
        %6269 = vst.msk [vmem:[%s5184 + $0x51] sm:$0xff] %vm5074, %v6071
        %6270 = vst.msk [vmem:[%s5184 + $0x61] sm:$0xff] %vm5074, %v6072
        %6271 = vst.msk [vmem:[%s5184 + $0x69] sm:$0xff] %vm5074, %v6073
        %6272 = vst.msk [vmem:[%s5184 + $0x79] sm:$0xff] %vm5074, %v6074
        %6273 = vst.msk [vmem:[%s5184 + $0x81] sm:$0xff] %vm5074, %v6075
        %6274 = vst.msk [vmem:[%s5184 + $0x91] sm:$0xff] %vm5074, %v6076
        %6275 = vst.msk [vmem:[%s5184 + $0x99] sm:$0xff] %vm5074, %v6077
        %6276 = vst.msk [vmem:[%s5184 + $0xa9] sm:$0xff] %vm5074, %v6078
        %6277 = vst.msk [vmem:[%s5184 + $0xb1] sm:$0xff] %vm5074, %v6079
        %6278 = vst.msk [vmem:[%s5184 + $0xc1] sm:$0xff] %vm5074, %v6080
        %6279 = vst.msk [vmem:[%s5184 + $0xc9] sm:$0xff] %vm5074, %v6081
        %6280 = vst.msk [vmem:[%s5184 + $0xd9] sm:$0xff] %vm5074, %v6082
        %6281 = vst.msk [vmem:[%s5184 + $0xe1] sm:$0xff] %vm5074, %v6083
        %6282 = vst.msk [vmem:[%s5184 + $0xf1] sm:$0xff] %vm5074, %v6084
        %6283 = vst.msk [vmem:[%s5184 + $0xf9] sm:$0xff] %vm5074, %v6085
        %6284 = vst.msk [vmem:[%s5184 + $0x109] sm:$0xff] %vm5074, %v6086
        %6285 = vst.msk [vmem:[%s5184 + $0x111] sm:$0xff] %vm5074, %v6087
        %6286 = vst.msk [vmem:[%s5184 + $0x121] sm:$0xff] %vm5074, %v6088
        %6287 = vst.msk [vmem:[%s5184 + $0x129] sm:$0xff] %vm5074, %v6089
        %6288 = vst.msk [vmem:[%s5184 + $0x139] sm:$0xff] %vm5074, %v6090
        %6289 = vst.msk [vmem:[%s5184 + $0x141] sm:$0xff] %vm5074, %v6091
        %6290 = vst.msk [vmem:[%s5184 + $0x151] sm:$0xff] %vm5074, %v6092
        %6291 = vst.msk [vmem:[%s5184 + $0x159] sm:$0xff] %vm5074, %v6093
        %6292 = vst.msk [vmem:[%s5184 + $0x169] sm:$0xff] %vm5074, %v6094
        %6293 = vst.msk [vmem:[%s5184 + $0x171] sm:$0xff] %vm5074, %v6095
        %6294 = vst.msk [vmem:[%s5217 + $0x1] sm:$0xff] %vm5074, %v6064
        %6295 = vst.msk [vmem:[%s5217 + $0x9] sm:$0xff] %vm5074, %v6065
        %6296 = vst.msk [vmem:[%s5217 + $0x19] sm:$0xff] %vm5074, %v6066
        %6297 = vst.msk [vmem:[%s5217 + $0x21] sm:$0xff] %vm5074, %v6067
        %6298 = vst.msk [vmem:[%s5217 + $0x31] sm:$0xff] %vm5074, %v6068
        %6299 = vst.msk [vmem:[%s5217 + $0x39] sm:$0xff] %vm5074, %v6069
        %6300 = vst.msk [vmem:[%s5217 + $0x49] sm:$0xff] %vm5074, %v6070
        %6301 = vst.msk [vmem:[%s5217 + $0x51] sm:$0xff] %vm5074, %v6071
        %6302 = vst.msk [vmem:[%s5217 + $0x61] sm:$0xff] %vm5074, %v6072
        %6303 = vst.msk [vmem:[%s5217 + $0x69] sm:$0xff] %vm5074, %v6073
        %6304 = vst.msk [vmem:[%s5217 + $0x79] sm:$0xff] %vm5074, %v6074
        %6305 = vst.msk [vmem:[%s5217 + $0x81] sm:$0xff] %vm5074, %v6075
        %6306 = vst.msk [vmem:[%s5217 + $0x91] sm:$0xff] %vm5074, %v6076
        %6307 = vst.msk [vmem:[%s5217 + $0x99] sm:$0xff] %vm5074, %v6077
        %6308 = vst.msk [vmem:[%s5217 + $0xa9] sm:$0xff] %vm5074, %v6078
        %6309 = vst.msk [vmem:[%s5217 + $0xb1] sm:$0xff] %vm5074, %v6079
        %6310 = vst.msk [vmem:[%s5217 + $0xc1] sm:$0xff] %vm5074, %v6080
        %6311 = vst.msk [vmem:[%s5217 + $0xc9] sm:$0xff] %vm5074, %v6081
        %6312 = vst.msk [vmem:[%s5217 + $0xd9] sm:$0xff] %vm5074, %v6082
        %6313 = vst.msk [vmem:[%s5217 + $0xe1] sm:$0xff] %vm5074, %v6083
        %6314 = vst.msk [vmem:[%s5217 + $0xf1] sm:$0xff] %vm5074, %v6084
        %6315 = vst.msk [vmem:[%s5217 + $0xf9] sm:$0xff] %vm5074, %v6085
        %6316 = vst.msk [vmem:[%s5217 + $0x109] sm:$0xff] %vm5074, %v6086
        %6317 = vst.msk [vmem:[%s5217 + $0x111] sm:$0xff] %vm5074, %v6087
        %6318 = vst.msk [vmem:[%s5217 + $0x121] sm:$0xff] %vm5074, %v6088
        %6319 = vst.msk [vmem:[%s5217 + $0x129] sm:$0xff] %vm5074, %v6089
        %6320 = vst.msk [vmem:[%s5217 + $0x139] sm:$0xff] %vm5074, %v6090
        %6321 = vst.msk [vmem:[%s5217 + $0x141] sm:$0xff] %vm5074, %v6091
        %6322 = vst.msk [vmem:[%s5217 + $0x151] sm:$0xff] %vm5074, %v6092
        %6323 = vst.msk [vmem:[%s5217 + $0x159] sm:$0xff] %vm5074, %v6093
        %6324 = vst.msk [vmem:[%s5217 + $0x169] sm:$0xff] %vm5074, %v6094
        %6325 = vst.msk [vmem:[%s5217 + $0x171] sm:$0xff] %vm5074, %v6095
        %v6326 = vld [vmem:[#allocation4] sm:$0xff]
        %v6327 = vld [vmem:[#allocation4 + $0x8] sm:$0xff]
        %v6328 = vld [vmem:[#allocation4 + $0x18] sm:$0xff]
        %v6329 = vld [vmem:[#allocation4 + $0x20] sm:$0xff]
        %v6330 = vld [vmem:[#allocation4 + $0x30] sm:$0xff]
        %v6331 = vld [vmem:[#allocation4 + $0x38] sm:$0xff]
        %v6332 = vld [vmem:[#allocation4 + $0x48] sm:$0xff]
        %v6333 = vld [vmem:[#allocation4 + $0x50] sm:$0xff]
        %v6334 = vld [vmem:[#allocation4 + $0x60] sm:$0xff]
        %v6335 = vld [vmem:[#allocation4 + $0x68] sm:$0xff]
        %v6336 = vld [vmem:[#allocation4 + $0x78] sm:$0xff]
        %v6337 = vld [vmem:[#allocation4 + $0x80] sm:$0xff]
        %v6338 = vld [vmem:[#allocation4 + $0x90] sm:$0xff]
        %v6339 = vld [vmem:[#allocation4 + $0x98] sm:$0xff]
        %v6340 = vld [vmem:[#allocation4 + $0xa8] sm:$0xff]
        %v6341 = vld [vmem:[#allocation4 + $0xb0] sm:$0xff]
        %v6342 = vld [vmem:[#allocation4 + $0xc0] sm:$0xff]
        %v6343 = vld [vmem:[#allocation4 + $0xc8] sm:$0xff]
        %v6344 = vld [vmem:[#allocation4 + $0xd8] sm:$0xff]
        %v6345 = vld [vmem:[#allocation4 + $0xe0] sm:$0xff]
        %v6346 = vld [vmem:[#allocation4 + $0xf0] sm:$0xff]
        %v6347 = vld [vmem:[#allocation4 + $0xf8] sm:$0xff]
        %v6348 = vld [vmem:[#allocation4 + $0x108] sm:$0xff]
        %v6349 = vld [vmem:[#allocation4 + $0x110] sm:$0xff]
        %v6350 = vld [vmem:[#allocation4 + $0x120] sm:$0xff]
        %v6351 = vld [vmem:[#allocation4 + $0x128] sm:$0xff]
        %v6352 = vld [vmem:[#allocation4 + $0x138] sm:$0xff]
        %v6353 = vld [vmem:[#allocation4 + $0x140] sm:$0xff]
        %v6354 = vld [vmem:[#allocation4 + $0x150] sm:$0xff]
        %v6355 = vld [vmem:[#allocation4 + $0x158] sm:$0xff]
        %v6356 = vld [vmem:[#allocation4 + $0x168] sm:$0xff]
        %v6357 = vld [vmem:[#allocation4 + $0x170] sm:$0xff]
        %v6358 = vld [vmem:[#allocation4 + $0x180] sm:$0xff]
        %v6359 = vld [vmem:[#allocation4 + $0x188] sm:$0xff]
        %v6360 = vld [vmem:[#allocation4 + $0x198] sm:$0xff]
        %v6361 = vld [vmem:[#allocation4 + $0x1a0] sm:$0xff]
        %v6362 = vld [vmem:[#allocation4 + $0x1] sm:$0xff]
        %v6363 = vld [vmem:[#allocation4 + $0x9] sm:$0xff]
        %v6364 = vld [vmem:[#allocation4 + $0x19] sm:$0xff]
        %v6365 = vld [vmem:[#allocation4 + $0x21] sm:$0xff]
        %v6366 = vld [vmem:[#allocation4 + $0x31] sm:$0xff]
        %v6367 = vld [vmem:[#allocation4 + $0x39] sm:$0xff]
        %v6368 = vld [vmem:[#allocation4 + $0x49] sm:$0xff]
        %v6369 = vld [vmem:[#allocation4 + $0x51] sm:$0xff]
        %v6370 = vld [vmem:[#allocation4 + $0x61] sm:$0xff]
        %v6371 = vld [vmem:[#allocation4 + $0x69] sm:$0xff]
        %v6372 = vld [vmem:[#allocation4 + $0x79] sm:$0xff]
        %v6373 = vld [vmem:[#allocation4 + $0x81] sm:$0xff]
        %v6374 = vld [vmem:[#allocation4 + $0x91] sm:$0xff]
        %v6375 = vld [vmem:[#allocation4 + $0x99] sm:$0xff]
        %v6376 = vld [vmem:[#allocation4 + $0xa9] sm:$0xff]
        %v6377 = vld [vmem:[#allocation4 + $0xb1] sm:$0xff]
        %v6378 = vld [vmem:[#allocation4 + $0xc1] sm:$0xff]
        %v6379 = vld [vmem:[#allocation4 + $0xc9] sm:$0xff]
        %v6380 = vld [vmem:[#allocation4 + $0xd9] sm:$0xff]
        %v6381 = vld [vmem:[#allocation4 + $0xe1] sm:$0xff]
        %v6382 = vld [vmem:[#allocation4 + $0xf1] sm:$0xff]
        %v6383 = vld [vmem:[#allocation4 + $0xf9] sm:$0xff]
        %v6384 = vld [vmem:[#allocation4 + $0x109] sm:$0xff]
        %v6385 = vld [vmem:[#allocation4 + $0x111] sm:$0xff]
        %v6386 = vld [vmem:[#allocation4 + $0x121] sm:$0xff]
        %v6387 = vld [vmem:[#allocation4 + $0x129] sm:$0xff]
        %v6388 = vld [vmem:[#allocation4 + $0x139] sm:$0xff]
        %v6389 = vld [vmem:[#allocation4 + $0x141] sm:$0xff]
        %v6390 = vld [vmem:[#allocation4 + $0x151] sm:$0xff]
        %v6391 = vld [vmem:[#allocation4 + $0x159] sm:$0xff]
        %v6392 = vld [vmem:[#allocation4 + $0x169] sm:$0xff]
        %v6393 = vld [vmem:[#allocation4 + $0x171] sm:$0xff]
        %v6394 = vld [vmem:[#allocation4 + $0x181] sm:$0xff]
        %v6395 = vld [vmem:[#allocation4 + $0x189] sm:$0xff]
        %v6396 = vld [vmem:[#allocation4 + $0x199] sm:$0xff]
        %v6397 = vld [vmem:[#allocation4 + $0x1a1] sm:$0xff]
        %v6398 = vadd.f32 %v6326, %v6362
        %v6399 = vadd.f32 %v6327, %v6363
        %v6400 = vadd.f32 %v6328, %v6364
        %v6401 = vadd.f32 %v6329, %v6365
        %v6402 = vadd.f32 %v6330, %v6366
        %v6403 = vadd.f32 %v6331, %v6367
        %v6404 = vadd.f32 %v6332, %v6368
        %v6405 = vadd.f32 %v6333, %v6369
        %v6406 = vadd.f32 %v6334, %v6370
        %v6407 = vadd.f32 %v6335, %v6371
        %v6408 = vadd.f32 %v6336, %v6372
        %v6409 = vadd.f32 %v6337, %v6373
        %v6410 = vadd.f32 %v6338, %v6374
        %v6411 = vadd.f32 %v6339, %v6375
        %v6412 = vadd.f32 %v6340, %v6376
        %v6413 = vadd.f32 %v6341, %v6377
        %v6414 = vadd.f32 %v6342, %v6378
        %v6415 = vadd.f32 %v6343, %v6379
        %v6416 = vadd.f32 %v6344, %v6380
        %v6417 = vadd.f32 %v6345, %v6381
        %v6418 = vadd.f32 %v6346, %v6382
        %v6419 = vadd.f32 %v6347, %v6383
        %v6420 = vadd.f32 %v6348, %v6384
        %v6421 = vadd.f32 %v6349, %v6385
        %v6422 = vadd.f32 %v6350, %v6386
        %v6423 = vadd.f32 %v6351, %v6387
        %v6424 = vadd.f32 %v6352, %v6388
        %v6425 = vadd.f32 %v6353, %v6389
        %v6426 = vadd.f32 %v6354, %v6390
        %v6427 = vadd.f32 %v6355, %v6391
        %v6428 = vadd.f32 %v6356, %v6392
        %v6429 = vadd.f32 %v6357, %v6393
        %v6430 = vadd.f32 %v6358, %v6394
        %v6431 = vadd.f32 %v6359, %v6395
        %v6432 = vadd.f32 %v6360, %v6396
        %v6433 = vadd.f32 %v6361, %v6397
        %v6434 = vld [vmem:[#allocation4 + $0x2] sm:$0xff]
        %v6435 = vld [vmem:[#allocation4 + $0xa] sm:$0xff]
        %v6436 = vld [vmem:[#allocation4 + $0x1a] sm:$0xff]
        %v6437 = vld [vmem:[#allocation4 + $0x22] sm:$0xff]
        %v6438 = vld [vmem:[#allocation4 + $0x32] sm:$0xff]
        %v6439 = vld [vmem:[#allocation4 + $0x3a] sm:$0xff]
        %v6440 = vld [vmem:[#allocation4 + $0x4a] sm:$0xff]
        %v6441 = vld [vmem:[#allocation4 + $0x52] sm:$0xff]
        %v6442 = vld [vmem:[#allocation4 + $0x62] sm:$0xff]
        %v6443 = vld [vmem:[#allocation4 + $0x6a] sm:$0xff]
        %v6444 = vld [vmem:[#allocation4 + $0x7a] sm:$0xff]
        %v6445 = vld [vmem:[#allocation4 + $0x82] sm:$0xff]
        %v6446 = vld [vmem:[#allocation4 + $0x92] sm:$0xff]
        %v6447 = vld [vmem:[#allocation4 + $0x9a] sm:$0xff]
        %v6448 = vld [vmem:[#allocation4 + $0xaa] sm:$0xff]
        %v6449 = vld [vmem:[#allocation4 + $0xb2] sm:$0xff]
        %v6450 = vld [vmem:[#allocation4 + $0xc2] sm:$0xff]
        %v6451 = vld [vmem:[#allocation4 + $0xca] sm:$0xff]
        %v6452 = vld [vmem:[#allocation4 + $0xda] sm:$0xff]
        %v6453 = vld [vmem:[#allocation4 + $0xe2] sm:$0xff]
        %v6454 = vld [vmem:[#allocation4 + $0xf2] sm:$0xff]
        %v6455 = vld [vmem:[#allocation4 + $0xfa] sm:$0xff]
        %v6456 = vld [vmem:[#allocation4 + $0x10a] sm:$0xff]
        %v6457 = vld [vmem:[#allocation4 + $0x112] sm:$0xff]
        %v6458 = vld [vmem:[#allocation4 + $0x122] sm:$0xff]
        %v6459 = vld [vmem:[#allocation4 + $0x12a] sm:$0xff]
        %v6460 = vld [vmem:[#allocation4 + $0x13a] sm:$0xff]
        %v6461 = vld [vmem:[#allocation4 + $0x142] sm:$0xff]
        %v6462 = vld [vmem:[#allocation4 + $0x152] sm:$0xff]
        %v6463 = vld [vmem:[#allocation4 + $0x15a] sm:$0xff]
        %v6464 = vld [vmem:[#allocation4 + $0x16a] sm:$0xff]
        %v6465 = vld [vmem:[#allocation4 + $0x172] sm:$0xff]
        %v6466 = vld [vmem:[#allocation4 + $0x182] sm:$0xff]
        %v6467 = vld [vmem:[#allocation4 + $0x18a] sm:$0xff]
        %v6468 = vld [vmem:[#allocation4 + $0x19a] sm:$0xff]
        %v6469 = vld [vmem:[#allocation4 + $0x1a2] sm:$0xff]
        %v6470 = vadd.f32 %v6398, %v6434
        %v6471 = vadd.f32 %v6399, %v6435
        %v6472 = vadd.f32 %v6400, %v6436
        %v6473 = vadd.f32 %v6401, %v6437
        %v6474 = vadd.f32 %v6402, %v6438
        %v6475 = vadd.f32 %v6403, %v6439
        %v6476 = vadd.f32 %v6404, %v6440
        %v6477 = vadd.f32 %v6405, %v6441
        %v6478 = vadd.f32 %v6406, %v6442
        %v6479 = vadd.f32 %v6407, %v6443
        %v6480 = vadd.f32 %v6408, %v6444
        %v6481 = vadd.f32 %v6409, %v6445
        %v6482 = vadd.f32 %v6410, %v6446
        %v6483 = vadd.f32 %v6411, %v6447
        %v6484 = vadd.f32 %v6412, %v6448
        %v6485 = vadd.f32 %v6413, %v6449
        %v6486 = vadd.f32 %v6414, %v6450
        %v6487 = vadd.f32 %v6415, %v6451
        %v6488 = vadd.f32 %v6416, %v6452
        %v6489 = vadd.f32 %v6417, %v6453
        %v6490 = vadd.f32 %v6418, %v6454
        %v6491 = vadd.f32 %v6419, %v6455
        %v6492 = vadd.f32 %v6420, %v6456
        %v6493 = vadd.f32 %v6421, %v6457
        %v6494 = vadd.f32 %v6422, %v6458
        %v6495 = vadd.f32 %v6423, %v6459
        %v6496 = vadd.f32 %v6424, %v6460
        %v6497 = vadd.f32 %v6425, %v6461
        %v6498 = vadd.f32 %v6426, %v6462
        %v6499 = vadd.f32 %v6427, %v6463
        %v6500 = vadd.f32 %v6428, %v6464
        %v6501 = vadd.f32 %v6429, %v6465
        %v6502 = vadd.f32 %v6430, %v6466
        %v6503 = vadd.f32 %v6431, %v6467
        %v6504 = vadd.f32 %v6432, %v6468
        %v6505 = vadd.f32 %v6433, %v6469
        %v6506 = vadd.f32 %v6470, %v6472
        %v6507 = vadd.f32 %v6471, %v6473
        %v6508 = vadd.f32 %v6472, %v6474
        %v6509 = vadd.f32 %v6473, %v6475
        %v6510 = vadd.f32 %v6474, %v6476
        %v6511 = vadd.f32 %v6475, %v6477
        %v6512 = vadd.f32 %v6476, %v6478
        %v6513 = vadd.f32 %v6477, %v6479
        %v6514 = vadd.f32 %v6478, %v6480
        %v6515 = vadd.f32 %v6479, %v6481
        %v6516 = vadd.f32 %v6480, %v6482
        %v6517 = vadd.f32 %v6481, %v6483
        %v6518 = vadd.f32 %v6482, %v6484
        %v6519 = vadd.f32 %v6483, %v6485
        %v6520 = vadd.f32 %v6484, %v6486
        %v6521 = vadd.f32 %v6485, %v6487
        %v6522 = vadd.f32 %v6486, %v6488
        %v6523 = vadd.f32 %v6487, %v6489
        %v6524 = vadd.f32 %v6488, %v6490
        %v6525 = vadd.f32 %v6489, %v6491
        %v6526 = vadd.f32 %v6490, %v6492
        %v6527 = vadd.f32 %v6491, %v6493
        %v6528 = vadd.f32 %v6492, %v6494
        %v6529 = vadd.f32 %v6493, %v6495
        %v6530 = vadd.f32 %v6494, %v6496
        %v6531 = vadd.f32 %v6495, %v6497
        %v6532 = vadd.f32 %v6496, %v6498
        %v6533 = vadd.f32 %v6497, %v6499
        %v6534 = vadd.f32 %v6498, %v6500
        %v6535 = vadd.f32 %v6499, %v6501
        %v6536 = vadd.f32 %v6500, %v6502
        %v6537 = vadd.f32 %v6501, %v6503
        %v6538 = vadd.f32 %v6506, %v6474
        %v6539 = vadd.f32 %v6507, %v6475
        %v6540 = vadd.f32 %v6508, %v6476
        %v6541 = vadd.f32 %v6509, %v6477
        %v6542 = vadd.f32 %v6510, %v6478
        %v6543 = vadd.f32 %v6511, %v6479
        %v6544 = vadd.f32 %v6512, %v6480
        %v6545 = vadd.f32 %v6513, %v6481
        %v6546 = vadd.f32 %v6514, %v6482
        %v6547 = vadd.f32 %v6515, %v6483
        %v6548 = vadd.f32 %v6516, %v6484
        %v6549 = vadd.f32 %v6517, %v6485
        %v6550 = vadd.f32 %v6518, %v6486
        %v6551 = vadd.f32 %v6519, %v6487
        %v6552 = vadd.f32 %v6520, %v6488
        %v6553 = vadd.f32 %v6521, %v6489
        %v6554 = vadd.f32 %v6522, %v6490
        %v6555 = vadd.f32 %v6523, %v6491
        %v6556 = vadd.f32 %v6524, %v6492
        %v6557 = vadd.f32 %v6525, %v6493
        %v6558 = vadd.f32 %v6526, %v6494
        %v6559 = vadd.f32 %v6527, %v6495
        %v6560 = vadd.f32 %v6528, %v6496
        %v6561 = vadd.f32 %v6529, %v6497
        %v6562 = vadd.f32 %v6530, %v6498
        %v6563 = vadd.f32 %v6531, %v6499
        %v6564 = vadd.f32 %v6532, %v6500
        %v6565 = vadd.f32 %v6533, %v6501
        %v6566 = vadd.f32 %v6534, %v6502
        %v6567 = vadd.f32 %v6535, %v6503
        %v6568 = vadd.f32 %v6536, %v6504
        %v6569 = vadd.f32 %v6537, %v6505
        %v6570 = vmul.f32 %v6538, %v5497
        %v6571 = vmul.f32 %v6539, %v5502
        %v6572 = vmul.f32 %v6540, %v5507
        %v6573 = vmul.f32 %v6541, %v5512
        %v6574 = vmul.f32 %v6542, %v5517
        %v6575 = vmul.f32 %v6543, %v5522
        %v6576 = vmul.f32 %v6544, %v5527
        %v6577 = vmul.f32 %v6545, %v5532
        %v6578 = vmul.f32 %v6546, %v5537
        %v6579 = vmul.f32 %v6547, %v5542
        %v6580 = vmul.f32 %v6548, %v5547
        %v6581 = vmul.f32 %v6549, %v5552
        %v6582 = vmul.f32 %v6550, %v5557
        %v6583 = vmul.f32 %v6551, %v5562
        %v6584 = vmul.f32 %v6552, %v5567
        %v6585 = vmul.f32 %v6553, %v5572
        %v6586 = vmul.f32 %v6554, %v5577
        %v6587 = vmul.f32 %v6555, %v5582
        %v6588 = vmul.f32 %v6556, %v5587
        %v6589 = vmul.f32 %v6557, %v5592
        %v6590 = vmul.f32 %v6558, %v5597
        %v6591 = vmul.f32 %v6559, %v5602
        %v6592 = vmul.f32 %v6560, %v5607
        %v6593 = vmul.f32 %v6561, %v5612
        %v6594 = vmul.f32 %v6562, %v5617
        %v6595 = vmul.f32 %v6563, %v5622
        %v6596 = vmul.f32 %v6564, %v5627
        %v6597 = vmul.f32 %v6565, %v5632
        %v6598 = vmul.f32 %v6566, %v5637
        %v6599 = vmul.f32 %v6567, %v5642
        %v6600 = vmul.f32 %v6568, %v5647
        %v6601 = vmul.f32 %v6569, %v5652
        %v6602 = vld [vmem:[#allocation5] sm:$0xff]
        %v6603 = vld [vmem:[#allocation5 + $0x8] sm:$0xff]
        %v6604 = vld [vmem:[#allocation5 + $0x18] sm:$0xff]
        %v6605 = vld [vmem:[#allocation5 + $0x20] sm:$0xff]
        %v6606 = vld [vmem:[#allocation5 + $0x30] sm:$0xff]
        %v6607 = vld [vmem:[#allocation5 + $0x38] sm:$0xff]
        %v6608 = vld [vmem:[#allocation5 + $0x48] sm:$0xff]
        %v6609 = vld [vmem:[#allocation5 + $0x50] sm:$0xff]
        %v6610 = vld [vmem:[#allocation5 + $0x60] sm:$0xff]
        %v6611 = vld [vmem:[#allocation5 + $0x68] sm:$0xff]
        %v6612 = vld [vmem:[#allocation5 + $0x78] sm:$0xff]
        %v6613 = vld [vmem:[#allocation5 + $0x80] sm:$0xff]
        %v6614 = vld [vmem:[#allocation5 + $0x90] sm:$0xff]
        %v6615 = vld [vmem:[#allocation5 + $0x98] sm:$0xff]
        %v6616 = vld [vmem:[#allocation5 + $0xa8] sm:$0xff]
        %v6617 = vld [vmem:[#allocation5 + $0xb0] sm:$0xff]
        %v6618 = vld [vmem:[#allocation5 + $0xc0] sm:$0xff]
        %v6619 = vld [vmem:[#allocation5 + $0xc8] sm:$0xff]
        %v6620 = vld [vmem:[#allocation5 + $0xd8] sm:$0xff]
        %v6621 = vld [vmem:[#allocation5 + $0xe0] sm:$0xff]
        %v6622 = vld [vmem:[#allocation5 + $0xf0] sm:$0xff]
        %v6623 = vld [vmem:[#allocation5 + $0xf8] sm:$0xff]
        %v6624 = vld [vmem:[#allocation5 + $0x108] sm:$0xff]
        %v6625 = vld [vmem:[#allocation5 + $0x110] sm:$0xff]
        %v6626 = vld [vmem:[#allocation5 + $0x120] sm:$0xff]
        %v6627 = vld [vmem:[#allocation5 + $0x128] sm:$0xff]
        %v6628 = vld [vmem:[#allocation5 + $0x138] sm:$0xff]
        %v6629 = vld [vmem:[#allocation5 + $0x140] sm:$0xff]
        %v6630 = vld [vmem:[#allocation5 + $0x150] sm:$0xff]
        %v6631 = vld [vmem:[#allocation5 + $0x158] sm:$0xff]
        %v6632 = vld [vmem:[#allocation5 + $0x168] sm:$0xff]
        %v6633 = vld [vmem:[#allocation5 + $0x170] sm:$0xff]
        %v6634 = vld [vmem:[#allocation5 + $0x180] sm:$0xff]
        %v6635 = vld [vmem:[#allocation5 + $0x188] sm:$0xff]
        %v6636 = vld [vmem:[#allocation5 + $0x198] sm:$0xff]
        %v6637 = vld [vmem:[#allocation5 + $0x1a0] sm:$0xff]
        %v6638 = vld [vmem:[#allocation5 + $0x1] sm:$0xff]
        %v6639 = vld [vmem:[#allocation5 + $0x9] sm:$0xff]
        %v6640 = vld [vmem:[#allocation5 + $0x19] sm:$0xff]
        %v6641 = vld [vmem:[#allocation5 + $0x21] sm:$0xff]
        %v6642 = vld [vmem:[#allocation5 + $0x31] sm:$0xff]
        %v6643 = vld [vmem:[#allocation5 + $0x39] sm:$0xff]
        %v6644 = vld [vmem:[#allocation5 + $0x49] sm:$0xff]
        %v6645 = vld [vmem:[#allocation5 + $0x51] sm:$0xff]
        %v6646 = vld [vmem:[#allocation5 + $0x61] sm:$0xff]
        %v6647 = vld [vmem:[#allocation5 + $0x69] sm:$0xff]
        %v6648 = vld [vmem:[#allocation5 + $0x79] sm:$0xff]
        %v6649 = vld [vmem:[#allocation5 + $0x81] sm:$0xff]
        %v6650 = vld [vmem:[#allocation5 + $0x91] sm:$0xff]
        %v6651 = vld [vmem:[#allocation5 + $0x99] sm:$0xff]
        %v6652 = vld [vmem:[#allocation5 + $0xa9] sm:$0xff]
        %v6653 = vld [vmem:[#allocation5 + $0xb1] sm:$0xff]
        %v6654 = vld [vmem:[#allocation5 + $0xc1] sm:$0xff]
        %v6655 = vld [vmem:[#allocation5 + $0xc9] sm:$0xff]
        %v6656 = vld [vmem:[#allocation5 + $0xd9] sm:$0xff]
        %v6657 = vld [vmem:[#allocation5 + $0xe1] sm:$0xff]
        %v6658 = vld [vmem:[#allocation5 + $0xf1] sm:$0xff]
        %v6659 = vld [vmem:[#allocation5 + $0xf9] sm:$0xff]
        %v6660 = vld [vmem:[#allocation5 + $0x109] sm:$0xff]
        %v6661 = vld [vmem:[#allocation5 + $0x111] sm:$0xff]
        %v6662 = vld [vmem:[#allocation5 + $0x121] sm:$0xff]
        %v6663 = vld [vmem:[#allocation5 + $0x129] sm:$0xff]
        %v6664 = vld [vmem:[#allocation5 + $0x139] sm:$0xff]
        %v6665 = vld [vmem:[#allocation5 + $0x141] sm:$0xff]
        %v6666 = vld [vmem:[#allocation5 + $0x151] sm:$0xff]
        %v6667 = vld [vmem:[#allocation5 + $0x159] sm:$0xff]
        %v6668 = vld [vmem:[#allocation5 + $0x169] sm:$0xff]
        %v6669 = vld [vmem:[#allocation5 + $0x171] sm:$0xff]
        %v6670 = vld [vmem:[#allocation5 + $0x181] sm:$0xff]
        %v6671 = vld [vmem:[#allocation5 + $0x189] sm:$0xff]
        %v6672 = vld [vmem:[#allocation5 + $0x199] sm:$0xff]
        %v6673 = vld [vmem:[#allocation5 + $0x1a1] sm:$0xff]
        %v6674 = vmax.f32 %v6602, %v6638
        %v6675 = vmax.f32 %v6603, %v6639
        %v6676 = vmax.f32 %v6604, %v6640
        %v6677 = vmax.f32 %v6605, %v6641
        %v6678 = vmax.f32 %v6606, %v6642
        %v6679 = vmax.f32 %v6607, %v6643
        %v6680 = vmax.f32 %v6608, %v6644
        %v6681 = vmax.f32 %v6609, %v6645
        %v6682 = vmax.f32 %v6610, %v6646
        %v6683 = vmax.f32 %v6611, %v6647
        %v6684 = vmax.f32 %v6612, %v6648
        %v6685 = vmax.f32 %v6613, %v6649
        %v6686 = vmax.f32 %v6614, %v6650
        %v6687 = vmax.f32 %v6615, %v6651
        %v6688 = vmax.f32 %v6616, %v6652
        %v6689 = vmax.f32 %v6617, %v6653
        %v6690 = vmax.f32 %v6618, %v6654
        %v6691 = vmax.f32 %v6619, %v6655
        %v6692 = vmax.f32 %v6620, %v6656
        %v6693 = vmax.f32 %v6621, %v6657
        %v6694 = vmax.f32 %v6622, %v6658
        %v6695 = vmax.f32 %v6623, %v6659
        %v6696 = vmax.f32 %v6624, %v6660
        %v6697 = vmax.f32 %v6625, %v6661
        %v6698 = vmax.f32 %v6626, %v6662
        %v6699 = vmax.f32 %v6627, %v6663
        %v6700 = vmax.f32 %v6628, %v6664
        %v6701 = vmax.f32 %v6629, %v6665
        %v6702 = vmax.f32 %v6630, %v6666
        %v6703 = vmax.f32 %v6631, %v6667
        %v6704 = vmax.f32 %v6632, %v6668
        %v6705 = vmax.f32 %v6633, %v6669
        %v6706 = vmax.f32 %v6634, %v6670
        %v6707 = vmax.f32 %v6635, %v6671
        %v6708 = vmax.f32 %v6636, %v6672
        %v6709 = vmax.f32 %v6637, %v6673
        %v6710 = vld [vmem:[#allocation5 + $0x2] sm:$0xff]
        %v6711 = vld [vmem:[#allocation5 + $0xa] sm:$0xff]
        %v6712 = vld [vmem:[#allocation5 + $0x1a] sm:$0xff]
        %v6713 = vld [vmem:[#allocation5 + $0x22] sm:$0xff]
        %v6714 = vld [vmem:[#allocation5 + $0x32] sm:$0xff]
        %v6715 = vld [vmem:[#allocation5 + $0x3a] sm:$0xff]
        %v6716 = vld [vmem:[#allocation5 + $0x4a] sm:$0xff]
        %v6717 = vld [vmem:[#allocation5 + $0x52] sm:$0xff]
        %v6718 = vld [vmem:[#allocation5 + $0x62] sm:$0xff]
        %v6719 = vld [vmem:[#allocation5 + $0x6a] sm:$0xff]
        %v6720 = vld [vmem:[#allocation5 + $0x7a] sm:$0xff]
        %v6721 = vld [vmem:[#allocation5 + $0x82] sm:$0xff]
        %v6722 = vld [vmem:[#allocation5 + $0x92] sm:$0xff]
        %v6723 = vld [vmem:[#allocation5 + $0x9a] sm:$0xff]
        %v6724 = vld [vmem:[#allocation5 + $0xaa] sm:$0xff]
        %v6725 = vld [vmem:[#allocation5 + $0xb2] sm:$0xff]
        %v6726 = vld [vmem:[#allocation5 + $0xc2] sm:$0xff]
        %v6727 = vld [vmem:[#allocation5 + $0xca] sm:$0xff]
        %v6728 = vld [vmem:[#allocation5 + $0xda] sm:$0xff]
        %v6729 = vld [vmem:[#allocation5 + $0xe2] sm:$0xff]
        %v6730 = vld [vmem:[#allocation5 + $0xf2] sm:$0xff]
        %v6731 = vld [vmem:[#allocation5 + $0xfa] sm:$0xff]
        %v6732 = vld [vmem:[#allocation5 + $0x10a] sm:$0xff]
        %v6733 = vld [vmem:[#allocation5 + $0x112] sm:$0xff]
        %v6734 = vld [vmem:[#allocation5 + $0x122] sm:$0xff]
        %v6735 = vld [vmem:[#allocation5 + $0x12a] sm:$0xff]
        %v6736 = vld [vmem:[#allocation5 + $0x13a] sm:$0xff]
        %v6737 = vld [vmem:[#allocation5 + $0x142] sm:$0xff]
        %v6738 = vld [vmem:[#allocation5 + $0x152] sm:$0xff]
        %v6739 = vld [vmem:[#allocation5 + $0x15a] sm:$0xff]
        %v6740 = vld [vmem:[#allocation5 + $0x16a] sm:$0xff]
        %v6741 = vld [vmem:[#allocation5 + $0x172] sm:$0xff]
        %v6742 = vld [vmem:[#allocation5 + $0x182] sm:$0xff]
        %v6743 = vld [vmem:[#allocation5 + $0x18a] sm:$0xff]
        %v6744 = vld [vmem:[#allocation5 + $0x19a] sm:$0xff]
        %v6745 = vld [vmem:[#allocation5 + $0x1a2] sm:$0xff]
        %v6746 = vmax.f32 %v6674, %v6710
        %v6747 = vmax.f32 %v6675, %v6711
        %v6748 = vmax.f32 %v6676, %v6712
        %v6749 = vmax.f32 %v6677, %v6713
        %v6750 = vmax.f32 %v6678, %v6714
        %v6751 = vmax.f32 %v6679, %v6715
        %v6752 = vmax.f32 %v6680, %v6716
        %v6753 = vmax.f32 %v6681, %v6717
        %v6754 = vmax.f32 %v6682, %v6718
        %v6755 = vmax.f32 %v6683, %v6719
        %v6756 = vmax.f32 %v6684, %v6720
        %v6757 = vmax.f32 %v6685, %v6721
        %v6758 = vmax.f32 %v6686, %v6722
        %v6759 = vmax.f32 %v6687, %v6723
        %v6760 = vmax.f32 %v6688, %v6724
        %v6761 = vmax.f32 %v6689, %v6725
        %v6762 = vmax.f32 %v6690, %v6726
        %v6763 = vmax.f32 %v6691, %v6727
        %v6764 = vmax.f32 %v6692, %v6728
        %v6765 = vmax.f32 %v6693, %v6729
        %v6766 = vmax.f32 %v6694, %v6730
        %v6767 = vmax.f32 %v6695, %v6731
        %v6768 = vmax.f32 %v6696, %v6732
        %v6769 = vmax.f32 %v6697, %v6733
        %v6770 = vmax.f32 %v6698, %v6734
        %v6771 = vmax.f32 %v6699, %v6735
        %v6772 = vmax.f32 %v6700, %v6736
        %v6773 = vmax.f32 %v6701, %v6737
        %v6774 = vmax.f32 %v6702, %v6738
        %v6775 = vmax.f32 %v6703, %v6739
        %v6776 = vmax.f32 %v6704, %v6740
        %v6777 = vmax.f32 %v6705, %v6741
        %v6778 = vmax.f32 %v6706, %v6742
        %v6779 = vmax.f32 %v6707, %v6743
        %v6780 = vmax.f32 %v6708, %v6744
        %v6781 = vmax.f32 %v6709, %v6745
        %v6782 = vmax.f32 %v6746, %v6748
        %v6783 = vmax.f32 %v6747, %v6749
        %v6784 = vmax.f32 %v6748, %v6750
        %v6785 = vmax.f32 %v6749, %v6751
        %v6786 = vmax.f32 %v6750, %v6752
        %v6787 = vmax.f32 %v6751, %v6753
        %v6788 = vmax.f32 %v6752, %v6754
        %v6789 = vmax.f32 %v6753, %v6755
        %v6790 = vmax.f32 %v6754, %v6756
        %v6791 = vmax.f32 %v6755, %v6757
        %v6792 = vmax.f32 %v6756, %v6758
        %v6793 = vmax.f32 %v6757, %v6759
        %v6794 = vmax.f32 %v6758, %v6760
        %v6795 = vmax.f32 %v6759, %v6761
        %v6796 = vmax.f32 %v6760, %v6762
        %v6797 = vmax.f32 %v6761, %v6763
        %v6798 = vmax.f32 %v6762, %v6764
        %v6799 = vmax.f32 %v6763, %v6765
        %v6800 = vmax.f32 %v6764, %v6766
        %v6801 = vmax.f32 %v6765, %v6767
        %v6802 = vmax.f32 %v6766, %v6768
        %v6803 = vmax.f32 %v6767, %v6769
        %v6804 = vmax.f32 %v6768, %v6770
        %v6805 = vmax.f32 %v6769, %v6771
        %v6806 = vmax.f32 %v6770, %v6772
        %v6807 = vmax.f32 %v6771, %v6773
        %v6808 = vmax.f32 %v6772, %v6774
        %v6809 = vmax.f32 %v6773, %v6775
        %v6810 = vmax.f32 %v6774, %v6776
        %v6811 = vmax.f32 %v6775, %v6777
        %v6812 = vmax.f32 %v6776, %v6778
        %v6813 = vmax.f32 %v6777, %v6779
        %v6814 = vmax.f32 %v6782, %v6750
        %v6815 = vmax.f32 %v6783, %v6751
        %v6816 = vmax.f32 %v6784, %v6752
        %v6817 = vmax.f32 %v6785, %v6753
        %v6818 = vmax.f32 %v6786, %v6754
        %v6819 = vmax.f32 %v6787, %v6755
        %v6820 = vmax.f32 %v6788, %v6756
        %v6821 = vmax.f32 %v6789, %v6757
        %v6822 = vmax.f32 %v6790, %v6758
        %v6823 = vmax.f32 %v6791, %v6759
        %v6824 = vmax.f32 %v6792, %v6760
        %v6825 = vmax.f32 %v6793, %v6761
        %v6826 = vmax.f32 %v6794, %v6762
        %v6827 = vmax.f32 %v6795, %v6763
        %v6828 = vmax.f32 %v6796, %v6764
        %v6829 = vmax.f32 %v6797, %v6765
        %v6830 = vmax.f32 %v6798, %v6766
        %v6831 = vmax.f32 %v6799, %v6767
        %v6832 = vmax.f32 %v6800, %v6768
        %v6833 = vmax.f32 %v6801, %v6769
        %v6834 = vmax.f32 %v6802, %v6770
        %v6835 = vmax.f32 %v6803, %v6771
        %v6836 = vmax.f32 %v6804, %v6772
        %v6837 = vmax.f32 %v6805, %v6773
        %v6838 = vmax.f32 %v6806, %v6774
        %v6839 = vmax.f32 %v6807, %v6775
        %v6840 = vmax.f32 %v6808, %v6776
        %v6841 = vmax.f32 %v6809, %v6777
        %v6842 = vmax.f32 %v6810, %v6778
        %v6843 = vmax.f32 %v6811, %v6779
        %v6844 = vmax.f32 %v6812, %v6780
        %v6845 = vmax.f32 %v6813, %v6781
        %s6846 = sld [smem:[#allocation6 + $0x100]]
        %s6847 = sld [smem:[#allocation6 + $0x101]]
        %s6848 = sld [smem:[#allocation6 + $0x102]]
        %v6849 = vstv %s6846
        %v6850 = vmul.f32 %v6849, %v6064
        %v6851 = vmul.f32 %v6849, %v6065
        %v6852 = vmul.f32 %v6849, %v6066
        %v6853 = vmul.f32 %v6849, %v6067
        %v6854 = vmul.f32 %v6849, %v6068
        %v6855 = vmul.f32 %v6849, %v6069
        %v6856 = vmul.f32 %v6849, %v6070
        %v6857 = vmul.f32 %v6849, %v6071
        %v6858 = vmul.f32 %v6849, %v6072
        %v6859 = vmul.f32 %v6849, %v6073
        %v6860 = vmul.f32 %v6849, %v6074
        %v6861 = vmul.f32 %v6849, %v6075
        %v6862 = vmul.f32 %v6849, %v6076
        %v6863 = vmul.f32 %v6849, %v6077
        %v6864 = vmul.f32 %v6849, %v6078
        %v6865 = vmul.f32 %v6849, %v6079
        %v6866 = vmul.f32 %v6849, %v6080
        %v6867 = vmul.f32 %v6849, %v6081
        %v6868 = vmul.f32 %v6849, %v6082
        %v6869 = vmul.f32 %v6849, %v6083
        %v6870 = vmul.f32 %v6849, %v6084
        %v6871 = vmul.f32 %v6849, %v6085
        %v6872 = vmul.f32 %v6849, %v6086
        %v6873 = vmul.f32 %v6849, %v6087
        %v6874 = vmul.f32 %v6849, %v6088
        %v6875 = vmul.f32 %v6849, %v6089
        %v6876 = vmul.f32 %v6849, %v6090
        %v6877 = vmul.f32 %v6849, %v6091
        %v6878 = vmul.f32 %v6849, %v6092
        %v6879 = vmul.f32 %v6849, %v6093
        %v6880 = vmul.f32 %v6849, %v6094
        %v6881 = vmul.f32 %v6849, %v6095
        %v6882 = vstv %s6847
        %v6883 = vmul.f32 %v6882, %v6570
        %v6884 = vmul.f32 %v6882, %v6571
        %v6885 = vmul.f32 %v6882, %v6572
        %v6886 = vmul.f32 %v6882, %v6573
        %v6887 = vmul.f32 %v6882, %v6574
        %v6888 = vmul.f32 %v6882, %v6575
        %v6889 = vmul.f32 %v6882, %v6576
        %v6890 = vmul.f32 %v6882, %v6577
        %v6891 = vmul.f32 %v6882, %v6578
        %v6892 = vmul.f32 %v6882, %v6579
        %v6893 = vmul.f32 %v6882, %v6580
        %v6894 = vmul.f32 %v6882, %v6581
        %v6895 = vmul.f32 %v6882, %v6582
        %v6896 = vmul.f32 %v6882, %v6583
        %v6897 = vmul.f32 %v6882, %v6584
        %v6898 = vmul.f32 %v6882, %v6585
        %v6899 = vmul.f32 %v6882, %v6586
        %v6900 = vmul.f32 %v6882, %v6587
        %v6901 = vmul.f32 %v6882, %v6588
        %v6902 = vmul.f32 %v6882, %v6589
        %v6903 = vmul.f32 %v6882, %v6590
        %v6904 = vmul.f32 %v6882, %v6591
        %v6905 = vmul.f32 %v6882, %v6592
        %v6906 = vmul.f32 %v6882, %v6593
        %v6907 = vmul.f32 %v6882, %v6594
        %v6908 = vmul.f32 %v6882, %v6595
        %v6909 = vmul.f32 %v6882, %v6596
        %v6910 = vmul.f32 %v6882, %v6597
        %v6911 = vmul.f32 %v6882, %v6598
        %v6912 = vmul.f32 %v6882, %v6599
        %v6913 = vmul.f32 %v6882, %v6600
        %v6914 = vmul.f32 %v6882, %v6601
        %v6915 = vadd.f32 %v6850, %v6883
        %v6916 = vadd.f32 %v6851, %v6884
        %v6917 = vadd.f32 %v6852, %v6885
        %v6918 = vadd.f32 %v6853, %v6886
        %v6919 = vadd.f32 %v6854, %v6887
        %v6920 = vadd.f32 %v6855, %v6888
        %v6921 = vadd.f32 %v6856, %v6889
        %v6922 = vadd.f32 %v6857, %v6890
        %v6923 = vadd.f32 %v6858, %v6891
        %v6924 = vadd.f32 %v6859, %v6892
        %v6925 = vadd.f32 %v6860, %v6893
        %v6926 = vadd.f32 %v6861, %v6894
        %v6927 = vadd.f32 %v6862, %v6895
        %v6928 = vadd.f32 %v6863, %v6896
        %v6929 = vadd.f32 %v6864, %v6897
        %v6930 = vadd.f32 %v6865, %v6898
        %v6931 = vadd.f32 %v6866, %v6899
        %v6932 = vadd.f32 %v6867, %v6900
        %v6933 = vadd.f32 %v6868, %v6901
        %v6934 = vadd.f32 %v6869, %v6902
        %v6935 = vadd.f32 %v6870, %v6903
        %v6936 = vadd.f32 %v6871, %v6904
        %v6937 = vadd.f32 %v6872, %v6905
        %v6938 = vadd.f32 %v6873, %v6906
        %v6939 = vadd.f32 %v6874, %v6907
        %v6940 = vadd.f32 %v6875, %v6908
        %v6941 = vadd.f32 %v6876, %v6909
        %v6942 = vadd.f32 %v6877, %v6910
        %v6943 = vadd.f32 %v6878, %v6911
        %v6944 = vadd.f32 %v6879, %v6912
        %v6945 = vadd.f32 %v6880, %v6913
        %v6946 = vadd.f32 %v6881, %v6914
        %v6947 = vstv %s6848
        %v6948 = vmul.f32 %v6947, %v6814
        %v6949 = vmul.f32 %v6947, %v6815
        %v6950 = vmul.f32 %v6947, %v6816
        %v6951 = vmul.f32 %v6947, %v6817
        %v6952 = vmul.f32 %v6947, %v6818
        %v6953 = vmul.f32 %v6947, %v6819
        %v6954 = vmul.f32 %v6947, %v6820
        %v6955 = vmul.f32 %v6947, %v6821
        %v6956 = vmul.f32 %v6947, %v6822
        %v6957 = vmul.f32 %v6947, %v6823
        %v6958 = vmul.f32 %v6947, %v6824
        %v6959 = vmul.f32 %v6947, %v6825
        %v6960 = vmul.f32 %v6947, %v6826
        %v6961 = vmul.f32 %v6947, %v6827
        %v6962 = vmul.f32 %v6947, %v6828
        %v6963 = vmul.f32 %v6947, %v6829
        %v6964 = vmul.f32 %v6947, %v6830
        %v6965 = vmul.f32 %v6947, %v6831
        %v6966 = vmul.f32 %v6947, %v6832
        %v6967 = vmul.f32 %v6947, %v6833
        %v6968 = vmul.f32 %v6947, %v6834
        %v6969 = vmul.f32 %v6947, %v6835
        %v6970 = vmul.f32 %v6947, %v6836
        %v6971 = vmul.f32 %v6947, %v6837
        %v6972 = vmul.f32 %v6947, %v6838
        %v6973 = vmul.f32 %v6947, %v6839
        %v6974 = vmul.f32 %v6947, %v6840
        %v6975 = vmul.f32 %v6947, %v6841
        %v6976 = vmul.f32 %v6947, %v6842
        %v6977 = vmul.f32 %v6947, %v6843
        %v6978 = vmul.f32 %v6947, %v6844
        %v6979 = vmul.f32 %v6947, %v6845
        %v6980 = vadd.f32 %v6915, %v6948
        %v6981 = vadd.f32 %v6916, %v6949
        %v6982 = vadd.f32 %v6917, %v6950
        %v6983 = vadd.f32 %v6918, %v6951
        %v6984 = vadd.f32 %v6919, %v6952
        %v6985 = vadd.f32 %v6920, %v6953
        %v6986 = vadd.f32 %v6921, %v6954
        %v6987 = vadd.f32 %v6922, %v6955
        %v6988 = vadd.f32 %v6923, %v6956
        %v6989 = vadd.f32 %v6924, %v6957
        %v6990 = vadd.f32 %v6925, %v6958
        %v6991 = vadd.f32 %v6926, %v6959
        %v6992 = vadd.f32 %v6927, %v6960
        %v6993 = vadd.f32 %v6928, %v6961
        %v6994 = vadd.f32 %v6929, %v6962
        %v6995 = vadd.f32 %v6930, %v6963
        %v6996 = vadd.f32 %v6931, %v6964
        %v6997 = vadd.f32 %v6932, %v6965
        %v6998 = vadd.f32 %v6933, %v6966
        %v6999 = vadd.f32 %v6934, %v6967
        %v7000 = vadd.f32 %v6935, %v6968
        %v7001 = vadd.f32 %v6936, %v6969
        %v7002 = vadd.f32 %v6937, %v6970
        %v7003 = vadd.f32 %v6938, %v6971
        %v7004 = vadd.f32 %v6939, %v6972
        %v7005 = vadd.f32 %v6940, %v6973
        %v7006 = vadd.f32 %v6941, %v6974
        %v7007 = vadd.f32 %v6942, %v6975
        %v7008 = vadd.f32 %v6943, %v6976
        %v7009 = vadd.f32 %v6944, %v6977
        %v7010 = vadd.f32 %v6945, %v6978
        %v7011 = vadd.f32 %v6946, %v6979
        %v7012 = vadd.f32 %v6230, %v6980
        %v7013 = vadd.f32 %v6231, %v6981
        %v7014 = vadd.f32 %v6232, %v6982
        %v7015 = vadd.f32 %v6233, %v6983
        %v7016 = vadd.f32 %v6234, %v6984
        %v7017 = vadd.f32 %v6235, %v6985
        %v7018 = vadd.f32 %v6236, %v6986
        %v7019 = vadd.f32 %v6237, %v6987
        %v7020 = vadd.f32 %v6238, %v6988
        %v7021 = vadd.f32 %v6239, %v6989
        %v7022 = vadd.f32 %v6240, %v6990
        %v7023 = vadd.f32 %v6241, %v6991
        %v7024 = vadd.f32 %v6242, %v6992
        %v7025 = vadd.f32 %v6243, %v6993
        %v7026 = vadd.f32 %v6244, %v6994
        %v7027 = vadd.f32 %v6245, %v6995
        %v7028 = vadd.f32 %v6246, %v6996
        %v7029 = vadd.f32 %v6247, %v6997
        %v7030 = vadd.f32 %v6248, %v6998
        %v7031 = vadd.f32 %v6249, %v6999
        %v7032 = vadd.f32 %v6250, %v7000
        %v7033 = vadd.f32 %v6251, %v7001
        %v7034 = vadd.f32 %v6252, %v7002
        %v7035 = vadd.f32 %v6253, %v7003
        %v7036 = vadd.f32 %v6254, %v7004
        %v7037 = vadd.f32 %v6255, %v7005
        %v7038 = vadd.f32 %v6256, %v7006
        %v7039 = vadd.f32 %v6257, %v7007
        %v7040 = vadd.f32 %v6258, %v7008
        %v7041 = vadd.f32 %v6259, %v7009
        %v7042 = vadd.f32 %v6260, %v7010
        %v7043 = vadd.f32 %v6261, %v7011
        %s7044 = sld [smem:[#allocation6 + $0x180]]
        %s7045 = sld [smem:[#allocation6 + $0x181]]
        %s7046 = sld [smem:[#allocation6 + $0x182]]
        %v7047 = vstv %s7044
        %v7048 = vmul.f32 %v7047, %v4948
        %v7049 = vmul.f32 %v7047, %v4951
        %v7050 = vmul.f32 %v7047, %v4956
        %v7051 = vmul.f32 %v7047, %v4959
        %v7052 = vmul.f32 %v7047, %v4964
        %v7053 = vmul.f32 %v7047, %v4967
        %v7054 = vmul.f32 %v7047, %v4972
        %v7055 = vmul.f32 %v7047, %v4975
        %v7056 = vmul.f32 %v7047, %v4980
        %v7057 = vmul.f32 %v7047, %v4983
        %v7058 = vmul.f32 %v7047, %v4988
        %v7059 = vmul.f32 %v7047, %v4991
        %v7060 = vmul.f32 %v7047, %v4996
        %v7061 = vmul.f32 %v7047, %v4999
        %v7062 = vmul.f32 %v7047, %v5004
        %v7063 = vmul.f32 %v7047, %v5007
        %v7064 = vmul.f32 %v7047, %v5012
        %v7065 = vmul.f32 %v7047, %v5015
        %v7066 = vmul.f32 %v7047, %v5020
        %v7067 = vmul.f32 %v7047, %v5023
        %v7068 = vmul.f32 %v7047, %v5028
        %v7069 = vmul.f32 %v7047, %v5031
        %v7070 = vmul.f32 %v7047, %v5036
        %v7071 = vmul.f32 %v7047, %v5039
        %v7072 = vmul.f32 %v7047, %v5044
        %v7073 = vmul.f32 %v7047, %v5047
        %v7074 = vmul.f32 %v7047, %v5052
        %v7075 = vmul.f32 %v7047, %v5055
        %v7076 = vmul.f32 %v7047, %v5060
        %v7077 = vmul.f32 %v7047, %v5063
        %v7078 = vmul.f32 %v7047, %v5068
        %v7079 = vmul.f32 %v7047, %v5071
        %v7080 = vstv %s7045
        %v7081 = vmul.f32 %v7080, %v5654
        %v7082 = vmul.f32 %v7080, %v5655
        %v7083 = vmul.f32 %v7080, %v5656
        %v7084 = vmul.f32 %v7080, %v5657
        %v7085 = vmul.f32 %v7080, %v5658
        %v7086 = vmul.f32 %v7080, %v5659
        %v7087 = vmul.f32 %v7080, %v5660
        %v7088 = vmul.f32 %v7080, %v5661
        %v7089 = vmul.f32 %v7080, %v5662
        %v7090 = vmul.f32 %v7080, %v5663
        %v7091 = vmul.f32 %v7080, %v5664
        %v7092 = vmul.f32 %v7080, %v5665
        %v7093 = vmul.f32 %v7080, %v5666
        %v7094 = vmul.f32 %v7080, %v5667
        %v7095 = vmul.f32 %v7080, %v5668
        %v7096 = vmul.f32 %v7080, %v5669
        %v7097 = vmul.f32 %v7080, %v5670
        %v7098 = vmul.f32 %v7080, %v5671
        %v7099 = vmul.f32 %v7080, %v5672
        %v7100 = vmul.f32 %v7080, %v5673
        %v7101 = vmul.f32 %v7080, %v5674
        %v7102 = vmul.f32 %v7080, %v5675
        %v7103 = vmul.f32 %v7080, %v5676
        %v7104 = vmul.f32 %v7080, %v5677
        %v7105 = vmul.f32 %v7080, %v5678
        %v7106 = vmul.f32 %v7080, %v5679
        %v7107 = vmul.f32 %v7080, %v5680
        %v7108 = vmul.f32 %v7080, %v5681
        %v7109 = vmul.f32 %v7080, %v5682
        %v7110 = vmul.f32 %v7080, %v5683
        %v7111 = vmul.f32 %v7080, %v5684
        %v7112 = vmul.f32 %v7080, %v5685
        %v7113 = vadd.f32 %v7048, %v7081
        %v7114 = vadd.f32 %v7049, %v7082
        %v7115 = vadd.f32 %v7050, %v7083
        %v7116 = vadd.f32 %v7051, %v7084
        %v7117 = vadd.f32 %v7052, %v7085
        %v7118 = vadd.f32 %v7053, %v7086
        %v7119 = vadd.f32 %v7054, %v7087
        %v7120 = vadd.f32 %v7055, %v7088
        %v7121 = vadd.f32 %v7056, %v7089
        %v7122 = vadd.f32 %v7057, %v7090
        %v7123 = vadd.f32 %v7058, %v7091
        %v7124 = vadd.f32 %v7059, %v7092
        %v7125 = vadd.f32 %v7060, %v7093
        %v7126 = vadd.f32 %v7061, %v7094
        %v7127 = vadd.f32 %v7062, %v7095
        %v7128 = vadd.f32 %v7063, %v7096
        %v7129 = vadd.f32 %v7064, %v7097
        %v7130 = vadd.f32 %v7065, %v7098
        %v7131 = vadd.f32 %v7066, %v7099
        %v7132 = vadd.f32 %v7067, %v7100
        %v7133 = vadd.f32 %v7068, %v7101
        %v7134 = vadd.f32 %v7069, %v7102
        %v7135 = vadd.f32 %v7070, %v7103
        %v7136 = vadd.f32 %v7071, %v7104
        %v7137 = vadd.f32 %v7072, %v7105
        %v7138 = vadd.f32 %v7073, %v7106
        %v7139 = vadd.f32 %v7074, %v7107
        %v7140 = vadd.f32 %v7075, %v7108
        %v7141 = vadd.f32 %v7076, %v7109
        %v7142 = vadd.f32 %v7077, %v7110
        %v7143 = vadd.f32 %v7078, %v7111
        %v7144 = vadd.f32 %v7079, %v7112
        %v7145 = vstv %s7046
        %v7146 = vmul.f32 %v7145, %v5898
        %v7147 = vmul.f32 %v7145, %v5899
        %v7148 = vmul.f32 %v7145, %v5900
        %v7149 = vmul.f32 %v7145, %v5901
        %v7150 = vmul.f32 %v7145, %v5902
        %v7151 = vmul.f32 %v7145, %v5903
        %v7152 = vmul.f32 %v7145, %v5904
        %v7153 = vmul.f32 %v7145, %v5905
        %v7154 = vmul.f32 %v7145, %v5906
        %v7155 = vmul.f32 %v7145, %v5907
        %v7156 = vmul.f32 %v7145, %v5908
        %v7157 = vmul.f32 %v7145, %v5909
        %v7158 = vmul.f32 %v7145, %v5910
        %v7159 = vmul.f32 %v7145, %v5911
        %v7160 = vmul.f32 %v7145, %v5912
        %v7161 = vmul.f32 %v7145, %v5913
        %v7162 = vmul.f32 %v7145, %v5914
        %v7163 = vmul.f32 %v7145, %v5915
        %v7164 = vmul.f32 %v7145, %v5916
        %v7165 = vmul.f32 %v7145, %v5917
        %v7166 = vmul.f32 %v7145, %v5918
        %v7167 = vmul.f32 %v7145, %v5919
        %v7168 = vmul.f32 %v7145, %v5920
        %v7169 = vmul.f32 %v7145, %v5921
        %v7170 = vmul.f32 %v7145, %v5922
        %v7171 = vmul.f32 %v7145, %v5923
        %v7172 = vmul.f32 %v7145, %v5924
        %v7173 = vmul.f32 %v7145, %v5925
        %v7174 = vmul.f32 %v7145, %v5926
        %v7175 = vmul.f32 %v7145, %v5927
        %v7176 = vmul.f32 %v7145, %v5928
        %v7177 = vmul.f32 %v7145, %v5929
        %v7178 = vadd.f32 %v7113, %v7146
        %v7179 = vadd.f32 %v7114, %v7147
        %v7180 = vadd.f32 %v7115, %v7148
        %v7181 = vadd.f32 %v7116, %v7149
        %v7182 = vadd.f32 %v7117, %v7150
        %v7183 = vadd.f32 %v7118, %v7151
        %v7184 = vadd.f32 %v7119, %v7152
        %v7185 = vadd.f32 %v7120, %v7153
        %v7186 = vadd.f32 %v7121, %v7154
        %v7187 = vadd.f32 %v7122, %v7155
        %v7188 = vadd.f32 %v7123, %v7156
        %v7189 = vadd.f32 %v7124, %v7157
        %v7190 = vadd.f32 %v7125, %v7158
        %v7191 = vadd.f32 %v7126, %v7159
        %v7192 = vadd.f32 %v7127, %v7160
        %v7193 = vadd.f32 %v7128, %v7161
        %v7194 = vadd.f32 %v7129, %v7162
        %v7195 = vadd.f32 %v7130, %v7163
        %v7196 = vadd.f32 %v7131, %v7164
        %v7197 = vadd.f32 %v7132, %v7165
        %v7198 = vadd.f32 %v7133, %v7166
        %v7199 = vadd.f32 %v7134, %v7167
        %v7200 = vadd.f32 %v7135, %v7168
        %v7201 = vadd.f32 %v7136, %v7169
        %v7202 = vadd.f32 %v7137, %v7170
        %v7203 = vadd.f32 %v7138, %v7171
        %v7204 = vadd.f32 %v7139, %v7172
        %v7205 = vadd.f32 %v7140, %v7173
        %v7206 = vadd.f32 %v7141, %v7174
        %v7207 = vadd.f32 %v7142, %v7175
        %v7208 = vadd.f32 %v7143, %v7176
        %v7209 = vadd.f32 %v7144, %v7177
        %s7210 = sld [smem:[#allocation6 + $0x200]]
        %s7211 = sld [smem:[#allocation6 + $0x201]]
        %s7212 = sld [smem:[#allocation6 + $0x202]]
        %v7213 = vstv %s7210
        %v7214 = vmul.f32 %v7213, %v6064
        %v7215 = vmul.f32 %v7213, %v6065
        %v7216 = vmul.f32 %v7213, %v6066
        %v7217 = vmul.f32 %v7213, %v6067
        %v7218 = vmul.f32 %v7213, %v6068
        %v7219 = vmul.f32 %v7213, %v6069
        %v7220 = vmul.f32 %v7213, %v6070
        %v7221 = vmul.f32 %v7213, %v6071
        %v7222 = vmul.f32 %v7213, %v6072
        %v7223 = vmul.f32 %v7213, %v6073
        %v7224 = vmul.f32 %v7213, %v6074
        %v7225 = vmul.f32 %v7213, %v6075
        %v7226 = vmul.f32 %v7213, %v6076
        %v7227 = vmul.f32 %v7213, %v6077
        %v7228 = vmul.f32 %v7213, %v6078
        %v7229 = vmul.f32 %v7213, %v6079
        %v7230 = vmul.f32 %v7213, %v6080
        %v7231 = vmul.f32 %v7213, %v6081
        %v7232 = vmul.f32 %v7213, %v6082
        %v7233 = vmul.f32 %v7213, %v6083
        %v7234 = vmul.f32 %v7213, %v6084
        %v7235 = vmul.f32 %v7213, %v6085
        %v7236 = vmul.f32 %v7213, %v6086
        %v7237 = vmul.f32 %v7213, %v6087
        %v7238 = vmul.f32 %v7213, %v6088
        %v7239 = vmul.f32 %v7213, %v6089
        %v7240 = vmul.f32 %v7213, %v6090
        %v7241 = vmul.f32 %v7213, %v6091
        %v7242 = vmul.f32 %v7213, %v6092
        %v7243 = vmul.f32 %v7213, %v6093
        %v7244 = vmul.f32 %v7213, %v6094
        %v7245 = vmul.f32 %v7213, %v6095
        %v7246 = vstv %s7211
        %v7247 = vmul.f32 %v7246, %v6570
        %v7248 = vmul.f32 %v7246, %v6571
        %v7249 = vmul.f32 %v7246, %v6572
        %v7250 = vmul.f32 %v7246, %v6573
        %v7251 = vmul.f32 %v7246, %v6574
        %v7252 = vmul.f32 %v7246, %v6575
        %v7253 = vmul.f32 %v7246, %v6576
        %v7254 = vmul.f32 %v7246, %v6577
        %v7255 = vmul.f32 %v7246, %v6578
        %v7256 = vmul.f32 %v7246, %v6579
        %v7257 = vmul.f32 %v7246, %v6580
        %v7258 = vmul.f32 %v7246, %v6581
        %v7259 = vmul.f32 %v7246, %v6582
        %v7260 = vmul.f32 %v7246, %v6583
        %v7261 = vmul.f32 %v7246, %v6584
        %v7262 = vmul.f32 %v7246, %v6585
        %v7263 = vmul.f32 %v7246, %v6586
        %v7264 = vmul.f32 %v7246, %v6587
        %v7265 = vmul.f32 %v7246, %v6588
        %v7266 = vmul.f32 %v7246, %v6589
        %v7267 = vmul.f32 %v7246, %v6590
        %v7268 = vmul.f32 %v7246, %v6591
        %v7269 = vmul.f32 %v7246, %v6592
        %v7270 = vmul.f32 %v7246, %v6593
        %v7271 = vmul.f32 %v7246, %v6594
        %v7272 = vmul.f32 %v7246, %v6595
        %v7273 = vmul.f32 %v7246, %v6596
        %v7274 = vmul.f32 %v7246, %v6597
        %v7275 = vmul.f32 %v7246, %v6598
        %v7276 = vmul.f32 %v7246, %v6599
        %v7277 = vmul.f32 %v7246, %v6600
        %v7278 = vmul.f32 %v7246, %v6601
        %v7279 = vadd.f32 %v7214, %v7247
        %v7280 = vadd.f32 %v7215, %v7248
        %v7281 = vadd.f32 %v7216, %v7249
        %v7282 = vadd.f32 %v7217, %v7250
        %v7283 = vadd.f32 %v7218, %v7251
        %v7284 = vadd.f32 %v7219, %v7252
        %v7285 = vadd.f32 %v7220, %v7253
        %v7286 = vadd.f32 %v7221, %v7254
        %v7287 = vadd.f32 %v7222, %v7255
        %v7288 = vadd.f32 %v7223, %v7256
        %v7289 = vadd.f32 %v7224, %v7257
        %v7290 = vadd.f32 %v7225, %v7258
        %v7291 = vadd.f32 %v7226, %v7259
        %v7292 = vadd.f32 %v7227, %v7260
        %v7293 = vadd.f32 %v7228, %v7261
        %v7294 = vadd.f32 %v7229, %v7262
        %v7295 = vadd.f32 %v7230, %v7263
        %v7296 = vadd.f32 %v7231, %v7264
        %v7297 = vadd.f32 %v7232, %v7265
        %v7298 = vadd.f32 %v7233, %v7266
        %v7299 = vadd.f32 %v7234, %v7267
        %v7300 = vadd.f32 %v7235, %v7268
        %v7301 = vadd.f32 %v7236, %v7269
        %v7302 = vadd.f32 %v7237, %v7270
        %v7303 = vadd.f32 %v7238, %v7271
        %v7304 = vadd.f32 %v7239, %v7272
        %v7305 = vadd.f32 %v7240, %v7273
        %v7306 = vadd.f32 %v7241, %v7274
        %v7307 = vadd.f32 %v7242, %v7275
        %v7308 = vadd.f32 %v7243, %v7276
        %v7309 = vadd.f32 %v7244, %v7277
        %v7310 = vadd.f32 %v7245, %v7278
        %v7311 = vstv %s7212
        %v7312 = vmul.f32 %v7311, %v6814
        %v7313 = vmul.f32 %v7311, %v6815
        %v7314 = vmul.f32 %v7311, %v6816
        %v7315 = vmul.f32 %v7311, %v6817
        %v7316 = vmul.f32 %v7311, %v6818
        %v7317 = vmul.f32 %v7311, %v6819
        %v7318 = vmul.f32 %v7311, %v6820
        %v7319 = vmul.f32 %v7311, %v6821
        %v7320 = vmul.f32 %v7311, %v6822
        %v7321 = vmul.f32 %v7311, %v6823
        %v7322 = vmul.f32 %v7311, %v6824
        %v7323 = vmul.f32 %v7311, %v6825
        %v7324 = vmul.f32 %v7311, %v6826
        %v7325 = vmul.f32 %v7311, %v6827
        %v7326 = vmul.f32 %v7311, %v6828
        %v7327 = vmul.f32 %v7311, %v6829
        %v7328 = vmul.f32 %v7311, %v6830
        %v7329 = vmul.f32 %v7311, %v6831
        %v7330 = vmul.f32 %v7311, %v6832
        %v7331 = vmul.f32 %v7311, %v6833
        %v7332 = vmul.f32 %v7311, %v6834
        %v7333 = vmul.f32 %v7311, %v6835
        %v7334 = vmul.f32 %v7311, %v6836
        %v7335 = vmul.f32 %v7311, %v6837
        %v7336 = vmul.f32 %v7311, %v6838
        %v7337 = vmul.f32 %v7311, %v6839
        %v7338 = vmul.f32 %v7311, %v6840
        %v7339 = vmul.f32 %v7311, %v6841
        %v7340 = vmul.f32 %v7311, %v6842
        %v7341 = vmul.f32 %v7311, %v6843
        %v7342 = vmul.f32 %v7311, %v6844
        %v7343 = vmul.f32 %v7311, %v6845
        %v7344 = vadd.f32 %v7279, %v7312
        %v7345 = vadd.f32 %v7280, %v7313
        %v7346 = vadd.f32 %v7281, %v7314
        %v7347 = vadd.f32 %v7282, %v7315
        %v7348 = vadd.f32 %v7283, %v7316
        %v7349 = vadd.f32 %v7284, %v7317
        %v7350 = vadd.f32 %v7285, %v7318
        %v7351 = vadd.f32 %v7286, %v7319
        %v7352 = vadd.f32 %v7287, %v7320
        %v7353 = vadd.f32 %v7288, %v7321
        %v7354 = vadd.f32 %v7289, %v7322
        %v7355 = vadd.f32 %v7290, %v7323
        %v7356 = vadd.f32 %v7291, %v7324
        %v7357 = vadd.f32 %v7292, %v7325
        %v7358 = vadd.f32 %v7293, %v7326
        %v7359 = vadd.f32 %v7294, %v7327
        %v7360 = vadd.f32 %v7295, %v7328
        %v7361 = vadd.f32 %v7296, %v7329
        %v7362 = vadd.f32 %v7297, %v7330
        %v7363 = vadd.f32 %v7298, %v7331
        %v7364 = vadd.f32 %v7299, %v7332
        %v7365 = vadd.f32 %v7300, %v7333
        %v7366 = vadd.f32 %v7301, %v7334
        %v7367 = vadd.f32 %v7302, %v7335
        %v7368 = vadd.f32 %v7303, %v7336
        %v7369 = vadd.f32 %v7304, %v7337
        %v7370 = vadd.f32 %v7305, %v7338
        %v7371 = vadd.f32 %v7306, %v7339
        %v7372 = vadd.f32 %v7307, %v7340
        %v7373 = vadd.f32 %v7308, %v7341
        %v7374 = vadd.f32 %v7309, %v7342
        %v7375 = vadd.f32 %v7310, %v7343
        %v7376 = vadd.f32 %v7178, %v7344
        %v7377 = vadd.f32 %v7179, %v7345
        %v7378 = vadd.f32 %v7180, %v7346
        %v7379 = vadd.f32 %v7181, %v7347
        %v7380 = vadd.f32 %v7182, %v7348
        %v7381 = vadd.f32 %v7183, %v7349
        %v7382 = vadd.f32 %v7184, %v7350
        %v7383 = vadd.f32 %v7185, %v7351
        %v7384 = vadd.f32 %v7186, %v7352
        %v7385 = vadd.f32 %v7187, %v7353
        %v7386 = vadd.f32 %v7188, %v7354
        %v7387 = vadd.f32 %v7189, %v7355
        %v7388 = vadd.f32 %v7190, %v7356
        %v7389 = vadd.f32 %v7191, %v7357
        %v7390 = vadd.f32 %v7192, %v7358
        %v7391 = vadd.f32 %v7193, %v7359
        %v7392 = vadd.f32 %v7194, %v7360
        %v7393 = vadd.f32 %v7195, %v7361
        %v7394 = vadd.f32 %v7196, %v7362
        %v7395 = vadd.f32 %v7197, %v7363
        %v7396 = vadd.f32 %v7198, %v7364
        %v7397 = vadd.f32 %v7199, %v7365
        %v7398 = vadd.f32 %v7200, %v7366
        %v7399 = vadd.f32 %v7201, %v7367
        %v7400 = vadd.f32 %v7202, %v7368
        %v7401 = vadd.f32 %v7203, %v7369
        %v7402 = vadd.f32 %v7204, %v7370
        %v7403 = vadd.f32 %v7205, %v7371
        %v7404 = vadd.f32 %v7206, %v7372
        %v7405 = vadd.f32 %v7207, %v7373
        %v7406 = vadd.f32 %v7208, %v7374
        %v7407 = vadd.f32 %v7209, %v7375
        %7408 = vst.msk [vmem:[%s5184 + $0x1] sm:$0xff] %vm5074, %v7012
        %7409 = vst.msk [vmem:[%s5184 + $0x9] sm:$0xff] %vm5074, %v7013
        %7410 = vst.msk [vmem:[%s5184 + $0x19] sm:$0xff] %vm5074, %v7014
        %7411 = vst.msk [vmem:[%s5184 + $0x21] sm:$0xff] %vm5074, %v7015
        %7412 = vst.msk [vmem:[%s5184 + $0x31] sm:$0xff] %vm5074, %v7016
        %7413 = vst.msk [vmem:[%s5184 + $0x39] sm:$0xff] %vm5074, %v7017
        %7414 = vst.msk [vmem:[%s5184 + $0x49] sm:$0xff] %vm5074, %v7018
        %7415 = vst.msk [vmem:[%s5184 + $0x51] sm:$0xff] %vm5074, %v7019
        %7416 = vst.msk [vmem:[%s5184 + $0x61] sm:$0xff] %vm5074, %v7020
        %7417 = vst.msk [vmem:[%s5184 + $0x69] sm:$0xff] %vm5074, %v7021
        %7418 = vst.msk [vmem:[%s5184 + $0x79] sm:$0xff] %vm5074, %v7022
        %7419 = vst.msk [vmem:[%s5184 + $0x81] sm:$0xff] %vm5074, %v7023
        %7420 = vst.msk [vmem:[%s5184 + $0x91] sm:$0xff] %vm5074, %v7024
        %7421 = vst.msk [vmem:[%s5184 + $0x99] sm:$0xff] %vm5074, %v7025
        %7422 = vst.msk [vmem:[%s5184 + $0xa9] sm:$0xff] %vm5074, %v7026
        %7423 = vst.msk [vmem:[%s5184 + $0xb1] sm:$0xff] %vm5074, %v7027
        %7424 = vst.msk [vmem:[%s5184 + $0xc1] sm:$0xff] %vm5074, %v7028
        %7425 = vst.msk [vmem:[%s5184 + $0xc9] sm:$0xff] %vm5074, %v7029
        %7426 = vst.msk [vmem:[%s5184 + $0xd9] sm:$0xff] %vm5074, %v7030
        %7427 = vst.msk [vmem:[%s5184 + $0xe1] sm:$0xff] %vm5074, %v7031
        %7428 = vst.msk [vmem:[%s5184 + $0xf1] sm:$0xff] %vm5074, %v7032
        %7429 = vst.msk [vmem:[%s5184 + $0xf9] sm:$0xff] %vm5074, %v7033
        %7430 = vst.msk [vmem:[%s5184 + $0x109] sm:$0xff] %vm5074, %v7034
        %7431 = vst.msk [vmem:[%s5184 + $0x111] sm:$0xff] %vm5074, %v7035
        %7432 = vst.msk [vmem:[%s5184 + $0x121] sm:$0xff] %vm5074, %v7036
        %7433 = vst.msk [vmem:[%s5184 + $0x129] sm:$0xff] %vm5074, %v7037
        %7434 = vst.msk [vmem:[%s5184 + $0x139] sm:$0xff] %vm5074, %v7038
        %7435 = vst.msk [vmem:[%s5184 + $0x141] sm:$0xff] %vm5074, %v7039
        %7436 = vst.msk [vmem:[%s5184 + $0x151] sm:$0xff] %vm5074, %v7040
        %7437 = vst.msk [vmem:[%s5184 + $0x159] sm:$0xff] %vm5074, %v7041
        %7438 = vst.msk [vmem:[%s5184 + $0x169] sm:$0xff] %vm5074, %v7042
        %7439 = vst.msk [vmem:[%s5184 + $0x171] sm:$0xff] %vm5074, %v7043
        %7440 = vst.msk [vmem:[%s5217 + $0x1] sm:$0xff] %vm5074, %v7012
        %7441 = vst.msk [vmem:[%s5217 + $0x9] sm:$0xff] %vm5074, %v7013
        %7442 = vst.msk [vmem:[%s5217 + $0x19] sm:$0xff] %vm5074, %v7014
        %7443 = vst.msk [vmem:[%s5217 + $0x21] sm:$0xff] %vm5074, %v7015
        %7444 = vst.msk [vmem:[%s5217 + $0x31] sm:$0xff] %vm5074, %v7016
        %7445 = vst.msk [vmem:[%s5217 + $0x39] sm:$0xff] %vm5074, %v7017
        %7446 = vst.msk [vmem:[%s5217 + $0x49] sm:$0xff] %vm5074, %v7018
        %7447 = vst.msk [vmem:[%s5217 + $0x51] sm:$0xff] %vm5074, %v7019
        %7448 = vst.msk [vmem:[%s5217 + $0x61] sm:$0xff] %vm5074, %v7020
        %7449 = vst.msk [vmem:[%s5217 + $0x69] sm:$0xff] %vm5074, %v7021
        %7450 = vst.msk [vmem:[%s5217 + $0x79] sm:$0xff] %vm5074, %v7022
        %7451 = vst.msk [vmem:[%s5217 + $0x81] sm:$0xff] %vm5074, %v7023
        %7452 = vst.msk [vmem:[%s5217 + $0x91] sm:$0xff] %vm5074, %v7024
        %7453 = vst.msk [vmem:[%s5217 + $0x99] sm:$0xff] %vm5074, %v7025
        %7454 = vst.msk [vmem:[%s5217 + $0xa9] sm:$0xff] %vm5074, %v7026
        %7455 = vst.msk [vmem:[%s5217 + $0xb1] sm:$0xff] %vm5074, %v7027
        %7456 = vst.msk [vmem:[%s5217 + $0xc1] sm:$0xff] %vm5074, %v7028
        %7457 = vst.msk [vmem:[%s5217 + $0xc9] sm:$0xff] %vm5074, %v7029
        %7458 = vst.msk [vmem:[%s5217 + $0xd9] sm:$0xff] %vm5074, %v7030
        %7459 = vst.msk [vmem:[%s5217 + $0xe1] sm:$0xff] %vm5074, %v7031
        %7460 = vst.msk [vmem:[%s5217 + $0xf1] sm:$0xff] %vm5074, %v7032
        %7461 = vst.msk [vmem:[%s5217 + $0xf9] sm:$0xff] %vm5074, %v7033
        %7462 = vst.msk [vmem:[%s5217 + $0x109] sm:$0xff] %vm5074, %v7034
        %7463 = vst.msk [vmem:[%s5217 + $0x111] sm:$0xff] %vm5074, %v7035
        %7464 = vst.msk [vmem:[%s5217 + $0x121] sm:$0xff] %vm5074, %v7036
        %7465 = vst.msk [vmem:[%s5217 + $0x129] sm:$0xff] %vm5074, %v7037
        %7466 = vst.msk [vmem:[%s5217 + $0x139] sm:$0xff] %vm5074, %v7038
        %7467 = vst.msk [vmem:[%s5217 + $0x141] sm:$0xff] %vm5074, %v7039
        %7468 = vst.msk [vmem:[%s5217 + $0x151] sm:$0xff] %vm5074, %v7040
        %7469 = vst.msk [vmem:[%s5217 + $0x159] sm:$0xff] %vm5074, %v7041
        %7470 = vst.msk [vmem:[%s5217 + $0x169] sm:$0xff] %vm5074, %v7042
        %7471 = vst.msk [vmem:[%s5217 + $0x171] sm:$0xff] %vm5074, %v7043
        %v7472 = vld [vmem:[#allocation4] sm:$0xff]
        %v7473 = vld [vmem:[#allocation4 + $0x8] sm:$0xff]
        %v7474 = vld [vmem:[#allocation4 + $0x18] sm:$0xff]
        %v7475 = vld [vmem:[#allocation4 + $0x20] sm:$0xff]
        %v7476 = vld [vmem:[#allocation4 + $0x30] sm:$0xff]
        %v7477 = vld [vmem:[#allocation4 + $0x38] sm:$0xff]
        %v7478 = vld [vmem:[#allocation4 + $0x48] sm:$0xff]
        %v7479 = vld [vmem:[#allocation4 + $0x50] sm:$0xff]
        %v7480 = vld [vmem:[#allocation4 + $0x60] sm:$0xff]
        %v7481 = vld [vmem:[#allocation4 + $0x68] sm:$0xff]
        %v7482 = vld [vmem:[#allocation4 + $0x78] sm:$0xff]
        %v7483 = vld [vmem:[#allocation4 + $0x80] sm:$0xff]
        %v7484 = vld [vmem:[#allocation4 + $0x90] sm:$0xff]
        %v7485 = vld [vmem:[#allocation4 + $0x98] sm:$0xff]
        %v7486 = vld [vmem:[#allocation4 + $0xa8] sm:$0xff]
        %v7487 = vld [vmem:[#allocation4 + $0xb0] sm:$0xff]
        %v7488 = vld [vmem:[#allocation4 + $0xc0] sm:$0xff]
        %v7489 = vld [vmem:[#allocation4 + $0xc8] sm:$0xff]
        %v7490 = vld [vmem:[#allocation4 + $0xd8] sm:$0xff]
        %v7491 = vld [vmem:[#allocation4 + $0xe0] sm:$0xff]
        %v7492 = vld [vmem:[#allocation4 + $0xf0] sm:$0xff]
        %v7493 = vld [vmem:[#allocation4 + $0xf8] sm:$0xff]
        %v7494 = vld [vmem:[#allocation4 + $0x108] sm:$0xff]
        %v7495 = vld [vmem:[#allocation4 + $0x110] sm:$0xff]
        %v7496 = vld [vmem:[#allocation4 + $0x120] sm:$0xff]
        %v7497 = vld [vmem:[#allocation4 + $0x128] sm:$0xff]
        %v7498 = vld [vmem:[#allocation4 + $0x138] sm:$0xff]
        %v7499 = vld [vmem:[#allocation4 + $0x140] sm:$0xff]
        %v7500 = vld [vmem:[#allocation4 + $0x150] sm:$0xff]
        %v7501 = vld [vmem:[#allocation4 + $0x158] sm:$0xff]
        %v7502 = vld [vmem:[#allocation4 + $0x168] sm:$0xff]
        %v7503 = vld [vmem:[#allocation4 + $0x170] sm:$0xff]
        %v7504 = vld [vmem:[#allocation4 + $0x180] sm:$0xff]
        %v7505 = vld [vmem:[#allocation4 + $0x188] sm:$0xff]
        %v7506 = vld [vmem:[#allocation4 + $0x198] sm:$0xff]
        %v7507 = vld [vmem:[#allocation4 + $0x1a0] sm:$0xff]
        %v7508 = vld [vmem:[#allocation4 + $0x1] sm:$0xff]
        %v7509 = vld [vmem:[#allocation4 + $0x9] sm:$0xff]
        %v7510 = vld [vmem:[#allocation4 + $0x19] sm:$0xff]
        %v7511 = vld [vmem:[#allocation4 + $0x21] sm:$0xff]
        %v7512 = vld [vmem:[#allocation4 + $0x31] sm:$0xff]
        %v7513 = vld [vmem:[#allocation4 + $0x39] sm:$0xff]
        %v7514 = vld [vmem:[#allocation4 + $0x49] sm:$0xff]
        %v7515 = vld [vmem:[#allocation4 + $0x51] sm:$0xff]
        %v7516 = vld [vmem:[#allocation4 + $0x61] sm:$0xff]
        %v7517 = vld [vmem:[#allocation4 + $0x69] sm:$0xff]
        %v7518 = vld [vmem:[#allocation4 + $0x79] sm:$0xff]
        %v7519 = vld [vmem:[#allocation4 + $0x81] sm:$0xff]
        %v7520 = vld [vmem:[#allocation4 + $0x91] sm:$0xff]
        %v7521 = vld [vmem:[#allocation4 + $0x99] sm:$0xff]
        %v7522 = vld [vmem:[#allocation4 + $0xa9] sm:$0xff]
        %v7523 = vld [vmem:[#allocation4 + $0xb1] sm:$0xff]
        %v7524 = vld [vmem:[#allocation4 + $0xc1] sm:$0xff]
        %v7525 = vld [vmem:[#allocation4 + $0xc9] sm:$0xff]
        %v7526 = vld [vmem:[#allocation4 + $0xd9] sm:$0xff]
        %v7527 = vld [vmem:[#allocation4 + $0xe1] sm:$0xff]
        %v7528 = vld [vmem:[#allocation4 + $0xf1] sm:$0xff]
        %v7529 = vld [vmem:[#allocation4 + $0xf9] sm:$0xff]
        %v7530 = vld [vmem:[#allocation4 + $0x109] sm:$0xff]
        %v7531 = vld [vmem:[#allocation4 + $0x111] sm:$0xff]
        %v7532 = vld [vmem:[#allocation4 + $0x121] sm:$0xff]
        %v7533 = vld [vmem:[#allocation4 + $0x129] sm:$0xff]
        %v7534 = vld [vmem:[#allocation4 + $0x139] sm:$0xff]
        %v7535 = vld [vmem:[#allocation4 + $0x141] sm:$0xff]
        %v7536 = vld [vmem:[#allocation4 + $0x151] sm:$0xff]
        %v7537 = vld [vmem:[#allocation4 + $0x159] sm:$0xff]
        %v7538 = vld [vmem:[#allocation4 + $0x169] sm:$0xff]
        %v7539 = vld [vmem:[#allocation4 + $0x171] sm:$0xff]
        %v7540 = vld [vmem:[#allocation4 + $0x181] sm:$0xff]
        %v7541 = vld [vmem:[#allocation4 + $0x189] sm:$0xff]
        %v7542 = vld [vmem:[#allocation4 + $0x199] sm:$0xff]
        %v7543 = vld [vmem:[#allocation4 + $0x1a1] sm:$0xff]
        %v7544 = vadd.f32 %v7472, %v7508
        %v7545 = vadd.f32 %v7473, %v7509
        %v7546 = vadd.f32 %v7474, %v7510
        %v7547 = vadd.f32 %v7475, %v7511
        %v7548 = vadd.f32 %v7476, %v7512
        %v7549 = vadd.f32 %v7477, %v7513
        %v7550 = vadd.f32 %v7478, %v7514
        %v7551 = vadd.f32 %v7479, %v7515
        %v7552 = vadd.f32 %v7480, %v7516
        %v7553 = vadd.f32 %v7481, %v7517
        %v7554 = vadd.f32 %v7482, %v7518
        %v7555 = vadd.f32 %v7483, %v7519
        %v7556 = vadd.f32 %v7484, %v7520
        %v7557 = vadd.f32 %v7485, %v7521
        %v7558 = vadd.f32 %v7486, %v7522
        %v7559 = vadd.f32 %v7487, %v7523
        %v7560 = vadd.f32 %v7488, %v7524
        %v7561 = vadd.f32 %v7489, %v7525
        %v7562 = vadd.f32 %v7490, %v7526
        %v7563 = vadd.f32 %v7491, %v7527
        %v7564 = vadd.f32 %v7492, %v7528
        %v7565 = vadd.f32 %v7493, %v7529
        %v7566 = vadd.f32 %v7494, %v7530
        %v7567 = vadd.f32 %v7495, %v7531
        %v7568 = vadd.f32 %v7496, %v7532
        %v7569 = vadd.f32 %v7497, %v7533
        %v7570 = vadd.f32 %v7498, %v7534
        %v7571 = vadd.f32 %v7499, %v7535
        %v7572 = vadd.f32 %v7500, %v7536
        %v7573 = vadd.f32 %v7501, %v7537
        %v7574 = vadd.f32 %v7502, %v7538
        %v7575 = vadd.f32 %v7503, %v7539
        %v7576 = vadd.f32 %v7504, %v7540
        %v7577 = vadd.f32 %v7505, %v7541
        %v7578 = vadd.f32 %v7506, %v7542
        %v7579 = vadd.f32 %v7507, %v7543
        %v7580 = vld [vmem:[#allocation4 + $0x2] sm:$0xff]
        %v7581 = vld [vmem:[#allocation4 + $0xa] sm:$0xff]
        %v7582 = vld [vmem:[#allocation4 + $0x1a] sm:$0xff]
        %v7583 = vld [vmem:[#allocation4 + $0x22] sm:$0xff]
        %v7584 = vld [vmem:[#allocation4 + $0x32] sm:$0xff]
        %v7585 = vld [vmem:[#allocation4 + $0x3a] sm:$0xff]
        %v7586 = vld [vmem:[#allocation4 + $0x4a] sm:$0xff]
        %v7587 = vld [vmem:[#allocation4 + $0x52] sm:$0xff]
        %v7588 = vld [vmem:[#allocation4 + $0x62] sm:$0xff]
        %v7589 = vld [vmem:[#allocation4 + $0x6a] sm:$0xff]
        %v7590 = vld [vmem:[#allocation4 + $0x7a] sm:$0xff]
        %v7591 = vld [vmem:[#allocation4 + $0x82] sm:$0xff]
        %v7592 = vld [vmem:[#allocation4 + $0x92] sm:$0xff]
        %v7593 = vld [vmem:[#allocation4 + $0x9a] sm:$0xff]
        %v7594 = vld [vmem:[#allocation4 + $0xaa] sm:$0xff]
        %v7595 = vld [vmem:[#allocation4 + $0xb2] sm:$0xff]
        %v7596 = vld [vmem:[#allocation4 + $0xc2] sm:$0xff]
        %v7597 = vld [vmem:[#allocation4 + $0xca] sm:$0xff]
        %v7598 = vld [vmem:[#allocation4 + $0xda] sm:$0xff]
        %v7599 = vld [vmem:[#allocation4 + $0xe2] sm:$0xff]
        %v7600 = vld [vmem:[#allocation4 + $0xf2] sm:$0xff]
        %v7601 = vld [vmem:[#allocation4 + $0xfa] sm:$0xff]
        %v7602 = vld [vmem:[#allocation4 + $0x10a] sm:$0xff]
        %v7603 = vld [vmem:[#allocation4 + $0x112] sm:$0xff]
        %v7604 = vld [vmem:[#allocation4 + $0x122] sm:$0xff]
        %v7605 = vld [vmem:[#allocation4 + $0x12a] sm:$0xff]
        %v7606 = vld [vmem:[#allocation4 + $0x13a] sm:$0xff]
        %v7607 = vld [vmem:[#allocation4 + $0x142] sm:$0xff]
        %v7608 = vld [vmem:[#allocation4 + $0x152] sm:$0xff]
        %v7609 = vld [vmem:[#allocation4 + $0x15a] sm:$0xff]
        %v7610 = vld [vmem:[#allocation4 + $0x16a] sm:$0xff]
        %v7611 = vld [vmem:[#allocation4 + $0x172] sm:$0xff]
        %v7612 = vld [vmem:[#allocation4 + $0x182] sm:$0xff]
        %v7613 = vld [vmem:[#allocation4 + $0x18a] sm:$0xff]
        %v7614 = vld [vmem:[#allocation4 + $0x19a] sm:$0xff]
        %v7615 = vld [vmem:[#allocation4 + $0x1a2] sm:$0xff]
        %v7616 = vadd.f32 %v7544, %v7580
        %v7617 = vadd.f32 %v7545, %v7581
        %v7618 = vadd.f32 %v7546, %v7582
        %v7619 = vadd.f32 %v7547, %v7583
        %v7620 = vadd.f32 %v7548, %v7584
        %v7621 = vadd.f32 %v7549, %v7585
        %v7622 = vadd.f32 %v7550, %v7586
        %v7623 = vadd.f32 %v7551, %v7587
        %v7624 = vadd.f32 %v7552, %v7588
        %v7625 = vadd.f32 %v7553, %v7589
        %v7626 = vadd.f32 %v7554, %v7590
        %v7627 = vadd.f32 %v7555, %v7591
        %v7628 = vadd.f32 %v7556, %v7592
        %v7629 = vadd.f32 %v7557, %v7593
        %v7630 = vadd.f32 %v7558, %v7594
        %v7631 = vadd.f32 %v7559, %v7595
        %v7632 = vadd.f32 %v7560, %v7596
        %v7633 = vadd.f32 %v7561, %v7597
        %v7634 = vadd.f32 %v7562, %v7598
        %v7635 = vadd.f32 %v7563, %v7599
        %v7636 = vadd.f32 %v7564, %v7600
        %v7637 = vadd.f32 %v7565, %v7601
        %v7638 = vadd.f32 %v7566, %v7602
        %v7639 = vadd.f32 %v7567, %v7603
        %v7640 = vadd.f32 %v7568, %v7604
        %v7641 = vadd.f32 %v7569, %v7605
        %v7642 = vadd.f32 %v7570, %v7606
        %v7643 = vadd.f32 %v7571, %v7607
        %v7644 = vadd.f32 %v7572, %v7608
        %v7645 = vadd.f32 %v7573, %v7609
        %v7646 = vadd.f32 %v7574, %v7610
        %v7647 = vadd.f32 %v7575, %v7611
        %v7648 = vadd.f32 %v7576, %v7612
        %v7649 = vadd.f32 %v7577, %v7613
        %v7650 = vadd.f32 %v7578, %v7614
        %v7651 = vadd.f32 %v7579, %v7615
        %v7652 = vadd.f32 %v7616, %v7618
        %v7653 = vadd.f32 %v7617, %v7619
        %v7654 = vadd.f32 %v7618, %v7620
        %v7655 = vadd.f32 %v7619, %v7621
        %v7656 = vadd.f32 %v7620, %v7622
        %v7657 = vadd.f32 %v7621, %v7623
        %v7658 = vadd.f32 %v7622, %v7624
        %v7659 = vadd.f32 %v7623, %v7625
        %v7660 = vadd.f32 %v7624, %v7626
        %v7661 = vadd.f32 %v7625, %v7627
        %v7662 = vadd.f32 %v7626, %v7628
        %v7663 = vadd.f32 %v7627, %v7629
        %v7664 = vadd.f32 %v7628, %v7630
        %v7665 = vadd.f32 %v7629, %v7631
        %v7666 = vadd.f32 %v7630, %v7632
        %v7667 = vadd.f32 %v7631, %v7633
        %v7668 = vadd.f32 %v7632, %v7634
        %v7669 = vadd.f32 %v7633, %v7635
        %v7670 = vadd.f32 %v7634, %v7636
        %v7671 = vadd.f32 %v7635, %v7637
        %v7672 = vadd.f32 %v7636, %v7638
        %v7673 = vadd.f32 %v7637, %v7639
        %v7674 = vadd.f32 %v7638, %v7640
        %v7675 = vadd.f32 %v7639, %v7641
        %v7676 = vadd.f32 %v7640, %v7642
        %v7677 = vadd.f32 %v7641, %v7643
        %v7678 = vadd.f32 %v7642, %v7644
        %v7679 = vadd.f32 %v7643, %v7645
        %v7680 = vadd.f32 %v7644, %v7646
        %v7681 = vadd.f32 %v7645, %v7647
        %v7682 = vadd.f32 %v7646, %v7648
        %v7683 = vadd.f32 %v7647, %v7649
        %v7684 = vadd.f32 %v7652, %v7620
        %v7685 = vadd.f32 %v7653, %v7621
        %v7686 = vadd.f32 %v7654, %v7622
        %v7687 = vadd.f32 %v7655, %v7623
        %v7688 = vadd.f32 %v7656, %v7624
        %v7689 = vadd.f32 %v7657, %v7625
        %v7690 = vadd.f32 %v7658, %v7626
        %v7691 = vadd.f32 %v7659, %v7627
        %v7692 = vadd.f32 %v7660, %v7628
        %v7693 = vadd.f32 %v7661, %v7629
        %v7694 = vadd.f32 %v7662, %v7630
        %v7695 = vadd.f32 %v7663, %v7631
        %v7696 = vadd.f32 %v7664, %v7632
        %v7697 = vadd.f32 %v7665, %v7633
        %v7698 = vadd.f32 %v7666, %v7634
        %v7699 = vadd.f32 %v7667, %v7635
        %v7700 = vadd.f32 %v7668, %v7636
        %v7701 = vadd.f32 %v7669, %v7637
        %v7702 = vadd.f32 %v7670, %v7638
        %v7703 = vadd.f32 %v7671, %v7639
        %v7704 = vadd.f32 %v7672, %v7640
        %v7705 = vadd.f32 %v7673, %v7641
        %v7706 = vadd.f32 %v7674, %v7642
        %v7707 = vadd.f32 %v7675, %v7643
        %v7708 = vadd.f32 %v7676, %v7644
        %v7709 = vadd.f32 %v7677, %v7645
        %v7710 = vadd.f32 %v7678, %v7646
        %v7711 = vadd.f32 %v7679, %v7647
        %v7712 = vadd.f32 %v7680, %v7648
        %v7713 = vadd.f32 %v7681, %v7649
        %v7714 = vadd.f32 %v7682, %v7650
        %v7715 = vadd.f32 %v7683, %v7651
        %v7716 = vmul.f32 %v7684, %v5497
        %v7717 = vmul.f32 %v7685, %v5502
        %v7718 = vmul.f32 %v7686, %v5507
        %v7719 = vmul.f32 %v7687, %v5512
        %v7720 = vmul.f32 %v7688, %v5517
        %v7721 = vmul.f32 %v7689, %v5522
        %v7722 = vmul.f32 %v7690, %v5527
        %v7723 = vmul.f32 %v7691, %v5532
        %v7724 = vmul.f32 %v7692, %v5537
        %v7725 = vmul.f32 %v7693, %v5542
        %v7726 = vmul.f32 %v7694, %v5547
        %v7727 = vmul.f32 %v7695, %v5552
        %v7728 = vmul.f32 %v7696, %v5557
        %v7729 = vmul.f32 %v7697, %v5562
        %v7730 = vmul.f32 %v7698, %v5567
        %v7731 = vmul.f32 %v7699, %v5572
        %v7732 = vmul.f32 %v7700, %v5577
        %v7733 = vmul.f32 %v7701, %v5582
        %v7734 = vmul.f32 %v7702, %v5587
        %v7735 = vmul.f32 %v7703, %v5592
        %v7736 = vmul.f32 %v7704, %v5597
        %v7737 = vmul.f32 %v7705, %v5602
        %v7738 = vmul.f32 %v7706, %v5607
        %v7739 = vmul.f32 %v7707, %v5612
        %v7740 = vmul.f32 %v7708, %v5617
        %v7741 = vmul.f32 %v7709, %v5622
        %v7742 = vmul.f32 %v7710, %v5627
        %v7743 = vmul.f32 %v7711, %v5632
        %v7744 = vmul.f32 %v7712, %v5637
        %v7745 = vmul.f32 %v7713, %v5642
        %v7746 = vmul.f32 %v7714, %v5647
        %v7747 = vmul.f32 %v7715, %v5652
        %v7748 = vld [vmem:[#allocation5] sm:$0xff]
        %v7749 = vld [vmem:[#allocation5 + $0x8] sm:$0xff]
        %v7750 = vld [vmem:[#allocation5 + $0x18] sm:$0xff]
        %v7751 = vld [vmem:[#allocation5 + $0x20] sm:$0xff]
        %v7752 = vld [vmem:[#allocation5 + $0x30] sm:$0xff]
        %v7753 = vld [vmem:[#allocation5 + $0x38] sm:$0xff]
        %v7754 = vld [vmem:[#allocation5 + $0x48] sm:$0xff]
        %v7755 = vld [vmem:[#allocation5 + $0x50] sm:$0xff]
        %v7756 = vld [vmem:[#allocation5 + $0x60] sm:$0xff]
        %v7757 = vld [vmem:[#allocation5 + $0x68] sm:$0xff]
        %v7758 = vld [vmem:[#allocation5 + $0x78] sm:$0xff]
        %v7759 = vld [vmem:[#allocation5 + $0x80] sm:$0xff]
        %v7760 = vld [vmem:[#allocation5 + $0x90] sm:$0xff]
        %v7761 = vld [vmem:[#allocation5 + $0x98] sm:$0xff]
        %v7762 = vld [vmem:[#allocation5 + $0xa8] sm:$0xff]
        %v7763 = vld [vmem:[#allocation5 + $0xb0] sm:$0xff]
        %v7764 = vld [vmem:[#allocation5 + $0xc0] sm:$0xff]
        %v7765 = vld [vmem:[#allocation5 + $0xc8] sm:$0xff]
        %v7766 = vld [vmem:[#allocation5 + $0xd8] sm:$0xff]
        %v7767 = vld [vmem:[#allocation5 + $0xe0] sm:$0xff]
        %v7768 = vld [vmem:[#allocation5 + $0xf0] sm:$0xff]
        %v7769 = vld [vmem:[#allocation5 + $0xf8] sm:$0xff]
        %v7770 = vld [vmem:[#allocation5 + $0x108] sm:$0xff]
        %v7771 = vld [vmem:[#allocation5 + $0x110] sm:$0xff]
        %v7772 = vld [vmem:[#allocation5 + $0x120] sm:$0xff]
        %v7773 = vld [vmem:[#allocation5 + $0x128] sm:$0xff]
        %v7774 = vld [vmem:[#allocation5 + $0x138] sm:$0xff]
        %v7775 = vld [vmem:[#allocation5 + $0x140] sm:$0xff]
        %v7776 = vld [vmem:[#allocation5 + $0x150] sm:$0xff]
        %v7777 = vld [vmem:[#allocation5 + $0x158] sm:$0xff]
        %v7778 = vld [vmem:[#allocation5 + $0x168] sm:$0xff]
        %v7779 = vld [vmem:[#allocation5 + $0x170] sm:$0xff]
        %v7780 = vld [vmem:[#allocation5 + $0x180] sm:$0xff]
        %v7781 = vld [vmem:[#allocation5 + $0x188] sm:$0xff]
        %v7782 = vld [vmem:[#allocation5 + $0x198] sm:$0xff]
        %v7783 = vld [vmem:[#allocation5 + $0x1a0] sm:$0xff]
        %v7784 = vld [vmem:[#allocation5 + $0x1] sm:$0xff]
        %v7785 = vld [vmem:[#allocation5 + $0x9] sm:$0xff]
        %v7786 = vld [vmem:[#allocation5 + $0x19] sm:$0xff]
        %v7787 = vld [vmem:[#allocation5 + $0x21] sm:$0xff]
        %v7788 = vld [vmem:[#allocation5 + $0x31] sm:$0xff]
        %v7789 = vld [vmem:[#allocation5 + $0x39] sm:$0xff]
        %v7790 = vld [vmem:[#allocation5 + $0x49] sm:$0xff]
        %v7791 = vld [vmem:[#allocation5 + $0x51] sm:$0xff]
        %v7792 = vld [vmem:[#allocation5 + $0x61] sm:$0xff]
        %v7793 = vld [vmem:[#allocation5 + $0x69] sm:$0xff]
        %v7794 = vld [vmem:[#allocation5 + $0x79] sm:$0xff]
        %v7795 = vld [vmem:[#allocation5 + $0x81] sm:$0xff]
        %v7796 = vld [vmem:[#allocation5 + $0x91] sm:$0xff]
        %v7797 = vld [vmem:[#allocation5 + $0x99] sm:$0xff]
        %v7798 = vld [vmem:[#allocation5 + $0xa9] sm:$0xff]
        %v7799 = vld [vmem:[#allocation5 + $0xb1] sm:$0xff]
        %v7800 = vld [vmem:[#allocation5 + $0xc1] sm:$0xff]
        %v7801 = vld [vmem:[#allocation5 + $0xc9] sm:$0xff]
        %v7802 = vld [vmem:[#allocation5 + $0xd9] sm:$0xff]
        %v7803 = vld [vmem:[#allocation5 + $0xe1] sm:$0xff]
        %v7804 = vld [vmem:[#allocation5 + $0xf1] sm:$0xff]
        %v7805 = vld [vmem:[#allocation5 + $0xf9] sm:$0xff]
        %v7806 = vld [vmem:[#allocation5 + $0x109] sm:$0xff]
        %v7807 = vld [vmem:[#allocation5 + $0x111] sm:$0xff]
        %v7808 = vld [vmem:[#allocation5 + $0x121] sm:$0xff]
        %v7809 = vld [vmem:[#allocation5 + $0x129] sm:$0xff]
        %v7810 = vld [vmem:[#allocation5 + $0x139] sm:$0xff]
        %v7811 = vld [vmem:[#allocation5 + $0x141] sm:$0xff]
        %v7812 = vld [vmem:[#allocation5 + $0x151] sm:$0xff]
        %v7813 = vld [vmem:[#allocation5 + $0x159] sm:$0xff]
        %v7814 = vld [vmem:[#allocation5 + $0x169] sm:$0xff]
        %v7815 = vld [vmem:[#allocation5 + $0x171] sm:$0xff]
        %v7816 = vld [vmem:[#allocation5 + $0x181] sm:$0xff]
        %v7817 = vld [vmem:[#allocation5 + $0x189] sm:$0xff]
        %v7818 = vld [vmem:[#allocation5 + $0x199] sm:$0xff]
        %v7819 = vld [vmem:[#allocation5 + $0x1a1] sm:$0xff]
        %v7820 = vmax.f32 %v7748, %v7784
        %v7821 = vmax.f32 %v7749, %v7785
        %v7822 = vmax.f32 %v7750, %v7786
        %v7823 = vmax.f32 %v7751, %v7787
        %v7824 = vmax.f32 %v7752, %v7788
        %v7825 = vmax.f32 %v7753, %v7789
        %v7826 = vmax.f32 %v7754, %v7790
        %v7827 = vmax.f32 %v7755, %v7791
        %v7828 = vmax.f32 %v7756, %v7792
        %v7829 = vmax.f32 %v7757, %v7793
        %v7830 = vmax.f32 %v7758, %v7794
        %v7831 = vmax.f32 %v7759, %v7795
        %v7832 = vmax.f32 %v7760, %v7796
        %v7833 = vmax.f32 %v7761, %v7797
        %v7834 = vmax.f32 %v7762, %v7798
        %v7835 = vmax.f32 %v7763, %v7799
        %v7836 = vmax.f32 %v7764, %v7800
        %v7837 = vmax.f32 %v7765, %v7801
        %v7838 = vmax.f32 %v7766, %v7802
        %v7839 = vmax.f32 %v7767, %v7803
        %v7840 = vmax.f32 %v7768, %v7804
        %v7841 = vmax.f32 %v7769, %v7805
        %v7842 = vmax.f32 %v7770, %v7806
        %v7843 = vmax.f32 %v7771, %v7807
        %v7844 = vmax.f32 %v7772, %v7808
        %v7845 = vmax.f32 %v7773, %v7809
        %v7846 = vmax.f32 %v7774, %v7810
        %v7847 = vmax.f32 %v7775, %v7811
        %v7848 = vmax.f32 %v7776, %v7812
        %v7849 = vmax.f32 %v7777, %v7813
        %v7850 = vmax.f32 %v7778, %v7814
        %v7851 = vmax.f32 %v7779, %v7815
        %v7852 = vmax.f32 %v7780, %v7816
        %v7853 = vmax.f32 %v7781, %v7817
        %v7854 = vmax.f32 %v7782, %v7818
        %v7855 = vmax.f32 %v7783, %v7819
        %v7856 = vld [vmem:[#allocation5 + $0x2] sm:$0xff]
        %v7857 = vld [vmem:[#allocation5 + $0xa] sm:$0xff]
        %v7858 = vld [vmem:[#allocation5 + $0x1a] sm:$0xff]
        %v7859 = vld [vmem:[#allocation5 + $0x22] sm:$0xff]
        %v7860 = vld [vmem:[#allocation5 + $0x32] sm:$0xff]
        %v7861 = vld [vmem:[#allocation5 + $0x3a] sm:$0xff]
        %v7862 = vld [vmem:[#allocation5 + $0x4a] sm:$0xff]
        %v7863 = vld [vmem:[#allocation5 + $0x52] sm:$0xff]
        %v7864 = vld [vmem:[#allocation5 + $0x62] sm:$0xff]
        %v7865 = vld [vmem:[#allocation5 + $0x6a] sm:$0xff]
        %v7866 = vld [vmem:[#allocation5 + $0x7a] sm:$0xff]
        %v7867 = vld [vmem:[#allocation5 + $0x82] sm:$0xff]
        %v7868 = vld [vmem:[#allocation5 + $0x92] sm:$0xff]
        %v7869 = vld [vmem:[#allocation5 + $0x9a] sm:$0xff]
        %v7870 = vld [vmem:[#allocation5 + $0xaa] sm:$0xff]
        %v7871 = vld [vmem:[#allocation5 + $0xb2] sm:$0xff]
        %v7872 = vld [vmem:[#allocation5 + $0xc2] sm:$0xff]
        %v7873 = vld [vmem:[#allocation5 + $0xca] sm:$0xff]
        %v7874 = vld [vmem:[#allocation5 + $0xda] sm:$0xff]
        %v7875 = vld [vmem:[#allocation5 + $0xe2] sm:$0xff]
        %v7876 = vld [vmem:[#allocation5 + $0xf2] sm:$0xff]
        %v7877 = vld [vmem:[#allocation5 + $0xfa] sm:$0xff]
        %v7878 = vld [vmem:[#allocation5 + $0x10a] sm:$0xff]
        %v7879 = vld [vmem:[#allocation5 + $0x112] sm:$0xff]
        %v7880 = vld [vmem:[#allocation5 + $0x122] sm:$0xff]
        %v7881 = vld [vmem:[#allocation5 + $0x12a] sm:$0xff]
        %v7882 = vld [vmem:[#allocation5 + $0x13a] sm:$0xff]
        %v7883 = vld [vmem:[#allocation5 + $0x142] sm:$0xff]
        %v7884 = vld [vmem:[#allocation5 + $0x152] sm:$0xff]
        %v7885 = vld [vmem:[#allocation5 + $0x15a] sm:$0xff]
        %v7886 = vld [vmem:[#allocation5 + $0x16a] sm:$0xff]
        %v7887 = vld [vmem:[#allocation5 + $0x172] sm:$0xff]
        %v7888 = vld [vmem:[#allocation5 + $0x182] sm:$0xff]
        %v7889 = vld [vmem:[#allocation5 + $0x18a] sm:$0xff]
        %v7890 = vld [vmem:[#allocation5 + $0x19a] sm:$0xff]
        %v7891 = vld [vmem:[#allocation5 + $0x1a2] sm:$0xff]
        %v7892 = vmax.f32 %v7820, %v7856
        %v7893 = vmax.f32 %v7821, %v7857
        %v7894 = vmax.f32 %v7822, %v7858
        %v7895 = vmax.f32 %v7823, %v7859
        %v7896 = vmax.f32 %v7824, %v7860
        %v7897 = vmax.f32 %v7825, %v7861
        %v7898 = vmax.f32 %v7826, %v7862
        %v7899 = vmax.f32 %v7827, %v7863
        %v7900 = vmax.f32 %v7828, %v7864
        %v7901 = vmax.f32 %v7829, %v7865
        %v7902 = vmax.f32 %v7830, %v7866
        %v7903 = vmax.f32 %v7831, %v7867
        %v7904 = vmax.f32 %v7832, %v7868
        %v7905 = vmax.f32 %v7833, %v7869
        %v7906 = vmax.f32 %v7834, %v7870
        %v7907 = vmax.f32 %v7835, %v7871
        %v7908 = vmax.f32 %v7836, %v7872
        %v7909 = vmax.f32 %v7837, %v7873
        %v7910 = vmax.f32 %v7838, %v7874
        %v7911 = vmax.f32 %v7839, %v7875
        %v7912 = vmax.f32 %v7840, %v7876
        %v7913 = vmax.f32 %v7841, %v7877
        %v7914 = vmax.f32 %v7842, %v7878
        %v7915 = vmax.f32 %v7843, %v7879
        %v7916 = vmax.f32 %v7844, %v7880
        %v7917 = vmax.f32 %v7845, %v7881
        %v7918 = vmax.f32 %v7846, %v7882
        %v7919 = vmax.f32 %v7847, %v7883
        %v7920 = vmax.f32 %v7848, %v7884
        %v7921 = vmax.f32 %v7849, %v7885
        %v7922 = vmax.f32 %v7850, %v7886
        %v7923 = vmax.f32 %v7851, %v7887
        %v7924 = vmax.f32 %v7852, %v7888
        %v7925 = vmax.f32 %v7853, %v7889
        %v7926 = vmax.f32 %v7854, %v7890
        %v7927 = vmax.f32 %v7855, %v7891
        %v7928 = vmax.f32 %v7892, %v7894
        %v7929 = vmax.f32 %v7893, %v7895
        %v7930 = vmax.f32 %v7894, %v7896
        %v7931 = vmax.f32 %v7895, %v7897
        %v7932 = vmax.f32 %v7896, %v7898
        %v7933 = vmax.f32 %v7897, %v7899
        %v7934 = vmax.f32 %v7898, %v7900
        %v7935 = vmax.f32 %v7899, %v7901
        %v7936 = vmax.f32 %v7900, %v7902
        %v7937 = vmax.f32 %v7901, %v7903
        %v7938 = vmax.f32 %v7902, %v7904
        %v7939 = vmax.f32 %v7903, %v7905
        %v7940 = vmax.f32 %v7904, %v7906
        %v7941 = vmax.f32 %v7905, %v7907
        %v7942 = vmax.f32 %v7906, %v7908
        %v7943 = vmax.f32 %v7907, %v7909
        %v7944 = vmax.f32 %v7908, %v7910
        %v7945 = vmax.f32 %v7909, %v7911
        %v7946 = vmax.f32 %v7910, %v7912
        %v7947 = vmax.f32 %v7911, %v7913
        %v7948 = vmax.f32 %v7912, %v7914
        %v7949 = vmax.f32 %v7913, %v7915
        %v7950 = vmax.f32 %v7914, %v7916
        %v7951 = vmax.f32 %v7915, %v7917
        %v7952 = vmax.f32 %v7916, %v7918
        %v7953 = vmax.f32 %v7917, %v7919
        %v7954 = vmax.f32 %v7918, %v7920
        %v7955 = vmax.f32 %v7919, %v7921
        %v7956 = vmax.f32 %v7920, %v7922
        %v7957 = vmax.f32 %v7921, %v7923
        %v7958 = vmax.f32 %v7922, %v7924
        %v7959 = vmax.f32 %v7923, %v7925
        %v7960 = vmax.f32 %v7928, %v7896
        %v7961 = vmax.f32 %v7929, %v7897
        %v7962 = vmax.f32 %v7930, %v7898
        %v7963 = vmax.f32 %v7931, %v7899
        %v7964 = vmax.f32 %v7932, %v7900
        %v7965 = vmax.f32 %v7933, %v7901
        %v7966 = vmax.f32 %v7934, %v7902
        %v7967 = vmax.f32 %v7935, %v7903
        %v7968 = vmax.f32 %v7936, %v7904
        %v7969 = vmax.f32 %v7937, %v7905
        %v7970 = vmax.f32 %v7938, %v7906
        %v7971 = vmax.f32 %v7939, %v7907
        %v7972 = vmax.f32 %v7940, %v7908
        %v7973 = vmax.f32 %v7941, %v7909
        %v7974 = vmax.f32 %v7942, %v7910
        %v7975 = vmax.f32 %v7943, %v7911
        %v7976 = vmax.f32 %v7944, %v7912
        %v7977 = vmax.f32 %v7945, %v7913
        %v7978 = vmax.f32 %v7946, %v7914
        %v7979 = vmax.f32 %v7947, %v7915
        %v7980 = vmax.f32 %v7948, %v7916
        %v7981 = vmax.f32 %v7949, %v7917
        %v7982 = vmax.f32 %v7950, %v7918
        %v7983 = vmax.f32 %v7951, %v7919
        %v7984 = vmax.f32 %v7952, %v7920
        %v7985 = vmax.f32 %v7953, %v7921
        %v7986 = vmax.f32 %v7954, %v7922
        %v7987 = vmax.f32 %v7955, %v7923
        %v7988 = vmax.f32 %v7956, %v7924
        %v7989 = vmax.f32 %v7957, %v7925
        %v7990 = vmax.f32 %v7958, %v7926
        %v7991 = vmax.f32 %v7959, %v7927
        %s7992 = sld [smem:[#allocation6 + $0x280]]
        %s7993 = sld [smem:[#allocation6 + $0x281]]
        %s7994 = sld [smem:[#allocation6 + $0x282]]
        %v7995 = vstv %s7992
        %v7996 = vmul.f32 %v7995, %v7012
        %v7997 = vmul.f32 %v7995, %v7013
        %v7998 = vmul.f32 %v7995, %v7014
        %v7999 = vmul.f32 %v7995, %v7015
        %v8000 = vmul.f32 %v7995, %v7016
        %v8001 = vmul.f32 %v7995, %v7017
        %v8002 = vmul.f32 %v7995, %v7018
        %v8003 = vmul.f32 %v7995, %v7019
        %v8004 = vmul.f32 %v7995, %v7020
        %v8005 = vmul.f32 %v7995, %v7021
        %v8006 = vmul.f32 %v7995, %v7022
        %v8007 = vmul.f32 %v7995, %v7023
        %v8008 = vmul.f32 %v7995, %v7024
        %v8009 = vmul.f32 %v7995, %v7025
        %v8010 = vmul.f32 %v7995, %v7026
        %v8011 = vmul.f32 %v7995, %v7027
        %v8012 = vmul.f32 %v7995, %v7028
        %v8013 = vmul.f32 %v7995, %v7029
        %v8014 = vmul.f32 %v7995, %v7030
        %v8015 = vmul.f32 %v7995, %v7031
        %v8016 = vmul.f32 %v7995, %v7032
        %v8017 = vmul.f32 %v7995, %v7033
        %v8018 = vmul.f32 %v7995, %v7034
        %v8019 = vmul.f32 %v7995, %v7035
        %v8020 = vmul.f32 %v7995, %v7036
        %v8021 = vmul.f32 %v7995, %v7037
        %v8022 = vmul.f32 %v7995, %v7038
        %v8023 = vmul.f32 %v7995, %v7039
        %v8024 = vmul.f32 %v7995, %v7040
        %v8025 = vmul.f32 %v7995, %v7041
        %v8026 = vmul.f32 %v7995, %v7042
        %v8027 = vmul.f32 %v7995, %v7043
        %v8028 = vstv %s7993
        %v8029 = vmul.f32 %v8028, %v7716
        %v8030 = vmul.f32 %v8028, %v7717
        %v8031 = vmul.f32 %v8028, %v7718
        %v8032 = vmul.f32 %v8028, %v7719
        %v8033 = vmul.f32 %v8028, %v7720
        %v8034 = vmul.f32 %v8028, %v7721
        %v8035 = vmul.f32 %v8028, %v7722
        %v8036 = vmul.f32 %v8028, %v7723
        %v8037 = vmul.f32 %v8028, %v7724
        %v8038 = vmul.f32 %v8028, %v7725
        %v8039 = vmul.f32 %v8028, %v7726
        %v8040 = vmul.f32 %v8028, %v7727
        %v8041 = vmul.f32 %v8028, %v7728
        %v8042 = vmul.f32 %v8028, %v7729
        %v8043 = vmul.f32 %v8028, %v7730
        %v8044 = vmul.f32 %v8028, %v7731
        %v8045 = vmul.f32 %v8028, %v7732
        %v8046 = vmul.f32 %v8028, %v7733
        %v8047 = vmul.f32 %v8028, %v7734
        %v8048 = vmul.f32 %v8028, %v7735
        %v8049 = vmul.f32 %v8028, %v7736
        %v8050 = vmul.f32 %v8028, %v7737
        %v8051 = vmul.f32 %v8028, %v7738
        %v8052 = vmul.f32 %v8028, %v7739
        %v8053 = vmul.f32 %v8028, %v7740
        %v8054 = vmul.f32 %v8028, %v7741
        %v8055 = vmul.f32 %v8028, %v7742
        %v8056 = vmul.f32 %v8028, %v7743
        %v8057 = vmul.f32 %v8028, %v7744
        %v8058 = vmul.f32 %v8028, %v7745
        %v8059 = vmul.f32 %v8028, %v7746
        %v8060 = vmul.f32 %v8028, %v7747
        %v8061 = vadd.f32 %v7996, %v8029
        %v8062 = vadd.f32 %v7997, %v8030
        %v8063 = vadd.f32 %v7998, %v8031
        %v8064 = vadd.f32 %v7999, %v8032
        %v8065 = vadd.f32 %v8000, %v8033
        %v8066 = vadd.f32 %v8001, %v8034
        %v8067 = vadd.f32 %v8002, %v8035
        %v8068 = vadd.f32 %v8003, %v8036
        %v8069 = vadd.f32 %v8004, %v8037
        %v8070 = vadd.f32 %v8005, %v8038
        %v8071 = vadd.f32 %v8006, %v8039
        %v8072 = vadd.f32 %v8007, %v8040
        %v8073 = vadd.f32 %v8008, %v8041
        %v8074 = vadd.f32 %v8009, %v8042
        %v8075 = vadd.f32 %v8010, %v8043
        %v8076 = vadd.f32 %v8011, %v8044
        %v8077 = vadd.f32 %v8012, %v8045
        %v8078 = vadd.f32 %v8013, %v8046
        %v8079 = vadd.f32 %v8014, %v8047
        %v8080 = vadd.f32 %v8015, %v8048
        %v8081 = vadd.f32 %v8016, %v8049
        %v8082 = vadd.f32 %v8017, %v8050
        %v8083 = vadd.f32 %v8018, %v8051
        %v8084 = vadd.f32 %v8019, %v8052
        %v8085 = vadd.f32 %v8020, %v8053
        %v8086 = vadd.f32 %v8021, %v8054
        %v8087 = vadd.f32 %v8022, %v8055
        %v8088 = vadd.f32 %v8023, %v8056
        %v8089 = vadd.f32 %v8024, %v8057
        %v8090 = vadd.f32 %v8025, %v8058
        %v8091 = vadd.f32 %v8026, %v8059
        %v8092 = vadd.f32 %v8027, %v8060
        %v8093 = vstv %s7994
        %v8094 = vmul.f32 %v8093, %v7960
        %v8095 = vmul.f32 %v8093, %v7961
        %v8096 = vmul.f32 %v8093, %v7962
        %v8097 = vmul.f32 %v8093, %v7963
        %v8098 = vmul.f32 %v8093, %v7964
        %v8099 = vmul.f32 %v8093, %v7965
        %v8100 = vmul.f32 %v8093, %v7966
        %v8101 = vmul.f32 %v8093, %v7967
        %v8102 = vmul.f32 %v8093, %v7968
        %v8103 = vmul.f32 %v8093, %v7969
        %v8104 = vmul.f32 %v8093, %v7970
        %v8105 = vmul.f32 %v8093, %v7971
        %v8106 = vmul.f32 %v8093, %v7972
        %v8107 = vmul.f32 %v8093, %v7973
        %v8108 = vmul.f32 %v8093, %v7974
        %v8109 = vmul.f32 %v8093, %v7975
        %v8110 = vmul.f32 %v8093, %v7976
        %v8111 = vmul.f32 %v8093, %v7977
        %v8112 = vmul.f32 %v8093, %v7978
        %v8113 = vmul.f32 %v8093, %v7979
        %v8114 = vmul.f32 %v8093, %v7980
        %v8115 = vmul.f32 %v8093, %v7981
        %v8116 = vmul.f32 %v8093, %v7982
        %v8117 = vmul.f32 %v8093, %v7983
        %v8118 = vmul.f32 %v8093, %v7984
        %v8119 = vmul.f32 %v8093, %v7985
        %v8120 = vmul.f32 %v8093, %v7986
        %v8121 = vmul.f32 %v8093, %v7987
        %v8122 = vmul.f32 %v8093, %v7988
        %v8123 = vmul.f32 %v8093, %v7989
        %v8124 = vmul.f32 %v8093, %v7990
        %v8125 = vmul.f32 %v8093, %v7991
        %v8126 = vadd.f32 %v8061, %v8094
        %v8127 = vadd.f32 %v8062, %v8095
        %v8128 = vadd.f32 %v8063, %v8096
        %v8129 = vadd.f32 %v8064, %v8097
        %v8130 = vadd.f32 %v8065, %v8098
        %v8131 = vadd.f32 %v8066, %v8099
        %v8132 = vadd.f32 %v8067, %v8100
        %v8133 = vadd.f32 %v8068, %v8101
        %v8134 = vadd.f32 %v8069, %v8102
        %v8135 = vadd.f32 %v8070, %v8103
        %v8136 = vadd.f32 %v8071, %v8104
        %v8137 = vadd.f32 %v8072, %v8105
        %v8138 = vadd.f32 %v8073, %v8106
        %v8139 = vadd.f32 %v8074, %v8107
        %v8140 = vadd.f32 %v8075, %v8108
        %v8141 = vadd.f32 %v8076, %v8109
        %v8142 = vadd.f32 %v8077, %v8110
        %v8143 = vadd.f32 %v8078, %v8111
        %v8144 = vadd.f32 %v8079, %v8112
        %v8145 = vadd.f32 %v8080, %v8113
        %v8146 = vadd.f32 %v8081, %v8114
        %v8147 = vadd.f32 %v8082, %v8115
        %v8148 = vadd.f32 %v8083, %v8116
        %v8149 = vadd.f32 %v8084, %v8117
        %v8150 = vadd.f32 %v8085, %v8118
        %v8151 = vadd.f32 %v8086, %v8119
        %v8152 = vadd.f32 %v8087, %v8120
        %v8153 = vadd.f32 %v8088, %v8121
        %v8154 = vadd.f32 %v8089, %v8122
        %v8155 = vadd.f32 %v8090, %v8123
        %v8156 = vadd.f32 %v8091, %v8124
        %v8157 = vadd.f32 %v8092, %v8125
        %v8158 = vadd.f32 %v7376, %v8126
        %v8159 = vadd.f32 %v7377, %v8127
        %v8160 = vadd.f32 %v7378, %v8128
        %v8161 = vadd.f32 %v7379, %v8129
        %v8162 = vadd.f32 %v7380, %v8130
        %v8163 = vadd.f32 %v7381, %v8131
        %v8164 = vadd.f32 %v7382, %v8132
        %v8165 = vadd.f32 %v7383, %v8133
        %v8166 = vadd.f32 %v7384, %v8134
        %v8167 = vadd.f32 %v7385, %v8135
        %v8168 = vadd.f32 %v7386, %v8136
        %v8169 = vadd.f32 %v7387, %v8137
        %v8170 = vadd.f32 %v7388, %v8138
        %v8171 = vadd.f32 %v7389, %v8139
        %v8172 = vadd.f32 %v7390, %v8140
        %v8173 = vadd.f32 %v7391, %v8141
        %v8174 = vadd.f32 %v7392, %v8142
        %v8175 = vadd.f32 %v7393, %v8143
        %v8176 = vadd.f32 %v7394, %v8144
        %v8177 = vadd.f32 %v7395, %v8145
        %v8178 = vadd.f32 %v7396, %v8146
        %v8179 = vadd.f32 %v7397, %v8147
        %v8180 = vadd.f32 %v7398, %v8148
        %v8181 = vadd.f32 %v7399, %v8149
        %v8182 = vadd.f32 %v7400, %v8150
        %v8183 = vadd.f32 %v7401, %v8151
        %v8184 = vadd.f32 %v7402, %v8152
        %v8185 = vadd.f32 %v7403, %v8153
        %v8186 = vadd.f32 %v7404, %v8154
        %v8187 = vadd.f32 %v7405, %v8155
        %v8188 = vadd.f32 %v7406, %v8156
        %v8189 = vadd.f32 %v7407, %v8157
        %8222 = vrot.lane.b32.xlu0 %v7012, 4
        %v8223 = vpop.permute.xlu0 %8222
        %8224 = vrot.lane.b32.xlu0 %v7013, 4
        %v8225 = vpop.permute.xlu0 %8224
        %8226 = vrot.lane.b32.xlu0 %v7014, 4
        %v8227 = vpop.permute.xlu0 %8226
        %8228 = vrot.lane.b32.xlu0 %v7015, 4
        %v8229 = vpop.permute.xlu0 %8228
        %8230 = vrot.lane.b32.xlu0 %v7016, 4
        %v8231 = vpop.permute.xlu0 %8230
        %8232 = vrot.lane.b32.xlu0 %v7017, 4
        %v8233 = vpop.permute.xlu0 %8232
        %8234 = vrot.lane.b32.xlu0 %v7018, 4
        %v8235 = vpop.permute.xlu0 %8234
        %8236 = vrot.lane.b32.xlu0 %v7019, 4
        %v8237 = vpop.permute.xlu0 %8236
        %8238 = vrot.lane.b32.xlu0 %v7020, 4
        %v8239 = vpop.permute.xlu0 %8238
        %8240 = vrot.lane.b32.xlu0 %v7021, 4
        %v8241 = vpop.permute.xlu0 %8240
        %8242 = vrot.lane.b32.xlu0 %v7022, 4
        %v8243 = vpop.permute.xlu0 %8242
        %8244 = vrot.lane.b32.xlu0 %v7023, 4
        %v8245 = vpop.permute.xlu0 %8244
        %8246 = vrot.lane.b32.xlu0 %v7024, 4
        %v8247 = vpop.permute.xlu0 %8246
        %8248 = vrot.lane.b32.xlu0 %v7025, 4
        %v8249 = vpop.permute.xlu0 %8248
        %8250 = vrot.lane.b32.xlu0 %v7026, 4
        %v8251 = vpop.permute.xlu0 %8250
        %8252 = vrot.lane.b32.xlu0 %v7027, 4
        %v8253 = vpop.permute.xlu0 %8252
        %8254 = vrot.lane.b32.xlu0 %v7028, 4
        %v8255 = vpop.permute.xlu0 %8254
        %8256 = vrot.lane.b32.xlu0 %v7029, 4
        %v8257 = vpop.permute.xlu0 %8256
        %8258 = vrot.lane.b32.xlu0 %v7030, 4
        %v8259 = vpop.permute.xlu0 %8258
        %8260 = vrot.lane.b32.xlu0 %v7031, 4
        %v8261 = vpop.permute.xlu0 %8260
        %8262 = vrot.lane.b32.xlu0 %v7032, 4
        %v8263 = vpop.permute.xlu0 %8262
        %8264 = vrot.lane.b32.xlu0 %v7033, 4
        %v8265 = vpop.permute.xlu0 %8264
        %8266 = vrot.lane.b32.xlu0 %v7034, 4
        %v8267 = vpop.permute.xlu0 %8266
        %8268 = vrot.lane.b32.xlu0 %v7035, 4
        %v8269 = vpop.permute.xlu0 %8268
        %8270 = vrot.lane.b32.xlu0 %v7036, 4
        %v8271 = vpop.permute.xlu0 %8270
        %8272 = vrot.lane.b32.xlu0 %v7037, 4
        %v8273 = vpop.permute.xlu0 %8272
        %8274 = vrot.lane.b32.xlu0 %v7038, 4
        %v8275 = vpop.permute.xlu0 %8274
        %8276 = vrot.lane.b32.xlu0 %v7039, 4
        %v8277 = vpop.permute.xlu0 %8276
        %8278 = vrot.lane.b32.xlu0 %v7040, 4
        %v8279 = vpop.permute.xlu0 %8278
        %8280 = vrot.lane.b32.xlu0 %v7041, 4
        %v8281 = vpop.permute.xlu0 %8280
        %8282 = vrot.lane.b32.xlu0 %v7042, 4
        %v8283 = vpop.permute.xlu0 %8282
        %8284 = vrot.lane.b32.xlu0 %v7043, 4
        %v8285 = vpop.permute.xlu0 %8284
        %8350 = vrot.lane.b32.xlu0 %v8158, 8
        %v8351 = vpop.permute.xlu0 %8350
        %8352 = vrot.lane.b32.xlu0 %v8159, 8
        %v8353 = vpop.permute.xlu0 %8352
        %8354 = vrot.lane.b32.xlu0 %v8160, 8
        %v8355 = vpop.permute.xlu0 %8354
        %8356 = vrot.lane.b32.xlu0 %v8161, 8
        %v8357 = vpop.permute.xlu0 %8356
        %8358 = vrot.lane.b32.xlu0 %v8162, 8
        %v8359 = vpop.permute.xlu0 %8358
        %8360 = vrot.lane.b32.xlu0 %v8163, 8
        %v8361 = vpop.permute.xlu0 %8360
        %8362 = vrot.lane.b32.xlu0 %v8164, 8
        %v8363 = vpop.permute.xlu0 %8362
        %8364 = vrot.lane.b32.xlu0 %v8165, 8
        %v8365 = vpop.permute.xlu0 %8364
        %8366 = vrot.lane.b32.xlu0 %v8166, 8
        %v8367 = vpop.permute.xlu0 %8366
        %8368 = vrot.lane.b32.xlu0 %v8167, 8
        %v8369 = vpop.permute.xlu0 %8368
        %8370 = vrot.lane.b32.xlu0 %v8168, 8
        %v8371 = vpop.permute.xlu0 %8370
        %8372 = vrot.lane.b32.xlu0 %v8169, 8
        %v8373 = vpop.permute.xlu0 %8372
        %8374 = vrot.lane.b32.xlu0 %v8170, 8
        %v8375 = vpop.permute.xlu0 %8374
        %8376 = vrot.lane.b32.xlu0 %v8171, 8
        %v8377 = vpop.permute.xlu0 %8376
        %8378 = vrot.lane.b32.xlu0 %v8172, 8
        %v8379 = vpop.permute.xlu0 %8378
        %8380 = vrot.lane.b32.xlu0 %v8173, 8
        %v8381 = vpop.permute.xlu0 %8380
        %8382 = vrot.lane.b32.xlu0 %v8174, 8
        %v8383 = vpop.permute.xlu0 %8382
        %8384 = vrot.lane.b32.xlu0 %v8175, 8
        %v8385 = vpop.permute.xlu0 %8384
        %8386 = vrot.lane.b32.xlu0 %v8176, 8
        %v8387 = vpop.permute.xlu0 %8386
        %8388 = vrot.lane.b32.xlu0 %v8177, 8
        %v8389 = vpop.permute.xlu0 %8388
        %8390 = vrot.lane.b32.xlu0 %v8178, 8
        %v8391 = vpop.permute.xlu0 %8390
        %8392 = vrot.lane.b32.xlu0 %v8179, 8
        %v8393 = vpop.permute.xlu0 %8392
        %8394 = vrot.lane.b32.xlu0 %v8180, 8
        %v8395 = vpop.permute.xlu0 %8394
        %8396 = vrot.lane.b32.xlu0 %v8181, 8
        %v8397 = vpop.permute.xlu0 %8396
        %8398 = vrot.lane.b32.xlu0 %v8182, 8
        %v8399 = vpop.permute.xlu0 %8398
        %8400 = vrot.lane.b32.xlu0 %v8183, 8
        %v8401 = vpop.permute.xlu0 %8400
        %8402 = vrot.lane.b32.xlu0 %v8184, 8
        %v8403 = vpop.permute.xlu0 %8402
        %8404 = vrot.lane.b32.xlu0 %v8185, 8
        %v8405 = vpop.permute.xlu0 %8404
        %8406 = vrot.lane.b32.xlu0 %v8186, 8
        %v8407 = vpop.permute.xlu0 %8406
        %8408 = vrot.lane.b32.xlu0 %v8187, 8
        %v8409 = vpop.permute.xlu0 %8408
        %8410 = vrot.lane.b32.xlu0 %v8188, 8
        %v8411 = vpop.permute.xlu0 %8410
        %8412 = vrot.lane.b32.xlu0 %v8189, 8
        %v8413 = vpop.permute.xlu0 %8412
        %v8446 = vsel %vm5074, %v6064, %v8223
        %v8447 = vsel %vm5074, %v6065, %v8225
        %v8448 = vsel %vm5074, %v6066, %v8227
        %v8449 = vsel %vm5074, %v6067, %v8229
        %v8450 = vsel %vm5074, %v6068, %v8231
        %v8451 = vsel %vm5074, %v6069, %v8233
        %v8452 = vsel %vm5074, %v6070, %v8235
        %v8453 = vsel %vm5074, %v6071, %v8237
        %v8454 = vsel %vm5074, %v6072, %v8239
        %v8455 = vsel %vm5074, %v6073, %v8241
        %v8456 = vsel %vm5074, %v6074, %v8243
        %v8457 = vsel %vm5074, %v6075, %v8245
        %v8458 = vsel %vm5074, %v6076, %v8247
        %v8459 = vsel %vm5074, %v6077, %v8249
        %v8460 = vsel %vm5074, %v6078, %v8251
        %v8461 = vsel %vm5074, %v6079, %v8253
        %v8462 = vsel %vm5074, %v6080, %v8255
        %v8463 = vsel %vm5074, %v6081, %v8257
        %v8464 = vsel %vm5074, %v6082, %v8259
        %v8465 = vsel %vm5074, %v6083, %v8261
        %v8466 = vsel %vm5074, %v6084, %v8263
        %v8467 = vsel %vm5074, %v6085, %v8265
        %v8468 = vsel %vm5074, %v6086, %v8267
        %v8469 = vsel %vm5074, %v6087, %v8269
        %v8470 = vsel %vm5074, %v6088, %v8271
        %v8471 = vsel %vm5074, %v6089, %v8273
        %v8472 = vsel %vm5074, %v6090, %v8275
        %v8473 = vsel %vm5074, %v6091, %v8277
        %v8474 = vsel %vm5074, %v6092, %v8279
        %v8475 = vsel %vm5074, %v6093, %v8281
        %v8476 = vsel %vm5074, %v6094, %v8283
        %v8477 = vsel %vm5074, %v6095, %v8285
        %v8478 = vsel %vm587, %v8446, %v8351
        %v8479 = vsel %vm587, %v8447, %v8353
        %v8480 = vsel %vm587, %v8448, %v8355
        %v8481 = vsel %vm587, %v8449, %v8357
        %v8482 = vsel %vm587, %v8450, %v8359
        %v8483 = vsel %vm587, %v8451, %v8361
        %v8484 = vsel %vm587, %v8452, %v8363
        %v8485 = vsel %vm587, %v8453, %v8365
        %v8486 = vsel %vm587, %v8454, %v8367
        %v8487 = vsel %vm587, %v8455, %v8369
        %v8488 = vsel %vm587, %v8456, %v8371
        %v8489 = vsel %vm587, %v8457, %v8373
        %v8490 = vsel %vm587, %v8458, %v8375
        %v8491 = vsel %vm587, %v8459, %v8377
        %v8492 = vsel %vm587, %v8460, %v8379
        %v8493 = vsel %vm587, %v8461, %v8381
        %v8494 = vsel %vm587, %v8462, %v8383
        %v8495 = vsel %vm587, %v8463, %v8385
        %v8496 = vsel %vm587, %v8464, %v8387
        %v8497 = vsel %vm587, %v8465, %v8389
        %v8498 = vsel %vm587, %v8466, %v8391
        %v8499 = vsel %vm587, %v8467, %v8393
        %v8500 = vsel %vm587, %v8468, %v8395
        %v8501 = vsel %vm587, %v8469, %v8397
        %v8502 = vsel %vm587, %v8470, %v8399
        %v8503 = vsel %vm587, %v8471, %v8401
        %v8504 = vsel %vm587, %v8472, %v8403
        %v8505 = vsel %vm587, %v8473, %v8405
        %v8506 = vsel %vm587, %v8474, %v8407
        %v8507 = vsel %vm587, %v8475, %v8409
        %v8508 = vsel %vm587, %v8476, %v8411
        %v8509 = vsel %vm587, %v8477, %v8413
        %v8510 = vld [vmem:[%s12] sm:$0xf]
        %v8511 = vld [vmem:[%s12 + $0x4] sm:$0x3]
        %v8512 = vpack.c.bf16 %v8479, %v8478
        %v8513 = vpack.c.bf16 %v8481, %v8480
        %v8514 = vpack.c.bf16 %v8483, %v8482
        %v8515 = vpack.c.bf16 %v8485, %v8484
        %v8516 = vpack.c.bf16 %v8487, %v8486
        %v8517 = vpack.c.bf16 %v8489, %v8488
        %v8518 = vpack.c.bf16 %v8491, %v8490
        %v8519 = vpack.c.bf16 %v8493, %v8492
        %v8520 = vpack.c.bf16 %v8495, %v8494
        %v8521 = vpack.c.bf16 %v8497, %v8496
        %v8522 = vpack.c.bf16 %v8499, %v8498
        %v8523 = vpack.c.bf16 %v8501, %v8500
        %v8524 = vpack.c.bf16 %v8503, %v8502
        %v8525 = vpack.c.bf16 %v8505, %v8504
        %v8526 = vpack.c.bf16 %v8507, %v8506
        %v8527 = vpack.c.bf16 %v8509, %v8508
        %v8530 = vunpack.c.l.b16 %v8510
        %v8531 = vunpack.c.l.b16 %v8511
        %v8532 = vpack.c.b16 %v8531, %v8530
        %vm8533 = vcmask 97280
        %v8535 = vsel %vm8533, %v8512, 0
        %v8538 = vsel %vm8533, %v8513, 0
        %v8541 = vsel %vm8533, %v8514, 0
        %v8544 = vsel %vm8533, %v8515, 0
        %v8547 = vsel %vm8533, %v8516, 0
        %v8550 = vsel %vm8533, %v8517, 0
        %v8553 = vsel %vm8533, %v8518, 0
        %v8556 = vsel %vm8533, %v8519, 0
        %v8559 = vsel %vm8533, %v8520, 0
        %v8562 = vsel %vm8533, %v8521, 0
        %v8565 = vsel %vm8533, %v8522, 0
        %v8568 = vsel %vm8533, %v8523, 0
        %v8571 = vsel %vm8533, %v8524, 0
        %v8574 = vsel %vm8533, %v8525, 0
        %v8577 = vsel %vm8533, %v8526, 0
        %v8580 = vsel %vm8533, %v8527, 0
        %vm8582 = vcmask 1045504
        %v8584 = vsel %vm8582, %v8532, 0
        %8586 = vmatprep.subr.bf16.mxu0 0
        %8587 = vmatpush1.bf16.msra.mxu0 %v8584
        %8588 = vmatprep.subr.bf16.mxu0 0
        %8589 = vmatpush1.bf16.msra.mxu0 0
        %8590 = vmatprep.subr.bf16.mxu0 0
        %8591 = vmatpush1.bf16.msra.mxu0 0
        %8592 = vmatprep.subr.bf16.mxu0 0
        %8593 = vmatpush1.bf16.msra.mxu0 0
        %8594 = vmatprep.subr.bf16.mxu0 0
        %8595 = vmatpush1.bf16.msra.mxu0 0
        %8596 = vmatprep.subr.bf16.mxu0 0
        %8597 = vmatpush1.bf16.msra.mxu0 0
        %8598 = vmatprep.subr.bf16.mxu0 0
        %8599 = vmatpush1.bf16.msra.mxu0 0
        %8600 = vmatprep.subr.bf16.mxu0 0
        %8601 = vmatpush1.bf16.msra.mxu0 0
        %8602 = vmatprep.subr.bf16.mxu0 0
        %8603 = vmatpush1.bf16.msra.mxu0 0
        %8604 = vmatprep.subr.bf16.mxu0 0
        %8605 = vmatpush1.bf16.msra.mxu0 0
        %8606 = vmatprep.subr.bf16.mxu0 0
        %8607 = vmatpush1.bf16.msra.mxu0 0
        %8608 = vmatprep.subr.bf16.mxu0 0
        %8609 = vmatpush1.bf16.msra.mxu0 0
        %8610 = vmatprep.subr.bf16.mxu0 0
        %8611 = vmatpush1.bf16.msra.mxu0 0
        %8612 = vmatprep.subr.bf16.mxu0 0
        %8613 = vmatpush1.bf16.msra.mxu0 0
        %8614 = vmatprep.subr.bf16.mxu0 0
        %8615 = vmatpush1.bf16.msra.mxu0 0
        %8616 = vmatprep.subr.bf16.mxu0 0
        %8617 = vmatpush1.bf16.msra.mxu0 0
        %8618 = vmatprep.mubr.bf16.mxu0 0
        %8619 = vmatmul.mubr.bf16.gmra.mrb[0].mxu0 %v8535
        %v8620 = vpop.f32.mrb[0].mxu0
        %v8621 = vadd.f32 %v4777, %v8620
        %v8622 = vpop.f32.mrb[0].mxu0
        %v8623 = vpop.f32.mrb[0].mxu0
        %v8624 = vadd.f32 %v4778, %v8623
        %v8625 = vpop.f32.mrb[0].mxu0
        %8626 = vmatprep.mubr.bf16.mxu0 0
        %8627 = vmatmul.mubr.bf16.gmra.mrb[0].mxu0 %v8538
        %v8628 = vpop.f32.mrb[0].mxu0
        %v8629 = vadd.f32 %v4779, %v8628
        %v8630 = vpop.f32.mrb[0].mxu0
        %v8631 = vpop.f32.mrb[0].mxu0
        %v8632 = vadd.f32 %v4780, %v8631
        %v8633 = vpop.f32.mrb[0].mxu0
        %8634 = vmatprep.mubr.bf16.mxu0 0
        %8635 = vmatmul.mubr.bf16.gmra.mrb[0].mxu0 %v8541
        %v8636 = vpop.f32.mrb[0].mxu0
        %v8637 = vadd.f32 %v4781, %v8636
        %v8638 = vpop.f32.mrb[0].mxu0
        %v8639 = vpop.f32.mrb[0].mxu0
        %v8640 = vadd.f32 %v4782, %v8639
        %v8641 = vpop.f32.mrb[0].mxu0
        %8642 = vmatprep.mubr.bf16.mxu0 0
        %8643 = vmatmul.mubr.bf16.gmra.mrb[0].mxu0 %v8544
        %v8644 = vpop.f32.mrb[0].mxu0
        %v8645 = vadd.f32 %v4783, %v8644
        %v8646 = vpop.f32.mrb[0].mxu0
        %v8647 = vpop.f32.mrb[0].mxu0
        %v8648 = vadd.f32 %v4784, %v8647
        %v8649 = vpop.f32.mrb[0].mxu0
        %8650 = vmatprep.mubr.bf16.mxu0 0
        %8651 = vmatmul.mubr.bf16.gmra.mrb[0].mxu0 %v8547
        %v8652 = vpop.f32.mrb[0].mxu0
        %v8653 = vadd.f32 %v4785, %v8652
        %v8654 = vpop.f32.mrb[0].mxu0
        %v8655 = vpop.f32.mrb[0].mxu0
        %v8656 = vadd.f32 %v4786, %v8655
        %v8657 = vpop.f32.mrb[0].mxu0
        %8658 = vmatprep.mubr.bf16.mxu0 0
        %8659 = vmatmul.mubr.bf16.gmra.mrb[0].mxu0 %v8550
        %v8660 = vpop.f32.mrb[0].mxu0
        %v8661 = vadd.f32 %v4787, %v8660
        %v8662 = vpop.f32.mrb[0].mxu0
        %v8663 = vpop.f32.mrb[0].mxu0
        %v8664 = vadd.f32 %v4788, %v8663
        %v8665 = vpop.f32.mrb[0].mxu0
        %8666 = vmatprep.mubr.bf16.mxu0 0
        %8667 = vmatmul.mubr.bf16.gmra.mrb[0].mxu0 %v8553
        %v8668 = vpop.f32.mrb[0].mxu0
        %v8669 = vadd.f32 %v4789, %v8668
        %v8670 = vpop.f32.mrb[0].mxu0
        %v8671 = vpop.f32.mrb[0].mxu0
        %v8672 = vadd.f32 %v4790, %v8671
        %v8673 = vpop.f32.mrb[0].mxu0
        %8674 = vmatprep.mubr.bf16.mxu0 0
        %8675 = vmatmul.mubr.bf16.gmra.mrb[0].mxu0 %v8556
        %v8676 = vpop.f32.mrb[0].mxu0
        %v8677 = vadd.f32 %v4791, %v8676
        %v8678 = vpop.f32.mrb[0].mxu0
        %v8679 = vpop.f32.mrb[0].mxu0
        %v8680 = vadd.f32 %v4792, %v8679
        %v8681 = vpop.f32.mrb[0].mxu0
        %8682 = vmatprep.mubr.bf16.mxu0 0
        %8683 = vmatmul.mubr.bf16.gmra.mrb[0].mxu0 %v8559
        %v8684 = vpop.f32.mrb[0].mxu0
        %v8685 = vadd.f32 %v4793, %v8684
        %v8686 = vpop.f32.mrb[0].mxu0
        %v8687 = vpop.f32.mrb[0].mxu0
        %v8688 = vadd.f32 %v4794, %v8687
        %v8689 = vpop.f32.mrb[0].mxu0
        %8690 = vmatprep.mubr.bf16.mxu0 0
        %8691 = vmatmul.mubr.bf16.gmra.mrb[0].mxu0 %v8562
        %v8692 = vpop.f32.mrb[0].mxu0
        %v8693 = vadd.f32 %v4795, %v8692
        %v8694 = vpop.f32.mrb[0].mxu0
        %v8695 = vpop.f32.mrb[0].mxu0
        %v8696 = vadd.f32 %v4796, %v8695
        %v8697 = vpop.f32.mrb[0].mxu0
        %8698 = vmatprep.mubr.bf16.mxu0 0
        %8699 = vmatmul.mubr.bf16.gmra.mrb[0].mxu0 %v8565
        %v8700 = vpop.f32.mrb[0].mxu0
        %v8701 = vadd.f32 %v4797, %v8700
        %v8702 = vpop.f32.mrb[0].mxu0
        %v8703 = vpop.f32.mrb[0].mxu0
        %v8704 = vadd.f32 %v4798, %v8703
        %v8705 = vpop.f32.mrb[0].mxu0
        %8706 = vmatprep.mubr.bf16.mxu0 0
        %8707 = vmatmul.mubr.bf16.gmra.mrb[0].mxu0 %v8568
        %v8708 = vpop.f32.mrb[0].mxu0
        %v8709 = vadd.f32 %v4799, %v8708
        %v8710 = vpop.f32.mrb[0].mxu0
        %v8711 = vpop.f32.mrb[0].mxu0
        %v8712 = vadd.f32 %v4800, %v8711
        %v8713 = vpop.f32.mrb[0].mxu0
        %8714 = vmatprep.mubr.bf16.mxu0 0
        %8715 = vmatmul.mubr.bf16.gmra.mrb[0].mxu0 %v8571
        %v8716 = vpop.f32.mrb[0].mxu0
        %v8717 = vadd.f32 %v4801, %v8716
        %v8718 = vpop.f32.mrb[0].mxu0
        %v8719 = vpop.f32.mrb[0].mxu0
        %v8720 = vadd.f32 %v4802, %v8719
        %v8721 = vpop.f32.mrb[0].mxu0
        %8722 = vmatprep.mubr.bf16.mxu0 0
        %8723 = vmatmul.mubr.bf16.gmra.mrb[0].mxu0 %v8574
        %v8724 = vpop.f32.mrb[0].mxu0
        %v8725 = vadd.f32 %v4803, %v8724
        %v8726 = vpop.f32.mrb[0].mxu0
        %v8727 = vpop.f32.mrb[0].mxu0
        %v8728 = vadd.f32 %v4804, %v8727
        %v8729 = vpop.f32.mrb[0].mxu0
        %8730 = vmatprep.mubr.bf16.mxu0 0
        %8731 = vmatmul.mubr.bf16.gmra.mrb[0].mxu0 %v8577
        %v8732 = vpop.f32.mrb[0].mxu0
        %v8733 = vadd.f32 %v4805, %v8732
        %v8734 = vpop.f32.mrb[0].mxu0
        %v8735 = vpop.f32.mrb[0].mxu0
        %v8736 = vadd.f32 %v4806, %v8735
        %v8737 = vpop.f32.mrb[0].mxu0
        %8738 = vmatprep.mubr.bf16.mxu0 0
        %8739 = vmatmul.mubr.bf16.gmra.mrb[0].mxu0 %v8580
        %v8740 = vpop.f32.mrb[0].mxu0
        %v8741 = vadd.f32 %v4807, %v8740
        %v8742 = vpop.f32.mrb[0].mxu0
        %v8743 = vpop.f32.mrb[0].mxu0
        %v8744 = vadd.f32 %v4808, %v8743
        %v8745 = vpop.f32.mrb[0].mxu0
        %8746 = vdwg.mxu0
        %v8747 = vsel %vm2312, %v8621, 0.0
        %v8748 = vsel %vm2312, %v8624, 0.0
        %v8749 = vadd.f32 %v8747, %v8748
        %v8750 = vsel %vm2312, %v8629, 0.0
        %v8751 = vadd.f32 %v8749, %v8750
        %v8752 = vsel %vm2312, %v8632, 0.0
        %v8753 = vadd.f32 %v8751, %v8752
        %v8754 = vsel %vm2312, %v8637, 0.0
        %v8755 = vadd.f32 %v8753, %v8754
        %v8756 = vsel %vm2312, %v8640, 0.0
        %v8757 = vadd.f32 %v8755, %v8756
        %v8758 = vsel %vm2312, %v8645, 0.0
        %v8759 = vadd.f32 %v8757, %v8758
        %v8760 = vsel %vm2312, %v8648, 0.0
        %v8761 = vadd.f32 %v8759, %v8760
        %v8762 = vsel %vm2312, %v8653, 0.0
        %v8763 = vadd.f32 %v8761, %v8762
        %v8764 = vsel %vm2312, %v8656, 0.0
        %v8765 = vadd.f32 %v8763, %v8764
        %v8766 = vsel %vm2312, %v8661, 0.0
        %v8767 = vadd.f32 %v8765, %v8766
        %v8768 = vsel %vm2312, %v8664, 0.0
        %v8769 = vadd.f32 %v8767, %v8768
        %v8770 = vsel %vm2312, %v8669, 0.0
        %v8771 = vadd.f32 %v8769, %v8770
        %v8772 = vsel %vm2312, %v8672, 0.0
        %v8773 = vadd.f32 %v8771, %v8772
        %v8774 = vsel %vm2312, %v8677, 0.0
        %v8775 = vadd.f32 %v8773, %v8774
        %v8776 = vsel %vm2312, %v8680, 0.0
        %v8777 = vadd.f32 %v8775, %v8776
        %v8778 = vsel %vm2312, %v8685, 0.0
        %v8779 = vadd.f32 %v8777, %v8778
        %v8780 = vsel %vm2312, %v8688, 0.0
        %v8781 = vadd.f32 %v8779, %v8780
        %v8782 = vsel %vm2312, %v8693, 0.0
        %v8783 = vadd.f32 %v8781, %v8782
        %v8784 = vsel %vm2312, %v8696, 0.0
        %v8785 = vadd.f32 %v8783, %v8784
        %v8786 = vsel %vm2312, %v8701, 0.0
        %v8787 = vadd.f32 %v8785, %v8786
        %v8788 = vsel %vm2312, %v8704, 0.0
        %v8789 = vadd.f32 %v8787, %v8788
        %v8790 = vsel %vm2312, %v8709, 0.0
        %v8791 = vadd.f32 %v8789, %v8790
        %v8792 = vsel %vm2312, %v8712, 0.0
        %v8793 = vadd.f32 %v8791, %v8792
        %v8794 = vsel %vm2312, %v8717, 0.0
        %v8795 = vadd.f32 %v8793, %v8794
        %v8796 = vsel %vm2312, %v8720, 0.0
        %v8797 = vadd.f32 %v8795, %v8796
        %v8798 = vsel %vm2312, %v8725, 0.0
        %v8799 = vadd.f32 %v8797, %v8798
        %v8800 = vsel %vm2312, %v8728, 0.0
        %v8801 = vadd.f32 %v8799, %v8800
        %v8802 = vsel %vm2312, %v8733, 0.0
        %v8803 = vadd.f32 %v8801, %v8802
        %v8804 = vsel %vm2312, %v8736, 0.0
        %v8805 = vadd.f32 %v8803, %v8804
        %v8806 = vsel %vm2312, %v8741, 0.0
        %v8807 = vadd.f32 %v8805, %v8806
        %v8808 = vsel %vm2312, %v8744, 0.0
        %v8809 = vadd.f32 %v8807, %v8808
        %v8810 = vrot.slane %v8809, 4
        %v8811 = vadd.f32 %v8809, %v8810
        %v8812 = vrot.slane %v8811, 2
        %v8813 = vadd.f32 %v8811, %v8812
        %v8814 = vrot.slane %v8813, 1
        %v8815 = vadd.f32 %v8813, %v8814
        %v8816 = vrcp.pop 256.0
        %v8817 = vmul.f32 %v8815, %v8816
        %v8818 = vld [vmem:[%s13] sm:$0xf]
        %v8819 = vld [vmem:[%s13 + $0x4] sm:$0xf]
        %v8820 = vpack.c.bf16 %v8817, %v8817
        %v8823 = vunpack.c.l.b16 %v8818
        %v8824 = vunpack.c.l.b16 %v8819
        %v8825 = vpack.c.b16 %v8824, %v8823
        %v8828 = vsel %vm2312, %v8820, 0
        %8830 = vmatprep.subr.bf16.mxu0 0
        %8831 = vmatpush1.bf16.msra.mxu0 %v8825
        %8832 = vmatprep.subr.bf16.mxu0 0
        %8833 = vmatpush1.bf16.msra.mxu0 0
        %8834 = vmatprep.subr.bf16.mxu0 0
        %8835 = vmatpush1.bf16.msra.mxu0 0
        %8836 = vmatprep.subr.bf16.mxu0 0
        %8837 = vmatpush1.bf16.msra.mxu0 0
        %8838 = vmatprep.subr.bf16.mxu0 0
        %8839 = vmatpush1.bf16.msra.mxu0 0
        %8840 = vmatprep.subr.bf16.mxu0 0
        %8841 = vmatpush1.bf16.msra.mxu0 0
        %8842 = vmatprep.subr.bf16.mxu0 0
        %8843 = vmatpush1.bf16.msra.mxu0 0
        %8844 = vmatprep.subr.bf16.mxu0 0
        %8845 = vmatpush1.bf16.msra.mxu0 0
        %8846 = vmatprep.subr.bf16.mxu0 0
        %8847 = vmatpush1.bf16.msra.mxu0 0
        %8848 = vmatprep.subr.bf16.mxu0 0
        %8849 = vmatpush1.bf16.msra.mxu0 0
        %8850 = vmatprep.subr.bf16.mxu0 0
        %8851 = vmatpush1.bf16.msra.mxu0 0
        %8852 = vmatprep.subr.bf16.mxu0 0
        %8853 = vmatpush1.bf16.msra.mxu0 0
        %8854 = vmatprep.subr.bf16.mxu0 0
        %8855 = vmatpush1.bf16.msra.mxu0 0
        %8856 = vmatprep.subr.bf16.mxu0 0
        %8857 = vmatpush1.bf16.msra.mxu0 0
        %8858 = vmatprep.subr.bf16.mxu0 0
        %8859 = vmatpush1.bf16.msra.mxu0 0
        %8860 = vmatprep.subr.bf16.mxu0 0
        %8861 = vmatpush1.bf16.msra.mxu0 0
        %8862 = vmatprep.mubr.bf16.mxu0 0
        %8863 = vmatmul.mubr.bf16.gmra.mrb[0].mxu0 %v8828
        %v8864 = vpop.f32.mrb[0].mxu0
        %v8865 = vadd.f32 0.0, %v8864
        %v8866 = vpop.f32.mrb[0].mxu0
        %v8867 = vpop.f32.mrb[0].mxu0
        %v8868 = vpop.f32.mrb[0].mxu0
        %8869 = vdwg.mxu0
        %v8870 = vmax.f32 %v8865, 0.0
        %v8871 = vld [vmem:[%s14] sm:$0x3]
        %v8872 = vpack.c.bf16 %v8870, %v8870
        %v8874 = vsel %vm5074, %v8872, 0
        %vm8876 = vcmask 1041408
        %v8878 = vsel %vm8876, %v8871, 0
        %8880 = vmatprep.subr.bf16.mxu0 0
        %8881 = vmatpush1.bf16.msra.mxu0 %v8878
        %8882 = vmatprep.subr.bf16.mxu0 0
        %8883 = vmatpush1.bf16.msra.mxu0 0
        %8884 = vmatprep.subr.bf16.mxu0 0
        %8885 = vmatpush1.bf16.msra.mxu0 0
        %8886 = vmatprep.subr.bf16.mxu0 0
        %8887 = vmatpush1.bf16.msra.mxu0 0
        %8888 = vmatprep.subr.bf16.mxu0 0
        %8889 = vmatpush1.bf16.msra.mxu0 0
        %8890 = vmatprep.subr.bf16.mxu0 0
        %8891 = vmatpush1.bf16.msra.mxu0 0
        %8892 = vmatprep.subr.bf16.mxu0 0
        %8893 = vmatpush1.bf16.msra.mxu0 0
        %8894 = vmatprep.subr.bf16.mxu0 0
        %8895 = vmatpush1.bf16.msra.mxu0 0
        %8896 = vmatprep.subr.bf16.mxu0 0
        %8897 = vmatpush1.bf16.msra.mxu0 0
        %8898 = vmatprep.subr.bf16.mxu0 0
        %8899 = vmatpush1.bf16.msra.mxu0 0
        %8900 = vmatprep.subr.bf16.mxu0 0
        %8901 = vmatpush1.bf16.msra.mxu0 0
        %8902 = vmatprep.subr.bf16.mxu0 0
        %8903 = vmatpush1.bf16.msra.mxu0 0
        %8904 = vmatprep.subr.bf16.mxu0 0
        %8905 = vmatpush1.bf16.msra.mxu0 0
        %8906 = vmatprep.subr.bf16.mxu0 0
        %8907 = vmatpush1.bf16.msra.mxu0 0
        %8908 = vmatprep.subr.bf16.mxu0 0
        %8909 = vmatpush1.bf16.msra.mxu0 0
        %8910 = vmatprep.subr.bf16.mxu0 0
        %8911 = vmatpush1.bf16.msra.mxu0 0
        %8912 = vmatprep.mubr.bf16.mxu0 0
        %8913 = vmatmul.mubr.bf16.gmra.mrb[0].mxu0 %v8874
        %v8914 = vpop.f32.mrb[0].mxu0
        %v8915 = vadd.f32 0.0, %v8914
        %v8916 = vpop.f32.mrb[0].mxu0
        %v8917 = vpop.f32.mrb[0].mxu0
        %v8918 = vpop.f32.mrb[0].mxu0
        %8919 = vdwg.mxu0
        %v8920 = vxor.u32 %v8915, 2147483648
        %v8921 = vmul.f32 %v8920, 1.442695
        %v8922 = vpow.pop %v8921
        %v8923 = vadd.f32 %v8922, 1.0
        %v8924 = vrcp.pop %v8923
        %v8925 = vmul.f32 1.0, %v8924
        %v8926 = vlaneseq
        %v8927 = vshrl.u32 %v8926, 7
        %v8928 = vsub.s32 0, %v8927
        %v8929 = vrot.slane %v8925, %v8928
        %v8930 = vmul.f32 %v8621, %v8929
        %v8931 = vmul.f32 %v8624, %v8929
        %v8932 = vmul.f32 %v8629, %v8929
        %v8933 = vmul.f32 %v8632, %v8929
        %v8934 = vmul.f32 %v8637, %v8929
        %v8935 = vmul.f32 %v8640, %v8929
        %v8936 = vmul.f32 %v8645, %v8929
        %v8937 = vmul.f32 %v8648, %v8929
        %v8938 = vmul.f32 %v8653, %v8929
        %v8939 = vmul.f32 %v8656, %v8929
        %v8940 = vmul.f32 %v8661, %v8929
        %v8941 = vmul.f32 %v8664, %v8929
        %v8942 = vmul.f32 %v8669, %v8929
        %v8943 = vmul.f32 %v8672, %v8929
        %v8944 = vmul.f32 %v8677, %v8929
        %v8945 = vmul.f32 %v8680, %v8929
        %v8946 = vmul.f32 %v8685, %v8929
        %v8947 = vmul.f32 %v8688, %v8929
        %v8948 = vmul.f32 %v8693, %v8929
        %v8949 = vmul.f32 %v8696, %v8929
        %v8950 = vmul.f32 %v8701, %v8929
        %v8951 = vmul.f32 %v8704, %v8929
        %v8952 = vmul.f32 %v8709, %v8929
        %v8953 = vmul.f32 %v8712, %v8929
        %v8954 = vmul.f32 %v8717, %v8929
        %v8955 = vmul.f32 %v8720, %v8929
        %v8956 = vmul.f32 %v8725, %v8929
        %v8957 = vmul.f32 %v8728, %v8929
        %v8958 = vmul.f32 %v8733, %v8929
        %v8959 = vmul.f32 %v8736, %v8929
        %v8960 = vmul.f32 %v8741, %v8929
        %v8961 = vmul.f32 %v8744, %v8929
        %v8962 = vadd.f32 %v8930, %v847
        %v8963 = vadd.f32 %v8931, %v848
        %v8964 = vadd.f32 %v8932, %v849
        %v8965 = vadd.f32 %v8933, %v850
        %v8966 = vadd.f32 %v8934, %v851
        %v8967 = vadd.f32 %v8935, %v852
        %v8968 = vadd.f32 %v8936, %v853
        %v8969 = vadd.f32 %v8937, %v854
        %v8970 = vadd.f32 %v8938, %v855
        %v8971 = vadd.f32 %v8939, %v856
        %v8972 = vadd.f32 %v8940, %v857
        %v8973 = vadd.f32 %v8941, %v858
        %v8974 = vadd.f32 %v8942, %v859
        %v8975 = vadd.f32 %v8943, %v860
        %v8976 = vadd.f32 %v8944, %v861
        %v8977 = vadd.f32 %v8945, %v862
        %v8978 = vadd.f32 %v8946, %v863
        %v8979 = vadd.f32 %v8947, %v864
        %v8980 = vadd.f32 %v8948, %v865
        %v8981 = vadd.f32 %v8949, %v866
        %v8982 = vadd.f32 %v8950, %v867
        %v8983 = vadd.f32 %v8951, %v868
        %v8984 = vadd.f32 %v8952, %v869
        %v8985 = vadd.f32 %v8953, %v870
        %v8986 = vadd.f32 %v8954, %v871
        %v8987 = vadd.f32 %v8955, %v872
        %v8988 = vadd.f32 %v8956, %v873
        %v8989 = vadd.f32 %v8957, %v874
        %v8990 = vadd.f32 %v8958, %v875
        %v8991 = vadd.f32 %v8959, %v876
        %v8992 = vadd.f32 %v8960, %v877
        %v8993 = vadd.f32 %v8961, %v878
        %v8994 = vmax.f32 %v8962, 0.0
        %v8995 = vmax.f32 %v8963, 0.0
        %v8996 = vmax.f32 %v8964, 0.0
        %v8997 = vmax.f32 %v8965, 0.0
        %v8998 = vmax.f32 %v8966, 0.0
        %v8999 = vmax.f32 %v8967, 0.0
        %v9000 = vmax.f32 %v8968, 0.0
        %v9001 = vmax.f32 %v8969, 0.0
        %v9002 = vmax.f32 %v8970, 0.0
        %v9003 = vmax.f32 %v8971, 0.0
        %v9004 = vmax.f32 %v8972, 0.0
        %v9005 = vmax.f32 %v8973, 0.0
        %v9006 = vmax.f32 %v8974, 0.0
        %v9007 = vmax.f32 %v8975, 0.0
        %v9008 = vmax.f32 %v8976, 0.0
        %v9009 = vmax.f32 %v8977, 0.0
        %v9010 = vmax.f32 %v8978, 0.0
        %v9011 = vmax.f32 %v8979, 0.0
        %v9012 = vmax.f32 %v8980, 0.0
        %v9013 = vmax.f32 %v8981, 0.0
        %v9014 = vmax.f32 %v8982, 0.0
        %v9015 = vmax.f32 %v8983, 0.0
        %v9016 = vmax.f32 %v8984, 0.0
        %v9017 = vmax.f32 %v8985, 0.0
        %v9018 = vmax.f32 %v8986, 0.0
        %v9019 = vmax.f32 %v8987, 0.0
        %v9020 = vmax.f32 %v8988, 0.0
        %v9021 = vmax.f32 %v8989, 0.0
        %v9022 = vmax.f32 %v8990, 0.0
        %v9023 = vmax.f32 %v8991, 0.0
        %v9024 = vmax.f32 %v8992, 0.0
        %v9025 = vmax.f32 %v8993, 0.0
        %9026 = vst.msk [vmem:[%s535] sm:$0xff] %vm2312, %v8994
        %9027 = vst.msk [vmem:[%s535 + $0x8] sm:$0xff] %vm2312, %v8995
        %9028 = vst.msk [vmem:[%s535 + $0x10] sm:$0xff] %vm2312, %v8996
        %9029 = vst.msk [vmem:[%s535 + $0x18] sm:$0xff] %vm2312, %v8997
        %9030 = vst.msk [vmem:[%s535 + $0x20] sm:$0xff] %vm2312, %v8998
        %9031 = vst.msk [vmem:[%s535 + $0x28] sm:$0xff] %vm2312, %v8999
        %9032 = vst.msk [vmem:[%s535 + $0x30] sm:$0xff] %vm2312, %v9000
        %9033 = vst.msk [vmem:[%s535 + $0x38] sm:$0xff] %vm2312, %v9001
        %9034 = vst.msk [vmem:[%s535 + $0x40] sm:$0xff] %vm2312, %v9002
        %9035 = vst.msk [vmem:[%s535 + $0x48] sm:$0xff] %vm2312, %v9003
        %9036 = vst.msk [vmem:[%s535 + $0x50] sm:$0xff] %vm2312, %v9004
        %9037 = vst.msk [vmem:[%s535 + $0x58] sm:$0xff] %vm2312, %v9005
        %9038 = vst.msk [vmem:[%s535 + $0x60] sm:$0xff] %vm2312, %v9006
        %9039 = vst.msk [vmem:[%s535 + $0x68] sm:$0xff] %vm2312, %v9007
        %9040 = vst.msk [vmem:[%s535 + $0x70] sm:$0xff] %vm2312, %v9008
        %9041 = vst.msk [vmem:[%s535 + $0x78] sm:$0xff] %vm2312, %v9009
        %9042 = vst.msk [vmem:[%s535 + $0x80] sm:$0xff] %vm2312, %v9010
        %9043 = vst.msk [vmem:[%s535 + $0x88] sm:$0xff] %vm2312, %v9011
        %9044 = vst.msk [vmem:[%s535 + $0x90] sm:$0xff] %vm2312, %v9012
        %9045 = vst.msk [vmem:[%s535 + $0x98] sm:$0xff] %vm2312, %v9013
        %9046 = vst.msk [vmem:[%s535 + $0xa0] sm:$0xff] %vm2312, %v9014
        %9047 = vst.msk [vmem:[%s535 + $0xa8] sm:$0xff] %vm2312, %v9015
        %9048 = vst.msk [vmem:[%s535 + $0xb0] sm:$0xff] %vm2312, %v9016
        %9049 = vst.msk [vmem:[%s535 + $0xb8] sm:$0xff] %vm2312, %v9017
        %9050 = vst.msk [vmem:[%s535 + $0xc0] sm:$0xff] %vm2312, %v9018
        %9051 = vst.msk [vmem:[%s535 + $0xc8] sm:$0xff] %vm2312, %v9019
        %9052 = vst.msk [vmem:[%s535 + $0xd0] sm:$0xff] %vm2312, %v9020
        %9053 = vst.msk [vmem:[%s535 + $0xd8] sm:$0xff] %vm2312, %v9021
        %9054 = vst.msk [vmem:[%s535 + $0xe0] sm:$0xff] %vm2312, %v9022
        %9055 = vst.msk [vmem:[%s535 + $0xe8] sm:$0xff] %vm2312, %v9023
        %9056 = vst.msk [vmem:[%s535 + $0xf0] sm:$0xff] %vm2312, %v9024
        %9057 = vst.msk [vmem:[%s535 + $0xf8] sm:$0xff] %vm2312, %v9025
        %s9058 = smul.u32 32, %s28
        %p9059 = scmp.lt.s32.totalorder %s9058, 63
        %s9060 = scalar_select %p9059, %s9058, 63
        %s9061 = smul.addr %s9060, 8
        %s9062 = scalar_lea.vmem %s16, %s9061
        // Predicated region
        $region89: #{cifar_rf_basic_block.1} parent=83 // pred_check
          %p9063 = pneg %p387
        $region90: #{cifar_rf_basic_block.1} parent=83 // pred_check_branch
          %9065 = sbr.rel (%p9063) target = $region92
        $region91: #{cifar_rf_basic_block.1} parent=83 // pred_region
          %s9066 = smul.u32 32, %s28
        $region92: #{cifar_rf_basic_block.1} parent=83 // pred_fallthru
          _
      $region84: #{cifar_rf_basic_block.1} parent=5 // pred_fallthru
        _
      %p9067 = scmp.le.s32.totalorder 2, %s23
      // Predicated region
      $region93: #{cifar_rf_basic_block.1} parent=5 // pred_check
        %p9068 = pneg %p9067
      $region94: #{cifar_rf_basic_block.1} parent=5 // pred_check_branch
        %9070 = sbr.rel (%p9068) target = $region96
      $region95: #{cifar_rf_basic_block.1} parent=5 // pred_region
        %s9071 = ssub.s32 %s23, 2
        // Predicated region
        $region97: #{cifar_rf_basic_block.1} parent=95 // pred_check
          %p9072 = pneg %p393
        $region98: #{cifar_rf_basic_block.1} parent=95 // pred_check_branch
          %9074 = sbr.rel (%p9072) target = $region100
        $region99: #{cifar_rf_basic_block.1} parent=95 // pred_region
          %s9075 = smul.u32 32, %s29
          %p9076 = scmp.lt.s32.totalorder %s9075, 63
          %s9077 = scalar_select %p9076, %s9075, 63
          %s9078 = smul.addr %s9077, 8
          %s9079 = scalar_lea.vmem %s16, %s9078
        $region100: #{cifar_rf_basic_block.1} parent=95 // pred_fallthru
          _
      $region96: #{cifar_rf_basic_block.1} parent=5 // pred_fallthru
        _
    $region6: #{cifar_rf_basic_block.1} parent=1 // loop_footer
      %s27 = sadd.s32 1, %s23
    $region7: #{cifar_rf_basic_block.1} parent=1 // loop_footer_branch
      %22 = sbr.rel target = $region3
    $region8: #{cifar_rf_basic_block.1} parent=1 // loop_exit
      _
    %9080 = vsyncpa [#allocation7], 1
    %s9081 = scalar_lea.sflag [#allocation7], 1
    %9082 = vsyncpa %s9081, 1

</llo_original>
